<compile_context>
chip_gen: v7x
topology: tpu7x:2x2x1
jax: 0.10.0
libtpu: 0.0.40
codegen_flags: <defaults>
</compile_context>

<pallas_src>
import jax
import jax.numpy as jnp
from jax.experimental import pallas as pl
from jax.experimental.pallas import tpu as pltpu

D_IN = 4096
D_HID = 2048
EB_SIZE = 128
TK = 1024   # reduction tile of the first (4096 -> 2048) matmul
TM = 256    # batch tile (rows per grid step); bounds VMEM independent of N


def _round_up(x, m):
    return (x + m - 1) // m * m


def _get_visual_kernel(x_ref, w1_ref, b1_ref, w2_ref, scale_ref, shift_ref,
                       o_ref, h_acc):
    """Grid = (M tiles, K tiles); axis 1 (K) is the reduction of the first matmul.

    x_ref     : (TM, TK)       bf16 input tile
    w1_ref    : (TK, 2048)     bf16 W1 tile
    b1_ref    : (1, 2048)      f32 bias of first Linear
    w2_ref    : (2048, 128)    bf16 full W2 (no bias), resident across the grid
    scale_ref : (1, 128)       f32 folded BatchNorm scale  gamma / sqrt(var + eps)
    shift_ref : (1, 128)       f32 folded BatchNorm shift  beta - mean * scale
    o_ref     : (TM, 128)      f32 output tile
    h_acc     : (TM, 2048) f32 VMEM accumulator for the hidden layer
    """
    k = pl.program_id(1)

    @pl.when(k == 0)
    def _():
        h_acc[...] = jnp.zeros_like(h_acc)

    # First matmul: accumulate x_k @ W1_k (bf16 operands, f32 accumulation on MXU).
    h_acc[...] += jnp.dot(x_ref[...], w1_ref[...],
                          preferred_element_type=jnp.float32)

    @pl.when(k == pl.num_programs(1) - 1)
    def _():
        # Dropout is identity in eval mode.
        # TODO(synk): training-mode dropout (RNG masking) not implemented.
        h = jnp.maximum(h_acc[...] + b1_ref[...], 0.0)          # bias + ReLU
        y = jnp.dot(h.astype(jnp.bfloat16), w2_ref[...],
                    preferred_element_type=jnp.float32)
        # BatchNorm1d (eval) folded into per-feature affine transform.
        o_ref[...] = (y * scale_ref[...] + shift_ref[...]).astype(o_ref.dtype)


def _vmem_limit_bytes(tm, tk):
    """Approximate VMEM footprint (double-buffered I/O + scratch) with headroom."""
    dbl = 2
    x_b = tm * tk * 2 * dbl                 # bf16 x tile
    w1_b = tk * D_HID * 2 * dbl             # bf16 W1 tile
    w2_b = D_HID * EB_SIZE * 2 * dbl        # bf16 W2
    b1_b = D_HID * 4 * dbl                  # f32 bias
    bn_b = 2 * EB_SIZE * 4 * dbl            # f32 scale + shift
    out_b = tm * EB_SIZE * 4 * dbl          # f32 output tile
    acc_b = tm * D_HID * 4                  # f32 accumulator scratch
    total = x_b + w1_b + w2_b + b1_b + bn_b + out_b + acc_b
    return min(max(int(total * 1.5) + (4 << 20), 16 << 20), 48 << 20)


def get_visual(x, w1, b1, w2, gamma, beta, running_mean, running_var,
               eps=1e-5, tm=TM, tk=TK):
    """x: (N, 4096) float32/bfloat16.  Returns (N, 128) float32."""
    n = x.shape[0]
    assert x.shape[1] == D_IN and D_IN % tk == 0

    # Batch (M) tiling: a fixed tile bounds VMEM independent of batch size.
    tm_eff = min(tm, _round_up(n, 8))
    n_pad = _round_up(n, tm_eff)
    if n_pad != n:
        x = jnp.pad(x, ((0, n_pad - n), (0, 0)))

    # Stream activations & weights in bf16 (MXU-native); accumulate in f32.
    x_bf = x.astype(jnp.bfloat16)
    w1_bf = w1.astype(jnp.bfloat16)
    w2_bf = w2.astype(jnp.bfloat16)

    # Fold BatchNorm running stats + affine into per-feature scale/shift (f32).
    scale = (gamma / jnp.sqrt(running_var + eps)).astype(jnp.float32)
    shift = (beta - running_mean * scale).astype(jnp.float32)
    scale_2d = scale.reshape(1, EB_SIZE)
    shift_2d = shift.reshape(1, EB_SIZE)
    b1_2d = b1.astype(jnp.float32).reshape(1, D_HID)

    grid = (n_pad // tm_eff, D_IN // tk)

    cost = pl.CostEstimate(
        flops=2 * n_pad * D_IN * D_HID + 2 * n_pad * D_HID * EB_SIZE,
        transcendentals=0,
        bytes_accessed=(x_bf.size * 2 + w1_bf.size * 2 + w2_bf.size * 2
                        + b1_2d.size * 4 + 2 * EB_SIZE * 4
                        + n_pad * EB_SIZE * 4),
    )

    out = pl.pallas_call(
        _get_visual_kernel,
        out_shape=jax.ShapeDtypeStruct((n_pad, EB_SIZE), jnp.float32),
        grid_spec=pltpu.PrefetchScalarGridSpec(
            num_scalar_prefetch=0,
            grid=grid,
            in_specs=[
                pl.BlockSpec((tm_eff, tk), lambda m, k: (m, k)),        # x tile
                pl.BlockSpec((tk, D_HID), lambda m, k: (k, 0)),         # W1 tile
                pl.BlockSpec((1, D_HID), lambda m, k: (0, 0)),          # b1
                pl.BlockSpec((D_HID, EB_SIZE), lambda m, k: (0, 0)),    # W2 (full)
                pl.BlockSpec((1, EB_SIZE), lambda m, k: (0, 0)),        # bn scale
                pl.BlockSpec((1, EB_SIZE), lambda m, k: (0, 0)),        # bn shift
            ],
            out_specs=pl.BlockSpec((tm_eff, EB_SIZE), lambda m, k: (m, 0)),
            scratch_shapes=[pltpu.VMEM((tm_eff, D_HID), jnp.float32)],
        ),
        compiler_params=pltpu.CompilerParams(
            dimension_semantics=("parallel", "arbitrary"),
            vmem_limit_bytes=_vmem_limit_bytes(tm_eff, tk),
        ),
        cost_estimate=cost,
    )(x_bf, w1_bf, b1_2d, w2_bf, scale_2d, shift_2d)

    return out[:n]


def _reference_f32(x, w1, b1, w2, gamma, beta, mean, var, eps=1e-5):
    h = jnp.maximum(x @ w1 + b1, 0.0)
    y = h @ w2
    scale = gamma / jnp.sqrt(var + eps)
    return y * scale + (beta - mean * scale)


def _reference_bf16(x, w1, b1, w2, gamma, beta, mean, var, eps=1e-5):
    # Same mixed precision as the kernel (bf16 operands, f32 accumulation).
    h = jnp.maximum(
        jnp.dot(x.astype(jnp.bfloat16), w1.astype(jnp.bfloat16),
                preferred_element_type=jnp.float32) + b1, 0.0)
    y = jnp.dot(h.astype(jnp.bfloat16), w2.astype(jnp.bfloat16),
                preferred_element_type=jnp.float32)
    scale = gamma / jnp.sqrt(var + eps)
    return y * scale + (beta - mean * scale)


if __name__ == "__main__":
    key = jax.random.PRNGKey(0)
    kx, kw1, kb1, kw2, kg, kb, km, kv = jax.random.split(key, 8)

    N = 8  # small batch (multiple of 8 for clean sublane tiling)
    x = jax.random.normal(kx, (N, D_IN), dtype=jnp.float32)

    # Deterministic synthetic parameters (shapes from the module __init__).
    w1 = jax.random.normal(kw1, (D_IN, D_HID), dtype=jnp.float32) * 0.02
    b1 = jax.random.normal(kb1, (D_HID,), dtype=jnp.float32) * 0.02
    w2 = jax.random.normal(kw2, (D_HID, EB_SIZE), dtype=jnp.float32) * 0.02
    gamma = 1.0 + 0.1 * jax.random.normal(kg, (EB_SIZE,), dtype=jnp.float32)
    beta = 0.1 * jax.random.normal(kb, (EB_SIZE,), dtype=jnp.float32)
    running_mean = 0.1 * jax.random.normal(km, (EB_SIZE,), dtype=jnp.float32)
    running_var = jnp.abs(1.0 + 0.1 * jax.random.normal(kv, (EB_SIZE,),
                                                        dtype=jnp.float32))

    out = get_visual(x, w1, b1, w2, gamma, beta, running_mean, running_var)
    out = jax.block_until_ready(out)
    assert out.shape == (N, EB_SIZE)

    # Tight check against a reference at the kernel's precision (bf16 in / f32 acc).
    ref_bf16 = _reference_bf16(x, w1, b1, w2, gamma, beta,
                               running_mean, running_var)
    assert jnp.allclose(out, ref_bf16, atol=2e-3, rtol=2e-3)

    # Loose sanity check against the full-f32 PyTorch-equivalent math.
    ref_f32 = _reference_f32(x, w1, b1, w2, gamma, beta,
                             running_mean, running_var)
    assert jnp.allclose(out, ref_f32, atol=5e-2, rtol=5e-2)

    print("KERNEL_OK")
</pallas_src>

<mosaic_0001>
module attributes {stable_mosaic.version = 11 : i64} {
  func.func @_get_visual_kernel(%arg0: i32, %arg1: i32, %arg2: memref<8x1024xbf16, #tpu.memory_space<vmem>>, %arg3: memref<1024x2048xbf16, #tpu.memory_space<vmem>>, %arg4: memref<1x2048xf32, #tpu.memory_space<vmem>>, %arg5: memref<2048x128xbf16, #tpu.memory_space<vmem>>, %arg6: memref<1x128xf32, #tpu.memory_space<vmem>>, %arg7: memref<1x128xf32, #tpu.memory_space<vmem>>, %arg8: memref<8x128xf32, #tpu.memory_space<vmem>>, %arg9: memref<8x2048xf32, #tpu.memory_space<vmem>>) attributes {dimension_semantics = [#tpu.dimension_semantics<parallel>, #tpu.dimension_semantics<arbitrary>], iteration_bounds = array<i64: 1, 4>, scalar_prefetch = 0 : i64, scratch_operands = 1 : i64, tpu.core_type = #tpu.core_type<tc>, window_params = [{transform_indices = @transform_0, window_bounds = array<i64: 8, 1024>}, {transform_indices = @transform_1, window_bounds = array<i64: 1024, 2048>}, {pipeline_mode = #tpu.pipeline_mode<synchronous>, transform_indices = @transform_2, window_bounds = array<i64: 1, 2048>}, {pipeline_mode = #tpu.pipeline_mode<synchronous>, transform_indices = @transform_3, window_bounds = array<i64: 2048, 128>}, {pipeline_mode = #tpu.pipeline_mode<synchronous>, transform_indices = @transform_4, window_bounds = array<i64: 1, 128>}, {pipeline_mode = #tpu.pipeline_mode<synchronous>, transform_indices = @transform_5, window_bounds = array<i64: 1, 128>}, {transform_indices = @transform_6, window_bounds = array<i64: 8, 128>}]} {
    %c0_i32 = arith.constant 0 : i32
    %0 = arith.cmpi eq, %arg1, %c0_i32 : i32
    %1 = arith.extui %0 : i1 to i32
    %c0_i32_0 = arith.constant 0 : i32
    %2 = arith.cmpi ne, %1, %c0_i32_0 : i32
    scf.if %2 {
      %cst_9 = arith.constant 0.000000e+00 : f32
      %12 = vector.broadcast %cst_9 : f32 to vector<8x2048xf32>
      %c0_10 = arith.constant 0 : index
      %c0_11 = arith.constant 0 : index
      %13 = vector.load %arg9[%c0_10, %c0_11] : memref<8x2048xf32, #tpu.memory_space<vmem>>, vector<8x2048xf32>
      tpu.vector_store %arg9[%c0_10, %c0_11], %12 {strides = array<i32>} : memref<8x2048xf32, #tpu.memory_space<vmem>>, vector<8x2048xf32>,
    } else {
    }
    %c0 = arith.constant 0 : index
    %c0_1 = arith.constant 0 : index
    %3 = vector.load %arg9[%c0, %c0_1] : memref<8x2048xf32, #tpu.memory_space<vmem>>, vector<8x2048xf32>
    %c0_2 = arith.constant 0 : index
    %c0_3 = arith.constant 0 : index
    %4 = vector.load %arg2[%c0_2, %c0_3] : memref<8x1024xbf16, #tpu.memory_space<vmem>>, vector<8x1024xbf16>
    %c0_4 = arith.constant 0 : index
    %c0_5 = arith.constant 0 : index
    %5 = vector.load %arg3[%c0_4, %c0_5] : memref<1024x2048xbf16, #tpu.memory_space<vmem>>, vector<1024x2048xbf16>
    %cst = arith.constant dense<0.000000e+00> : vector<8x2048xf32>
    %6 = tpu.matmul %4, %5, %cst {dimension_numbers = #tpu.dot_dimension_numbers<[1], [0], [0], [1], [0, 0, 1, 1], [], []>} : vector<8x1024xbf16>, vector<1024x2048xbf16>, vector<8x2048xf32> -> vector<8x2048xf32>
    %7 = arith.addf %3, %6 : vector<8x2048xf32>
    %c0_6 = arith.constant 0 : index
    %c0_7 = arith.constant 0 : index
    %8 = vector.load %arg9[%c0_6, %c0_7] : memref<8x2048xf32, #tpu.memory_space<vmem>>, vector<8x2048xf32>
    tpu.vector_store %arg9[%c0_6, %c0_7], %7 {strides = array<i32>} : memref<8x2048xf32, #tpu.memory_space<vmem>>, vector<8x2048xf32>,
    %c3_i32 = arith.constant 3 : i32
    %9 = arith.cmpi eq, %arg1, %c3_i32 : i32
    %10 = arith.extui %9 : i1 to i32
    %c0_i32_8 = arith.constant 0 : i32
    %11 = arith.cmpi ne, %10, %c0_i32_8 : i32
    scf.if %11 {
      %c0_9 = arith.constant 0 : index
      %c0_10 = arith.constant 0 : index
      %12 = vector.load %arg9[%c0_9, %c0_10] : memref<8x2048xf32, #tpu.memory_space<vmem>>, vector<8x2048xf32>
      %c0_11 = arith.constant 0 : index
      %c0_12 = arith.constant 0 : index
      %13 = vector.load %arg4[%c0_11, %c0_12] : memref<1x2048xf32, #tpu.memory_space<vmem>>, vector<1x2048xf32>
      %14 = vector.broadcast %13 : vector<1x2048xf32> to vector<8x2048xf32>
      %15 = arith.addf %12, %14 : vector<8x2048xf32>
      %cst_13 = arith.constant 0.000000e+00 : f32
      %16 = vector.broadcast %cst_13 : f32 to vector<8x2048xf32>
      %17 = arith.maximumf %15, %16 : vector<8x2048xf32>
      %18 = arith.truncf %17 : vector<8x2048xf32> to vector<8x2048xbf16>
      %c0_14 = arith.constant 0 : index
      %c0_15 = arith.constant 0 : index
      %19 = vector.load %arg5[%c0_14, %c0_15] : memref<2048x128xbf16, #tpu.memory_space<vmem>>, vector<2048x128xbf16>
      %cst_16 = arith.constant dense<0.000000e+00> : vector<8x128xf32>
      %20 = tpu.matmul %18, %19, %cst_16 {dimension_numbers = #tpu.dot_dimension_numbers<[1], [0], [0], [1], [0, 0, 1, 1], [], []>} : vector<8x2048xbf16>, vector<2048x128xbf16>, vector<8x128xf32> -> vector<8x128xf32>
      %c0_17 = arith.constant 0 : index
      %c0_18 = arith.constant 0 : index
      %21 = vector.load %arg6[%c0_17, %c0_18] : memref<1x128xf32, #tpu.memory_space<vmem>>, vector<1x128xf32>
      %22 = vector.broadcast %21 : vector<1x128xf32> to vector<8x128xf32>
      %23 = arith.mulf %20, %22 : vector<8x128xf32>
      %c0_19 = arith.constant 0 : index
      %c0_20 = arith.constant 0 : index
      %24 = vector.load %arg7[%c0_19, %c0_20] : memref<1x128xf32, #tpu.memory_space<vmem>>, vector<1x128xf32>
      %25 = vector.broadcast %24 : vector<1x128xf32> to vector<8x128xf32>
      %26 = arith.addf %23, %25 : vector<8x128xf32>
      %c0_21 = arith.constant 0 : index
      %c0_22 = arith.constant 0 : index
      %27 = vector.load %arg8[%c0_21, %c0_22] : memref<8x128xf32, #tpu.memory_space<vmem>>, vector<8x128xf32>
      tpu.vector_store %arg8[%c0_21, %c0_22], %26 {strides = array<i32>} : memref<8x128xf32, #tpu.memory_space<vmem>>, vector<8x128xf32>,
    } else {
    }
    return
  }
  func.func @transform_0(%arg0: i32, %arg1: i32) -> (i32, i32) {
    %c0_i32 = arith.constant 0 : i32
    return %arg0, %arg1 : i32, i32
  }
  func.func @transform_1(%arg0: i32, %arg1: i32) -> (i32, i32) {
    %c0_i32 = arith.constant 0 : i32
    %c0_i32_0 = arith.constant 0 : i32
    return %arg1, %c0_i32 : i32, i32
  }
  func.func @transform_2(%arg0: i32, %arg1: i32) -> (i32, i32) {
    %c0_i32 = arith.constant 0 : i32
    %c0_i32_0 = arith.constant 0 : i32
    %c0_i32_1 = arith.constant 0 : i32
    return %c0_i32, %c0_i32_0 : i32, i32
  }
  func.func @transform_3(%arg0: i32, %arg1: i32) -> (i32, i32) {
    %c0_i32 = arith.constant 0 : i32
    %c0_i32_0 = arith.constant 0 : i32
    %c0_i32_1 = arith.constant 0 : i32
    return %c0_i32, %c0_i32_0 : i32, i32
  }
  func.func @transform_4(%arg0: i32, %arg1: i32) -> (i32, i32) {
    %c0_i32 = arith.constant 0 : i32
    %c0_i32_0 = arith.constant 0 : i32
    %c0_i32_1 = arith.constant 0 : i32
    return %c0_i32, %c0_i32_0 : i32, i32
  }
  func.func @transform_5(%arg0: i32, %arg1: i32) -> (i32, i32) {
    %c0_i32 = arith.constant 0 : i32
    %c0_i32_0 = arith.constant 0 : i32
    %c0_i32_1 = arith.constant 0 : i32
    return %c0_i32, %c0_i32_0 : i32, i32
  }
  func.func @transform_6(%arg0: i32, %arg1: i32) -> (i32, i32) {
    %c0_i32 = arith.constant 0 : i32
    %c0_i32_0 = arith.constant 0 : i32
    return %arg0, %c0_i32 : i32, i32
  }
}

</mosaic_0001>

<llo_original>
// kernel: tpu_custom_call.1
$region0: #{tpu_custom_call.1}
  #allocation0 [shape = 'u32[]', space=smem, size = 0x4, offset = 0x4, fixed_abs, tag = 'smem constant byte address 0x4 - core index']
  #allocation1 [shape = 'u32[144,128]{1,0:T(1,128)}', space=vmem, size = 0x12000, scoped, tag = 'internal scratch']
  #allocation2 [shape = 'f32[8,2048]{1,0:T(8,128)}', space=vmem, size = 0x10000, scoped, tag = 'scratch operand']
  %s0 = inlined_call_operand.hbm [shape: bf16[8,4096], index: 0, kind: input, shape index: {}]
  %s1 = inlined_call_operand.hbm [shape: bf16[4096,2048], index: 1, kind: input, shape index: {}]
  %s2 = inlined_call_operand.hbm [shape: f32[1,2048], index: 2, kind: input, shape index: {}]
  %s3 = inlined_call_operand.hbm [shape: bf16[2048,128], index: 3, kind: input, shape index: {}]
  %s4 = inlined_call_operand.hbm [shape: f32[1,128], index: 4, kind: input, shape index: {}]
  %s5 = inlined_call_operand.hbm [shape: f32[1,128], index: 5, kind: input, shape index: {}]
  %s6 = inlined_call_operand.hbm [shape: f32[8,128], index: 6, kind: output, shape index: {}]
  %s7 = sld [smem:[#allocation0]]
  $region89: #{tpu_custom_call.1} parent=0
    _
  %s9 = ssub.s32 1, %s7
  %s10 = scalar_select 0, %s9, %s7
  $region1: #{tpu_custom_call.1} parent=0
    #allocation3 [shape = 'u8[32768]{0}', space=vmem, size = 0x8000, scoped, tag = 'input window, operand 0']
    #allocation4 [shape = 's32[2]{0}', space=sflag, size = 0x8, scoped, tag = 'scoped memory for tpu_custom_call.1']
    #allocation5 [shape = 's32[2]{0}', space=sflag, size = 0x8, scoped, tag = 'scoped memory for tpu_custom_call.1']
    #allocation6 [shape = 'u8[8388608]{0}', space=vmem, size = 0x800000, scoped, tag = 'input window, operand 1']
    #allocation7 [shape = 's32[2]{0}', space=sflag, size = 0x8, scoped, tag = 'scoped memory for tpu_custom_call.1']
    #allocation8 [shape = 'u8[8192]{0}', space=vmem, size = 0x2000, scoped, tag = 'input window, operand 2, single buffered']
    #allocation9 [shape = 'u8[524288]{0}', space=vmem, size = 0x80000, scoped, tag = 'input window, operand 3, single buffered']
    #allocation10 [shape = 's32[1]{0}', space=sflag, size = 0x4, scoped, tag = 'scoped memory for tpu_custom_call.1']
    #allocation11 [shape = 'u8[512]{0}', space=vmem, size = 0x400, scoped, tag = 'input window, operand 4, single buffered']
    #allocation12 [shape = 'u8[512]{0}', space=vmem, size = 0x400, scoped, tag = 'input window, operand 5, single buffered']
    #allocation13 [shape = 's32[1]{0}', space=sflag, size = 0x4, scoped, tag = 'scoped memory for tpu_custom_call.1']
    #allocation14 [shape = 'u8[4096]{0}', space=vmem, size = 0x1000, scoped, tag = 'output window, operand 0, single buffered']
    %11 = vsyncpa [#allocation4], 0
    %s12 = scalar_lea.sflag [#allocation4], 1
    %13 = vsyncpa %s12, 0
    %14 = vsyncpa [#allocation7], 0
    %s15 = scalar_lea.sflag [#allocation7], 1
    %16 = vsyncpa %s15, 0
    %17 = vsyncpa [#allocation10], 0
    %18 = vsyncpa [#allocation13], 0
    %19 = vsyncpa [#allocation5], 0
    loop: start=0, step=1, limit=6
    $region2: #{tpu_custom_call.1} parent=1 // loop_pre_header
      _
    $region3: #{tpu_custom_call.1} parent=1 // loop_header
      %s21 = sphi 0, %s25
      %p22 = scmp.ge.s32.totalorder %s21, 6
      %s28 = sphi 0, %s40
      %s29 = sphi 0, %s36
      %s30 = sphi 0, %s28
      %s31 = sphi 0, %s29
      %s32 = sphi 0, %s30
      %s33 = sphi 0, %s31
      %s45 = sphi 0, %s47
      %s48 = sphi 0, %s45
      %s49 = sphi 0, %s48
      %s65 = sphi 0, %s49
      %s71 = sphi 0, %s73
      %s74 = sphi 0, %s71
      %s75 = sphi 0, %s74
      %s91 = sphi 0, %s75
      %s95 = sphi 0, %s95
      %s97 = sphi 0, %s95
      %s98 = sphi 0, %s97
      %s112 = sphi 0, %s98
      %s116 = sphi 0, %s116
      %s118 = sphi 0, %s116
      %s119 = sphi 0, %s118
      %s133 = sphi 0, %s119
      %s137 = sphi 0, %s137
      %s139 = sphi 0, %s137
      %s140 = sphi 0, %s139
      %s154 = sphi 0, %s140
      %s158 = sphi 0, %s158
      %s160 = sphi 0, %s158
      %s161 = sphi 0, %s160
      %s175 = sphi 0, %s161
      %s181 = sphi 0, %s183
      %s184 = sphi 0, %s181
      %s185 = sphi 0, %s184
      %s201 = sphi 0, %s185
    $region4: #{tpu_custom_call.1} parent=1 // loop_header_branch
      %24 = sbr.rel (%p22) target = $region8
    $region5: #{tpu_custom_call.1} parent=1 // loop_body
      %s26 = ssub.s32 %s21, 1
      %s27 = ssub.s32 %s21, 2
      %s34 = sadd.s32 1, %s29
      %p35 = scmp.ge.s32.totalorder %s34, 4
      %s36 = scalar_select %p35, 0, %s34
      %s37 = sadd.s32 1, %s28
      %s38 = scalar_select %p35, %s37, %s28
      %p39 = scmp.ge.s32.totalorder %s38, 1
      %s40 = scalar_select %p39, 0, %s38
      %s41 = ssub.s32 %s28, %s40
      %s42 = ssub.s32 %s29, %s36
      %s43 = sor.u32 %s41, %s42
      %p44 = scmp.eq.s32.totalorder %s43, 0
      %s46 = sadd.s32 %s45, 1
      %s47 = scalar_select %p44, %s45, %s46
      %p50 = pneg %p44
      %p51 = scmp.eq.s32.totalorder %s21, 3
      %p52 = por %p50, %p51
      %p53 = scmp.ne.s32.totalorder %s45, %s48
      %p54 = scmp.eq.s32.totalorder %s21, 0
      %p55 = por %p53, %p54
      %p56 = scmp.ne.s32.totalorder %s45, %s48
      %p57 = scmp.eq.s32.totalorder %s26, 3
      %p58 = por %p56, %p57
      %p59 = scmp.ne.s32.totalorder %s48, %s49
      %p60 = scmp.eq.s32.totalorder %s26, 0
      %p61 = por %p59, %p60
      %p62 = scmp.ne.s32.totalorder %s48, %s49
      %p63 = scmp.eq.s32.totalorder %s27, 3
      %p64 = por %p62, %p63
      %p66 = scmp.ne.s32.totalorder %s49, %s65
      %p67 = scmp.eq.s32.totalorder %s27, 0
      %p68 = por %p66, %p67
      %s69 = ssub.s32 %s29, %s36
      %p70 = scmp.eq.s32.totalorder %s69, 0
      %s72 = sadd.s32 %s71, 1
      %s73 = scalar_select %p70, %s71, %s72
      %p76 = pneg %p70
      %p77 = scmp.eq.s32.totalorder %s21, 3
      %p78 = por %p76, %p77
      %p79 = scmp.ne.s32.totalorder %s71, %s74
      %p80 = scmp.eq.s32.totalorder %s21, 0
      %p81 = por %p79, %p80
      %p82 = scmp.ne.s32.totalorder %s71, %s74
      %p83 = scmp.eq.s32.totalorder %s26, 3
      %p84 = por %p82, %p83
      %p85 = scmp.ne.s32.totalorder %s74, %s75
      %p86 = scmp.eq.s32.totalorder %s26, 0
      %p87 = por %p85, %p86
      %p88 = scmp.ne.s32.totalorder %s74, %s75
      %p89 = scmp.eq.s32.totalorder %s27, 3
      %p90 = por %p88, %p89
      %p92 = scmp.ne.s32.totalorder %s75, %s91
      %p93 = scmp.eq.s32.totalorder %s27, 0
      %p94 = por %p92, %p93
      %s96 = sadd.s32 %s95, 1
      %p99 = scmp.eq.s32.totalorder %s21, 3
      %p100 = scmp.ne.s32.totalorder %s95, %s97
      %p101 = scmp.eq.s32.totalorder %s21, 0
      %p102 = por %p100, %p101
      %p103 = scmp.ne.s32.totalorder %s95, %s97
      %p104 = scmp.eq.s32.totalorder %s26, 3
      %p105 = por %p103, %p104
      %p106 = scmp.ne.s32.totalorder %s97, %s98
      %p107 = scmp.eq.s32.totalorder %s26, 0
      %p108 = por %p106, %p107
      %p109 = scmp.ne.s32.totalorder %s97, %s98
      %p110 = scmp.eq.s32.totalorder %s27, 3
      %p111 = por %p109, %p110
      %p113 = scmp.ne.s32.totalorder %s98, %s112
      %p114 = scmp.eq.s32.totalorder %s27, 0
      %p115 = por %p113, %p114
      %s117 = sadd.s32 %s116, 1
      %p120 = scmp.eq.s32.totalorder %s21, 3
      %p121 = scmp.ne.s32.totalorder %s116, %s118
      %p122 = scmp.eq.s32.totalorder %s21, 0
      %p123 = por %p121, %p122
      %p124 = scmp.ne.s32.totalorder %s116, %s118
      %p125 = scmp.eq.s32.totalorder %s26, 3
      %p126 = por %p124, %p125
      %p127 = scmp.ne.s32.totalorder %s118, %s119
      %p128 = scmp.eq.s32.totalorder %s26, 0
      %p129 = por %p127, %p128
      %p130 = scmp.ne.s32.totalorder %s118, %s119
      %p131 = scmp.eq.s32.totalorder %s27, 3
      %p132 = por %p130, %p131
      %p134 = scmp.ne.s32.totalorder %s119, %s133
      %p135 = scmp.eq.s32.totalorder %s27, 0
      %p136 = por %p134, %p135
      %s138 = sadd.s32 %s137, 1
      %p141 = scmp.eq.s32.totalorder %s21, 3
      %p142 = scmp.ne.s32.totalorder %s137, %s139
      %p143 = scmp.eq.s32.totalorder %s21, 0
      %p144 = por %p142, %p143
      %p145 = scmp.ne.s32.totalorder %s137, %s139
      %p146 = scmp.eq.s32.totalorder %s26, 3
      %p147 = por %p145, %p146
      %p148 = scmp.ne.s32.totalorder %s139, %s140
      %p149 = scmp.eq.s32.totalorder %s26, 0
      %p150 = por %p148, %p149
      %p151 = scmp.ne.s32.totalorder %s139, %s140
      %p152 = scmp.eq.s32.totalorder %s27, 3
      %p153 = por %p151, %p152
      %p155 = scmp.ne.s32.totalorder %s140, %s154
      %p156 = scmp.eq.s32.totalorder %s27, 0
      %p157 = por %p155, %p156
      %s159 = sadd.s32 %s158, 1
      %p162 = scmp.eq.s32.totalorder %s21, 3
      %p163 = scmp.ne.s32.totalorder %s158, %s160
      %p164 = scmp.eq.s32.totalorder %s21, 0
      %p165 = por %p163, %p164
      %p166 = scmp.ne.s32.totalorder %s158, %s160
      %p167 = scmp.eq.s32.totalorder %s26, 3
      %p168 = por %p166, %p167
      %p169 = scmp.ne.s32.totalorder %s160, %s161
      %p170 = scmp.eq.s32.totalorder %s26, 0
      %p171 = por %p169, %p170
      %p172 = scmp.ne.s32.totalorder %s160, %s161
      %p173 = scmp.eq.s32.totalorder %s27, 3
      %p174 = por %p172, %p173
      %p176 = scmp.ne.s32.totalorder %s161, %s175
      %p177 = scmp.eq.s32.totalorder %s27, 0
      %p178 = por %p176, %p177
      %s179 = ssub.s32 %s28, %s40
      %p180 = scmp.eq.s32.totalorder %s179, 0
      %s182 = sadd.s32 %s181, 1
      %s183 = scalar_select %p180, %s181, %s182
      %p186 = pneg %p180
      %p187 = scmp.eq.s32.totalorder %s21, 3
      %p188 = por %p186, %p187
      %p189 = scmp.ne.s32.totalorder %s181, %s184
      %p190 = scmp.eq.s32.totalorder %s21, 0
      %p191 = por %p189, %p190
      %p192 = scmp.ne.s32.totalorder %s181, %s184
      %p193 = scmp.eq.s32.totalorder %s26, 3
      %p194 = por %p192, %p193
      %p195 = scmp.ne.s32.totalorder %s184, %s185
      %p196 = scmp.eq.s32.totalorder %s26, 0
      %p197 = por %p195, %p196
      %p198 = scmp.ne.s32.totalorder %s184, %s185
      %p199 = scmp.eq.s32.totalorder %s27, 3
      %p200 = por %p198, %p199
      %p202 = scmp.ne.s32.totalorder %s185, %s201
      %p203 = scmp.eq.s32.totalorder %s27, 0
      %p204 = por %p202, %p203
      %p205 = scmp.le.s32.totalorder 1, %s21
      %p206 = scmp.lt.s32.totalorder %s21, 5
      %p207 = pnand %p205, %p206
      %p208 = pneg %p207
      // Predicated region
      $region9: #{tpu_custom_call.1} parent=5 // pred_check
        _
      $region10: #{tpu_custom_call.1} parent=5 // pred_check_branch
        %210 = sbr.rel (%p207) target = $region12
      $region11: #{tpu_custom_call.1} parent=5 // pred_region
        %s211 = ssub.s32 %s21, 1
        // Predicated region
        $region13: #{tpu_custom_call.1} parent=11 // pred_check
          %p212 = pneg %p108
        $region14: #{tpu_custom_call.1} parent=11 // pred_check_branch
          %214 = sbr.rel (%p212) target = $region16
        $region15: #{tpu_custom_call.1} parent=11 // pred_region
          %s216 = ssub.s32 256, 256
          %217 = vsyncadd [#allocation7], %s216
          %s219 = sshll.u32 [#allocation8], 4
          %s220 = int_to_ptr.vmem [resolvable:$true] %s219
          %222 = dma.hbm_to_vmem [thread:$0]  %s2, 256, %s220, [#allocation7]
        $region16: #{tpu_custom_call.1} parent=11 // pred_fallthru
          _
        // Predicated region
        $region17: #{tpu_custom_call.1} parent=11 // pred_check
          %p223 = pneg %p129
        $region18: #{tpu_custom_call.1} parent=11 // pred_check_branch
          %225 = sbr.rel (%p223) target = $region20
        $region19: #{tpu_custom_call.1} parent=11 // pred_region
          %s227 = ssub.s32 16384, 16384
          %228 = vsyncadd [#allocation10], %s227
          %s229 = sshll.u32 [#allocation9], 4
          %s230 = int_to_ptr.vmem [resolvable:$true] %s229
          %235 = dma.hbm_to_vmem [thread:$0]  %s3, 16384, %s230, [#allocation10], 64, 64, 4
        $region20: #{tpu_custom_call.1} parent=11 // pred_fallthru
          _
        // Predicated region
        $region21: #{tpu_custom_call.1} parent=11 // pred_check
          %p236 = pneg %p150
        $region22: #{tpu_custom_call.1} parent=11 // pred_check_branch
          %238 = sbr.rel (%p236) target = $region24
        $region23: #{tpu_custom_call.1} parent=11 // pred_region
          %s240 = ssub.s32 16, 16
          %241 = vsyncadd [#allocation10], %s240
          %s243 = sshll.u32 [#allocation11], 4
          %s244 = int_to_ptr.vmem [resolvable:$true] %s243
          %246 = dma.hbm_to_vmem [thread:$0]  %s4, 16, %s244, [#allocation10]
        $region24: #{tpu_custom_call.1} parent=11 // pred_fallthru
          _
        // Predicated region
        $region25: #{tpu_custom_call.1} parent=11 // pred_check
          %p247 = pneg %p171
        $region26: #{tpu_custom_call.1} parent=11 // pred_check_branch
          %249 = sbr.rel (%p247) target = $region28
        $region27: #{tpu_custom_call.1} parent=11 // pred_region
          %s251 = ssub.s32 16, 16
          %252 = vsyncadd [#allocation13], %s251
          %s254 = sshll.u32 [#allocation12], 4
          %s255 = int_to_ptr.vmem [resolvable:$true] %s254
          %257 = dma.hbm_to_vmem [thread:$0]  %s5, 16, %s255, [#allocation13]
        $region28: #{tpu_custom_call.1} parent=11 // pred_fallthru
          _
      $region12: #{tpu_custom_call.1} parent=5 // pred_fallthru
        _
      %p258 = scmp.lt.s32.totalorder %s21, 4
      // Predicated region
      $region29: #{tpu_custom_call.1} parent=5 // pred_check
        %p259 = pneg %p258
      $region30: #{tpu_custom_call.1} parent=5 // pred_check_branch
        %261 = sbr.rel (%p259) target = $region32
      $region31: #{tpu_custom_call.1} parent=5 // pred_region
        // Predicated region
        $region33: #{tpu_custom_call.1} parent=31 // pred_check
          %p262 = pneg %p55
        $region34: #{tpu_custom_call.1} parent=31 // pred_check_branch
          %264 = sbr.rel (%p262) target = $region36
        $region35: #{tpu_custom_call.1} parent=31 // pred_region
          %s265 = sand.u32 %s45, 1
          %s266 = scalar_lea.sflag [#allocation4], %s265
          %s267 = sand.u32 %s45, 1
          %s268 = smul.addr %s267, 32
          %s269 = scalar_lea.vmem [#allocation3], %s268
          %s270 = smul.u32 8, %s29
          %s272 = ssub.s32 512, 512
          %273 = vsyncadd %s266, %s272
          %s274 = smul.addr %s28, 32
          %s275 = sadd.s32 %s270, %s274
          %s276 = smul.addr %s275, 64
          %s277 = scalar_lea.hbm %s0, %s276
          %s279 = sshll.u32 %s269, 4
          %s280 = int_to_ptr.vmem [resolvable:$true] %s279
          %282 = dma.hbm_to_vmem [thread:$0]  %s277, 512, %s280, %s266
        $region36: #{tpu_custom_call.1} parent=31 // pred_fallthru
          _
        // Predicated region
        $region37: #{tpu_custom_call.1} parent=31 // pred_check
          %p283 = pneg %p81
        $region38: #{tpu_custom_call.1} parent=31 // pred_check_branch
          %285 = sbr.rel (%p283) target = $region40
        $region39: #{tpu_custom_call.1} parent=31 // pred_region
          %s286 = sand.u32 %s21, 1
          %s287 = scalar_lea.sflag [#allocation7], %s286
          %s288 = sand.u32 %s71, 1
          %s289 = smul.addr %s288, 8192
          %s290 = scalar_lea.vmem [#allocation6], %s289
          %s291 = smul.u32 128, %s29
          %s293 = ssub.s32 131072, 131072
          %294 = vsyncadd %s287, %s293
          %s295 = smul.addr %s291, 16
          %s296 = smul.addr %s295, 64
          %s297 = scalar_lea.hbm %s1, %s296
          %s298 = sshll.u32 %s290, 4
          %s299 = int_to_ptr.vmem [resolvable:$true] %s298
          %304 = dma.hbm_to_vmem [thread:$0]  %s297, 131072, %s299, %s287, 1024, 1024, 64
        $region40: #{tpu_custom_call.1} parent=31 // pred_fallthru
          _
      $region32: #{tpu_custom_call.1} parent=5 // pred_fallthru
        _
      %p305 = scmp.le.s32.totalorder 1, %s21
      %p306 = scmp.lt.s32.totalorder %s21, 5
      %p307 = pnand %p305, %p306
      %p308 = pneg %p307
      // Predicated region
      $region41: #{tpu_custom_call.1} parent=5 // pred_check
        _
      $region42: #{tpu_custom_call.1} parent=5 // pred_check_branch
        %310 = sbr.rel (%p307) target = $region44
      $region43: #{tpu_custom_call.1} parent=5 // pred_region
        %s311 = ssub.s32 %s21, 1
        %s312 = sand.u32 %s48, 1
        %s313 = scalar_lea.sflag [#allocation4], %s312
        %s314 = sand.u32 %s48, 1
        %s315 = smul.addr %s314, 32
        %s316 = scalar_lea.vmem [#allocation3], %s315
        // Predicated region
        $region45: #{tpu_custom_call.1} parent=43 // pred_check
          %p317 = pneg %p61
        $region46: #{tpu_custom_call.1} parent=43 // pred_check_branch
          %319 = sbr.rel (%p317) target = $region48
        $region47: #{tpu_custom_call.1} parent=43 // pred_region
          %320 = dma.done %s313, 512
        $region48: #{tpu_custom_call.1} parent=43 // pred_fallthru
          _
        %s321 = sand.u32 %s26, 1
        %s322 = scalar_lea.sflag [#allocation7], %s321
        %s323 = sand.u32 %s74, 1
        %s324 = smul.addr %s323, 8192
        %s325 = scalar_lea.vmem [#allocation6], %s324
        // Predicated region
        $region49: #{tpu_custom_call.1} parent=43 // pred_check
          %p326 = pneg %p87
        $region50: #{tpu_custom_call.1} parent=43 // pred_check_branch
          %328 = sbr.rel (%p326) target = $region52
        $region51: #{tpu_custom_call.1} parent=43 // pred_region
          %329 = dma.done %s322, 131072
        $region52: #{tpu_custom_call.1} parent=43 // pred_fallthru
          _
        // Predicated region
        $region53: #{tpu_custom_call.1} parent=43 // pred_check
          %p330 = pneg %p108
        $region54: #{tpu_custom_call.1} parent=43 // pred_check_branch
          %332 = sbr.rel (%p330) target = $region56
        $region55: #{tpu_custom_call.1} parent=43 // pred_region
          %333 = dma.done [#allocation7], 256
        $region56: #{tpu_custom_call.1} parent=43 // pred_fallthru
          _
        // Predicated region
        $region57: #{tpu_custom_call.1} parent=43 // pred_check
          %p334 = pneg %p129
        $region58: #{tpu_custom_call.1} parent=43 // pred_check_branch
          %336 = sbr.rel (%p334) target = $region60
        $region59: #{tpu_custom_call.1} parent=43 // pred_region
          %337 = dma.done [#allocation10], 16384
        $region60: #{tpu_custom_call.1} parent=43 // pred_fallthru
          _
        // Predicated region
        $region61: #{tpu_custom_call.1} parent=43 // pred_check
          %p338 = pneg %p150
        $region62: #{tpu_custom_call.1} parent=43 // pred_check_branch
          %340 = sbr.rel (%p338) target = $region64
        $region63: #{tpu_custom_call.1} parent=43 // pred_region
          %341 = dma.done [#allocation10], 16
        $region64: #{tpu_custom_call.1} parent=43 // pred_fallthru
          _
        // Predicated region
        $region65: #{tpu_custom_call.1} parent=43 // pred_check
          %p342 = pneg %p171
        $region66: #{tpu_custom_call.1} parent=43 // pred_check_branch
          %344 = sbr.rel (%p342) target = $region68
        $region67: #{tpu_custom_call.1} parent=43 // pred_region
          %345 = dma.done [#allocation13], 16
        $region68: #{tpu_custom_call.1} parent=43 // pred_fallthru
          _
        %s346 = sand.u32 %s48, 1
        %s347 = scalar_lea.sflag [#allocation4], %s346
        %s348 = sand.u32 %s48, 1
        %s349 = smul.addr %s348, 32
        %s350 = scalar_lea.vmem [#allocation3], %s349
        %p351 = pneg %p61
        %p352 = pneg %p58
        %s353 = sand.u32 %s26, 1
        %s354 = scalar_lea.sflag [#allocation7], %s353
        %s355 = sand.u32 %s74, 1
        %s356 = smul.addr %s355, 8192
        %s357 = scalar_lea.vmem [#allocation6], %s356
        %p358 = pneg %p87
        %p359 = pneg %p84
        %p360 = pneg %p108
        %p361 = pneg %p105
        %p362 = pneg %p129
        %p363 = pneg %p126
        %p364 = pneg %p150
        %p365 = pneg %p147
        %p366 = pneg %p171
        %p367 = pneg %p168
        %p368 = pneg %p197
        %p369 = pneg %p194
        %s370 = smul.u32 8, %s31
        %s371 = smul.u32 128, %s31
        %p373 = scmp.eq.s32.totalorder %s31, 0
        // Predicated region
        $region69: #{tpu_custom_call.1} parent=43 // pred_check
          %p374 = pneg %p373
        $region70: #{tpu_custom_call.1} parent=43 // pred_check_branch
          %376 = sbr.rel (%p374) target = $region72
        $region71: #{tpu_custom_call.1} parent=43 // pred_region
          %377 = vst [vmem:[#allocation2] sm:$0xff] 0.0
          %378 = vst [vmem:[#allocation2 + $0x8] sm:$0xff] 0.0
          %379 = vst [vmem:[#allocation2 + $0x10] sm:$0xff] 0.0
          %380 = vst [vmem:[#allocation2 + $0x18] sm:$0xff] 0.0
          %381 = vst [vmem:[#allocation2 + $0x20] sm:$0xff] 0.0
          %382 = vst [vmem:[#allocation2 + $0x28] sm:$0xff] 0.0
          %383 = vst [vmem:[#allocation2 + $0x30] sm:$0xff] 0.0
          %384 = vst [vmem:[#allocation2 + $0x38] sm:$0xff] 0.0
          %385 = vst [vmem:[#allocation2 + $0x40] sm:$0xff] 0.0
          %386 = vst [vmem:[#allocation2 + $0x48] sm:$0xff] 0.0
          %387 = vst [vmem:[#allocation2 + $0x50] sm:$0xff] 0.0
          %388 = vst [vmem:[#allocation2 + $0x58] sm:$0xff] 0.0
          %389 = vst [vmem:[#allocation2 + $0x60] sm:$0xff] 0.0
          %390 = vst [vmem:[#allocation2 + $0x68] sm:$0xff] 0.0
          %391 = vst [vmem:[#allocation2 + $0x70] sm:$0xff] 0.0
          %392 = vst [vmem:[#allocation2 + $0x78] sm:$0xff] 0.0
        $region72: #{tpu_custom_call.1} parent=43 // pred_fallthru
          _
        %v393 = vld [vmem:[#allocation2] sm:$0xff]
        %v394 = vld [vmem:[#allocation2 + $0x8] sm:$0xff]
        %v395 = vld [vmem:[#allocation2 + $0x10] sm:$0xff]
        %v396 = vld [vmem:[#allocation2 + $0x18] sm:$0xff]
        %v397 = vld [vmem:[#allocation2 + $0x20] sm:$0xff]
        %v398 = vld [vmem:[#allocation2 + $0x28] sm:$0xff]
        %v399 = vld [vmem:[#allocation2 + $0x30] sm:$0xff]
        %v400 = vld [vmem:[#allocation2 + $0x38] sm:$0xff]
        %v401 = vld [vmem:[#allocation2 + $0x40] sm:$0xff]
        %v402 = vld [vmem:[#allocation2 + $0x48] sm:$0xff]
        %v403 = vld [vmem:[#allocation2 + $0x50] sm:$0xff]
        %v404 = vld [vmem:[#allocation2 + $0x58] sm:$0xff]
        %v405 = vld [vmem:[#allocation2 + $0x60] sm:$0xff]
        %v406 = vld [vmem:[#allocation2 + $0x68] sm:$0xff]
        %v407 = vld [vmem:[#allocation2 + $0x70] sm:$0xff]
        %v408 = vld [vmem:[#allocation2 + $0x78] sm:$0xff]
        %v409 = vld [vmem:[%s316] sm:$0xff]
        %v410 = vld [vmem:[%s316 + $0x8] sm:$0xff]
        %v411 = vld [vmem:[%s316 + $0x10] sm:$0xff]
        %v412 = vld [vmem:[%s316 + $0x18] sm:$0xff]
        %v413 = vld [vmem:[%s325] sm:$0xff]
        %v414 = vld [vmem:[%s325 + $0x8] sm:$0xff]
        %v415 = vld [vmem:[%s325 + $0x10] sm:$0xff]
        %v416 = vld [vmem:[%s325 + $0x18] sm:$0xff]
        %v417 = vld [vmem:[%s325 + $0x20] sm:$0xff]
        %v418 = vld [vmem:[%s325 + $0x28] sm:$0xff]
        %v419 = vld [vmem:[%s325 + $0x30] sm:$0xff]
        %v420 = vld [vmem:[%s325 + $0x38] sm:$0xff]
        %v421 = vld [vmem:[%s325 + $0x40] sm:$0xff]
        %v422 = vld [vmem:[%s325 + $0x48] sm:$0xff]
        %v423 = vld [vmem:[%s325 + $0x50] sm:$0xff]
        %v424 = vld [vmem:[%s325 + $0x58] sm:$0xff]
        %v425 = vld [vmem:[%s325 + $0x60] sm:$0xff]
        %v426 = vld [vmem:[%s325 + $0x68] sm:$0xff]
        %v427 = vld [vmem:[%s325 + $0x70] sm:$0xff]
        %v428 = vld [vmem:[%s325 + $0x78] sm:$0xff]
        %v429 = vld [vmem:[%s325 + $0x80] sm:$0xff]
        %v430 = vld [vmem:[%s325 + $0x88] sm:$0xff]
        %v431 = vld [vmem:[%s325 + $0x90] sm:$0xff]
        %v432 = vld [vmem:[%s325 + $0x98] sm:$0xff]
        %v433 = vld [vmem:[%s325 + $0xa0] sm:$0xff]
        %v434 = vld [vmem:[%s325 + $0xa8] sm:$0xff]
        %v435 = vld [vmem:[%s325 + $0xb0] sm:$0xff]
        %v436 = vld [vmem:[%s325 + $0xb8] sm:$0xff]
        %v437 = vld [vmem:[%s325 + $0xc0] sm:$0xff]
        %v438 = vld [vmem:[%s325 + $0xc8] sm:$0xff]
        %v439 = vld [vmem:[%s325 + $0xd0] sm:$0xff]
        %v440 = vld [vmem:[%s325 + $0xd8] sm:$0xff]
        %v441 = vld [vmem:[%s325 + $0xe0] sm:$0xff]
        %v442 = vld [vmem:[%s325 + $0xe8] sm:$0xff]
        %v443 = vld [vmem:[%s325 + $0xf0] sm:$0xff]
        %v444 = vld [vmem:[%s325 + $0xf8] sm:$0xff]
        %v445 = vld [vmem:[%s325 + $0x100] sm:$0xff]
        %v446 = vld [vmem:[%s325 + $0x108] sm:$0xff]
        %v447 = vld [vmem:[%s325 + $0x110] sm:$0xff]
        %v448 = vld [vmem:[%s325 + $0x118] sm:$0xff]
        %v449 = vld [vmem:[%s325 + $0x120] sm:$0xff]
        %v450 = vld [vmem:[%s325 + $0x128] sm:$0xff]
        %v451 = vld [vmem:[%s325 + $0x130] sm:$0xff]
        %v452 = vld [vmem:[%s325 + $0x138] sm:$0xff]
        %v453 = vld [vmem:[%s325 + $0x140] sm:$0xff]
        %v454 = vld [vmem:[%s325 + $0x148] sm:$0xff]
        %v455 = vld [vmem:[%s325 + $0x150] sm:$0xff]
        %v456 = vld [vmem:[%s325 + $0x158] sm:$0xff]
        %v457 = vld [vmem:[%s325 + $0x160] sm:$0xff]
        %v458 = vld [vmem:[%s325 + $0x168] sm:$0xff]
        %v459 = vld [vmem:[%s325 + $0x170] sm:$0xff]
        %v460 = vld [vmem:[%s325 + $0x178] sm:$0xff]
        %v461 = vld [vmem:[%s325 + $0x180] sm:$0xff]
        %v462 = vld [vmem:[%s325 + $0x188] sm:$0xff]
        %v463 = vld [vmem:[%s325 + $0x190] sm:$0xff]
        %v464 = vld [vmem:[%s325 + $0x198] sm:$0xff]
        %v465 = vld [vmem:[%s325 + $0x1a0] sm:$0xff]
        %v466 = vld [vmem:[%s325 + $0x1a8] sm:$0xff]
        %v467 = vld [vmem:[%s325 + $0x1b0] sm:$0xff]
        %v468 = vld [vmem:[%s325 + $0x1b8] sm:$0xff]
        %v469 = vld [vmem:[%s325 + $0x1c0] sm:$0xff]
        %v470 = vld [vmem:[%s325 + $0x1c8] sm:$0xff]
        %v471 = vld [vmem:[%s325 + $0x1d0] sm:$0xff]
        %v472 = vld [vmem:[%s325 + $0x1d8] sm:$0xff]
        %v473 = vld [vmem:[%s325 + $0x1e0] sm:$0xff]
        %v474 = vld [vmem:[%s325 + $0x1e8] sm:$0xff]
        %v475 = vld [vmem:[%s325 + $0x1f0] sm:$0xff]
        %v476 = vld [vmem:[%s325 + $0x1f8] sm:$0xff]
        %v477 = vld [vmem:[%s325 + $0x200] sm:$0xff]
        %v478 = vld [vmem:[%s325 + $0x208] sm:$0xff]
        %v479 = vld [vmem:[%s325 + $0x210] sm:$0xff]
        %v480 = vld [vmem:[%s325 + $0x218] sm:$0xff]
        %v481 = vld [vmem:[%s325 + $0x220] sm:$0xff]
        %v482 = vld [vmem:[%s325 + $0x228] sm:$0xff]
        %v483 = vld [vmem:[%s325 + $0x230] sm:$0xff]
        %v484 = vld [vmem:[%s325 + $0x238] sm:$0xff]
        %v485 = vld [vmem:[%s325 + $0x240] sm:$0xff]
        %v486 = vld [vmem:[%s325 + $0x248] sm:$0xff]
        %v487 = vld [vmem:[%s325 + $0x250] sm:$0xff]
        %v488 = vld [vmem:[%s325 + $0x258] sm:$0xff]
        %v489 = vld [vmem:[%s325 + $0x260] sm:$0xff]
        %v490 = vld [vmem:[%s325 + $0x268] sm:$0xff]
        %v491 = vld [vmem:[%s325 + $0x270] sm:$0xff]
        %v492 = vld [vmem:[%s325 + $0x278] sm:$0xff]
        %v493 = vld [vmem:[%s325 + $0x280] sm:$0xff]
        %v494 = vld [vmem:[%s325 + $0x288] sm:$0xff]
        %v495 = vld [vmem:[%s325 + $0x290] sm:$0xff]
        %v496 = vld [vmem:[%s325 + $0x298] sm:$0xff]
        %v497 = vld [vmem:[%s325 + $0x2a0] sm:$0xff]
        %v498 = vld [vmem:[%s325 + $0x2a8] sm:$0xff]
        %v499 = vld [vmem:[%s325 + $0x2b0] sm:$0xff]
        %v500 = vld [vmem:[%s325 + $0x2b8] sm:$0xff]
        %v501 = vld [vmem:[%s325 + $0x2c0] sm:$0xff]
        %v502 = vld [vmem:[%s325 + $0x2c8] sm:$0xff]
        %v503 = vld [vmem:[%s325 + $0x2d0] sm:$0xff]
        %v504 = vld [vmem:[%s325 + $0x2d8] sm:$0xff]
        %v505 = vld [vmem:[%s325 + $0x2e0] sm:$0xff]
        %v506 = vld [vmem:[%s325 + $0x2e8] sm:$0xff]
        %v507 = vld [vmem:[%s325 + $0x2f0] sm:$0xff]
        %v508 = vld [vmem:[%s325 + $0x2f8] sm:$0xff]
        %v509 = vld [vmem:[%s325 + $0x300] sm:$0xff]
        %v510 = vld [vmem:[%s325 + $0x308] sm:$0xff]
        %v511 = vld [vmem:[%s325 + $0x310] sm:$0xff]
        %v512 = vld [vmem:[%s325 + $0x318] sm:$0xff]
        %v513 = vld [vmem:[%s325 + $0x320] sm:$0xff]
        %v514 = vld [vmem:[%s325 + $0x328] sm:$0xff]
        %v515 = vld [vmem:[%s325 + $0x330] sm:$0xff]
        %v516 = vld [vmem:[%s325 + $0x338] sm:$0xff]
        %v517 = vld [vmem:[%s325 + $0x340] sm:$0xff]
        %v518 = vld [vmem:[%s325 + $0x348] sm:$0xff]
        %v519 = vld [vmem:[%s325 + $0x350] sm:$0xff]
        %v520 = vld [vmem:[%s325 + $0x358] sm:$0xff]
        %v521 = vld [vmem:[%s325 + $0x360] sm:$0xff]
        %v522 = vld [vmem:[%s325 + $0x368] sm:$0xff]
        %v523 = vld [vmem:[%s325 + $0x370] sm:$0xff]
        %v524 = vld [vmem:[%s325 + $0x378] sm:$0xff]
        %v525 = vld [vmem:[%s325 + $0x380] sm:$0xff]
        %v526 = vld [vmem:[%s325 + $0x388] sm:$0xff]
        %v527 = vld [vmem:[%s325 + $0x390] sm:$0xff]
        %v528 = vld [vmem:[%s325 + $0x398] sm:$0xff]
        %v529 = vld [vmem:[%s325 + $0x3a0] sm:$0xff]
        %v530 = vld [vmem:[%s325 + $0x3a8] sm:$0xff]
        %v531 = vld [vmem:[%s325 + $0x3b0] sm:$0xff]
        %v532 = vld [vmem:[%s325 + $0x3b8] sm:$0xff]
        %v533 = vld [vmem:[%s325 + $0x3c0] sm:$0xff]
        %v534 = vld [vmem:[%s325 + $0x3c8] sm:$0xff]
        %v535 = vld [vmem:[%s325 + $0x3d0] sm:$0xff]
        %v536 = vld [vmem:[%s325 + $0x3d8] sm:$0xff]
        %v537 = vld [vmem:[%s325 + $0x3e0] sm:$0xff]
        %v538 = vld [vmem:[%s325 + $0x3e8] sm:$0xff]
        %v539 = vld [vmem:[%s325 + $0x3f0] sm:$0xff]
        %v540 = vld [vmem:[%s325 + $0x3f8] sm:$0xff]
        %v541 = vld [vmem:[%s325 + $0x400] sm:$0xff]
        %v542 = vld [vmem:[%s325 + $0x408] sm:$0xff]
        %v543 = vld [vmem:[%s325 + $0x410] sm:$0xff]
        %v544 = vld [vmem:[%s325 + $0x418] sm:$0xff]
        %v545 = vld [vmem:[%s325 + $0x420] sm:$0xff]
        %v546 = vld [vmem:[%s325 + $0x428] sm:$0xff]
        %v547 = vld [vmem:[%s325 + $0x430] sm:$0xff]
        %v548 = vld [vmem:[%s325 + $0x438] sm:$0xff]
        %v549 = vld [vmem:[%s325 + $0x440] sm:$0xff]
        %v550 = vld [vmem:[%s325 + $0x448] sm:$0xff]
        %v551 = vld [vmem:[%s325 + $0x450] sm:$0xff]
        %v552 = vld [vmem:[%s325 + $0x458] sm:$0xff]
        %v553 = vld [vmem:[%s325 + $0x460] sm:$0xff]
        %v554 = vld [vmem:[%s325 + $0x468] sm:$0xff]
        %v555 = vld [vmem:[%s325 + $0x470] sm:$0xff]
        %v556 = vld [vmem:[%s325 + $0x478] sm:$0xff]
        %v557 = vld [vmem:[%s325 + $0x480] sm:$0xff]
        %v558 = vld [vmem:[%s325 + $0x488] sm:$0xff]
        %v559 = vld [vmem:[%s325 + $0x490] sm:$0xff]
        %v560 = vld [vmem:[%s325 + $0x498] sm:$0xff]
        %v561 = vld [vmem:[%s325 + $0x4a0] sm:$0xff]
        %v562 = vld [vmem:[%s325 + $0x4a8] sm:$0xff]
        %v563 = vld [vmem:[%s325 + $0x4b0] sm:$0xff]
        %v564 = vld [vmem:[%s325 + $0x4b8] sm:$0xff]
        %v565 = vld [vmem:[%s325 + $0x4c0] sm:$0xff]
        %v566 = vld [vmem:[%s325 + $0x4c8] sm:$0xff]
        %v567 = vld [vmem:[%s325 + $0x4d0] sm:$0xff]
        %v568 = vld [vmem:[%s325 + $0x4d8] sm:$0xff]
        %v569 = vld [vmem:[%s325 + $0x4e0] sm:$0xff]
        %v570 = vld [vmem:[%s325 + $0x4e8] sm:$0xff]
        %v571 = vld [vmem:[%s325 + $0x4f0] sm:$0xff]
        %v572 = vld [vmem:[%s325 + $0x4f8] sm:$0xff]
        %v573 = vld [vmem:[%s325 + $0x500] sm:$0xff]
        %v574 = vld [vmem:[%s325 + $0x508] sm:$0xff]
        %v575 = vld [vmem:[%s325 + $0x510] sm:$0xff]
        %v576 = vld [vmem:[%s325 + $0x518] sm:$0xff]
        %v577 = vld [vmem:[%s325 + $0x520] sm:$0xff]
        %v578 = vld [vmem:[%s325 + $0x528] sm:$0xff]
        %v579 = vld [vmem:[%s325 + $0x530] sm:$0xff]
        %v580 = vld [vmem:[%s325 + $0x538] sm:$0xff]
        %v581 = vld [vmem:[%s325 + $0x540] sm:$0xff]
        %v582 = vld [vmem:[%s325 + $0x548] sm:$0xff]
        %v583 = vld [vmem:[%s325 + $0x550] sm:$0xff]
        %v584 = vld [vmem:[%s325 + $0x558] sm:$0xff]
        %v585 = vld [vmem:[%s325 + $0x560] sm:$0xff]
        %v586 = vld [vmem:[%s325 + $0x568] sm:$0xff]
        %v587 = vld [vmem:[%s325 + $0x570] sm:$0xff]
        %v588 = vld [vmem:[%s325 + $0x578] sm:$0xff]
        %v589 = vld [vmem:[%s325 + $0x580] sm:$0xff]
        %v590 = vld [vmem:[%s325 + $0x588] sm:$0xff]
        %v591 = vld [vmem:[%s325 + $0x590] sm:$0xff]
        %v592 = vld [vmem:[%s325 + $0x598] sm:$0xff]
        %v593 = vld [vmem:[%s325 + $0x5a0] sm:$0xff]
        %v594 = vld [vmem:[%s325 + $0x5a8] sm:$0xff]
        %v595 = vld [vmem:[%s325 + $0x5b0] sm:$0xff]
        %v596 = vld [vmem:[%s325 + $0x5b8] sm:$0xff]
        %v597 = vld [vmem:[%s325 + $0x5c0] sm:$0xff]
        %v598 = vld [vmem:[%s325 + $0x5c8] sm:$0xff]
        %v599 = vld [vmem:[%s325 + $0x5d0] sm:$0xff]
        %v600 = vld [vmem:[%s325 + $0x5d8] sm:$0xff]
        %v601 = vld [vmem:[%s325 + $0x5e0] sm:$0xff]
        %v602 = vld [vmem:[%s325 + $0x5e8] sm:$0xff]
        %v603 = vld [vmem:[%s325 + $0x5f0] sm:$0xff]
        %v604 = vld [vmem:[%s325 + $0x5f8] sm:$0xff]
        %v605 = vld [vmem:[%s325 + $0x600] sm:$0xff]
        %v606 = vld [vmem:[%s325 + $0x608] sm:$0xff]
        %v607 = vld [vmem:[%s325 + $0x610] sm:$0xff]
        %v608 = vld [vmem:[%s325 + $0x618] sm:$0xff]
        %v609 = vld [vmem:[%s325 + $0x620] sm:$0xff]
        %v610 = vld [vmem:[%s325 + $0x628] sm:$0xff]
        %v611 = vld [vmem:[%s325 + $0x630] sm:$0xff]
        %v612 = vld [vmem:[%s325 + $0x638] sm:$0xff]
        %v613 = vld [vmem:[%s325 + $0x640] sm:$0xff]
        %v614 = vld [vmem:[%s325 + $0x648] sm:$0xff]
        %v615 = vld [vmem:[%s325 + $0x650] sm:$0xff]
        %v616 = vld [vmem:[%s325 + $0x658] sm:$0xff]
        %v617 = vld [vmem:[%s325 + $0x660] sm:$0xff]
        %v618 = vld [vmem:[%s325 + $0x668] sm:$0xff]
        %v619 = vld [vmem:[%s325 + $0x670] sm:$0xff]
        %v620 = vld [vmem:[%s325 + $0x678] sm:$0xff]
        %v621 = vld [vmem:[%s325 + $0x680] sm:$0xff]
        %v622 = vld [vmem:[%s325 + $0x688] sm:$0xff]
        %v623 = vld [vmem:[%s325 + $0x690] sm:$0xff]
        %v624 = vld [vmem:[%s325 + $0x698] sm:$0xff]
        %v625 = vld [vmem:[%s325 + $0x6a0] sm:$0xff]
        %v626 = vld [vmem:[%s325 + $0x6a8] sm:$0xff]
        %v627 = vld [vmem:[%s325 + $0x6b0] sm:$0xff]
        %v628 = vld [vmem:[%s325 + $0x6b8] sm:$0xff]
        %v629 = vld [vmem:[%s325 + $0x6c0] sm:$0xff]
        %v630 = vld [vmem:[%s325 + $0x6c8] sm:$0xff]
        %v631 = vld [vmem:[%s325 + $0x6d0] sm:$0xff]
        %v632 = vld [vmem:[%s325 + $0x6d8] sm:$0xff]
        %v633 = vld [vmem:[%s325 + $0x6e0] sm:$0xff]
        %v634 = vld [vmem:[%s325 + $0x6e8] sm:$0xff]
        %v635 = vld [vmem:[%s325 + $0x6f0] sm:$0xff]
        %v636 = vld [vmem:[%s325 + $0x6f8] sm:$0xff]
        %v637 = vld [vmem:[%s325 + $0x700] sm:$0xff]
        %v638 = vld [vmem:[%s325 + $0x708] sm:$0xff]
        %v639 = vld [vmem:[%s325 + $0x710] sm:$0xff]
        %v640 = vld [vmem:[%s325 + $0x718] sm:$0xff]
        %v641 = vld [vmem:[%s325 + $0x720] sm:$0xff]
        %v642 = vld [vmem:[%s325 + $0x728] sm:$0xff]
        %v643 = vld [vmem:[%s325 + $0x730] sm:$0xff]
        %v644 = vld [vmem:[%s325 + $0x738] sm:$0xff]
        %v645 = vld [vmem:[%s325 + $0x740] sm:$0xff]
        %v646 = vld [vmem:[%s325 + $0x748] sm:$0xff]
        %v647 = vld [vmem:[%s325 + $0x750] sm:$0xff]
        %v648 = vld [vmem:[%s325 + $0x758] sm:$0xff]
        %v649 = vld [vmem:[%s325 + $0x760] sm:$0xff]
        %v650 = vld [vmem:[%s325 + $0x768] sm:$0xff]
        %v651 = vld [vmem:[%s325 + $0x770] sm:$0xff]
        %v652 = vld [vmem:[%s325 + $0x778] sm:$0xff]
        %v653 = vld [vmem:[%s325 + $0x780] sm:$0xff]
        %v654 = vld [vmem:[%s325 + $0x788] sm:$0xff]
        %v655 = vld [vmem:[%s325 + $0x790] sm:$0xff]
        %v656 = vld [vmem:[%s325 + $0x798] sm:$0xff]
        %v657 = vld [vmem:[%s325 + $0x7a0] sm:$0xff]
        %v658 = vld [vmem:[%s325 + $0x7a8] sm:$0xff]
        %v659 = vld [vmem:[%s325 + $0x7b0] sm:$0xff]
        %v660 = vld [vmem:[%s325 + $0x7b8] sm:$0xff]
        %v661 = vld [vmem:[%s325 + $0x7c0] sm:$0xff]
        %v662 = vld [vmem:[%s325 + $0x7c8] sm:$0xff]
        %v663 = vld [vmem:[%s325 + $0x7d0] sm:$0xff]
        %v664 = vld [vmem:[%s325 + $0x7d8] sm:$0xff]
        %v665 = vld [vmem:[%s325 + $0x7e0] sm:$0xff]
        %v666 = vld [vmem:[%s325 + $0x7e8] sm:$0xff]
        %v667 = vld [vmem:[%s325 + $0x7f0] sm:$0xff]
        %v668 = vld [vmem:[%s325 + $0x7f8] sm:$0xff]
        %v669 = vld [vmem:[%s325 + $0x800] sm:$0xff]
        %v670 = vld [vmem:[%s325 + $0x808] sm:$0xff]
        %v671 = vld [vmem:[%s325 + $0x810] sm:$0xff]
        %v672 = vld [vmem:[%s325 + $0x818] sm:$0xff]
        %v673 = vld [vmem:[%s325 + $0x820] sm:$0xff]
        %v674 = vld [vmem:[%s325 + $0x828] sm:$0xff]
        %v675 = vld [vmem:[%s325 + $0x830] sm:$0xff]
        %v676 = vld [vmem:[%s325 + $0x838] sm:$0xff]
        %v677 = vld [vmem:[%s325 + $0x840] sm:$0xff]
        %v678 = vld [vmem:[%s325 + $0x848] sm:$0xff]
        %v679 = vld [vmem:[%s325 + $0x850] sm:$0xff]
        %v680 = vld [vmem:[%s325 + $0x858] sm:$0xff]
        %v681 = vld [vmem:[%s325 + $0x860] sm:$0xff]
        %v682 = vld [vmem:[%s325 + $0x868] sm:$0xff]
        %v683 = vld [vmem:[%s325 + $0x870] sm:$0xff]
        %v684 = vld [vmem:[%s325 + $0x878] sm:$0xff]
        %v685 = vld [vmem:[%s325 + $0x880] sm:$0xff]
        %v686 = vld [vmem:[%s325 + $0x888] sm:$0xff]
        %v687 = vld [vmem:[%s325 + $0x890] sm:$0xff]
        %v688 = vld [vmem:[%s325 + $0x898] sm:$0xff]
        %v689 = vld [vmem:[%s325 + $0x8a0] sm:$0xff]
        %v690 = vld [vmem:[%s325 + $0x8a8] sm:$0xff]
        %v691 = vld [vmem:[%s325 + $0x8b0] sm:$0xff]
        %v692 = vld [vmem:[%s325 + $0x8b8] sm:$0xff]
        %v693 = vld [vmem:[%s325 + $0x8c0] sm:$0xff]
        %v694 = vld [vmem:[%s325 + $0x8c8] sm:$0xff]
        %v695 = vld [vmem:[%s325 + $0x8d0] sm:$0xff]
        %v696 = vld [vmem:[%s325 + $0x8d8] sm:$0xff]
        %v697 = vld [vmem:[%s325 + $0x8e0] sm:$0xff]
        %v698 = vld [vmem:[%s325 + $0x8e8] sm:$0xff]
        %v699 = vld [vmem:[%s325 + $0x8f0] sm:$0xff]
        %v700 = vld [vmem:[%s325 + $0x8f8] sm:$0xff]
        %v701 = vld [vmem:[%s325 + $0x900] sm:$0xff]
        %v702 = vld [vmem:[%s325 + $0x908] sm:$0xff]
        %v703 = vld [vmem:[%s325 + $0x910] sm:$0xff]
        %v704 = vld [vmem:[%s325 + $0x918] sm:$0xff]
        %v705 = vld [vmem:[%s325 + $0x920] sm:$0xff]
        %v706 = vld [vmem:[%s325 + $0x928] sm:$0xff]
        %v707 = vld [vmem:[%s325 + $0x930] sm:$0xff]
        %v708 = vld [vmem:[%s325 + $0x938] sm:$0xff]
        %v709 = vld [vmem:[%s325 + $0x940] sm:$0xff]
        %v710 = vld [vmem:[%s325 + $0x948] sm:$0xff]
        %v711 = vld [vmem:[%s325 + $0x950] sm:$0xff]
        %v712 = vld [vmem:[%s325 + $0x958] sm:$0xff]
        %v713 = vld [vmem:[%s325 + $0x960] sm:$0xff]
        %v714 = vld [vmem:[%s325 + $0x968] sm:$0xff]
        %v715 = vld [vmem:[%s325 + $0x970] sm:$0xff]
        %v716 = vld [vmem:[%s325 + $0x978] sm:$0xff]
        %v717 = vld [vmem:[%s325 + $0x980] sm:$0xff]
        %v718 = vld [vmem:[%s325 + $0x988] sm:$0xff]
        %v719 = vld [vmem:[%s325 + $0x990] sm:$0xff]
        %v720 = vld [vmem:[%s325 + $0x998] sm:$0xff]
        %v721 = vld [vmem:[%s325 + $0x9a0] sm:$0xff]
        %v722 = vld [vmem:[%s325 + $0x9a8] sm:$0xff]
        %v723 = vld [vmem:[%s325 + $0x9b0] sm:$0xff]
        %v724 = vld [vmem:[%s325 + $0x9b8] sm:$0xff]
        %v725 = vld [vmem:[%s325 + $0x9c0] sm:$0xff]
        %v726 = vld [vmem:[%s325 + $0x9c8] sm:$0xff]
        %v727 = vld [vmem:[%s325 + $0x9d0] sm:$0xff]
        %v728 = vld [vmem:[%s325 + $0x9d8] sm:$0xff]
        %v729 = vld [vmem:[%s325 + $0x9e0] sm:$0xff]
        %v730 = vld [vmem:[%s325 + $0x9e8] sm:$0xff]
        %v731 = vld [vmem:[%s325 + $0x9f0] sm:$0xff]
        %v732 = vld [vmem:[%s325 + $0x9f8] sm:$0xff]
        %v733 = vld [vmem:[%s325 + $0xa00] sm:$0xff]
        %v734 = vld [vmem:[%s325 + $0xa08] sm:$0xff]
        %v735 = vld [vmem:[%s325 + $0xa10] sm:$0xff]
        %v736 = vld [vmem:[%s325 + $0xa18] sm:$0xff]
        %v737 = vld [vmem:[%s325 + $0xa20] sm:$0xff]
        %v738 = vld [vmem:[%s325 + $0xa28] sm:$0xff]
        %v739 = vld [vmem:[%s325 + $0xa30] sm:$0xff]
        %v740 = vld [vmem:[%s325 + $0xa38] sm:$0xff]
        %v741 = vld [vmem:[%s325 + $0xa40] sm:$0xff]
        %v742 = vld [vmem:[%s325 + $0xa48] sm:$0xff]
        %v743 = vld [vmem:[%s325 + $0xa50] sm:$0xff]
        %v744 = vld [vmem:[%s325 + $0xa58] sm:$0xff]
        %v745 = vld [vmem:[%s325 + $0xa60] sm:$0xff]
        %v746 = vld [vmem:[%s325 + $0xa68] sm:$0xff]
        %v747 = vld [vmem:[%s325 + $0xa70] sm:$0xff]
        %v748 = vld [vmem:[%s325 + $0xa78] sm:$0xff]
        %v749 = vld [vmem:[%s325 + $0xa80] sm:$0xff]
        %v750 = vld [vmem:[%s325 + $0xa88] sm:$0xff]
        %v751 = vld [vmem:[%s325 + $0xa90] sm:$0xff]
        %v752 = vld [vmem:[%s325 + $0xa98] sm:$0xff]
        %v753 = vld [vmem:[%s325 + $0xaa0] sm:$0xff]
        %v754 = vld [vmem:[%s325 + $0xaa8] sm:$0xff]
        %v755 = vld [vmem:[%s325 + $0xab0] sm:$0xff]
        %v756 = vld [vmem:[%s325 + $0xab8] sm:$0xff]
        %v757 = vld [vmem:[%s325 + $0xac0] sm:$0xff]
        %v758 = vld [vmem:[%s325 + $0xac8] sm:$0xff]
        %v759 = vld [vmem:[%s325 + $0xad0] sm:$0xff]
        %v760 = vld [vmem:[%s325 + $0xad8] sm:$0xff]
        %v761 = vld [vmem:[%s325 + $0xae0] sm:$0xff]
        %v762 = vld [vmem:[%s325 + $0xae8] sm:$0xff]
        %v763 = vld [vmem:[%s325 + $0xaf0] sm:$0xff]
        %v764 = vld [vmem:[%s325 + $0xaf8] sm:$0xff]
        %v765 = vld [vmem:[%s325 + $0xb00] sm:$0xff]
        %v766 = vld [vmem:[%s325 + $0xb08] sm:$0xff]
        %v767 = vld [vmem:[%s325 + $0xb10] sm:$0xff]
        %v768 = vld [vmem:[%s325 + $0xb18] sm:$0xff]
        %v769 = vld [vmem:[%s325 + $0xb20] sm:$0xff]
        %v770 = vld [vmem:[%s325 + $0xb28] sm:$0xff]
        %v771 = vld [vmem:[%s325 + $0xb30] sm:$0xff]
        %v772 = vld [vmem:[%s325 + $0xb38] sm:$0xff]
        %v773 = vld [vmem:[%s325 + $0xb40] sm:$0xff]
        %v774 = vld [vmem:[%s325 + $0xb48] sm:$0xff]
        %v775 = vld [vmem:[%s325 + $0xb50] sm:$0xff]
        %v776 = vld [vmem:[%s325 + $0xb58] sm:$0xff]
        %v777 = vld [vmem:[%s325 + $0xb60] sm:$0xff]
        %v778 = vld [vmem:[%s325 + $0xb68] sm:$0xff]
        %v779 = vld [vmem:[%s325 + $0xb70] sm:$0xff]
        %v780 = vld [vmem:[%s325 + $0xb78] sm:$0xff]
        %v781 = vld [vmem:[%s325 + $0xb80] sm:$0xff]
        %v782 = vld [vmem:[%s325 + $0xb88] sm:$0xff]
        %v783 = vld [vmem:[%s325 + $0xb90] sm:$0xff]
        %v784 = vld [vmem:[%s325 + $0xb98] sm:$0xff]
        %v785 = vld [vmem:[%s325 + $0xba0] sm:$0xff]
        %v786 = vld [vmem:[%s325 + $0xba8] sm:$0xff]
        %v787 = vld [vmem:[%s325 + $0xbb0] sm:$0xff]
        %v788 = vld [vmem:[%s325 + $0xbb8] sm:$0xff]
        %v789 = vld [vmem:[%s325 + $0xbc0] sm:$0xff]
        %v790 = vld [vmem:[%s325 + $0xbc8] sm:$0xff]
        %v791 = vld [vmem:[%s325 + $0xbd0] sm:$0xff]
        %v792 = vld [vmem:[%s325 + $0xbd8] sm:$0xff]
        %v793 = vld [vmem:[%s325 + $0xbe0] sm:$0xff]
        %v794 = vld [vmem:[%s325 + $0xbe8] sm:$0xff]
        %v795 = vld [vmem:[%s325 + $0xbf0] sm:$0xff]
        %v796 = vld [vmem:[%s325 + $0xbf8] sm:$0xff]
        %v797 = vld [vmem:[%s325 + $0xc00] sm:$0xff]
        %v798 = vld [vmem:[%s325 + $0xc08] sm:$0xff]
        %v799 = vld [vmem:[%s325 + $0xc10] sm:$0xff]
        %v800 = vld [vmem:[%s325 + $0xc18] sm:$0xff]
        %v801 = vld [vmem:[%s325 + $0xc20] sm:$0xff]
        %v802 = vld [vmem:[%s325 + $0xc28] sm:$0xff]
        %v803 = vld [vmem:[%s325 + $0xc30] sm:$0xff]
        %v804 = vld [vmem:[%s325 + $0xc38] sm:$0xff]
        %v805 = vld [vmem:[%s325 + $0xc40] sm:$0xff]
        %v806 = vld [vmem:[%s325 + $0xc48] sm:$0xff]
        %v807 = vld [vmem:[%s325 + $0xc50] sm:$0xff]
        %v808 = vld [vmem:[%s325 + $0xc58] sm:$0xff]
        %v809 = vld [vmem:[%s325 + $0xc60] sm:$0xff]
        %v810 = vld [vmem:[%s325 + $0xc68] sm:$0xff]
        %v811 = vld [vmem:[%s325 + $0xc70] sm:$0xff]
        %v812 = vld [vmem:[%s325 + $0xc78] sm:$0xff]
        %v813 = vld [vmem:[%s325 + $0xc80] sm:$0xff]
        %v814 = vld [vmem:[%s325 + $0xc88] sm:$0xff]
        %v815 = vld [vmem:[%s325 + $0xc90] sm:$0xff]
        %v816 = vld [vmem:[%s325 + $0xc98] sm:$0xff]
        %v817 = vld [vmem:[%s325 + $0xca0] sm:$0xff]
        %v818 = vld [vmem:[%s325 + $0xca8] sm:$0xff]
        %v819 = vld [vmem:[%s325 + $0xcb0] sm:$0xff]
        %v820 = vld [vmem:[%s325 + $0xcb8] sm:$0xff]
        %v821 = vld [vmem:[%s325 + $0xcc0] sm:$0xff]
        %v822 = vld [vmem:[%s325 + $0xcc8] sm:$0xff]
        %v823 = vld [vmem:[%s325 + $0xcd0] sm:$0xff]
        %v824 = vld [vmem:[%s325 + $0xcd8] sm:$0xff]
        %v825 = vld [vmem:[%s325 + $0xce0] sm:$0xff]
        %v826 = vld [vmem:[%s325 + $0xce8] sm:$0xff]
        %v827 = vld [vmem:[%s325 + $0xcf0] sm:$0xff]
        %v828 = vld [vmem:[%s325 + $0xcf8] sm:$0xff]
        %v829 = vld [vmem:[%s325 + $0xd00] sm:$0xff]
        %v830 = vld [vmem:[%s325 + $0xd08] sm:$0xff]
        %v831 = vld [vmem:[%s325 + $0xd10] sm:$0xff]
        %v832 = vld [vmem:[%s325 + $0xd18] sm:$0xff]
        %v833 = vld [vmem:[%s325 + $0xd20] sm:$0xff]
        %v834 = vld [vmem:[%s325 + $0xd28] sm:$0xff]
        %v835 = vld [vmem:[%s325 + $0xd30] sm:$0xff]
        %v836 = vld [vmem:[%s325 + $0xd38] sm:$0xff]
        %v837 = vld [vmem:[%s325 + $0xd40] sm:$0xff]
        %v838 = vld [vmem:[%s325 + $0xd48] sm:$0xff]
        %v839 = vld [vmem:[%s325 + $0xd50] sm:$0xff]
        %v840 = vld [vmem:[%s325 + $0xd58] sm:$0xff]
        %v841 = vld [vmem:[%s325 + $0xd60] sm:$0xff]
        %v842 = vld [vmem:[%s325 + $0xd68] sm:$0xff]
        %v843 = vld [vmem:[%s325 + $0xd70] sm:$0xff]
        %v844 = vld [vmem:[%s325 + $0xd78] sm:$0xff]
        %v845 = vld [vmem:[%s325 + $0xd80] sm:$0xff]
        %v846 = vld [vmem:[%s325 + $0xd88] sm:$0xff]
        %v847 = vld [vmem:[%s325 + $0xd90] sm:$0xff]
        %v848 = vld [vmem:[%s325 + $0xd98] sm:$0xff]
        %v849 = vld [vmem:[%s325 + $0xda0] sm:$0xff]
        %v850 = vld [vmem:[%s325 + $0xda8] sm:$0xff]
        %v851 = vld [vmem:[%s325 + $0xdb0] sm:$0xff]
        %v852 = vld [vmem:[%s325 + $0xdb8] sm:$0xff]
        %v853 = vld [vmem:[%s325 + $0xdc0] sm:$0xff]
        %v854 = vld [vmem:[%s325 + $0xdc8] sm:$0xff]
        %v855 = vld [vmem:[%s325 + $0xdd0] sm:$0xff]
        %v856 = vld [vmem:[%s325 + $0xdd8] sm:$0xff]
        %v857 = vld [vmem:[%s325 + $0xde0] sm:$0xff]
        %v858 = vld [vmem:[%s325 + $0xde8] sm:$0xff]
        %v859 = vld [vmem:[%s325 + $0xdf0] sm:$0xff]
        %v860 = vld [vmem:[%s325 + $0xdf8] sm:$0xff]
        %v861 = vld [vmem:[%s325 + $0xe00] sm:$0xff]
        %v862 = vld [vmem:[%s325 + $0xe08] sm:$0xff]
        %v863 = vld [vmem:[%s325 + $0xe10] sm:$0xff]
        %v864 = vld [vmem:[%s325 + $0xe18] sm:$0xff]
        %v865 = vld [vmem:[%s325 + $0xe20] sm:$0xff]
        %v866 = vld [vmem:[%s325 + $0xe28] sm:$0xff]
        %v867 = vld [vmem:[%s325 + $0xe30] sm:$0xff]
        %v868 = vld [vmem:[%s325 + $0xe38] sm:$0xff]
        %v869 = vld [vmem:[%s325 + $0xe40] sm:$0xff]
        %v870 = vld [vmem:[%s325 + $0xe48] sm:$0xff]
        %v871 = vld [vmem:[%s325 + $0xe50] sm:$0xff]
        %v872 = vld [vmem:[%s325 + $0xe58] sm:$0xff]
        %v873 = vld [vmem:[%s325 + $0xe60] sm:$0xff]
        %v874 = vld [vmem:[%s325 + $0xe68] sm:$0xff]
        %v875 = vld [vmem:[%s325 + $0xe70] sm:$0xff]
        %v876 = vld [vmem:[%s325 + $0xe78] sm:$0xff]
        %v877 = vld [vmem:[%s325 + $0xe80] sm:$0xff]
        %v878 = vld [vmem:[%s325 + $0xe88] sm:$0xff]
        %v879 = vld [vmem:[%s325 + $0xe90] sm:$0xff]
        %v880 = vld [vmem:[%s325 + $0xe98] sm:$0xff]
        %v881 = vld [vmem:[%s325 + $0xea0] sm:$0xff]
        %v882 = vld [vmem:[%s325 + $0xea8] sm:$0xff]
        %v883 = vld [vmem:[%s325 + $0xeb0] sm:$0xff]
        %v884 = vld [vmem:[%s325 + $0xeb8] sm:$0xff]
        %v885 = vld [vmem:[%s325 + $0xec0] sm:$0xff]
        %v886 = vld [vmem:[%s325 + $0xec8] sm:$0xff]
        %v887 = vld [vmem:[%s325 + $0xed0] sm:$0xff]
        %v888 = vld [vmem:[%s325 + $0xed8] sm:$0xff]
        %v889 = vld [vmem:[%s325 + $0xee0] sm:$0xff]
        %v890 = vld [vmem:[%s325 + $0xee8] sm:$0xff]
        %v891 = vld [vmem:[%s325 + $0xef0] sm:$0xff]
        %v892 = vld [vmem:[%s325 + $0xef8] sm:$0xff]
        %v893 = vld [vmem:[%s325 + $0xf00] sm:$0xff]
        %v894 = vld [vmem:[%s325 + $0xf08] sm:$0xff]
        %v895 = vld [vmem:[%s325 + $0xf10] sm:$0xff]
        %v896 = vld [vmem:[%s325 + $0xf18] sm:$0xff]
        %v897 = vld [vmem:[%s325 + $0xf20] sm:$0xff]
        %v898 = vld [vmem:[%s325 + $0xf28] sm:$0xff]
        %v899 = vld [vmem:[%s325 + $0xf30] sm:$0xff]
        %v900 = vld [vmem:[%s325 + $0xf38] sm:$0xff]
        %v901 = vld [vmem:[%s325 + $0xf40] sm:$0xff]
        %v902 = vld [vmem:[%s325 + $0xf48] sm:$0xff]
        %v903 = vld [vmem:[%s325 + $0xf50] sm:$0xff]
        %v904 = vld [vmem:[%s325 + $0xf58] sm:$0xff]
        %v905 = vld [vmem:[%s325 + $0xf60] sm:$0xff]
        %v906 = vld [vmem:[%s325 + $0xf68] sm:$0xff]
        %v907 = vld [vmem:[%s325 + $0xf70] sm:$0xff]
        %v908 = vld [vmem:[%s325 + $0xf78] sm:$0xff]
        %v909 = vld [vmem:[%s325 + $0xf80] sm:$0xff]
        %v910 = vld [vmem:[%s325 + $0xf88] sm:$0xff]
        %v911 = vld [vmem:[%s325 + $0xf90] sm:$0xff]
        %v912 = vld [vmem:[%s325 + $0xf98] sm:$0xff]
        %v913 = vld [vmem:[%s325 + $0xfa0] sm:$0xff]
        %v914 = vld [vmem:[%s325 + $0xfa8] sm:$0xff]
        %v915 = vld [vmem:[%s325 + $0xfb0] sm:$0xff]
        %v916 = vld [vmem:[%s325 + $0xfb8] sm:$0xff]
        %v917 = vld [vmem:[%s325 + $0xfc0] sm:$0xff]
        %v918 = vld [vmem:[%s325 + $0xfc8] sm:$0xff]
        %v919 = vld [vmem:[%s325 + $0xfd0] sm:$0xff]
        %v920 = vld [vmem:[%s325 + $0xfd8] sm:$0xff]
        %v921 = vld [vmem:[%s325 + $0xfe0] sm:$0xff]
        %v922 = vld [vmem:[%s325 + $0xfe8] sm:$0xff]
        %v923 = vld [vmem:[%s325 + $0xff0] sm:$0xff]
        %v924 = vld [vmem:[%s325 + $0xff8] sm:$0xff]
        %v925 = vld [vmem:[%s325 + $0x1000] sm:$0xff]
        %v926 = vld [vmem:[%s325 + $0x1008] sm:$0xff]
        %v927 = vld [vmem:[%s325 + $0x1010] sm:$0xff]
        %v928 = vld [vmem:[%s325 + $0x1018] sm:$0xff]
        %v929 = vld [vmem:[%s325 + $0x1020] sm:$0xff]
        %v930 = vld [vmem:[%s325 + $0x1028] sm:$0xff]
        %v931 = vld [vmem:[%s325 + $0x1030] sm:$0xff]
        %v932 = vld [vmem:[%s325 + $0x1038] sm:$0xff]
        %v933 = vld [vmem:[%s325 + $0x1040] sm:$0xff]
        %v934 = vld [vmem:[%s325 + $0x1048] sm:$0xff]
        %v935 = vld [vmem:[%s325 + $0x1050] sm:$0xff]
        %v936 = vld [vmem:[%s325 + $0x1058] sm:$0xff]
        %v937 = vld [vmem:[%s325 + $0x1060] sm:$0xff]
        %v938 = vld [vmem:[%s325 + $0x1068] sm:$0xff]
        %v939 = vld [vmem:[%s325 + $0x1070] sm:$0xff]
        %v940 = vld [vmem:[%s325 + $0x1078] sm:$0xff]
        %v941 = vld [vmem:[%s325 + $0x1080] sm:$0xff]
        %v942 = vld [vmem:[%s325 + $0x1088] sm:$0xff]
        %v943 = vld [vmem:[%s325 + $0x1090] sm:$0xff]
        %v944 = vld [vmem:[%s325 + $0x1098] sm:$0xff]
        %v945 = vld [vmem:[%s325 + $0x10a0] sm:$0xff]
        %v946 = vld [vmem:[%s325 + $0x10a8] sm:$0xff]
        %v947 = vld [vmem:[%s325 + $0x10b0] sm:$0xff]
        %v948 = vld [vmem:[%s325 + $0x10b8] sm:$0xff]
        %v949 = vld [vmem:[%s325 + $0x10c0] sm:$0xff]
        %v950 = vld [vmem:[%s325 + $0x10c8] sm:$0xff]
        %v951 = vld [vmem:[%s325 + $0x10d0] sm:$0xff]
        %v952 = vld [vmem:[%s325 + $0x10d8] sm:$0xff]
        %v953 = vld [vmem:[%s325 + $0x10e0] sm:$0xff]
        %v954 = vld [vmem:[%s325 + $0x10e8] sm:$0xff]
        %v955 = vld [vmem:[%s325 + $0x10f0] sm:$0xff]
        %v956 = vld [vmem:[%s325 + $0x10f8] sm:$0xff]
        %v957 = vld [vmem:[%s325 + $0x1100] sm:$0xff]
        %v958 = vld [vmem:[%s325 + $0x1108] sm:$0xff]
        %v959 = vld [vmem:[%s325 + $0x1110] sm:$0xff]
        %v960 = vld [vmem:[%s325 + $0x1118] sm:$0xff]
        %v961 = vld [vmem:[%s325 + $0x1120] sm:$0xff]
        %v962 = vld [vmem:[%s325 + $0x1128] sm:$0xff]
        %v963 = vld [vmem:[%s325 + $0x1130] sm:$0xff]
        %v964 = vld [vmem:[%s325 + $0x1138] sm:$0xff]
        %v965 = vld [vmem:[%s325 + $0x1140] sm:$0xff]
        %v966 = vld [vmem:[%s325 + $0x1148] sm:$0xff]
        %v967 = vld [vmem:[%s325 + $0x1150] sm:$0xff]
        %v968 = vld [vmem:[%s325 + $0x1158] sm:$0xff]
        %v969 = vld [vmem:[%s325 + $0x1160] sm:$0xff]
        %v970 = vld [vmem:[%s325 + $0x1168] sm:$0xff]
        %v971 = vld [vmem:[%s325 + $0x1170] sm:$0xff]
        %v972 = vld [vmem:[%s325 + $0x1178] sm:$0xff]
        %v973 = vld [vmem:[%s325 + $0x1180] sm:$0xff]
        %v974 = vld [vmem:[%s325 + $0x1188] sm:$0xff]
        %v975 = vld [vmem:[%s325 + $0x1190] sm:$0xff]
        %v976 = vld [vmem:[%s325 + $0x1198] sm:$0xff]
        %v977 = vld [vmem:[%s325 + $0x11a0] sm:$0xff]
        %v978 = vld [vmem:[%s325 + $0x11a8] sm:$0xff]
        %v979 = vld [vmem:[%s325 + $0x11b0] sm:$0xff]
        %v980 = vld [vmem:[%s325 + $0x11b8] sm:$0xff]
        %v981 = vld [vmem:[%s325 + $0x11c0] sm:$0xff]
        %v982 = vld [vmem:[%s325 + $0x11c8] sm:$0xff]
        %v983 = vld [vmem:[%s325 + $0x11d0] sm:$0xff]
        %v984 = vld [vmem:[%s325 + $0x11d8] sm:$0xff]
        %v985 = vld [vmem:[%s325 + $0x11e0] sm:$0xff]
        %v986 = vld [vmem:[%s325 + $0x11e8] sm:$0xff]
        %v987 = vld [vmem:[%s325 + $0x11f0] sm:$0xff]
        %v988 = vld [vmem:[%s325 + $0x11f8] sm:$0xff]
        %v989 = vld [vmem:[%s325 + $0x1200] sm:$0xff]
        %v990 = vld [vmem:[%s325 + $0x1208] sm:$0xff]
        %v991 = vld [vmem:[%s325 + $0x1210] sm:$0xff]
        %v992 = vld [vmem:[%s325 + $0x1218] sm:$0xff]
        %v993 = vld [vmem:[%s325 + $0x1220] sm:$0xff]
        %v994 = vld [vmem:[%s325 + $0x1228] sm:$0xff]
        %v995 = vld [vmem:[%s325 + $0x1230] sm:$0xff]
        %v996 = vld [vmem:[%s325 + $0x1238] sm:$0xff]
        %v997 = vld [vmem:[%s325 + $0x1240] sm:$0xff]
        %v998 = vld [vmem:[%s325 + $0x1248] sm:$0xff]
        %v999 = vld [vmem:[%s325 + $0x1250] sm:$0xff]
        %v1000 = vld [vmem:[%s325 + $0x1258] sm:$0xff]
        %v1001 = vld [vmem:[%s325 + $0x1260] sm:$0xff]
        %v1002 = vld [vmem:[%s325 + $0x1268] sm:$0xff]
        %v1003 = vld [vmem:[%s325 + $0x1270] sm:$0xff]
        %v1004 = vld [vmem:[%s325 + $0x1278] sm:$0xff]
        %v1005 = vld [vmem:[%s325 + $0x1280] sm:$0xff]
        %v1006 = vld [vmem:[%s325 + $0x1288] sm:$0xff]
        %v1007 = vld [vmem:[%s325 + $0x1290] sm:$0xff]
        %v1008 = vld [vmem:[%s325 + $0x1298] sm:$0xff]
        %v1009 = vld [vmem:[%s325 + $0x12a0] sm:$0xff]
        %v1010 = vld [vmem:[%s325 + $0x12a8] sm:$0xff]
        %v1011 = vld [vmem:[%s325 + $0x12b0] sm:$0xff]
        %v1012 = vld [vmem:[%s325 + $0x12b8] sm:$0xff]
        %v1013 = vld [vmem:[%s325 + $0x12c0] sm:$0xff]
        %v1014 = vld [vmem:[%s325 + $0x12c8] sm:$0xff]
        %v1015 = vld [vmem:[%s325 + $0x12d0] sm:$0xff]
        %v1016 = vld [vmem:[%s325 + $0x12d8] sm:$0xff]
        %v1017 = vld [vmem:[%s325 + $0x12e0] sm:$0xff]
        %v1018 = vld [vmem:[%s325 + $0x12e8] sm:$0xff]
        %v1019 = vld [vmem:[%s325 + $0x12f0] sm:$0xff]
        %v1020 = vld [vmem:[%s325 + $0x12f8] sm:$0xff]
        %v1021 = vld [vmem:[%s325 + $0x1300] sm:$0xff]
        %v1022 = vld [vmem:[%s325 + $0x1308] sm:$0xff]
        %v1023 = vld [vmem:[%s325 + $0x1310] sm:$0xff]
        %v1024 = vld [vmem:[%s325 + $0x1318] sm:$0xff]
        %v1025 = vld [vmem:[%s325 + $0x1320] sm:$0xff]
        %v1026 = vld [vmem:[%s325 + $0x1328] sm:$0xff]
        %v1027 = vld [vmem:[%s325 + $0x1330] sm:$0xff]
        %v1028 = vld [vmem:[%s325 + $0x1338] sm:$0xff]
        %v1029 = vld [vmem:[%s325 + $0x1340] sm:$0xff]
        %v1030 = vld [vmem:[%s325 + $0x1348] sm:$0xff]
        %v1031 = vld [vmem:[%s325 + $0x1350] sm:$0xff]
        %v1032 = vld [vmem:[%s325 + $0x1358] sm:$0xff]
        %v1033 = vld [vmem:[%s325 + $0x1360] sm:$0xff]
        %v1034 = vld [vmem:[%s325 + $0x1368] sm:$0xff]
        %v1035 = vld [vmem:[%s325 + $0x1370] sm:$0xff]
        %v1036 = vld [vmem:[%s325 + $0x1378] sm:$0xff]
        %v1037 = vld [vmem:[%s325 + $0x1380] sm:$0xff]
        %v1038 = vld [vmem:[%s325 + $0x1388] sm:$0xff]
        %v1039 = vld [vmem:[%s325 + $0x1390] sm:$0xff]
        %v1040 = vld [vmem:[%s325 + $0x1398] sm:$0xff]
        %v1041 = vld [vmem:[%s325 + $0x13a0] sm:$0xff]
        %v1042 = vld [vmem:[%s325 + $0x13a8] sm:$0xff]
        %v1043 = vld [vmem:[%s325 + $0x13b0] sm:$0xff]
        %v1044 = vld [vmem:[%s325 + $0x13b8] sm:$0xff]
        %v1045 = vld [vmem:[%s325 + $0x13c0] sm:$0xff]
        %v1046 = vld [vmem:[%s325 + $0x13c8] sm:$0xff]
        %v1047 = vld [vmem:[%s325 + $0x13d0] sm:$0xff]
        %v1048 = vld [vmem:[%s325 + $0x13d8] sm:$0xff]
        %v1049 = vld [vmem:[%s325 + $0x13e0] sm:$0xff]
        %v1050 = vld [vmem:[%s325 + $0x13e8] sm:$0xff]
        %v1051 = vld [vmem:[%s325 + $0x13f0] sm:$0xff]
        %v1052 = vld [vmem:[%s325 + $0x13f8] sm:$0xff]
        %v1053 = vld [vmem:[%s325 + $0x1400] sm:$0xff]
        %v1054 = vld [vmem:[%s325 + $0x1408] sm:$0xff]
        %v1055 = vld [vmem:[%s325 + $0x1410] sm:$0xff]
        %v1056 = vld [vmem:[%s325 + $0x1418] sm:$0xff]
        %v1057 = vld [vmem:[%s325 + $0x1420] sm:$0xff]
        %v1058 = vld [vmem:[%s325 + $0x1428] sm:$0xff]
        %v1059 = vld [vmem:[%s325 + $0x1430] sm:$0xff]
        %v1060 = vld [vmem:[%s325 + $0x1438] sm:$0xff]
        %v1061 = vld [vmem:[%s325 + $0x1440] sm:$0xff]
        %v1062 = vld [vmem:[%s325 + $0x1448] sm:$0xff]
        %v1063 = vld [vmem:[%s325 + $0x1450] sm:$0xff]
        %v1064 = vld [vmem:[%s325 + $0x1458] sm:$0xff]
        %v1065 = vld [vmem:[%s325 + $0x1460] sm:$0xff]
        %v1066 = vld [vmem:[%s325 + $0x1468] sm:$0xff]
        %v1067 = vld [vmem:[%s325 + $0x1470] sm:$0xff]
        %v1068 = vld [vmem:[%s325 + $0x1478] sm:$0xff]
        %v1069 = vld [vmem:[%s325 + $0x1480] sm:$0xff]
        %v1070 = vld [vmem:[%s325 + $0x1488] sm:$0xff]
        %v1071 = vld [vmem:[%s325 + $0x1490] sm:$0xff]
        %v1072 = vld [vmem:[%s325 + $0x1498] sm:$0xff]
        %v1073 = vld [vmem:[%s325 + $0x14a0] sm:$0xff]
        %v1074 = vld [vmem:[%s325 + $0x14a8] sm:$0xff]
        %v1075 = vld [vmem:[%s325 + $0x14b0] sm:$0xff]
        %v1076 = vld [vmem:[%s325 + $0x14b8] sm:$0xff]
        %v1077 = vld [vmem:[%s325 + $0x14c0] sm:$0xff]
        %v1078 = vld [vmem:[%s325 + $0x14c8] sm:$0xff]
        %v1079 = vld [vmem:[%s325 + $0x14d0] sm:$0xff]
        %v1080 = vld [vmem:[%s325 + $0x14d8] sm:$0xff]
        %v1081 = vld [vmem:[%s325 + $0x14e0] sm:$0xff]
        %v1082 = vld [vmem:[%s325 + $0x14e8] sm:$0xff]
        %v1083 = vld [vmem:[%s325 + $0x14f0] sm:$0xff]
        %v1084 = vld [vmem:[%s325 + $0x14f8] sm:$0xff]
        %v1085 = vld [vmem:[%s325 + $0x1500] sm:$0xff]
        %v1086 = vld [vmem:[%s325 + $0x1508] sm:$0xff]
        %v1087 = vld [vmem:[%s325 + $0x1510] sm:$0xff]
        %v1088 = vld [vmem:[%s325 + $0x1518] sm:$0xff]
        %v1089 = vld [vmem:[%s325 + $0x1520] sm:$0xff]
        %v1090 = vld [vmem:[%s325 + $0x1528] sm:$0xff]
        %v1091 = vld [vmem:[%s325 + $0x1530] sm:$0xff]
        %v1092 = vld [vmem:[%s325 + $0x1538] sm:$0xff]
        %v1093 = vld [vmem:[%s325 + $0x1540] sm:$0xff]
        %v1094 = vld [vmem:[%s325 + $0x1548] sm:$0xff]
        %v1095 = vld [vmem:[%s325 + $0x1550] sm:$0xff]
        %v1096 = vld [vmem:[%s325 + $0x1558] sm:$0xff]
        %v1097 = vld [vmem:[%s325 + $0x1560] sm:$0xff]
        %v1098 = vld [vmem:[%s325 + $0x1568] sm:$0xff]
        %v1099 = vld [vmem:[%s325 + $0x1570] sm:$0xff]
        %v1100 = vld [vmem:[%s325 + $0x1578] sm:$0xff]
        %v1101 = vld [vmem:[%s325 + $0x1580] sm:$0xff]
        %v1102 = vld [vmem:[%s325 + $0x1588] sm:$0xff]
        %v1103 = vld [vmem:[%s325 + $0x1590] sm:$0xff]
        %v1104 = vld [vmem:[%s325 + $0x1598] sm:$0xff]
        %v1105 = vld [vmem:[%s325 + $0x15a0] sm:$0xff]
        %v1106 = vld [vmem:[%s325 + $0x15a8] sm:$0xff]
        %v1107 = vld [vmem:[%s325 + $0x15b0] sm:$0xff]
        %v1108 = vld [vmem:[%s325 + $0x15b8] sm:$0xff]
        %v1109 = vld [vmem:[%s325 + $0x15c0] sm:$0xff]
        %v1110 = vld [vmem:[%s325 + $0x15c8] sm:$0xff]
        %v1111 = vld [vmem:[%s325 + $0x15d0] sm:$0xff]
        %v1112 = vld [vmem:[%s325 + $0x15d8] sm:$0xff]
        %v1113 = vld [vmem:[%s325 + $0x15e0] sm:$0xff]
        %v1114 = vld [vmem:[%s325 + $0x15e8] sm:$0xff]
        %v1115 = vld [vmem:[%s325 + $0x15f0] sm:$0xff]
        %v1116 = vld [vmem:[%s325 + $0x15f8] sm:$0xff]
        %v1117 = vld [vmem:[%s325 + $0x1600] sm:$0xff]
        %v1118 = vld [vmem:[%s325 + $0x1608] sm:$0xff]
        %v1119 = vld [vmem:[%s325 + $0x1610] sm:$0xff]
        %v1120 = vld [vmem:[%s325 + $0x1618] sm:$0xff]
        %v1121 = vld [vmem:[%s325 + $0x1620] sm:$0xff]
        %v1122 = vld [vmem:[%s325 + $0x1628] sm:$0xff]
        %v1123 = vld [vmem:[%s325 + $0x1630] sm:$0xff]
        %v1124 = vld [vmem:[%s325 + $0x1638] sm:$0xff]
        %v1125 = vld [vmem:[%s325 + $0x1640] sm:$0xff]
        %v1126 = vld [vmem:[%s325 + $0x1648] sm:$0xff]
        %v1127 = vld [vmem:[%s325 + $0x1650] sm:$0xff]
        %v1128 = vld [vmem:[%s325 + $0x1658] sm:$0xff]
        %v1129 = vld [vmem:[%s325 + $0x1660] sm:$0xff]
        %v1130 = vld [vmem:[%s325 + $0x1668] sm:$0xff]
        %v1131 = vld [vmem:[%s325 + $0x1670] sm:$0xff]
        %v1132 = vld [vmem:[%s325 + $0x1678] sm:$0xff]
        %v1133 = vld [vmem:[%s325 + $0x1680] sm:$0xff]
        %v1134 = vld [vmem:[%s325 + $0x1688] sm:$0xff]
        %v1135 = vld [vmem:[%s325 + $0x1690] sm:$0xff]
        %v1136 = vld [vmem:[%s325 + $0x1698] sm:$0xff]
        %v1137 = vld [vmem:[%s325 + $0x16a0] sm:$0xff]
        %v1138 = vld [vmem:[%s325 + $0x16a8] sm:$0xff]
        %v1139 = vld [vmem:[%s325 + $0x16b0] sm:$0xff]
        %v1140 = vld [vmem:[%s325 + $0x16b8] sm:$0xff]
        %v1141 = vld [vmem:[%s325 + $0x16c0] sm:$0xff]
        %v1142 = vld [vmem:[%s325 + $0x16c8] sm:$0xff]
        %v1143 = vld [vmem:[%s325 + $0x16d0] sm:$0xff]
        %v1144 = vld [vmem:[%s325 + $0x16d8] sm:$0xff]
        %v1145 = vld [vmem:[%s325 + $0x16e0] sm:$0xff]
        %v1146 = vld [vmem:[%s325 + $0x16e8] sm:$0xff]
        %v1147 = vld [vmem:[%s325 + $0x16f0] sm:$0xff]
        %v1148 = vld [vmem:[%s325 + $0x16f8] sm:$0xff]
        %v1149 = vld [vmem:[%s325 + $0x1700] sm:$0xff]
        %v1150 = vld [vmem:[%s325 + $0x1708] sm:$0xff]
        %v1151 = vld [vmem:[%s325 + $0x1710] sm:$0xff]
        %v1152 = vld [vmem:[%s325 + $0x1718] sm:$0xff]
        %v1153 = vld [vmem:[%s325 + $0x1720] sm:$0xff]
        %v1154 = vld [vmem:[%s325 + $0x1728] sm:$0xff]
        %v1155 = vld [vmem:[%s325 + $0x1730] sm:$0xff]
        %v1156 = vld [vmem:[%s325 + $0x1738] sm:$0xff]
        %v1157 = vld [vmem:[%s325 + $0x1740] sm:$0xff]
        %v1158 = vld [vmem:[%s325 + $0x1748] sm:$0xff]
        %v1159 = vld [vmem:[%s325 + $0x1750] sm:$0xff]
        %v1160 = vld [vmem:[%s325 + $0x1758] sm:$0xff]
        %v1161 = vld [vmem:[%s325 + $0x1760] sm:$0xff]
        %v1162 = vld [vmem:[%s325 + $0x1768] sm:$0xff]
        %v1163 = vld [vmem:[%s325 + $0x1770] sm:$0xff]
        %v1164 = vld [vmem:[%s325 + $0x1778] sm:$0xff]
        %v1165 = vld [vmem:[%s325 + $0x1780] sm:$0xff]
        %v1166 = vld [vmem:[%s325 + $0x1788] sm:$0xff]
        %v1167 = vld [vmem:[%s325 + $0x1790] sm:$0xff]
        %v1168 = vld [vmem:[%s325 + $0x1798] sm:$0xff]
        %v1169 = vld [vmem:[%s325 + $0x17a0] sm:$0xff]
        %v1170 = vld [vmem:[%s325 + $0x17a8] sm:$0xff]
        %v1171 = vld [vmem:[%s325 + $0x17b0] sm:$0xff]
        %v1172 = vld [vmem:[%s325 + $0x17b8] sm:$0xff]
        %v1173 = vld [vmem:[%s325 + $0x17c0] sm:$0xff]
        %v1174 = vld [vmem:[%s325 + $0x17c8] sm:$0xff]
        %v1175 = vld [vmem:[%s325 + $0x17d0] sm:$0xff]
        %v1176 = vld [vmem:[%s325 + $0x17d8] sm:$0xff]
        %v1177 = vld [vmem:[%s325 + $0x17e0] sm:$0xff]
        %v1178 = vld [vmem:[%s325 + $0x17e8] sm:$0xff]
        %v1179 = vld [vmem:[%s325 + $0x17f0] sm:$0xff]
        %v1180 = vld [vmem:[%s325 + $0x17f8] sm:$0xff]
        %v1181 = vld [vmem:[%s325 + $0x1800] sm:$0xff]
        %v1182 = vld [vmem:[%s325 + $0x1808] sm:$0xff]
        %v1183 = vld [vmem:[%s325 + $0x1810] sm:$0xff]
        %v1184 = vld [vmem:[%s325 + $0x1818] sm:$0xff]
        %v1185 = vld [vmem:[%s325 + $0x1820] sm:$0xff]
        %v1186 = vld [vmem:[%s325 + $0x1828] sm:$0xff]
        %v1187 = vld [vmem:[%s325 + $0x1830] sm:$0xff]
        %v1188 = vld [vmem:[%s325 + $0x1838] sm:$0xff]
        %v1189 = vld [vmem:[%s325 + $0x1840] sm:$0xff]
        %v1190 = vld [vmem:[%s325 + $0x1848] sm:$0xff]
        %v1191 = vld [vmem:[%s325 + $0x1850] sm:$0xff]
        %v1192 = vld [vmem:[%s325 + $0x1858] sm:$0xff]
        %v1193 = vld [vmem:[%s325 + $0x1860] sm:$0xff]
        %v1194 = vld [vmem:[%s325 + $0x1868] sm:$0xff]
        %v1195 = vld [vmem:[%s325 + $0x1870] sm:$0xff]
        %v1196 = vld [vmem:[%s325 + $0x1878] sm:$0xff]
        %v1197 = vld [vmem:[%s325 + $0x1880] sm:$0xff]
        %v1198 = vld [vmem:[%s325 + $0x1888] sm:$0xff]
        %v1199 = vld [vmem:[%s325 + $0x1890] sm:$0xff]
        %v1200 = vld [vmem:[%s325 + $0x1898] sm:$0xff]
        %v1201 = vld [vmem:[%s325 + $0x18a0] sm:$0xff]
        %v1202 = vld [vmem:[%s325 + $0x18a8] sm:$0xff]
        %v1203 = vld [vmem:[%s325 + $0x18b0] sm:$0xff]
        %v1204 = vld [vmem:[%s325 + $0x18b8] sm:$0xff]
        %v1205 = vld [vmem:[%s325 + $0x18c0] sm:$0xff]
        %v1206 = vld [vmem:[%s325 + $0x18c8] sm:$0xff]
        %v1207 = vld [vmem:[%s325 + $0x18d0] sm:$0xff]
        %v1208 = vld [vmem:[%s325 + $0x18d8] sm:$0xff]
        %v1209 = vld [vmem:[%s325 + $0x18e0] sm:$0xff]
        %v1210 = vld [vmem:[%s325 + $0x18e8] sm:$0xff]
        %v1211 = vld [vmem:[%s325 + $0x18f0] sm:$0xff]
        %v1212 = vld [vmem:[%s325 + $0x18f8] sm:$0xff]
        %v1213 = vld [vmem:[%s325 + $0x1900] sm:$0xff]
        %v1214 = vld [vmem:[%s325 + $0x1908] sm:$0xff]
        %v1215 = vld [vmem:[%s325 + $0x1910] sm:$0xff]
        %v1216 = vld [vmem:[%s325 + $0x1918] sm:$0xff]
        %v1217 = vld [vmem:[%s325 + $0x1920] sm:$0xff]
        %v1218 = vld [vmem:[%s325 + $0x1928] sm:$0xff]
        %v1219 = vld [vmem:[%s325 + $0x1930] sm:$0xff]
        %v1220 = vld [vmem:[%s325 + $0x1938] sm:$0xff]
        %v1221 = vld [vmem:[%s325 + $0x1940] sm:$0xff]
        %v1222 = vld [vmem:[%s325 + $0x1948] sm:$0xff]
        %v1223 = vld [vmem:[%s325 + $0x1950] sm:$0xff]
        %v1224 = vld [vmem:[%s325 + $0x1958] sm:$0xff]
        %v1225 = vld [vmem:[%s325 + $0x1960] sm:$0xff]
        %v1226 = vld [vmem:[%s325 + $0x1968] sm:$0xff]
        %v1227 = vld [vmem:[%s325 + $0x1970] sm:$0xff]
        %v1228 = vld [vmem:[%s325 + $0x1978] sm:$0xff]
        %v1229 = vld [vmem:[%s325 + $0x1980] sm:$0xff]
        %v1230 = vld [vmem:[%s325 + $0x1988] sm:$0xff]
        %v1231 = vld [vmem:[%s325 + $0x1990] sm:$0xff]
        %v1232 = vld [vmem:[%s325 + $0x1998] sm:$0xff]
        %v1233 = vld [vmem:[%s325 + $0x19a0] sm:$0xff]
        %v1234 = vld [vmem:[%s325 + $0x19a8] sm:$0xff]
        %v1235 = vld [vmem:[%s325 + $0x19b0] sm:$0xff]
        %v1236 = vld [vmem:[%s325 + $0x19b8] sm:$0xff]
        %v1237 = vld [vmem:[%s325 + $0x19c0] sm:$0xff]
        %v1238 = vld [vmem:[%s325 + $0x19c8] sm:$0xff]
        %v1239 = vld [vmem:[%s325 + $0x19d0] sm:$0xff]
        %v1240 = vld [vmem:[%s325 + $0x19d8] sm:$0xff]
        %v1241 = vld [vmem:[%s325 + $0x19e0] sm:$0xff]
        %v1242 = vld [vmem:[%s325 + $0x19e8] sm:$0xff]
        %v1243 = vld [vmem:[%s325 + $0x19f0] sm:$0xff]
        %v1244 = vld [vmem:[%s325 + $0x19f8] sm:$0xff]
        %v1245 = vld [vmem:[%s325 + $0x1a00] sm:$0xff]
        %v1246 = vld [vmem:[%s325 + $0x1a08] sm:$0xff]
        %v1247 = vld [vmem:[%s325 + $0x1a10] sm:$0xff]
        %v1248 = vld [vmem:[%s325 + $0x1a18] sm:$0xff]
        %v1249 = vld [vmem:[%s325 + $0x1a20] sm:$0xff]
        %v1250 = vld [vmem:[%s325 + $0x1a28] sm:$0xff]
        %v1251 = vld [vmem:[%s325 + $0x1a30] sm:$0xff]
        %v1252 = vld [vmem:[%s325 + $0x1a38] sm:$0xff]
        %v1253 = vld [vmem:[%s325 + $0x1a40] sm:$0xff]
        %v1254 = vld [vmem:[%s325 + $0x1a48] sm:$0xff]
        %v1255 = vld [vmem:[%s325 + $0x1a50] sm:$0xff]
        %v1256 = vld [vmem:[%s325 + $0x1a58] sm:$0xff]
        %v1257 = vld [vmem:[%s325 + $0x1a60] sm:$0xff]
        %v1258 = vld [vmem:[%s325 + $0x1a68] sm:$0xff]
        %v1259 = vld [vmem:[%s325 + $0x1a70] sm:$0xff]
        %v1260 = vld [vmem:[%s325 + $0x1a78] sm:$0xff]
        %v1261 = vld [vmem:[%s325 + $0x1a80] sm:$0xff]
        %v1262 = vld [vmem:[%s325 + $0x1a88] sm:$0xff]
        %v1263 = vld [vmem:[%s325 + $0x1a90] sm:$0xff]
        %v1264 = vld [vmem:[%s325 + $0x1a98] sm:$0xff]
        %v1265 = vld [vmem:[%s325 + $0x1aa0] sm:$0xff]
        %v1266 = vld [vmem:[%s325 + $0x1aa8] sm:$0xff]
        %v1267 = vld [vmem:[%s325 + $0x1ab0] sm:$0xff]
        %v1268 = vld [vmem:[%s325 + $0x1ab8] sm:$0xff]
        %v1269 = vld [vmem:[%s325 + $0x1ac0] sm:$0xff]
        %v1270 = vld [vmem:[%s325 + $0x1ac8] sm:$0xff]
        %v1271 = vld [vmem:[%s325 + $0x1ad0] sm:$0xff]
        %v1272 = vld [vmem:[%s325 + $0x1ad8] sm:$0xff]
        %v1273 = vld [vmem:[%s325 + $0x1ae0] sm:$0xff]
        %v1274 = vld [vmem:[%s325 + $0x1ae8] sm:$0xff]
        %v1275 = vld [vmem:[%s325 + $0x1af0] sm:$0xff]
        %v1276 = vld [vmem:[%s325 + $0x1af8] sm:$0xff]
        %v1277 = vld [vmem:[%s325 + $0x1b00] sm:$0xff]
        %v1278 = vld [vmem:[%s325 + $0x1b08] sm:$0xff]
        %v1279 = vld [vmem:[%s325 + $0x1b10] sm:$0xff]
        %v1280 = vld [vmem:[%s325 + $0x1b18] sm:$0xff]
        %v1281 = vld [vmem:[%s325 + $0x1b20] sm:$0xff]
        %v1282 = vld [vmem:[%s325 + $0x1b28] sm:$0xff]
        %v1283 = vld [vmem:[%s325 + $0x1b30] sm:$0xff]
        %v1284 = vld [vmem:[%s325 + $0x1b38] sm:$0xff]
        %v1285 = vld [vmem:[%s325 + $0x1b40] sm:$0xff]
        %v1286 = vld [vmem:[%s325 + $0x1b48] sm:$0xff]
        %v1287 = vld [vmem:[%s325 + $0x1b50] sm:$0xff]
        %v1288 = vld [vmem:[%s325 + $0x1b58] sm:$0xff]
        %v1289 = vld [vmem:[%s325 + $0x1b60] sm:$0xff]
        %v1290 = vld [vmem:[%s325 + $0x1b68] sm:$0xff]
        %v1291 = vld [vmem:[%s325 + $0x1b70] sm:$0xff]
        %v1292 = vld [vmem:[%s325 + $0x1b78] sm:$0xff]
        %v1293 = vld [vmem:[%s325 + $0x1b80] sm:$0xff]
        %v1294 = vld [vmem:[%s325 + $0x1b88] sm:$0xff]
        %v1295 = vld [vmem:[%s325 + $0x1b90] sm:$0xff]
        %v1296 = vld [vmem:[%s325 + $0x1b98] sm:$0xff]
        %v1297 = vld [vmem:[%s325 + $0x1ba0] sm:$0xff]
        %v1298 = vld [vmem:[%s325 + $0x1ba8] sm:$0xff]
        %v1299 = vld [vmem:[%s325 + $0x1bb0] sm:$0xff]
        %v1300 = vld [vmem:[%s325 + $0x1bb8] sm:$0xff]
        %v1301 = vld [vmem:[%s325 + $0x1bc0] sm:$0xff]
        %v1302 = vld [vmem:[%s325 + $0x1bc8] sm:$0xff]
        %v1303 = vld [vmem:[%s325 + $0x1bd0] sm:$0xff]
        %v1304 = vld [vmem:[%s325 + $0x1bd8] sm:$0xff]
        %v1305 = vld [vmem:[%s325 + $0x1be0] sm:$0xff]
        %v1306 = vld [vmem:[%s325 + $0x1be8] sm:$0xff]
        %v1307 = vld [vmem:[%s325 + $0x1bf0] sm:$0xff]
        %v1308 = vld [vmem:[%s325 + $0x1bf8] sm:$0xff]
        %v1309 = vld [vmem:[%s325 + $0x1c00] sm:$0xff]
        %v1310 = vld [vmem:[%s325 + $0x1c08] sm:$0xff]
        %v1311 = vld [vmem:[%s325 + $0x1c10] sm:$0xff]
        %v1312 = vld [vmem:[%s325 + $0x1c18] sm:$0xff]
        %v1313 = vld [vmem:[%s325 + $0x1c20] sm:$0xff]
        %v1314 = vld [vmem:[%s325 + $0x1c28] sm:$0xff]
        %v1315 = vld [vmem:[%s325 + $0x1c30] sm:$0xff]
        %v1316 = vld [vmem:[%s325 + $0x1c38] sm:$0xff]
        %v1317 = vld [vmem:[%s325 + $0x1c40] sm:$0xff]
        %v1318 = vld [vmem:[%s325 + $0x1c48] sm:$0xff]
        %v1319 = vld [vmem:[%s325 + $0x1c50] sm:$0xff]
        %v1320 = vld [vmem:[%s325 + $0x1c58] sm:$0xff]
        %v1321 = vld [vmem:[%s325 + $0x1c60] sm:$0xff]
        %v1322 = vld [vmem:[%s325 + $0x1c68] sm:$0xff]
        %v1323 = vld [vmem:[%s325 + $0x1c70] sm:$0xff]
        %v1324 = vld [vmem:[%s325 + $0x1c78] sm:$0xff]
        %v1325 = vld [vmem:[%s325 + $0x1c80] sm:$0xff]
        %v1326 = vld [vmem:[%s325 + $0x1c88] sm:$0xff]
        %v1327 = vld [vmem:[%s325 + $0x1c90] sm:$0xff]
        %v1328 = vld [vmem:[%s325 + $0x1c98] sm:$0xff]
        %v1329 = vld [vmem:[%s325 + $0x1ca0] sm:$0xff]
        %v1330 = vld [vmem:[%s325 + $0x1ca8] sm:$0xff]
        %v1331 = vld [vmem:[%s325 + $0x1cb0] sm:$0xff]
        %v1332 = vld [vmem:[%s325 + $0x1cb8] sm:$0xff]
        %v1333 = vld [vmem:[%s325 + $0x1cc0] sm:$0xff]
        %v1334 = vld [vmem:[%s325 + $0x1cc8] sm:$0xff]
        %v1335 = vld [vmem:[%s325 + $0x1cd0] sm:$0xff]
        %v1336 = vld [vmem:[%s325 + $0x1cd8] sm:$0xff]
        %v1337 = vld [vmem:[%s325 + $0x1ce0] sm:$0xff]
        %v1338 = vld [vmem:[%s325 + $0x1ce8] sm:$0xff]
        %v1339 = vld [vmem:[%s325 + $0x1cf0] sm:$0xff]
        %v1340 = vld [vmem:[%s325 + $0x1cf8] sm:$0xff]
        %v1341 = vld [vmem:[%s325 + $0x1d00] sm:$0xff]
        %v1342 = vld [vmem:[%s325 + $0x1d08] sm:$0xff]
        %v1343 = vld [vmem:[%s325 + $0x1d10] sm:$0xff]
        %v1344 = vld [vmem:[%s325 + $0x1d18] sm:$0xff]
        %v1345 = vld [vmem:[%s325 + $0x1d20] sm:$0xff]
        %v1346 = vld [vmem:[%s325 + $0x1d28] sm:$0xff]
        %v1347 = vld [vmem:[%s325 + $0x1d30] sm:$0xff]
        %v1348 = vld [vmem:[%s325 + $0x1d38] sm:$0xff]
        %v1349 = vld [vmem:[%s325 + $0x1d40] sm:$0xff]
        %v1350 = vld [vmem:[%s325 + $0x1d48] sm:$0xff]
        %v1351 = vld [vmem:[%s325 + $0x1d50] sm:$0xff]
        %v1352 = vld [vmem:[%s325 + $0x1d58] sm:$0xff]
        %v1353 = vld [vmem:[%s325 + $0x1d60] sm:$0xff]
        %v1354 = vld [vmem:[%s325 + $0x1d68] sm:$0xff]
        %v1355 = vld [vmem:[%s325 + $0x1d70] sm:$0xff]
        %v1356 = vld [vmem:[%s325 + $0x1d78] sm:$0xff]
        %v1357 = vld [vmem:[%s325 + $0x1d80] sm:$0xff]
        %v1358 = vld [vmem:[%s325 + $0x1d88] sm:$0xff]
        %v1359 = vld [vmem:[%s325 + $0x1d90] sm:$0xff]
        %v1360 = vld [vmem:[%s325 + $0x1d98] sm:$0xff]
        %v1361 = vld [vmem:[%s325 + $0x1da0] sm:$0xff]
        %v1362 = vld [vmem:[%s325 + $0x1da8] sm:$0xff]
        %v1363 = vld [vmem:[%s325 + $0x1db0] sm:$0xff]
        %v1364 = vld [vmem:[%s325 + $0x1db8] sm:$0xff]
        %v1365 = vld [vmem:[%s325 + $0x1dc0] sm:$0xff]
        %v1366 = vld [vmem:[%s325 + $0x1dc8] sm:$0xff]
        %v1367 = vld [vmem:[%s325 + $0x1dd0] sm:$0xff]
        %v1368 = vld [vmem:[%s325 + $0x1dd8] sm:$0xff]
        %v1369 = vld [vmem:[%s325 + $0x1de0] sm:$0xff]
        %v1370 = vld [vmem:[%s325 + $0x1de8] sm:$0xff]
        %v1371 = vld [vmem:[%s325 + $0x1df0] sm:$0xff]
        %v1372 = vld [vmem:[%s325 + $0x1df8] sm:$0xff]
        %v1373 = vld [vmem:[%s325 + $0x1e00] sm:$0xff]
        %v1374 = vld [vmem:[%s325 + $0x1e08] sm:$0xff]
        %v1375 = vld [vmem:[%s325 + $0x1e10] sm:$0xff]
        %v1376 = vld [vmem:[%s325 + $0x1e18] sm:$0xff]
        %v1377 = vld [vmem:[%s325 + $0x1e20] sm:$0xff]
        %v1378 = vld [vmem:[%s325 + $0x1e28] sm:$0xff]
        %v1379 = vld [vmem:[%s325 + $0x1e30] sm:$0xff]
        %v1380 = vld [vmem:[%s325 + $0x1e38] sm:$0xff]
        %v1381 = vld [vmem:[%s325 + $0x1e40] sm:$0xff]
        %v1382 = vld [vmem:[%s325 + $0x1e48] sm:$0xff]
        %v1383 = vld [vmem:[%s325 + $0x1e50] sm:$0xff]
        %v1384 = vld [vmem:[%s325 + $0x1e58] sm:$0xff]
        %v1385 = vld [vmem:[%s325 + $0x1e60] sm:$0xff]
        %v1386 = vld [vmem:[%s325 + $0x1e68] sm:$0xff]
        %v1387 = vld [vmem:[%s325 + $0x1e70] sm:$0xff]
        %v1388 = vld [vmem:[%s325 + $0x1e78] sm:$0xff]
        %v1389 = vld [vmem:[%s325 + $0x1e80] sm:$0xff]
        %v1390 = vld [vmem:[%s325 + $0x1e88] sm:$0xff]
        %v1391 = vld [vmem:[%s325 + $0x1e90] sm:$0xff]
        %v1392 = vld [vmem:[%s325 + $0x1e98] sm:$0xff]
        %v1393 = vld [vmem:[%s325 + $0x1ea0] sm:$0xff]
        %v1394 = vld [vmem:[%s325 + $0x1ea8] sm:$0xff]
        %v1395 = vld [vmem:[%s325 + $0x1eb0] sm:$0xff]
        %v1396 = vld [vmem:[%s325 + $0x1eb8] sm:$0xff]
        %v1397 = vld [vmem:[%s325 + $0x1ec0] sm:$0xff]
        %v1398 = vld [vmem:[%s325 + $0x1ec8] sm:$0xff]
        %v1399 = vld [vmem:[%s325 + $0x1ed0] sm:$0xff]
        %v1400 = vld [vmem:[%s325 + $0x1ed8] sm:$0xff]
        %v1401 = vld [vmem:[%s325 + $0x1ee0] sm:$0xff]
        %v1402 = vld [vmem:[%s325 + $0x1ee8] sm:$0xff]
        %v1403 = vld [vmem:[%s325 + $0x1ef0] sm:$0xff]
        %v1404 = vld [vmem:[%s325 + $0x1ef8] sm:$0xff]
        %v1405 = vld [vmem:[%s325 + $0x1f00] sm:$0xff]
        %v1406 = vld [vmem:[%s325 + $0x1f08] sm:$0xff]
        %v1407 = vld [vmem:[%s325 + $0x1f10] sm:$0xff]
        %v1408 = vld [vmem:[%s325 + $0x1f18] sm:$0xff]
        %v1409 = vld [vmem:[%s325 + $0x1f20] sm:$0xff]
        %v1410 = vld [vmem:[%s325 + $0x1f28] sm:$0xff]
        %v1411 = vld [vmem:[%s325 + $0x1f30] sm:$0xff]
        %v1412 = vld [vmem:[%s325 + $0x1f38] sm:$0xff]
        %v1413 = vld [vmem:[%s325 + $0x1f40] sm:$0xff]
        %v1414 = vld [vmem:[%s325 + $0x1f48] sm:$0xff]
        %v1415 = vld [vmem:[%s325 + $0x1f50] sm:$0xff]
        %v1416 = vld [vmem:[%s325 + $0x1f58] sm:$0xff]
        %v1417 = vld [vmem:[%s325 + $0x1f60] sm:$0xff]
        %v1418 = vld [vmem:[%s325 + $0x1f68] sm:$0xff]
        %v1419 = vld [vmem:[%s325 + $0x1f70] sm:$0xff]
        %v1420 = vld [vmem:[%s325 + $0x1f78] sm:$0xff]
        %v1421 = vld [vmem:[%s325 + $0x1f80] sm:$0xff]
        %v1422 = vld [vmem:[%s325 + $0x1f88] sm:$0xff]
        %v1423 = vld [vmem:[%s325 + $0x1f90] sm:$0xff]
        %v1424 = vld [vmem:[%s325 + $0x1f98] sm:$0xff]
        %v1425 = vld [vmem:[%s325 + $0x1fa0] sm:$0xff]
        %v1426 = vld [vmem:[%s325 + $0x1fa8] sm:$0xff]
        %v1427 = vld [vmem:[%s325 + $0x1fb0] sm:$0xff]
        %v1428 = vld [vmem:[%s325 + $0x1fb8] sm:$0xff]
        %v1429 = vld [vmem:[%s325 + $0x1fc0] sm:$0xff]
        %v1430 = vld [vmem:[%s325 + $0x1fc8] sm:$0xff]
        %v1431 = vld [vmem:[%s325 + $0x1fd0] sm:$0xff]
        %v1432 = vld [vmem:[%s325 + $0x1fd8] sm:$0xff]
        %v1433 = vld [vmem:[%s325 + $0x1fe0] sm:$0xff]
        %v1434 = vld [vmem:[%s325 + $0x1fe8] sm:$0xff]
        %v1435 = vld [vmem:[%s325 + $0x1ff0] sm:$0xff]
        %v1436 = vld [vmem:[%s325 + $0x1ff8] sm:$0xff]
        %v1441 = vunpack.c.l.b16 %v409
        %v1442 = vunpack.c.h.b16 %v409
        %v1443 = vunpack.c.l.b16 %v410
        %v1444 = vunpack.c.h.b16 %v410
        %v1445 = vunpack.c.l.b16 %v411
        %v1446 = vunpack.c.h.b16 %v411
        %v1447 = vunpack.c.l.b16 %v412
        %v1448 = vunpack.c.h.b16 %v412
        %v1449 = vpack.c.b16 %v1441, %v1441
        %v1450 = vpack.c.b16 %v1442, %v1442
        %v1451 = vpack.c.b16 %v1443, %v1443
        %v1452 = vpack.c.b16 %v1444, %v1444
        %v1453 = vpack.c.b16 %v1445, %v1445
        %v1454 = vpack.c.b16 %v1446, %v1446
        %v1455 = vpack.c.b16 %v1447, %v1447
        %v1456 = vpack.c.b16 %v1448, %v1448
        %v2489 = vunpack.c.l.b16 %v413
        %v2490 = vunpack.c.h.b16 %v413
        %v2491 = vunpack.c.l.b16 %v414
        %v2492 = vunpack.c.h.b16 %v414
        %v2493 = vunpack.c.l.b16 %v415
        %v2494 = vunpack.c.h.b16 %v415
        %v2495 = vunpack.c.l.b16 %v416
        %v2496 = vunpack.c.h.b16 %v416
        %v2497 = vunpack.c.l.b16 %v417
        %v2498 = vunpack.c.h.b16 %v417
        %v2499 = vunpack.c.l.b16 %v418
        %v2500 = vunpack.c.h.b16 %v418
        %v2501 = vunpack.c.l.b16 %v419
        %v2502 = vunpack.c.h.b16 %v419
        %v2503 = vunpack.c.l.b16 %v420
        %v2504 = vunpack.c.h.b16 %v420
        %v2505 = vunpack.c.l.b16 %v421
        %v2506 = vunpack.c.h.b16 %v421
        %v2507 = vunpack.c.l.b16 %v422
        %v2508 = vunpack.c.h.b16 %v422
        %v2509 = vunpack.c.l.b16 %v423
        %v2510 = vunpack.c.h.b16 %v423
        %v2511 = vunpack.c.l.b16 %v424
        %v2512 = vunpack.c.h.b16 %v424
        %v2513 = vunpack.c.l.b16 %v425
        %v2514 = vunpack.c.h.b16 %v425
        %v2515 = vunpack.c.l.b16 %v426
        %v2516 = vunpack.c.h.b16 %v426
        %v2517 = vunpack.c.l.b16 %v427
        %v2518 = vunpack.c.h.b16 %v427
        %v2519 = vunpack.c.l.b16 %v428
        %v2520 = vunpack.c.h.b16 %v428
        %v2521 = vunpack.c.l.b16 %v429
        %v2522 = vunpack.c.h.b16 %v429
        %v2523 = vunpack.c.l.b16 %v430
        %v2524 = vunpack.c.h.b16 %v430
        %v2525 = vunpack.c.l.b16 %v431
        %v2526 = vunpack.c.h.b16 %v431
        %v2527 = vunpack.c.l.b16 %v432
        %v2528 = vunpack.c.h.b16 %v432
        %v2529 = vunpack.c.l.b16 %v433
        %v2530 = vunpack.c.h.b16 %v433
        %v2531 = vunpack.c.l.b16 %v434
        %v2532 = vunpack.c.h.b16 %v434
        %v2533 = vunpack.c.l.b16 %v435
        %v2534 = vunpack.c.h.b16 %v435
        %v2535 = vunpack.c.l.b16 %v436
        %v2536 = vunpack.c.h.b16 %v436
        %v2537 = vunpack.c.l.b16 %v437
        %v2538 = vunpack.c.h.b16 %v437
        %v2539 = vunpack.c.l.b16 %v438
        %v2540 = vunpack.c.h.b16 %v438
        %v2541 = vunpack.c.l.b16 %v439
        %v2542 = vunpack.c.h.b16 %v439
        %v2543 = vunpack.c.l.b16 %v440
        %v2544 = vunpack.c.h.b16 %v440
        %v2545 = vunpack.c.l.b16 %v441
        %v2546 = vunpack.c.h.b16 %v441
        %v2547 = vunpack.c.l.b16 %v442
        %v2548 = vunpack.c.h.b16 %v442
        %v2549 = vunpack.c.l.b16 %v443
        %v2550 = vunpack.c.h.b16 %v443
        %v2551 = vunpack.c.l.b16 %v444
        %v2552 = vunpack.c.h.b16 %v444
        %v2553 = vunpack.c.l.b16 %v445
        %v2554 = vunpack.c.h.b16 %v445
        %v2555 = vunpack.c.l.b16 %v446
        %v2556 = vunpack.c.h.b16 %v446
        %v2557 = vunpack.c.l.b16 %v447
        %v2558 = vunpack.c.h.b16 %v447
        %v2559 = vunpack.c.l.b16 %v448
        %v2560 = vunpack.c.h.b16 %v448
        %v2561 = vunpack.c.l.b16 %v449
        %v2562 = vunpack.c.h.b16 %v449
        %v2563 = vunpack.c.l.b16 %v450
        %v2564 = vunpack.c.h.b16 %v450
        %v2565 = vunpack.c.l.b16 %v451
        %v2566 = vunpack.c.h.b16 %v451
        %v2567 = vunpack.c.l.b16 %v452
        %v2568 = vunpack.c.h.b16 %v452
        %v2569 = vunpack.c.l.b16 %v453
        %v2570 = vunpack.c.h.b16 %v453
        %v2571 = vunpack.c.l.b16 %v454
        %v2572 = vunpack.c.h.b16 %v454
        %v2573 = vunpack.c.l.b16 %v455
        %v2574 = vunpack.c.h.b16 %v455
        %v2575 = vunpack.c.l.b16 %v456
        %v2576 = vunpack.c.h.b16 %v456
        %v2577 = vunpack.c.l.b16 %v457
        %v2578 = vunpack.c.h.b16 %v457
        %v2579 = vunpack.c.l.b16 %v458
        %v2580 = vunpack.c.h.b16 %v458
        %v2581 = vunpack.c.l.b16 %v459
        %v2582 = vunpack.c.h.b16 %v459
        %v2583 = vunpack.c.l.b16 %v460
        %v2584 = vunpack.c.h.b16 %v460
        %v2585 = vunpack.c.l.b16 %v461
        %v2586 = vunpack.c.h.b16 %v461
        %v2587 = vunpack.c.l.b16 %v462
        %v2588 = vunpack.c.h.b16 %v462
        %v2589 = vunpack.c.l.b16 %v463
        %v2590 = vunpack.c.h.b16 %v463
        %v2591 = vunpack.c.l.b16 %v464
        %v2592 = vunpack.c.h.b16 %v464
        %v2593 = vunpack.c.l.b16 %v465
        %v2594 = vunpack.c.h.b16 %v465
        %v2595 = vunpack.c.l.b16 %v466
        %v2596 = vunpack.c.h.b16 %v466
        %v2597 = vunpack.c.l.b16 %v467
        %v2598 = vunpack.c.h.b16 %v467
        %v2599 = vunpack.c.l.b16 %v468
        %v2600 = vunpack.c.h.b16 %v468
        %v2601 = vunpack.c.l.b16 %v469
        %v2602 = vunpack.c.h.b16 %v469
        %v2603 = vunpack.c.l.b16 %v470
        %v2604 = vunpack.c.h.b16 %v470
        %v2605 = vunpack.c.l.b16 %v471
        %v2606 = vunpack.c.h.b16 %v471
        %v2607 = vunpack.c.l.b16 %v472
        %v2608 = vunpack.c.h.b16 %v472
        %v2609 = vunpack.c.l.b16 %v473
        %v2610 = vunpack.c.h.b16 %v473
        %v2611 = vunpack.c.l.b16 %v474
        %v2612 = vunpack.c.h.b16 %v474
        %v2613 = vunpack.c.l.b16 %v475
        %v2614 = vunpack.c.h.b16 %v475
        %v2615 = vunpack.c.l.b16 %v476
        %v2616 = vunpack.c.h.b16 %v476
        %v2617 = vunpack.c.l.b16 %v477
        %v2618 = vunpack.c.h.b16 %v477
        %v2619 = vunpack.c.l.b16 %v478
        %v2620 = vunpack.c.h.b16 %v478
        %v2621 = vunpack.c.l.b16 %v479
        %v2622 = vunpack.c.h.b16 %v479
        %v2623 = vunpack.c.l.b16 %v480
        %v2624 = vunpack.c.h.b16 %v480
        %v2625 = vunpack.c.l.b16 %v481
        %v2626 = vunpack.c.h.b16 %v481
        %v2627 = vunpack.c.l.b16 %v482
        %v2628 = vunpack.c.h.b16 %v482
        %v2629 = vunpack.c.l.b16 %v483
        %v2630 = vunpack.c.h.b16 %v483
        %v2631 = vunpack.c.l.b16 %v484
        %v2632 = vunpack.c.h.b16 %v484
        %v2633 = vunpack.c.l.b16 %v485
        %v2634 = vunpack.c.h.b16 %v485
        %v2635 = vunpack.c.l.b16 %v486
        %v2636 = vunpack.c.h.b16 %v486
        %v2637 = vunpack.c.l.b16 %v487
        %v2638 = vunpack.c.h.b16 %v487
        %v2639 = vunpack.c.l.b16 %v488
        %v2640 = vunpack.c.h.b16 %v488
        %v2641 = vunpack.c.l.b16 %v489
        %v2642 = vunpack.c.h.b16 %v489
        %v2643 = vunpack.c.l.b16 %v490
        %v2644 = vunpack.c.h.b16 %v490
        %v2645 = vunpack.c.l.b16 %v491
        %v2646 = vunpack.c.h.b16 %v491
        %v2647 = vunpack.c.l.b16 %v492
        %v2648 = vunpack.c.h.b16 %v492
        %v2649 = vunpack.c.l.b16 %v493
        %v2650 = vunpack.c.h.b16 %v493
        %v2651 = vunpack.c.l.b16 %v494
        %v2652 = vunpack.c.h.b16 %v494
        %v2653 = vunpack.c.l.b16 %v495
        %v2654 = vunpack.c.h.b16 %v495
        %v2655 = vunpack.c.l.b16 %v496
        %v2656 = vunpack.c.h.b16 %v496
        %v2657 = vunpack.c.l.b16 %v497
        %v2658 = vunpack.c.h.b16 %v497
        %v2659 = vunpack.c.l.b16 %v498
        %v2660 = vunpack.c.h.b16 %v498
        %v2661 = vunpack.c.l.b16 %v499
        %v2662 = vunpack.c.h.b16 %v499
        %v2663 = vunpack.c.l.b16 %v500
        %v2664 = vunpack.c.h.b16 %v500
        %v2665 = vunpack.c.l.b16 %v501
        %v2666 = vunpack.c.h.b16 %v501
        %v2667 = vunpack.c.l.b16 %v502
        %v2668 = vunpack.c.h.b16 %v502
        %v2669 = vunpack.c.l.b16 %v503
        %v2670 = vunpack.c.h.b16 %v503
        %v2671 = vunpack.c.l.b16 %v504
        %v2672 = vunpack.c.h.b16 %v504
        %v2673 = vunpack.c.l.b16 %v505
        %v2674 = vunpack.c.h.b16 %v505
        %v2675 = vunpack.c.l.b16 %v506
        %v2676 = vunpack.c.h.b16 %v506
        %v2677 = vunpack.c.l.b16 %v507
        %v2678 = vunpack.c.h.b16 %v507
        %v2679 = vunpack.c.l.b16 %v508
        %v2680 = vunpack.c.h.b16 %v508
        %v2681 = vunpack.c.l.b16 %v509
        %v2682 = vunpack.c.h.b16 %v509
        %v2683 = vunpack.c.l.b16 %v510
        %v2684 = vunpack.c.h.b16 %v510
        %v2685 = vunpack.c.l.b16 %v511
        %v2686 = vunpack.c.h.b16 %v511
        %v2687 = vunpack.c.l.b16 %v512
        %v2688 = vunpack.c.h.b16 %v512
        %v2689 = vunpack.c.l.b16 %v513
        %v2690 = vunpack.c.h.b16 %v513
        %v2691 = vunpack.c.l.b16 %v514
        %v2692 = vunpack.c.h.b16 %v514
        %v2693 = vunpack.c.l.b16 %v515
        %v2694 = vunpack.c.h.b16 %v515
        %v2695 = vunpack.c.l.b16 %v516
        %v2696 = vunpack.c.h.b16 %v516
        %v2697 = vunpack.c.l.b16 %v517
        %v2698 = vunpack.c.h.b16 %v517
        %v2699 = vunpack.c.l.b16 %v518
        %v2700 = vunpack.c.h.b16 %v518
        %v2701 = vunpack.c.l.b16 %v519
        %v2702 = vunpack.c.h.b16 %v519
        %v2703 = vunpack.c.l.b16 %v520
        %v2704 = vunpack.c.h.b16 %v520
        %v2705 = vunpack.c.l.b16 %v521
        %v2706 = vunpack.c.h.b16 %v521
        %v2707 = vunpack.c.l.b16 %v522
        %v2708 = vunpack.c.h.b16 %v522
        %v2709 = vunpack.c.l.b16 %v523
        %v2710 = vunpack.c.h.b16 %v523
        %v2711 = vunpack.c.l.b16 %v524
        %v2712 = vunpack.c.h.b16 %v524
        %v2713 = vunpack.c.l.b16 %v525
        %v2714 = vunpack.c.h.b16 %v525
        %v2715 = vunpack.c.l.b16 %v526
        %v2716 = vunpack.c.h.b16 %v526
        %v2717 = vunpack.c.l.b16 %v527
        %v2718 = vunpack.c.h.b16 %v527
        %v2719 = vunpack.c.l.b16 %v528
        %v2720 = vunpack.c.h.b16 %v528
        %v2721 = vunpack.c.l.b16 %v529
        %v2722 = vunpack.c.h.b16 %v529
        %v2723 = vunpack.c.l.b16 %v530
        %v2724 = vunpack.c.h.b16 %v530
        %v2725 = vunpack.c.l.b16 %v531
        %v2726 = vunpack.c.h.b16 %v531
        %v2727 = vunpack.c.l.b16 %v532
        %v2728 = vunpack.c.h.b16 %v532
        %v2729 = vunpack.c.l.b16 %v533
        %v2730 = vunpack.c.h.b16 %v533
        %v2731 = vunpack.c.l.b16 %v534
        %v2732 = vunpack.c.h.b16 %v534
        %v2733 = vunpack.c.l.b16 %v535
        %v2734 = vunpack.c.h.b16 %v535
        %v2735 = vunpack.c.l.b16 %v536
        %v2736 = vunpack.c.h.b16 %v536
        %v2737 = vunpack.c.l.b16 %v537
        %v2738 = vunpack.c.h.b16 %v537
        %v2739 = vunpack.c.l.b16 %v538
        %v2740 = vunpack.c.h.b16 %v538
        %v2741 = vunpack.c.l.b16 %v539
        %v2742 = vunpack.c.h.b16 %v539
        %v2743 = vunpack.c.l.b16 %v540
        %v2744 = vunpack.c.h.b16 %v540
        %v2745 = vunpack.c.l.b16 %v541
        %v2746 = vunpack.c.h.b16 %v541
        %v2747 = vunpack.c.l.b16 %v542
        %v2748 = vunpack.c.h.b16 %v542
        %v2749 = vunpack.c.l.b16 %v543
        %v2750 = vunpack.c.h.b16 %v543
        %v2751 = vunpack.c.l.b16 %v544
        %v2752 = vunpack.c.h.b16 %v544
        %v2753 = vunpack.c.l.b16 %v545
        %v2754 = vunpack.c.h.b16 %v545
        %v2755 = vunpack.c.l.b16 %v546
        %v2756 = vunpack.c.h.b16 %v546
        %v2757 = vunpack.c.l.b16 %v547
        %v2758 = vunpack.c.h.b16 %v547
        %v2759 = vunpack.c.l.b16 %v548
        %v2760 = vunpack.c.h.b16 %v548
        %v2761 = vunpack.c.l.b16 %v549
        %v2762 = vunpack.c.h.b16 %v549
        %v2763 = vunpack.c.l.b16 %v550
        %v2764 = vunpack.c.h.b16 %v550
        %v2765 = vunpack.c.l.b16 %v551
        %v2766 = vunpack.c.h.b16 %v551
        %v2767 = vunpack.c.l.b16 %v552
        %v2768 = vunpack.c.h.b16 %v552
        %v2769 = vunpack.c.l.b16 %v553
        %v2770 = vunpack.c.h.b16 %v553
        %v2771 = vunpack.c.l.b16 %v554
        %v2772 = vunpack.c.h.b16 %v554
        %v2773 = vunpack.c.l.b16 %v555
        %v2774 = vunpack.c.h.b16 %v555
        %v2775 = vunpack.c.l.b16 %v556
        %v2776 = vunpack.c.h.b16 %v556
        %v2777 = vunpack.c.l.b16 %v557
        %v2778 = vunpack.c.h.b16 %v557
        %v2779 = vunpack.c.l.b16 %v558
        %v2780 = vunpack.c.h.b16 %v558
        %v2781 = vunpack.c.l.b16 %v559
        %v2782 = vunpack.c.h.b16 %v559
        %v2783 = vunpack.c.l.b16 %v560
        %v2784 = vunpack.c.h.b16 %v560
        %v2785 = vunpack.c.l.b16 %v561
        %v2786 = vunpack.c.h.b16 %v561
        %v2787 = vunpack.c.l.b16 %v562
        %v2788 = vunpack.c.h.b16 %v562
        %v2789 = vunpack.c.l.b16 %v563
        %v2790 = vunpack.c.h.b16 %v563
        %v2791 = vunpack.c.l.b16 %v564
        %v2792 = vunpack.c.h.b16 %v564
        %v2793 = vunpack.c.l.b16 %v565
        %v2794 = vunpack.c.h.b16 %v565
        %v2795 = vunpack.c.l.b16 %v566
        %v2796 = vunpack.c.h.b16 %v566
        %v2797 = vunpack.c.l.b16 %v567
        %v2798 = vunpack.c.h.b16 %v567
        %v2799 = vunpack.c.l.b16 %v568
        %v2800 = vunpack.c.h.b16 %v568
        %v2801 = vunpack.c.l.b16 %v569
        %v2802 = vunpack.c.h.b16 %v569
        %v2803 = vunpack.c.l.b16 %v570
        %v2804 = vunpack.c.h.b16 %v570
        %v2805 = vunpack.c.l.b16 %v571
        %v2806 = vunpack.c.h.b16 %v571
        %v2807 = vunpack.c.l.b16 %v572
        %v2808 = vunpack.c.h.b16 %v572
        %v2809 = vunpack.c.l.b16 %v573
        %v2810 = vunpack.c.h.b16 %v573
        %v2811 = vunpack.c.l.b16 %v574
        %v2812 = vunpack.c.h.b16 %v574
        %v2813 = vunpack.c.l.b16 %v575
        %v2814 = vunpack.c.h.b16 %v575
        %v2815 = vunpack.c.l.b16 %v576
        %v2816 = vunpack.c.h.b16 %v576
        %v2817 = vunpack.c.l.b16 %v577
        %v2818 = vunpack.c.h.b16 %v577
        %v2819 = vunpack.c.l.b16 %v578
        %v2820 = vunpack.c.h.b16 %v578
        %v2821 = vunpack.c.l.b16 %v579
        %v2822 = vunpack.c.h.b16 %v579
        %v2823 = vunpack.c.l.b16 %v580
        %v2824 = vunpack.c.h.b16 %v580
        %v2825 = vunpack.c.l.b16 %v581
        %v2826 = vunpack.c.h.b16 %v581
        %v2827 = vunpack.c.l.b16 %v582
        %v2828 = vunpack.c.h.b16 %v582
        %v2829 = vunpack.c.l.b16 %v583
        %v2830 = vunpack.c.h.b16 %v583
        %v2831 = vunpack.c.l.b16 %v584
        %v2832 = vunpack.c.h.b16 %v584
        %v2833 = vunpack.c.l.b16 %v585
        %v2834 = vunpack.c.h.b16 %v585
        %v2835 = vunpack.c.l.b16 %v586
        %v2836 = vunpack.c.h.b16 %v586
        %v2837 = vunpack.c.l.b16 %v587
        %v2838 = vunpack.c.h.b16 %v587
        %v2839 = vunpack.c.l.b16 %v588
        %v2840 = vunpack.c.h.b16 %v588
        %v2841 = vunpack.c.l.b16 %v589
        %v2842 = vunpack.c.h.b16 %v589
        %v2843 = vunpack.c.l.b16 %v590
        %v2844 = vunpack.c.h.b16 %v590
        %v2845 = vunpack.c.l.b16 %v591
        %v2846 = vunpack.c.h.b16 %v591
        %v2847 = vunpack.c.l.b16 %v592
        %v2848 = vunpack.c.h.b16 %v592
        %v2849 = vunpack.c.l.b16 %v593
        %v2850 = vunpack.c.h.b16 %v593
        %v2851 = vunpack.c.l.b16 %v594
        %v2852 = vunpack.c.h.b16 %v594
        %v2853 = vunpack.c.l.b16 %v595
        %v2854 = vunpack.c.h.b16 %v595
        %v2855 = vunpack.c.l.b16 %v596
        %v2856 = vunpack.c.h.b16 %v596
        %v2857 = vunpack.c.l.b16 %v597
        %v2858 = vunpack.c.h.b16 %v597
        %v2859 = vunpack.c.l.b16 %v598
        %v2860 = vunpack.c.h.b16 %v598
        %v2861 = vunpack.c.l.b16 %v599
        %v2862 = vunpack.c.h.b16 %v599
        %v2863 = vunpack.c.l.b16 %v600
        %v2864 = vunpack.c.h.b16 %v600
        %v2865 = vunpack.c.l.b16 %v601
        %v2866 = vunpack.c.h.b16 %v601
        %v2867 = vunpack.c.l.b16 %v602
        %v2868 = vunpack.c.h.b16 %v602
        %v2869 = vunpack.c.l.b16 %v603
        %v2870 = vunpack.c.h.b16 %v603
        %v2871 = vunpack.c.l.b16 %v604
        %v2872 = vunpack.c.h.b16 %v604
        %v2873 = vunpack.c.l.b16 %v605
        %v2874 = vunpack.c.h.b16 %v605
        %v2875 = vunpack.c.l.b16 %v606
        %v2876 = vunpack.c.h.b16 %v606
        %v2877 = vunpack.c.l.b16 %v607
        %v2878 = vunpack.c.h.b16 %v607
        %v2879 = vunpack.c.l.b16 %v608
        %v2880 = vunpack.c.h.b16 %v608
        %v2881 = vunpack.c.l.b16 %v609
        %v2882 = vunpack.c.h.b16 %v609
        %v2883 = vunpack.c.l.b16 %v610
        %v2884 = vunpack.c.h.b16 %v610
        %v2885 = vunpack.c.l.b16 %v611
        %v2886 = vunpack.c.h.b16 %v611
        %v2887 = vunpack.c.l.b16 %v612
        %v2888 = vunpack.c.h.b16 %v612
        %v2889 = vunpack.c.l.b16 %v613
        %v2890 = vunpack.c.h.b16 %v613
        %v2891 = vunpack.c.l.b16 %v614
        %v2892 = vunpack.c.h.b16 %v614
        %v2893 = vunpack.c.l.b16 %v615
        %v2894 = vunpack.c.h.b16 %v615
        %v2895 = vunpack.c.l.b16 %v616
        %v2896 = vunpack.c.h.b16 %v616
        %v2897 = vunpack.c.l.b16 %v617
        %v2898 = vunpack.c.h.b16 %v617
        %v2899 = vunpack.c.l.b16 %v618
        %v2900 = vunpack.c.h.b16 %v618
        %v2901 = vunpack.c.l.b16 %v619
        %v2902 = vunpack.c.h.b16 %v619
        %v2903 = vunpack.c.l.b16 %v620
        %v2904 = vunpack.c.h.b16 %v620
        %v2905 = vunpack.c.l.b16 %v621
        %v2906 = vunpack.c.h.b16 %v621
        %v2907 = vunpack.c.l.b16 %v622
        %v2908 = vunpack.c.h.b16 %v622
        %v2909 = vunpack.c.l.b16 %v623
        %v2910 = vunpack.c.h.b16 %v623
        %v2911 = vunpack.c.l.b16 %v624
        %v2912 = vunpack.c.h.b16 %v624
        %v2913 = vunpack.c.l.b16 %v625
        %v2914 = vunpack.c.h.b16 %v625
        %v2915 = vunpack.c.l.b16 %v626
        %v2916 = vunpack.c.h.b16 %v626
        %v2917 = vunpack.c.l.b16 %v627
        %v2918 = vunpack.c.h.b16 %v627
        %v2919 = vunpack.c.l.b16 %v628
        %v2920 = vunpack.c.h.b16 %v628
        %v2921 = vunpack.c.l.b16 %v629
        %v2922 = vunpack.c.h.b16 %v629
        %v2923 = vunpack.c.l.b16 %v630
        %v2924 = vunpack.c.h.b16 %v630
        %v2925 = vunpack.c.l.b16 %v631
        %v2926 = vunpack.c.h.b16 %v631
        %v2927 = vunpack.c.l.b16 %v632
        %v2928 = vunpack.c.h.b16 %v632
        %v2929 = vunpack.c.l.b16 %v633
        %v2930 = vunpack.c.h.b16 %v633
        %v2931 = vunpack.c.l.b16 %v634
        %v2932 = vunpack.c.h.b16 %v634
        %v2933 = vunpack.c.l.b16 %v635
        %v2934 = vunpack.c.h.b16 %v635
        %v2935 = vunpack.c.l.b16 %v636
        %v2936 = vunpack.c.h.b16 %v636
        %v2937 = vunpack.c.l.b16 %v637
        %v2938 = vunpack.c.h.b16 %v637
        %v2939 = vunpack.c.l.b16 %v638
        %v2940 = vunpack.c.h.b16 %v638
        %v2941 = vunpack.c.l.b16 %v639
        %v2942 = vunpack.c.h.b16 %v639
        %v2943 = vunpack.c.l.b16 %v640
        %v2944 = vunpack.c.h.b16 %v640
        %v2945 = vunpack.c.l.b16 %v641
        %v2946 = vunpack.c.h.b16 %v641
        %v2947 = vunpack.c.l.b16 %v642
        %v2948 = vunpack.c.h.b16 %v642
        %v2949 = vunpack.c.l.b16 %v643
        %v2950 = vunpack.c.h.b16 %v643
        %v2951 = vunpack.c.l.b16 %v644
        %v2952 = vunpack.c.h.b16 %v644
        %v2953 = vunpack.c.l.b16 %v645
        %v2954 = vunpack.c.h.b16 %v645
        %v2955 = vunpack.c.l.b16 %v646
        %v2956 = vunpack.c.h.b16 %v646
        %v2957 = vunpack.c.l.b16 %v647
        %v2958 = vunpack.c.h.b16 %v647
        %v2959 = vunpack.c.l.b16 %v648
        %v2960 = vunpack.c.h.b16 %v648
        %v2961 = vunpack.c.l.b16 %v649
        %v2962 = vunpack.c.h.b16 %v649
        %v2963 = vunpack.c.l.b16 %v650
        %v2964 = vunpack.c.h.b16 %v650
        %v2965 = vunpack.c.l.b16 %v651
        %v2966 = vunpack.c.h.b16 %v651
        %v2967 = vunpack.c.l.b16 %v652
        %v2968 = vunpack.c.h.b16 %v652
        %v2969 = vunpack.c.l.b16 %v653
        %v2970 = vunpack.c.h.b16 %v653
        %v2971 = vunpack.c.l.b16 %v654
        %v2972 = vunpack.c.h.b16 %v654
        %v2973 = vunpack.c.l.b16 %v655
        %v2974 = vunpack.c.h.b16 %v655
        %v2975 = vunpack.c.l.b16 %v656
        %v2976 = vunpack.c.h.b16 %v656
        %v2977 = vunpack.c.l.b16 %v657
        %v2978 = vunpack.c.h.b16 %v657
        %v2979 = vunpack.c.l.b16 %v658
        %v2980 = vunpack.c.h.b16 %v658
        %v2981 = vunpack.c.l.b16 %v659
        %v2982 = vunpack.c.h.b16 %v659
        %v2983 = vunpack.c.l.b16 %v660
        %v2984 = vunpack.c.h.b16 %v660
        %v2985 = vunpack.c.l.b16 %v661
        %v2986 = vunpack.c.h.b16 %v661
        %v2987 = vunpack.c.l.b16 %v662
        %v2988 = vunpack.c.h.b16 %v662
        %v2989 = vunpack.c.l.b16 %v663
        %v2990 = vunpack.c.h.b16 %v663
        %v2991 = vunpack.c.l.b16 %v664
        %v2992 = vunpack.c.h.b16 %v664
        %v2993 = vunpack.c.l.b16 %v665
        %v2994 = vunpack.c.h.b16 %v665
        %v2995 = vunpack.c.l.b16 %v666
        %v2996 = vunpack.c.h.b16 %v666
        %v2997 = vunpack.c.l.b16 %v667
        %v2998 = vunpack.c.h.b16 %v667
        %v2999 = vunpack.c.l.b16 %v668
        %v3000 = vunpack.c.h.b16 %v668
        %v3001 = vunpack.c.l.b16 %v669
        %v3002 = vunpack.c.h.b16 %v669
        %v3003 = vunpack.c.l.b16 %v670
        %v3004 = vunpack.c.h.b16 %v670
        %v3005 = vunpack.c.l.b16 %v671
        %v3006 = vunpack.c.h.b16 %v671
        %v3007 = vunpack.c.l.b16 %v672
        %v3008 = vunpack.c.h.b16 %v672
        %v3009 = vunpack.c.l.b16 %v673
        %v3010 = vunpack.c.h.b16 %v673
        %v3011 = vunpack.c.l.b16 %v674
        %v3012 = vunpack.c.h.b16 %v674
        %v3013 = vunpack.c.l.b16 %v675
        %v3014 = vunpack.c.h.b16 %v675
        %v3015 = vunpack.c.l.b16 %v676
        %v3016 = vunpack.c.h.b16 %v676
        %v3017 = vunpack.c.l.b16 %v677
        %v3018 = vunpack.c.h.b16 %v677
        %v3019 = vunpack.c.l.b16 %v678
        %v3020 = vunpack.c.h.b16 %v678
        %v3021 = vunpack.c.l.b16 %v679
        %v3022 = vunpack.c.h.b16 %v679
        %v3023 = vunpack.c.l.b16 %v680
        %v3024 = vunpack.c.h.b16 %v680
        %v3025 = vunpack.c.l.b16 %v681
        %v3026 = vunpack.c.h.b16 %v681
        %v3027 = vunpack.c.l.b16 %v682
        %v3028 = vunpack.c.h.b16 %v682
        %v3029 = vunpack.c.l.b16 %v683
        %v3030 = vunpack.c.h.b16 %v683
        %v3031 = vunpack.c.l.b16 %v684
        %v3032 = vunpack.c.h.b16 %v684
        %v3033 = vunpack.c.l.b16 %v685
        %v3034 = vunpack.c.h.b16 %v685
        %v3035 = vunpack.c.l.b16 %v686
        %v3036 = vunpack.c.h.b16 %v686
        %v3037 = vunpack.c.l.b16 %v687
        %v3038 = vunpack.c.h.b16 %v687
        %v3039 = vunpack.c.l.b16 %v688
        %v3040 = vunpack.c.h.b16 %v688
        %v3041 = vunpack.c.l.b16 %v689
        %v3042 = vunpack.c.h.b16 %v689
        %v3043 = vunpack.c.l.b16 %v690
        %v3044 = vunpack.c.h.b16 %v690
        %v3045 = vunpack.c.l.b16 %v691
        %v3046 = vunpack.c.h.b16 %v691
        %v3047 = vunpack.c.l.b16 %v692
        %v3048 = vunpack.c.h.b16 %v692
        %v3049 = vunpack.c.l.b16 %v693
        %v3050 = vunpack.c.h.b16 %v693
        %v3051 = vunpack.c.l.b16 %v694
        %v3052 = vunpack.c.h.b16 %v694
        %v3053 = vunpack.c.l.b16 %v695
        %v3054 = vunpack.c.h.b16 %v695
        %v3055 = vunpack.c.l.b16 %v696
        %v3056 = vunpack.c.h.b16 %v696
        %v3057 = vunpack.c.l.b16 %v697
        %v3058 = vunpack.c.h.b16 %v697
        %v3059 = vunpack.c.l.b16 %v698
        %v3060 = vunpack.c.h.b16 %v698
        %v3061 = vunpack.c.l.b16 %v699
        %v3062 = vunpack.c.h.b16 %v699
        %v3063 = vunpack.c.l.b16 %v700
        %v3064 = vunpack.c.h.b16 %v700
        %v3065 = vunpack.c.l.b16 %v701
        %v3066 = vunpack.c.h.b16 %v701
        %v3067 = vunpack.c.l.b16 %v702
        %v3068 = vunpack.c.h.b16 %v702
        %v3069 = vunpack.c.l.b16 %v703
        %v3070 = vunpack.c.h.b16 %v703
        %v3071 = vunpack.c.l.b16 %v704
        %v3072 = vunpack.c.h.b16 %v704
        %v3073 = vunpack.c.l.b16 %v705
        %v3074 = vunpack.c.h.b16 %v705
        %v3075 = vunpack.c.l.b16 %v706
        %v3076 = vunpack.c.h.b16 %v706
        %v3077 = vunpack.c.l.b16 %v707
        %v3078 = vunpack.c.h.b16 %v707
        %v3079 = vunpack.c.l.b16 %v708
        %v3080 = vunpack.c.h.b16 %v708
        %v3081 = vunpack.c.l.b16 %v709
        %v3082 = vunpack.c.h.b16 %v709
        %v3083 = vunpack.c.l.b16 %v710
        %v3084 = vunpack.c.h.b16 %v710
        %v3085 = vunpack.c.l.b16 %v711
        %v3086 = vunpack.c.h.b16 %v711
        %v3087 = vunpack.c.l.b16 %v712
        %v3088 = vunpack.c.h.b16 %v712
        %v3089 = vunpack.c.l.b16 %v713
        %v3090 = vunpack.c.h.b16 %v713
        %v3091 = vunpack.c.l.b16 %v714
        %v3092 = vunpack.c.h.b16 %v714
        %v3093 = vunpack.c.l.b16 %v715
        %v3094 = vunpack.c.h.b16 %v715
        %v3095 = vunpack.c.l.b16 %v716
        %v3096 = vunpack.c.h.b16 %v716
        %v3097 = vunpack.c.l.b16 %v717
        %v3098 = vunpack.c.h.b16 %v717
        %v3099 = vunpack.c.l.b16 %v718
        %v3100 = vunpack.c.h.b16 %v718
        %v3101 = vunpack.c.l.b16 %v719
        %v3102 = vunpack.c.h.b16 %v719
        %v3103 = vunpack.c.l.b16 %v720
        %v3104 = vunpack.c.h.b16 %v720
        %v3105 = vunpack.c.l.b16 %v721
        %v3106 = vunpack.c.h.b16 %v721
        %v3107 = vunpack.c.l.b16 %v722
        %v3108 = vunpack.c.h.b16 %v722
        %v3109 = vunpack.c.l.b16 %v723
        %v3110 = vunpack.c.h.b16 %v723
        %v3111 = vunpack.c.l.b16 %v724
        %v3112 = vunpack.c.h.b16 %v724
        %v3113 = vunpack.c.l.b16 %v725
        %v3114 = vunpack.c.h.b16 %v725
        %v3115 = vunpack.c.l.b16 %v726
        %v3116 = vunpack.c.h.b16 %v726
        %v3117 = vunpack.c.l.b16 %v727
        %v3118 = vunpack.c.h.b16 %v727
        %v3119 = vunpack.c.l.b16 %v728
        %v3120 = vunpack.c.h.b16 %v728
        %v3121 = vunpack.c.l.b16 %v729
        %v3122 = vunpack.c.h.b16 %v729
        %v3123 = vunpack.c.l.b16 %v730
        %v3124 = vunpack.c.h.b16 %v730
        %v3125 = vunpack.c.l.b16 %v731
        %v3126 = vunpack.c.h.b16 %v731
        %v3127 = vunpack.c.l.b16 %v732
        %v3128 = vunpack.c.h.b16 %v732
        %v3129 = vunpack.c.l.b16 %v733
        %v3130 = vunpack.c.h.b16 %v733
        %v3131 = vunpack.c.l.b16 %v734
        %v3132 = vunpack.c.h.b16 %v734
        %v3133 = vunpack.c.l.b16 %v735
        %v3134 = vunpack.c.h.b16 %v735
        %v3135 = vunpack.c.l.b16 %v736
        %v3136 = vunpack.c.h.b16 %v736
        %v3137 = vunpack.c.l.b16 %v737
        %v3138 = vunpack.c.h.b16 %v737
        %v3139 = vunpack.c.l.b16 %v738
        %v3140 = vunpack.c.h.b16 %v738
        %v3141 = vunpack.c.l.b16 %v739
        %v3142 = vunpack.c.h.b16 %v739
        %v3143 = vunpack.c.l.b16 %v740
        %v3144 = vunpack.c.h.b16 %v740
        %v3145 = vunpack.c.l.b16 %v741
        %v3146 = vunpack.c.h.b16 %v741
        %v3147 = vunpack.c.l.b16 %v742
        %v3148 = vunpack.c.h.b16 %v742
        %v3149 = vunpack.c.l.b16 %v743
        %v3150 = vunpack.c.h.b16 %v743
        %v3151 = vunpack.c.l.b16 %v744
        %v3152 = vunpack.c.h.b16 %v744
        %v3153 = vunpack.c.l.b16 %v745
        %v3154 = vunpack.c.h.b16 %v745
        %v3155 = vunpack.c.l.b16 %v746
        %v3156 = vunpack.c.h.b16 %v746
        %v3157 = vunpack.c.l.b16 %v747
        %v3158 = vunpack.c.h.b16 %v747
        %v3159 = vunpack.c.l.b16 %v748
        %v3160 = vunpack.c.h.b16 %v748
        %v3161 = vunpack.c.l.b16 %v749
        %v3162 = vunpack.c.h.b16 %v749
        %v3163 = vunpack.c.l.b16 %v750
        %v3164 = vunpack.c.h.b16 %v750
        %v3165 = vunpack.c.l.b16 %v751
        %v3166 = vunpack.c.h.b16 %v751
        %v3167 = vunpack.c.l.b16 %v752
        %v3168 = vunpack.c.h.b16 %v752
        %v3169 = vunpack.c.l.b16 %v753
        %v3170 = vunpack.c.h.b16 %v753
        %v3171 = vunpack.c.l.b16 %v754
        %v3172 = vunpack.c.h.b16 %v754
        %v3173 = vunpack.c.l.b16 %v755
        %v3174 = vunpack.c.h.b16 %v755
        %v3175 = vunpack.c.l.b16 %v756
        %v3176 = vunpack.c.h.b16 %v756
        %v3177 = vunpack.c.l.b16 %v757
        %v3178 = vunpack.c.h.b16 %v757
        %v3179 = vunpack.c.l.b16 %v758
        %v3180 = vunpack.c.h.b16 %v758
        %v3181 = vunpack.c.l.b16 %v759
        %v3182 = vunpack.c.h.b16 %v759
        %v3183 = vunpack.c.l.b16 %v760
        %v3184 = vunpack.c.h.b16 %v760
        %v3185 = vunpack.c.l.b16 %v761
        %v3186 = vunpack.c.h.b16 %v761
        %v3187 = vunpack.c.l.b16 %v762
        %v3188 = vunpack.c.h.b16 %v762
        %v3189 = vunpack.c.l.b16 %v763
        %v3190 = vunpack.c.h.b16 %v763
        %v3191 = vunpack.c.l.b16 %v764
        %v3192 = vunpack.c.h.b16 %v764
        %v3193 = vunpack.c.l.b16 %v765
        %v3194 = vunpack.c.h.b16 %v765
        %v3195 = vunpack.c.l.b16 %v766
        %v3196 = vunpack.c.h.b16 %v766
        %v3197 = vunpack.c.l.b16 %v767
        %v3198 = vunpack.c.h.b16 %v767
        %v3199 = vunpack.c.l.b16 %v768
        %v3200 = vunpack.c.h.b16 %v768
        %v3201 = vunpack.c.l.b16 %v769
        %v3202 = vunpack.c.h.b16 %v769
        %v3203 = vunpack.c.l.b16 %v770
        %v3204 = vunpack.c.h.b16 %v770
        %v3205 = vunpack.c.l.b16 %v771
        %v3206 = vunpack.c.h.b16 %v771
        %v3207 = vunpack.c.l.b16 %v772
        %v3208 = vunpack.c.h.b16 %v772
        %v3209 = vunpack.c.l.b16 %v773
        %v3210 = vunpack.c.h.b16 %v773
        %v3211 = vunpack.c.l.b16 %v774
        %v3212 = vunpack.c.h.b16 %v774
        %v3213 = vunpack.c.l.b16 %v775
        %v3214 = vunpack.c.h.b16 %v775
        %v3215 = vunpack.c.l.b16 %v776
        %v3216 = vunpack.c.h.b16 %v776
        %v3217 = vunpack.c.l.b16 %v777
        %v3218 = vunpack.c.h.b16 %v777
        %v3219 = vunpack.c.l.b16 %v778
        %v3220 = vunpack.c.h.b16 %v778
        %v3221 = vunpack.c.l.b16 %v779
        %v3222 = vunpack.c.h.b16 %v779
        %v3223 = vunpack.c.l.b16 %v780
        %v3224 = vunpack.c.h.b16 %v780
        %v3225 = vunpack.c.l.b16 %v781
        %v3226 = vunpack.c.h.b16 %v781
        %v3227 = vunpack.c.l.b16 %v782
        %v3228 = vunpack.c.h.b16 %v782
        %v3229 = vunpack.c.l.b16 %v783
        %v3230 = vunpack.c.h.b16 %v783
        %v3231 = vunpack.c.l.b16 %v784
        %v3232 = vunpack.c.h.b16 %v784
        %v3233 = vunpack.c.l.b16 %v785
        %v3234 = vunpack.c.h.b16 %v785
        %v3235 = vunpack.c.l.b16 %v786
        %v3236 = vunpack.c.h.b16 %v786
        %v3237 = vunpack.c.l.b16 %v787
        %v3238 = vunpack.c.h.b16 %v787
        %v3239 = vunpack.c.l.b16 %v788
        %v3240 = vunpack.c.h.b16 %v788
        %v3241 = vunpack.c.l.b16 %v789
        %v3242 = vunpack.c.h.b16 %v789
        %v3243 = vunpack.c.l.b16 %v790
        %v3244 = vunpack.c.h.b16 %v790
        %v3245 = vunpack.c.l.b16 %v791
        %v3246 = vunpack.c.h.b16 %v791
        %v3247 = vunpack.c.l.b16 %v792
        %v3248 = vunpack.c.h.b16 %v792
        %v3249 = vunpack.c.l.b16 %v793
        %v3250 = vunpack.c.h.b16 %v793
        %v3251 = vunpack.c.l.b16 %v794
        %v3252 = vunpack.c.h.b16 %v794
        %v3253 = vunpack.c.l.b16 %v795
        %v3254 = vunpack.c.h.b16 %v795
        %v3255 = vunpack.c.l.b16 %v796
        %v3256 = vunpack.c.h.b16 %v796
        %v3257 = vunpack.c.l.b16 %v797
        %v3258 = vunpack.c.h.b16 %v797
        %v3259 = vunpack.c.l.b16 %v798
        %v3260 = vunpack.c.h.b16 %v798
        %v3261 = vunpack.c.l.b16 %v799
        %v3262 = vunpack.c.h.b16 %v799
        %v3263 = vunpack.c.l.b16 %v800
        %v3264 = vunpack.c.h.b16 %v800
        %v3265 = vunpack.c.l.b16 %v801
        %v3266 = vunpack.c.h.b16 %v801
        %v3267 = vunpack.c.l.b16 %v802
        %v3268 = vunpack.c.h.b16 %v802
        %v3269 = vunpack.c.l.b16 %v803
        %v3270 = vunpack.c.h.b16 %v803
        %v3271 = vunpack.c.l.b16 %v804
        %v3272 = vunpack.c.h.b16 %v804
        %v3273 = vunpack.c.l.b16 %v805
        %v3274 = vunpack.c.h.b16 %v805
        %v3275 = vunpack.c.l.b16 %v806
        %v3276 = vunpack.c.h.b16 %v806
        %v3277 = vunpack.c.l.b16 %v807
        %v3278 = vunpack.c.h.b16 %v807
        %v3279 = vunpack.c.l.b16 %v808
        %v3280 = vunpack.c.h.b16 %v808
        %v3281 = vunpack.c.l.b16 %v809
        %v3282 = vunpack.c.h.b16 %v809
        %v3283 = vunpack.c.l.b16 %v810
        %v3284 = vunpack.c.h.b16 %v810
        %v3285 = vunpack.c.l.b16 %v811
        %v3286 = vunpack.c.h.b16 %v811
        %v3287 = vunpack.c.l.b16 %v812
        %v3288 = vunpack.c.h.b16 %v812
        %v3289 = vunpack.c.l.b16 %v813
        %v3290 = vunpack.c.h.b16 %v813
        %v3291 = vunpack.c.l.b16 %v814
        %v3292 = vunpack.c.h.b16 %v814
        %v3293 = vunpack.c.l.b16 %v815
        %v3294 = vunpack.c.h.b16 %v815
        %v3295 = vunpack.c.l.b16 %v816
        %v3296 = vunpack.c.h.b16 %v816
        %v3297 = vunpack.c.l.b16 %v817
        %v3298 = vunpack.c.h.b16 %v817
        %v3299 = vunpack.c.l.b16 %v818
        %v3300 = vunpack.c.h.b16 %v818
        %v3301 = vunpack.c.l.b16 %v819
        %v3302 = vunpack.c.h.b16 %v819
        %v3303 = vunpack.c.l.b16 %v820
        %v3304 = vunpack.c.h.b16 %v820
        %v3305 = vunpack.c.l.b16 %v821
        %v3306 = vunpack.c.h.b16 %v821
        %v3307 = vunpack.c.l.b16 %v822
        %v3308 = vunpack.c.h.b16 %v822
        %v3309 = vunpack.c.l.b16 %v823
        %v3310 = vunpack.c.h.b16 %v823
        %v3311 = vunpack.c.l.b16 %v824
        %v3312 = vunpack.c.h.b16 %v824
        %v3313 = vunpack.c.l.b16 %v825
        %v3314 = vunpack.c.h.b16 %v825
        %v3315 = vunpack.c.l.b16 %v826
        %v3316 = vunpack.c.h.b16 %v826
        %v3317 = vunpack.c.l.b16 %v827
        %v3318 = vunpack.c.h.b16 %v827
        %v3319 = vunpack.c.l.b16 %v828
        %v3320 = vunpack.c.h.b16 %v828
        %v3321 = vunpack.c.l.b16 %v829
        %v3322 = vunpack.c.h.b16 %v829
        %v3323 = vunpack.c.l.b16 %v830
        %v3324 = vunpack.c.h.b16 %v830
        %v3325 = vunpack.c.l.b16 %v831
        %v3326 = vunpack.c.h.b16 %v831
        %v3327 = vunpack.c.l.b16 %v832
        %v3328 = vunpack.c.h.b16 %v832
        %v3329 = vunpack.c.l.b16 %v833
        %v3330 = vunpack.c.h.b16 %v833
        %v3331 = vunpack.c.l.b16 %v834
        %v3332 = vunpack.c.h.b16 %v834
        %v3333 = vunpack.c.l.b16 %v835
        %v3334 = vunpack.c.h.b16 %v835
        %v3335 = vunpack.c.l.b16 %v836
        %v3336 = vunpack.c.h.b16 %v836
        %v3337 = vunpack.c.l.b16 %v837
        %v3338 = vunpack.c.h.b16 %v837
        %v3339 = vunpack.c.l.b16 %v838
        %v3340 = vunpack.c.h.b16 %v838
        %v3341 = vunpack.c.l.b16 %v839
        %v3342 = vunpack.c.h.b16 %v839
        %v3343 = vunpack.c.l.b16 %v840
        %v3344 = vunpack.c.h.b16 %v840
        %v3345 = vunpack.c.l.b16 %v841
        %v3346 = vunpack.c.h.b16 %v841
        %v3347 = vunpack.c.l.b16 %v842
        %v3348 = vunpack.c.h.b16 %v842
        %v3349 = vunpack.c.l.b16 %v843
        %v3350 = vunpack.c.h.b16 %v843
        %v3351 = vunpack.c.l.b16 %v844
        %v3352 = vunpack.c.h.b16 %v844
        %v3353 = vunpack.c.l.b16 %v845
        %v3354 = vunpack.c.h.b16 %v845
        %v3355 = vunpack.c.l.b16 %v846
        %v3356 = vunpack.c.h.b16 %v846
        %v3357 = vunpack.c.l.b16 %v847
        %v3358 = vunpack.c.h.b16 %v847
        %v3359 = vunpack.c.l.b16 %v848
        %v3360 = vunpack.c.h.b16 %v848
        %v3361 = vunpack.c.l.b16 %v849
        %v3362 = vunpack.c.h.b16 %v849
        %v3363 = vunpack.c.l.b16 %v850
        %v3364 = vunpack.c.h.b16 %v850
        %v3365 = vunpack.c.l.b16 %v851
        %v3366 = vunpack.c.h.b16 %v851
        %v3367 = vunpack.c.l.b16 %v852
        %v3368 = vunpack.c.h.b16 %v852
        %v3369 = vunpack.c.l.b16 %v853
        %v3370 = vunpack.c.h.b16 %v853
        %v3371 = vunpack.c.l.b16 %v854
        %v3372 = vunpack.c.h.b16 %v854
        %v3373 = vunpack.c.l.b16 %v855
        %v3374 = vunpack.c.h.b16 %v855
        %v3375 = vunpack.c.l.b16 %v856
        %v3376 = vunpack.c.h.b16 %v856
        %v3377 = vunpack.c.l.b16 %v857
        %v3378 = vunpack.c.h.b16 %v857
        %v3379 = vunpack.c.l.b16 %v858
        %v3380 = vunpack.c.h.b16 %v858
        %v3381 = vunpack.c.l.b16 %v859
        %v3382 = vunpack.c.h.b16 %v859
        %v3383 = vunpack.c.l.b16 %v860
        %v3384 = vunpack.c.h.b16 %v860
        %v3385 = vunpack.c.l.b16 %v861
        %v3386 = vunpack.c.h.b16 %v861
        %v3387 = vunpack.c.l.b16 %v862
        %v3388 = vunpack.c.h.b16 %v862
        %v3389 = vunpack.c.l.b16 %v863
        %v3390 = vunpack.c.h.b16 %v863
        %v3391 = vunpack.c.l.b16 %v864
        %v3392 = vunpack.c.h.b16 %v864
        %v3393 = vunpack.c.l.b16 %v865
        %v3394 = vunpack.c.h.b16 %v865
        %v3395 = vunpack.c.l.b16 %v866
        %v3396 = vunpack.c.h.b16 %v866
        %v3397 = vunpack.c.l.b16 %v867
        %v3398 = vunpack.c.h.b16 %v867
        %v3399 = vunpack.c.l.b16 %v868
        %v3400 = vunpack.c.h.b16 %v868
        %v3401 = vunpack.c.l.b16 %v869
        %v3402 = vunpack.c.h.b16 %v869
        %v3403 = vunpack.c.l.b16 %v870
        %v3404 = vunpack.c.h.b16 %v870
        %v3405 = vunpack.c.l.b16 %v871
        %v3406 = vunpack.c.h.b16 %v871
        %v3407 = vunpack.c.l.b16 %v872
        %v3408 = vunpack.c.h.b16 %v872
        %v3409 = vunpack.c.l.b16 %v873
        %v3410 = vunpack.c.h.b16 %v873
        %v3411 = vunpack.c.l.b16 %v874
        %v3412 = vunpack.c.h.b16 %v874
        %v3413 = vunpack.c.l.b16 %v875
        %v3414 = vunpack.c.h.b16 %v875
        %v3415 = vunpack.c.l.b16 %v876
        %v3416 = vunpack.c.h.b16 %v876
        %v3417 = vunpack.c.l.b16 %v877
        %v3418 = vunpack.c.h.b16 %v877
        %v3419 = vunpack.c.l.b16 %v878
        %v3420 = vunpack.c.h.b16 %v878
        %v3421 = vunpack.c.l.b16 %v879
        %v3422 = vunpack.c.h.b16 %v879
        %v3423 = vunpack.c.l.b16 %v880
        %v3424 = vunpack.c.h.b16 %v880
        %v3425 = vunpack.c.l.b16 %v881
        %v3426 = vunpack.c.h.b16 %v881
        %v3427 = vunpack.c.l.b16 %v882
        %v3428 = vunpack.c.h.b16 %v882
        %v3429 = vunpack.c.l.b16 %v883
        %v3430 = vunpack.c.h.b16 %v883
        %v3431 = vunpack.c.l.b16 %v884
        %v3432 = vunpack.c.h.b16 %v884
        %v3433 = vunpack.c.l.b16 %v885
        %v3434 = vunpack.c.h.b16 %v885
        %v3435 = vunpack.c.l.b16 %v886
        %v3436 = vunpack.c.h.b16 %v886
        %v3437 = vunpack.c.l.b16 %v887
        %v3438 = vunpack.c.h.b16 %v887
        %v3439 = vunpack.c.l.b16 %v888
        %v3440 = vunpack.c.h.b16 %v888
        %v3441 = vunpack.c.l.b16 %v889
        %v3442 = vunpack.c.h.b16 %v889
        %v3443 = vunpack.c.l.b16 %v890
        %v3444 = vunpack.c.h.b16 %v890
        %v3445 = vunpack.c.l.b16 %v891
        %v3446 = vunpack.c.h.b16 %v891
        %v3447 = vunpack.c.l.b16 %v892
        %v3448 = vunpack.c.h.b16 %v892
        %v3449 = vunpack.c.l.b16 %v893
        %v3450 = vunpack.c.h.b16 %v893
        %v3451 = vunpack.c.l.b16 %v894
        %v3452 = vunpack.c.h.b16 %v894
        %v3453 = vunpack.c.l.b16 %v895
        %v3454 = vunpack.c.h.b16 %v895
        %v3455 = vunpack.c.l.b16 %v896
        %v3456 = vunpack.c.h.b16 %v896
        %v3457 = vunpack.c.l.b16 %v897
        %v3458 = vunpack.c.h.b16 %v897
        %v3459 = vunpack.c.l.b16 %v898
        %v3460 = vunpack.c.h.b16 %v898
        %v3461 = vunpack.c.l.b16 %v899
        %v3462 = vunpack.c.h.b16 %v899
        %v3463 = vunpack.c.l.b16 %v900
        %v3464 = vunpack.c.h.b16 %v900
        %v3465 = vunpack.c.l.b16 %v901
        %v3466 = vunpack.c.h.b16 %v901
        %v3467 = vunpack.c.l.b16 %v902
        %v3468 = vunpack.c.h.b16 %v902
        %v3469 = vunpack.c.l.b16 %v903
        %v3470 = vunpack.c.h.b16 %v903
        %v3471 = vunpack.c.l.b16 %v904
        %v3472 = vunpack.c.h.b16 %v904
        %v3473 = vunpack.c.l.b16 %v905
        %v3474 = vunpack.c.h.b16 %v905
        %v3475 = vunpack.c.l.b16 %v906
        %v3476 = vunpack.c.h.b16 %v906
        %v3477 = vunpack.c.l.b16 %v907
        %v3478 = vunpack.c.h.b16 %v907
        %v3479 = vunpack.c.l.b16 %v908
        %v3480 = vunpack.c.h.b16 %v908
        %v3481 = vunpack.c.l.b16 %v909
        %v3482 = vunpack.c.h.b16 %v909
        %v3483 = vunpack.c.l.b16 %v910
        %v3484 = vunpack.c.h.b16 %v910
        %v3485 = vunpack.c.l.b16 %v911
        %v3486 = vunpack.c.h.b16 %v911
        %v3487 = vunpack.c.l.b16 %v912
        %v3488 = vunpack.c.h.b16 %v912
        %v3489 = vunpack.c.l.b16 %v913
        %v3490 = vunpack.c.h.b16 %v913
        %v3491 = vunpack.c.l.b16 %v914
        %v3492 = vunpack.c.h.b16 %v914
        %v3493 = vunpack.c.l.b16 %v915
        %v3494 = vunpack.c.h.b16 %v915
        %v3495 = vunpack.c.l.b16 %v916
        %v3496 = vunpack.c.h.b16 %v916
        %v3497 = vunpack.c.l.b16 %v917
        %v3498 = vunpack.c.h.b16 %v917
        %v3499 = vunpack.c.l.b16 %v918
        %v3500 = vunpack.c.h.b16 %v918
        %v3501 = vunpack.c.l.b16 %v919
        %v3502 = vunpack.c.h.b16 %v919
        %v3503 = vunpack.c.l.b16 %v920
        %v3504 = vunpack.c.h.b16 %v920
        %v3505 = vunpack.c.l.b16 %v921
        %v3506 = vunpack.c.h.b16 %v921
        %v3507 = vunpack.c.l.b16 %v922
        %v3508 = vunpack.c.h.b16 %v922
        %v3509 = vunpack.c.l.b16 %v923
        %v3510 = vunpack.c.h.b16 %v923
        %v3511 = vunpack.c.l.b16 %v924
        %v3512 = vunpack.c.h.b16 %v924
        %v3513 = vunpack.c.l.b16 %v925
        %v3514 = vunpack.c.h.b16 %v925
        %v3515 = vunpack.c.l.b16 %v926
        %v3516 = vunpack.c.h.b16 %v926
        %v3517 = vunpack.c.l.b16 %v927
        %v3518 = vunpack.c.h.b16 %v927
        %v3519 = vunpack.c.l.b16 %v928
        %v3520 = vunpack.c.h.b16 %v928
        %v3521 = vunpack.c.l.b16 %v929
        %v3522 = vunpack.c.h.b16 %v929
        %v3523 = vunpack.c.l.b16 %v930
        %v3524 = vunpack.c.h.b16 %v930
        %v3525 = vunpack.c.l.b16 %v931
        %v3526 = vunpack.c.h.b16 %v931
        %v3527 = vunpack.c.l.b16 %v932
        %v3528 = vunpack.c.h.b16 %v932
        %v3529 = vunpack.c.l.b16 %v933
        %v3530 = vunpack.c.h.b16 %v933
        %v3531 = vunpack.c.l.b16 %v934
        %v3532 = vunpack.c.h.b16 %v934
        %v3533 = vunpack.c.l.b16 %v935
        %v3534 = vunpack.c.h.b16 %v935
        %v3535 = vunpack.c.l.b16 %v936
        %v3536 = vunpack.c.h.b16 %v936
        %v3537 = vunpack.c.l.b16 %v937
        %v3538 = vunpack.c.h.b16 %v937
        %v3539 = vunpack.c.l.b16 %v938
        %v3540 = vunpack.c.h.b16 %v938
        %v3541 = vunpack.c.l.b16 %v939
        %v3542 = vunpack.c.h.b16 %v939
        %v3543 = vunpack.c.l.b16 %v940
        %v3544 = vunpack.c.h.b16 %v940
        %v3545 = vunpack.c.l.b16 %v941
        %v3546 = vunpack.c.h.b16 %v941
        %v3547 = vunpack.c.l.b16 %v942
        %v3548 = vunpack.c.h.b16 %v942
        %v3549 = vunpack.c.l.b16 %v943
        %v3550 = vunpack.c.h.b16 %v943
        %v3551 = vunpack.c.l.b16 %v944
        %v3552 = vunpack.c.h.b16 %v944
        %v3553 = vunpack.c.l.b16 %v945
        %v3554 = vunpack.c.h.b16 %v945
        %v3555 = vunpack.c.l.b16 %v946
        %v3556 = vunpack.c.h.b16 %v946
        %v3557 = vunpack.c.l.b16 %v947
        %v3558 = vunpack.c.h.b16 %v947
        %v3559 = vunpack.c.l.b16 %v948
        %v3560 = vunpack.c.h.b16 %v948
        %v3561 = vunpack.c.l.b16 %v949
        %v3562 = vunpack.c.h.b16 %v949
        %v3563 = vunpack.c.l.b16 %v950
        %v3564 = vunpack.c.h.b16 %v950
        %v3565 = vunpack.c.l.b16 %v951
        %v3566 = vunpack.c.h.b16 %v951
        %v3567 = vunpack.c.l.b16 %v952
        %v3568 = vunpack.c.h.b16 %v952
        %v3569 = vunpack.c.l.b16 %v953
        %v3570 = vunpack.c.h.b16 %v953
        %v3571 = vunpack.c.l.b16 %v954
        %v3572 = vunpack.c.h.b16 %v954
        %v3573 = vunpack.c.l.b16 %v955
        %v3574 = vunpack.c.h.b16 %v955
        %v3575 = vunpack.c.l.b16 %v956
        %v3576 = vunpack.c.h.b16 %v956
        %v3577 = vunpack.c.l.b16 %v957
        %v3578 = vunpack.c.h.b16 %v957
        %v3579 = vunpack.c.l.b16 %v958
        %v3580 = vunpack.c.h.b16 %v958
        %v3581 = vunpack.c.l.b16 %v959
        %v3582 = vunpack.c.h.b16 %v959
        %v3583 = vunpack.c.l.b16 %v960
        %v3584 = vunpack.c.h.b16 %v960
        %v3585 = vunpack.c.l.b16 %v961
        %v3586 = vunpack.c.h.b16 %v961
        %v3587 = vunpack.c.l.b16 %v962
        %v3588 = vunpack.c.h.b16 %v962
        %v3589 = vunpack.c.l.b16 %v963
        %v3590 = vunpack.c.h.b16 %v963
        %v3591 = vunpack.c.l.b16 %v964
        %v3592 = vunpack.c.h.b16 %v964
        %v3593 = vunpack.c.l.b16 %v965
        %v3594 = vunpack.c.h.b16 %v965
        %v3595 = vunpack.c.l.b16 %v966
        %v3596 = vunpack.c.h.b16 %v966
        %v3597 = vunpack.c.l.b16 %v967
        %v3598 = vunpack.c.h.b16 %v967
        %v3599 = vunpack.c.l.b16 %v968
        %v3600 = vunpack.c.h.b16 %v968
        %v3601 = vunpack.c.l.b16 %v969
        %v3602 = vunpack.c.h.b16 %v969
        %v3603 = vunpack.c.l.b16 %v970
        %v3604 = vunpack.c.h.b16 %v970
        %v3605 = vunpack.c.l.b16 %v971
        %v3606 = vunpack.c.h.b16 %v971
        %v3607 = vunpack.c.l.b16 %v972
        %v3608 = vunpack.c.h.b16 %v972
        %v3609 = vunpack.c.l.b16 %v973
        %v3610 = vunpack.c.h.b16 %v973
        %v3611 = vunpack.c.l.b16 %v974
        %v3612 = vunpack.c.h.b16 %v974
        %v3613 = vunpack.c.l.b16 %v975
        %v3614 = vunpack.c.h.b16 %v975
        %v3615 = vunpack.c.l.b16 %v976
        %v3616 = vunpack.c.h.b16 %v976
        %v3617 = vunpack.c.l.b16 %v977
        %v3618 = vunpack.c.h.b16 %v977
        %v3619 = vunpack.c.l.b16 %v978
        %v3620 = vunpack.c.h.b16 %v978
        %v3621 = vunpack.c.l.b16 %v979
        %v3622 = vunpack.c.h.b16 %v979
        %v3623 = vunpack.c.l.b16 %v980
        %v3624 = vunpack.c.h.b16 %v980
        %v3625 = vunpack.c.l.b16 %v981
        %v3626 = vunpack.c.h.b16 %v981
        %v3627 = vunpack.c.l.b16 %v982
        %v3628 = vunpack.c.h.b16 %v982
        %v3629 = vunpack.c.l.b16 %v983
        %v3630 = vunpack.c.h.b16 %v983
        %v3631 = vunpack.c.l.b16 %v984
        %v3632 = vunpack.c.h.b16 %v984
        %v3633 = vunpack.c.l.b16 %v985
        %v3634 = vunpack.c.h.b16 %v985
        %v3635 = vunpack.c.l.b16 %v986
        %v3636 = vunpack.c.h.b16 %v986
        %v3637 = vunpack.c.l.b16 %v987
        %v3638 = vunpack.c.h.b16 %v987
        %v3639 = vunpack.c.l.b16 %v988
        %v3640 = vunpack.c.h.b16 %v988
        %v3641 = vunpack.c.l.b16 %v989
        %v3642 = vunpack.c.h.b16 %v989
        %v3643 = vunpack.c.l.b16 %v990
        %v3644 = vunpack.c.h.b16 %v990
        %v3645 = vunpack.c.l.b16 %v991
        %v3646 = vunpack.c.h.b16 %v991
        %v3647 = vunpack.c.l.b16 %v992
        %v3648 = vunpack.c.h.b16 %v992
        %v3649 = vunpack.c.l.b16 %v993
        %v3650 = vunpack.c.h.b16 %v993
        %v3651 = vunpack.c.l.b16 %v994
        %v3652 = vunpack.c.h.b16 %v994
        %v3653 = vunpack.c.l.b16 %v995
        %v3654 = vunpack.c.h.b16 %v995
        %v3655 = vunpack.c.l.b16 %v996
        %v3656 = vunpack.c.h.b16 %v996
        %v3657 = vunpack.c.l.b16 %v997
        %v3658 = vunpack.c.h.b16 %v997
        %v3659 = vunpack.c.l.b16 %v998
        %v3660 = vunpack.c.h.b16 %v998
        %v3661 = vunpack.c.l.b16 %v999
        %v3662 = vunpack.c.h.b16 %v999
        %v3663 = vunpack.c.l.b16 %v1000
        %v3664 = vunpack.c.h.b16 %v1000
        %v3665 = vunpack.c.l.b16 %v1001
        %v3666 = vunpack.c.h.b16 %v1001
        %v3667 = vunpack.c.l.b16 %v1002
        %v3668 = vunpack.c.h.b16 %v1002
        %v3669 = vunpack.c.l.b16 %v1003
        %v3670 = vunpack.c.h.b16 %v1003
        %v3671 = vunpack.c.l.b16 %v1004
        %v3672 = vunpack.c.h.b16 %v1004
        %v3673 = vunpack.c.l.b16 %v1005
        %v3674 = vunpack.c.h.b16 %v1005
        %v3675 = vunpack.c.l.b16 %v1006
        %v3676 = vunpack.c.h.b16 %v1006
        %v3677 = vunpack.c.l.b16 %v1007
        %v3678 = vunpack.c.h.b16 %v1007
        %v3679 = vunpack.c.l.b16 %v1008
        %v3680 = vunpack.c.h.b16 %v1008
        %v3681 = vunpack.c.l.b16 %v1009
        %v3682 = vunpack.c.h.b16 %v1009
        %v3683 = vunpack.c.l.b16 %v1010
        %v3684 = vunpack.c.h.b16 %v1010
        %v3685 = vunpack.c.l.b16 %v1011
        %v3686 = vunpack.c.h.b16 %v1011
        %v3687 = vunpack.c.l.b16 %v1012
        %v3688 = vunpack.c.h.b16 %v1012
        %v3689 = vunpack.c.l.b16 %v1013
        %v3690 = vunpack.c.h.b16 %v1013
        %v3691 = vunpack.c.l.b16 %v1014
        %v3692 = vunpack.c.h.b16 %v1014
        %v3693 = vunpack.c.l.b16 %v1015
        %v3694 = vunpack.c.h.b16 %v1015
        %v3695 = vunpack.c.l.b16 %v1016
        %v3696 = vunpack.c.h.b16 %v1016
        %v3697 = vunpack.c.l.b16 %v1017
        %v3698 = vunpack.c.h.b16 %v1017
        %v3699 = vunpack.c.l.b16 %v1018
        %v3700 = vunpack.c.h.b16 %v1018
        %v3701 = vunpack.c.l.b16 %v1019
        %v3702 = vunpack.c.h.b16 %v1019
        %v3703 = vunpack.c.l.b16 %v1020
        %v3704 = vunpack.c.h.b16 %v1020
        %v3705 = vunpack.c.l.b16 %v1021
        %v3706 = vunpack.c.h.b16 %v1021
        %v3707 = vunpack.c.l.b16 %v1022
        %v3708 = vunpack.c.h.b16 %v1022
        %v3709 = vunpack.c.l.b16 %v1023
        %v3710 = vunpack.c.h.b16 %v1023
        %v3711 = vunpack.c.l.b16 %v1024
        %v3712 = vunpack.c.h.b16 %v1024
        %v3713 = vunpack.c.l.b16 %v1025
        %v3714 = vunpack.c.h.b16 %v1025
        %v3715 = vunpack.c.l.b16 %v1026
        %v3716 = vunpack.c.h.b16 %v1026
        %v3717 = vunpack.c.l.b16 %v1027
        %v3718 = vunpack.c.h.b16 %v1027
        %v3719 = vunpack.c.l.b16 %v1028
        %v3720 = vunpack.c.h.b16 %v1028
        %v3721 = vunpack.c.l.b16 %v1029
        %v3722 = vunpack.c.h.b16 %v1029
        %v3723 = vunpack.c.l.b16 %v1030
        %v3724 = vunpack.c.h.b16 %v1030
        %v3725 = vunpack.c.l.b16 %v1031
        %v3726 = vunpack.c.h.b16 %v1031
        %v3727 = vunpack.c.l.b16 %v1032
        %v3728 = vunpack.c.h.b16 %v1032
        %v3729 = vunpack.c.l.b16 %v1033
        %v3730 = vunpack.c.h.b16 %v1033
        %v3731 = vunpack.c.l.b16 %v1034
        %v3732 = vunpack.c.h.b16 %v1034
        %v3733 = vunpack.c.l.b16 %v1035
        %v3734 = vunpack.c.h.b16 %v1035
        %v3735 = vunpack.c.l.b16 %v1036
        %v3736 = vunpack.c.h.b16 %v1036
        %v3737 = vunpack.c.l.b16 %v1037
        %v3738 = vunpack.c.h.b16 %v1037
        %v3739 = vunpack.c.l.b16 %v1038
        %v3740 = vunpack.c.h.b16 %v1038
        %v3741 = vunpack.c.l.b16 %v1039
        %v3742 = vunpack.c.h.b16 %v1039
        %v3743 = vunpack.c.l.b16 %v1040
        %v3744 = vunpack.c.h.b16 %v1040
        %v3745 = vunpack.c.l.b16 %v1041
        %v3746 = vunpack.c.h.b16 %v1041
        %v3747 = vunpack.c.l.b16 %v1042
        %v3748 = vunpack.c.h.b16 %v1042
        %v3749 = vunpack.c.l.b16 %v1043
        %v3750 = vunpack.c.h.b16 %v1043
        %v3751 = vunpack.c.l.b16 %v1044
        %v3752 = vunpack.c.h.b16 %v1044
        %v3753 = vunpack.c.l.b16 %v1045
        %v3754 = vunpack.c.h.b16 %v1045
        %v3755 = vunpack.c.l.b16 %v1046
        %v3756 = vunpack.c.h.b16 %v1046
        %v3757 = vunpack.c.l.b16 %v1047
        %v3758 = vunpack.c.h.b16 %v1047
        %v3759 = vunpack.c.l.b16 %v1048
        %v3760 = vunpack.c.h.b16 %v1048
        %v3761 = vunpack.c.l.b16 %v1049
        %v3762 = vunpack.c.h.b16 %v1049
        %v3763 = vunpack.c.l.b16 %v1050
        %v3764 = vunpack.c.h.b16 %v1050
        %v3765 = vunpack.c.l.b16 %v1051
        %v3766 = vunpack.c.h.b16 %v1051
        %v3767 = vunpack.c.l.b16 %v1052
        %v3768 = vunpack.c.h.b16 %v1052
        %v3769 = vunpack.c.l.b16 %v1053
        %v3770 = vunpack.c.h.b16 %v1053
        %v3771 = vunpack.c.l.b16 %v1054
        %v3772 = vunpack.c.h.b16 %v1054
        %v3773 = vunpack.c.l.b16 %v1055
        %v3774 = vunpack.c.h.b16 %v1055
        %v3775 = vunpack.c.l.b16 %v1056
        %v3776 = vunpack.c.h.b16 %v1056
        %v3777 = vunpack.c.l.b16 %v1057
        %v3778 = vunpack.c.h.b16 %v1057
        %v3779 = vunpack.c.l.b16 %v1058
        %v3780 = vunpack.c.h.b16 %v1058
        %v3781 = vunpack.c.l.b16 %v1059
        %v3782 = vunpack.c.h.b16 %v1059
        %v3783 = vunpack.c.l.b16 %v1060
        %v3784 = vunpack.c.h.b16 %v1060
        %v3785 = vunpack.c.l.b16 %v1061
        %v3786 = vunpack.c.h.b16 %v1061
        %v3787 = vunpack.c.l.b16 %v1062
        %v3788 = vunpack.c.h.b16 %v1062
        %v3789 = vunpack.c.l.b16 %v1063
        %v3790 = vunpack.c.h.b16 %v1063
        %v3791 = vunpack.c.l.b16 %v1064
        %v3792 = vunpack.c.h.b16 %v1064
        %v3793 = vunpack.c.l.b16 %v1065
        %v3794 = vunpack.c.h.b16 %v1065
        %v3795 = vunpack.c.l.b16 %v1066
        %v3796 = vunpack.c.h.b16 %v1066
        %v3797 = vunpack.c.l.b16 %v1067
        %v3798 = vunpack.c.h.b16 %v1067
        %v3799 = vunpack.c.l.b16 %v1068
        %v3800 = vunpack.c.h.b16 %v1068
        %v3801 = vunpack.c.l.b16 %v1069
        %v3802 = vunpack.c.h.b16 %v1069
        %v3803 = vunpack.c.l.b16 %v1070
        %v3804 = vunpack.c.h.b16 %v1070
        %v3805 = vunpack.c.l.b16 %v1071
        %v3806 = vunpack.c.h.b16 %v1071
        %v3807 = vunpack.c.l.b16 %v1072
        %v3808 = vunpack.c.h.b16 %v1072
        %v3809 = vunpack.c.l.b16 %v1073
        %v3810 = vunpack.c.h.b16 %v1073
        %v3811 = vunpack.c.l.b16 %v1074
        %v3812 = vunpack.c.h.b16 %v1074
        %v3813 = vunpack.c.l.b16 %v1075
        %v3814 = vunpack.c.h.b16 %v1075
        %v3815 = vunpack.c.l.b16 %v1076
        %v3816 = vunpack.c.h.b16 %v1076
        %v3817 = vunpack.c.l.b16 %v1077
        %v3818 = vunpack.c.h.b16 %v1077
        %v3819 = vunpack.c.l.b16 %v1078
        %v3820 = vunpack.c.h.b16 %v1078
        %v3821 = vunpack.c.l.b16 %v1079
        %v3822 = vunpack.c.h.b16 %v1079
        %v3823 = vunpack.c.l.b16 %v1080
        %v3824 = vunpack.c.h.b16 %v1080
        %v3825 = vunpack.c.l.b16 %v1081
        %v3826 = vunpack.c.h.b16 %v1081
        %v3827 = vunpack.c.l.b16 %v1082
        %v3828 = vunpack.c.h.b16 %v1082
        %v3829 = vunpack.c.l.b16 %v1083
        %v3830 = vunpack.c.h.b16 %v1083
        %v3831 = vunpack.c.l.b16 %v1084
        %v3832 = vunpack.c.h.b16 %v1084
        %v3833 = vunpack.c.l.b16 %v1085
        %v3834 = vunpack.c.h.b16 %v1085
        %v3835 = vunpack.c.l.b16 %v1086
        %v3836 = vunpack.c.h.b16 %v1086
        %v3837 = vunpack.c.l.b16 %v1087
        %v3838 = vunpack.c.h.b16 %v1087
        %v3839 = vunpack.c.l.b16 %v1088
        %v3840 = vunpack.c.h.b16 %v1088
        %v3841 = vunpack.c.l.b16 %v1089
        %v3842 = vunpack.c.h.b16 %v1089
        %v3843 = vunpack.c.l.b16 %v1090
        %v3844 = vunpack.c.h.b16 %v1090
        %v3845 = vunpack.c.l.b16 %v1091
        %v3846 = vunpack.c.h.b16 %v1091
        %v3847 = vunpack.c.l.b16 %v1092
        %v3848 = vunpack.c.h.b16 %v1092
        %v3849 = vunpack.c.l.b16 %v1093
        %v3850 = vunpack.c.h.b16 %v1093
        %v3851 = vunpack.c.l.b16 %v1094
        %v3852 = vunpack.c.h.b16 %v1094
        %v3853 = vunpack.c.l.b16 %v1095
        %v3854 = vunpack.c.h.b16 %v1095
        %v3855 = vunpack.c.l.b16 %v1096
        %v3856 = vunpack.c.h.b16 %v1096
        %v3857 = vunpack.c.l.b16 %v1097
        %v3858 = vunpack.c.h.b16 %v1097
        %v3859 = vunpack.c.l.b16 %v1098
        %v3860 = vunpack.c.h.b16 %v1098
        %v3861 = vunpack.c.l.b16 %v1099
        %v3862 = vunpack.c.h.b16 %v1099
        %v3863 = vunpack.c.l.b16 %v1100
        %v3864 = vunpack.c.h.b16 %v1100
        %v3865 = vunpack.c.l.b16 %v1101
        %v3866 = vunpack.c.h.b16 %v1101
        %v3867 = vunpack.c.l.b16 %v1102
        %v3868 = vunpack.c.h.b16 %v1102
        %v3869 = vunpack.c.l.b16 %v1103
        %v3870 = vunpack.c.h.b16 %v1103
        %v3871 = vunpack.c.l.b16 %v1104
        %v3872 = vunpack.c.h.b16 %v1104
        %v3873 = vunpack.c.l.b16 %v1105
        %v3874 = vunpack.c.h.b16 %v1105
        %v3875 = vunpack.c.l.b16 %v1106
        %v3876 = vunpack.c.h.b16 %v1106
        %v3877 = vunpack.c.l.b16 %v1107
        %v3878 = vunpack.c.h.b16 %v1107
        %v3879 = vunpack.c.l.b16 %v1108
        %v3880 = vunpack.c.h.b16 %v1108
        %v3881 = vunpack.c.l.b16 %v1109
        %v3882 = vunpack.c.h.b16 %v1109
        %v3883 = vunpack.c.l.b16 %v1110
        %v3884 = vunpack.c.h.b16 %v1110
        %v3885 = vunpack.c.l.b16 %v1111
        %v3886 = vunpack.c.h.b16 %v1111
        %v3887 = vunpack.c.l.b16 %v1112
        %v3888 = vunpack.c.h.b16 %v1112
        %v3889 = vunpack.c.l.b16 %v1113
        %v3890 = vunpack.c.h.b16 %v1113
        %v3891 = vunpack.c.l.b16 %v1114
        %v3892 = vunpack.c.h.b16 %v1114
        %v3893 = vunpack.c.l.b16 %v1115
        %v3894 = vunpack.c.h.b16 %v1115
        %v3895 = vunpack.c.l.b16 %v1116
        %v3896 = vunpack.c.h.b16 %v1116
        %v3897 = vunpack.c.l.b16 %v1117
        %v3898 = vunpack.c.h.b16 %v1117
        %v3899 = vunpack.c.l.b16 %v1118
        %v3900 = vunpack.c.h.b16 %v1118
        %v3901 = vunpack.c.l.b16 %v1119
        %v3902 = vunpack.c.h.b16 %v1119
        %v3903 = vunpack.c.l.b16 %v1120
        %v3904 = vunpack.c.h.b16 %v1120
        %v3905 = vunpack.c.l.b16 %v1121
        %v3906 = vunpack.c.h.b16 %v1121
        %v3907 = vunpack.c.l.b16 %v1122
        %v3908 = vunpack.c.h.b16 %v1122
        %v3909 = vunpack.c.l.b16 %v1123
        %v3910 = vunpack.c.h.b16 %v1123
        %v3911 = vunpack.c.l.b16 %v1124
        %v3912 = vunpack.c.h.b16 %v1124
        %v3913 = vunpack.c.l.b16 %v1125
        %v3914 = vunpack.c.h.b16 %v1125
        %v3915 = vunpack.c.l.b16 %v1126
        %v3916 = vunpack.c.h.b16 %v1126
        %v3917 = vunpack.c.l.b16 %v1127
        %v3918 = vunpack.c.h.b16 %v1127
        %v3919 = vunpack.c.l.b16 %v1128
        %v3920 = vunpack.c.h.b16 %v1128
        %v3921 = vunpack.c.l.b16 %v1129
        %v3922 = vunpack.c.h.b16 %v1129
        %v3923 = vunpack.c.l.b16 %v1130
        %v3924 = vunpack.c.h.b16 %v1130
        %v3925 = vunpack.c.l.b16 %v1131
        %v3926 = vunpack.c.h.b16 %v1131
        %v3927 = vunpack.c.l.b16 %v1132
        %v3928 = vunpack.c.h.b16 %v1132
        %v3929 = vunpack.c.l.b16 %v1133
        %v3930 = vunpack.c.h.b16 %v1133
        %v3931 = vunpack.c.l.b16 %v1134
        %v3932 = vunpack.c.h.b16 %v1134
        %v3933 = vunpack.c.l.b16 %v1135
        %v3934 = vunpack.c.h.b16 %v1135
        %v3935 = vunpack.c.l.b16 %v1136
        %v3936 = vunpack.c.h.b16 %v1136
        %v3937 = vunpack.c.l.b16 %v1137
        %v3938 = vunpack.c.h.b16 %v1137
        %v3939 = vunpack.c.l.b16 %v1138
        %v3940 = vunpack.c.h.b16 %v1138
        %v3941 = vunpack.c.l.b16 %v1139
        %v3942 = vunpack.c.h.b16 %v1139
        %v3943 = vunpack.c.l.b16 %v1140
        %v3944 = vunpack.c.h.b16 %v1140
        %v3945 = vunpack.c.l.b16 %v1141
        %v3946 = vunpack.c.h.b16 %v1141
        %v3947 = vunpack.c.l.b16 %v1142
        %v3948 = vunpack.c.h.b16 %v1142
        %v3949 = vunpack.c.l.b16 %v1143
        %v3950 = vunpack.c.h.b16 %v1143
        %v3951 = vunpack.c.l.b16 %v1144
        %v3952 = vunpack.c.h.b16 %v1144
        %v3953 = vunpack.c.l.b16 %v1145
        %v3954 = vunpack.c.h.b16 %v1145
        %v3955 = vunpack.c.l.b16 %v1146
        %v3956 = vunpack.c.h.b16 %v1146
        %v3957 = vunpack.c.l.b16 %v1147
        %v3958 = vunpack.c.h.b16 %v1147
        %v3959 = vunpack.c.l.b16 %v1148
        %v3960 = vunpack.c.h.b16 %v1148
        %v3961 = vunpack.c.l.b16 %v1149
        %v3962 = vunpack.c.h.b16 %v1149
        %v3963 = vunpack.c.l.b16 %v1150
        %v3964 = vunpack.c.h.b16 %v1150
        %v3965 = vunpack.c.l.b16 %v1151
        %v3966 = vunpack.c.h.b16 %v1151
        %v3967 = vunpack.c.l.b16 %v1152
        %v3968 = vunpack.c.h.b16 %v1152
        %v3969 = vunpack.c.l.b16 %v1153
        %v3970 = vunpack.c.h.b16 %v1153
        %v3971 = vunpack.c.l.b16 %v1154
        %v3972 = vunpack.c.h.b16 %v1154
        %v3973 = vunpack.c.l.b16 %v1155
        %v3974 = vunpack.c.h.b16 %v1155
        %v3975 = vunpack.c.l.b16 %v1156
        %v3976 = vunpack.c.h.b16 %v1156
        %v3977 = vunpack.c.l.b16 %v1157
        %v3978 = vunpack.c.h.b16 %v1157
        %v3979 = vunpack.c.l.b16 %v1158
        %v3980 = vunpack.c.h.b16 %v1158
        %v3981 = vunpack.c.l.b16 %v1159
        %v3982 = vunpack.c.h.b16 %v1159
        %v3983 = vunpack.c.l.b16 %v1160
        %v3984 = vunpack.c.h.b16 %v1160
        %v3985 = vunpack.c.l.b16 %v1161
        %v3986 = vunpack.c.h.b16 %v1161
        %v3987 = vunpack.c.l.b16 %v1162
        %v3988 = vunpack.c.h.b16 %v1162
        %v3989 = vunpack.c.l.b16 %v1163
        %v3990 = vunpack.c.h.b16 %v1163
        %v3991 = vunpack.c.l.b16 %v1164
        %v3992 = vunpack.c.h.b16 %v1164
        %v3993 = vunpack.c.l.b16 %v1165
        %v3994 = vunpack.c.h.b16 %v1165
        %v3995 = vunpack.c.l.b16 %v1166
        %v3996 = vunpack.c.h.b16 %v1166
        %v3997 = vunpack.c.l.b16 %v1167
        %v3998 = vunpack.c.h.b16 %v1167
        %v3999 = vunpack.c.l.b16 %v1168
        %v4000 = vunpack.c.h.b16 %v1168
        %v4001 = vunpack.c.l.b16 %v1169
        %v4002 = vunpack.c.h.b16 %v1169
        %v4003 = vunpack.c.l.b16 %v1170
        %v4004 = vunpack.c.h.b16 %v1170
        %v4005 = vunpack.c.l.b16 %v1171
        %v4006 = vunpack.c.h.b16 %v1171
        %v4007 = vunpack.c.l.b16 %v1172
        %v4008 = vunpack.c.h.b16 %v1172
        %v4009 = vunpack.c.l.b16 %v1173
        %v4010 = vunpack.c.h.b16 %v1173
        %v4011 = vunpack.c.l.b16 %v1174
        %v4012 = vunpack.c.h.b16 %v1174
        %v4013 = vunpack.c.l.b16 %v1175
        %v4014 = vunpack.c.h.b16 %v1175
        %v4015 = vunpack.c.l.b16 %v1176
        %v4016 = vunpack.c.h.b16 %v1176
        %v4017 = vunpack.c.l.b16 %v1177
        %v4018 = vunpack.c.h.b16 %v1177
        %v4019 = vunpack.c.l.b16 %v1178
        %v4020 = vunpack.c.h.b16 %v1178
        %v4021 = vunpack.c.l.b16 %v1179
        %v4022 = vunpack.c.h.b16 %v1179
        %v4023 = vunpack.c.l.b16 %v1180
        %v4024 = vunpack.c.h.b16 %v1180
        %v4025 = vunpack.c.l.b16 %v1181
        %v4026 = vunpack.c.h.b16 %v1181
        %v4027 = vunpack.c.l.b16 %v1182
        %v4028 = vunpack.c.h.b16 %v1182
        %v4029 = vunpack.c.l.b16 %v1183
        %v4030 = vunpack.c.h.b16 %v1183
        %v4031 = vunpack.c.l.b16 %v1184
        %v4032 = vunpack.c.h.b16 %v1184
        %v4033 = vunpack.c.l.b16 %v1185
        %v4034 = vunpack.c.h.b16 %v1185
        %v4035 = vunpack.c.l.b16 %v1186
        %v4036 = vunpack.c.h.b16 %v1186
        %v4037 = vunpack.c.l.b16 %v1187
        %v4038 = vunpack.c.h.b16 %v1187
        %v4039 = vunpack.c.l.b16 %v1188
        %v4040 = vunpack.c.h.b16 %v1188
        %v4041 = vunpack.c.l.b16 %v1189
        %v4042 = vunpack.c.h.b16 %v1189
        %v4043 = vunpack.c.l.b16 %v1190
        %v4044 = vunpack.c.h.b16 %v1190
        %v4045 = vunpack.c.l.b16 %v1191
        %v4046 = vunpack.c.h.b16 %v1191
        %v4047 = vunpack.c.l.b16 %v1192
        %v4048 = vunpack.c.h.b16 %v1192
        %v4049 = vunpack.c.l.b16 %v1193
        %v4050 = vunpack.c.h.b16 %v1193
        %v4051 = vunpack.c.l.b16 %v1194
        %v4052 = vunpack.c.h.b16 %v1194
        %v4053 = vunpack.c.l.b16 %v1195
        %v4054 = vunpack.c.h.b16 %v1195
        %v4055 = vunpack.c.l.b16 %v1196
        %v4056 = vunpack.c.h.b16 %v1196
        %v4057 = vunpack.c.l.b16 %v1197
        %v4058 = vunpack.c.h.b16 %v1197
        %v4059 = vunpack.c.l.b16 %v1198
        %v4060 = vunpack.c.h.b16 %v1198
        %v4061 = vunpack.c.l.b16 %v1199
        %v4062 = vunpack.c.h.b16 %v1199
        %v4063 = vunpack.c.l.b16 %v1200
        %v4064 = vunpack.c.h.b16 %v1200
        %v4065 = vunpack.c.l.b16 %v1201
        %v4066 = vunpack.c.h.b16 %v1201
        %v4067 = vunpack.c.l.b16 %v1202
        %v4068 = vunpack.c.h.b16 %v1202
        %v4069 = vunpack.c.l.b16 %v1203
        %v4070 = vunpack.c.h.b16 %v1203
        %v4071 = vunpack.c.l.b16 %v1204
        %v4072 = vunpack.c.h.b16 %v1204
        %v4073 = vunpack.c.l.b16 %v1205
        %v4074 = vunpack.c.h.b16 %v1205
        %v4075 = vunpack.c.l.b16 %v1206
        %v4076 = vunpack.c.h.b16 %v1206
        %v4077 = vunpack.c.l.b16 %v1207
        %v4078 = vunpack.c.h.b16 %v1207
        %v4079 = vunpack.c.l.b16 %v1208
        %v4080 = vunpack.c.h.b16 %v1208
        %v4081 = vunpack.c.l.b16 %v1209
        %v4082 = vunpack.c.h.b16 %v1209
        %v4083 = vunpack.c.l.b16 %v1210
        %v4084 = vunpack.c.h.b16 %v1210
        %v4085 = vunpack.c.l.b16 %v1211
        %v4086 = vunpack.c.h.b16 %v1211
        %v4087 = vunpack.c.l.b16 %v1212
        %v4088 = vunpack.c.h.b16 %v1212
        %v4089 = vunpack.c.l.b16 %v1213
        %v4090 = vunpack.c.h.b16 %v1213
        %v4091 = vunpack.c.l.b16 %v1214
        %v4092 = vunpack.c.h.b16 %v1214
        %v4093 = vunpack.c.l.b16 %v1215
        %v4094 = vunpack.c.h.b16 %v1215
        %v4095 = vunpack.c.l.b16 %v1216
        %v4096 = vunpack.c.h.b16 %v1216
        %v4097 = vunpack.c.l.b16 %v1217
        %v4098 = vunpack.c.h.b16 %v1217
        %v4099 = vunpack.c.l.b16 %v1218
        %v4100 = vunpack.c.h.b16 %v1218
        %v4101 = vunpack.c.l.b16 %v1219
        %v4102 = vunpack.c.h.b16 %v1219
        %v4103 = vunpack.c.l.b16 %v1220
        %v4104 = vunpack.c.h.b16 %v1220
        %v4105 = vunpack.c.l.b16 %v1221
        %v4106 = vunpack.c.h.b16 %v1221
        %v4107 = vunpack.c.l.b16 %v1222
        %v4108 = vunpack.c.h.b16 %v1222
        %v4109 = vunpack.c.l.b16 %v1223
        %v4110 = vunpack.c.h.b16 %v1223
        %v4111 = vunpack.c.l.b16 %v1224
        %v4112 = vunpack.c.h.b16 %v1224
        %v4113 = vunpack.c.l.b16 %v1225
        %v4114 = vunpack.c.h.b16 %v1225
        %v4115 = vunpack.c.l.b16 %v1226
        %v4116 = vunpack.c.h.b16 %v1226
        %v4117 = vunpack.c.l.b16 %v1227
        %v4118 = vunpack.c.h.b16 %v1227
        %v4119 = vunpack.c.l.b16 %v1228
        %v4120 = vunpack.c.h.b16 %v1228
        %v4121 = vunpack.c.l.b16 %v1229
        %v4122 = vunpack.c.h.b16 %v1229
        %v4123 = vunpack.c.l.b16 %v1230
        %v4124 = vunpack.c.h.b16 %v1230
        %v4125 = vunpack.c.l.b16 %v1231
        %v4126 = vunpack.c.h.b16 %v1231
        %v4127 = vunpack.c.l.b16 %v1232
        %v4128 = vunpack.c.h.b16 %v1232
        %v4129 = vunpack.c.l.b16 %v1233
        %v4130 = vunpack.c.h.b16 %v1233
        %v4131 = vunpack.c.l.b16 %v1234
        %v4132 = vunpack.c.h.b16 %v1234
        %v4133 = vunpack.c.l.b16 %v1235
        %v4134 = vunpack.c.h.b16 %v1235
        %v4135 = vunpack.c.l.b16 %v1236
        %v4136 = vunpack.c.h.b16 %v1236
        %v4137 = vunpack.c.l.b16 %v1237
        %v4138 = vunpack.c.h.b16 %v1237
        %v4139 = vunpack.c.l.b16 %v1238
        %v4140 = vunpack.c.h.b16 %v1238
        %v4141 = vunpack.c.l.b16 %v1239
        %v4142 = vunpack.c.h.b16 %v1239
        %v4143 = vunpack.c.l.b16 %v1240
        %v4144 = vunpack.c.h.b16 %v1240
        %v4145 = vunpack.c.l.b16 %v1241
        %v4146 = vunpack.c.h.b16 %v1241
        %v4147 = vunpack.c.l.b16 %v1242
        %v4148 = vunpack.c.h.b16 %v1242
        %v4149 = vunpack.c.l.b16 %v1243
        %v4150 = vunpack.c.h.b16 %v1243
        %v4151 = vunpack.c.l.b16 %v1244
        %v4152 = vunpack.c.h.b16 %v1244
        %v4153 = vunpack.c.l.b16 %v1245
        %v4154 = vunpack.c.h.b16 %v1245
        %v4155 = vunpack.c.l.b16 %v1246
        %v4156 = vunpack.c.h.b16 %v1246
        %v4157 = vunpack.c.l.b16 %v1247
        %v4158 = vunpack.c.h.b16 %v1247
        %v4159 = vunpack.c.l.b16 %v1248
        %v4160 = vunpack.c.h.b16 %v1248
        %v4161 = vunpack.c.l.b16 %v1249
        %v4162 = vunpack.c.h.b16 %v1249
        %v4163 = vunpack.c.l.b16 %v1250
        %v4164 = vunpack.c.h.b16 %v1250
        %v4165 = vunpack.c.l.b16 %v1251
        %v4166 = vunpack.c.h.b16 %v1251
        %v4167 = vunpack.c.l.b16 %v1252
        %v4168 = vunpack.c.h.b16 %v1252
        %v4169 = vunpack.c.l.b16 %v1253
        %v4170 = vunpack.c.h.b16 %v1253
        %v4171 = vunpack.c.l.b16 %v1254
        %v4172 = vunpack.c.h.b16 %v1254
        %v4173 = vunpack.c.l.b16 %v1255
        %v4174 = vunpack.c.h.b16 %v1255
        %v4175 = vunpack.c.l.b16 %v1256
        %v4176 = vunpack.c.h.b16 %v1256
        %v4177 = vunpack.c.l.b16 %v1257
        %v4178 = vunpack.c.h.b16 %v1257
        %v4179 = vunpack.c.l.b16 %v1258
        %v4180 = vunpack.c.h.b16 %v1258
        %v4181 = vunpack.c.l.b16 %v1259
        %v4182 = vunpack.c.h.b16 %v1259
        %v4183 = vunpack.c.l.b16 %v1260
        %v4184 = vunpack.c.h.b16 %v1260
        %v4185 = vunpack.c.l.b16 %v1261
        %v4186 = vunpack.c.h.b16 %v1261
        %v4187 = vunpack.c.l.b16 %v1262
        %v4188 = vunpack.c.h.b16 %v1262
        %v4189 = vunpack.c.l.b16 %v1263
        %v4190 = vunpack.c.h.b16 %v1263
        %v4191 = vunpack.c.l.b16 %v1264
        %v4192 = vunpack.c.h.b16 %v1264
        %v4193 = vunpack.c.l.b16 %v1265
        %v4194 = vunpack.c.h.b16 %v1265
        %v4195 = vunpack.c.l.b16 %v1266
        %v4196 = vunpack.c.h.b16 %v1266
        %v4197 = vunpack.c.l.b16 %v1267
        %v4198 = vunpack.c.h.b16 %v1267
        %v4199 = vunpack.c.l.b16 %v1268
        %v4200 = vunpack.c.h.b16 %v1268
        %v4201 = vunpack.c.l.b16 %v1269
        %v4202 = vunpack.c.h.b16 %v1269
        %v4203 = vunpack.c.l.b16 %v1270
        %v4204 = vunpack.c.h.b16 %v1270
        %v4205 = vunpack.c.l.b16 %v1271
        %v4206 = vunpack.c.h.b16 %v1271
        %v4207 = vunpack.c.l.b16 %v1272
        %v4208 = vunpack.c.h.b16 %v1272
        %v4209 = vunpack.c.l.b16 %v1273
        %v4210 = vunpack.c.h.b16 %v1273
        %v4211 = vunpack.c.l.b16 %v1274
        %v4212 = vunpack.c.h.b16 %v1274
        %v4213 = vunpack.c.l.b16 %v1275
        %v4214 = vunpack.c.h.b16 %v1275
        %v4215 = vunpack.c.l.b16 %v1276
        %v4216 = vunpack.c.h.b16 %v1276
        %v4217 = vunpack.c.l.b16 %v1277
        %v4218 = vunpack.c.h.b16 %v1277
        %v4219 = vunpack.c.l.b16 %v1278
        %v4220 = vunpack.c.h.b16 %v1278
        %v4221 = vunpack.c.l.b16 %v1279
        %v4222 = vunpack.c.h.b16 %v1279
        %v4223 = vunpack.c.l.b16 %v1280
        %v4224 = vunpack.c.h.b16 %v1280
        %v4225 = vunpack.c.l.b16 %v1281
        %v4226 = vunpack.c.h.b16 %v1281
        %v4227 = vunpack.c.l.b16 %v1282
        %v4228 = vunpack.c.h.b16 %v1282
        %v4229 = vunpack.c.l.b16 %v1283
        %v4230 = vunpack.c.h.b16 %v1283
        %v4231 = vunpack.c.l.b16 %v1284
        %v4232 = vunpack.c.h.b16 %v1284
        %v4233 = vunpack.c.l.b16 %v1285
        %v4234 = vunpack.c.h.b16 %v1285
        %v4235 = vunpack.c.l.b16 %v1286
        %v4236 = vunpack.c.h.b16 %v1286
        %v4237 = vunpack.c.l.b16 %v1287
        %v4238 = vunpack.c.h.b16 %v1287
        %v4239 = vunpack.c.l.b16 %v1288
        %v4240 = vunpack.c.h.b16 %v1288
        %v4241 = vunpack.c.l.b16 %v1289
        %v4242 = vunpack.c.h.b16 %v1289
        %v4243 = vunpack.c.l.b16 %v1290
        %v4244 = vunpack.c.h.b16 %v1290
        %v4245 = vunpack.c.l.b16 %v1291
        %v4246 = vunpack.c.h.b16 %v1291
        %v4247 = vunpack.c.l.b16 %v1292
        %v4248 = vunpack.c.h.b16 %v1292
        %v4249 = vunpack.c.l.b16 %v1293
        %v4250 = vunpack.c.h.b16 %v1293
        %v4251 = vunpack.c.l.b16 %v1294
        %v4252 = vunpack.c.h.b16 %v1294
        %v4253 = vunpack.c.l.b16 %v1295
        %v4254 = vunpack.c.h.b16 %v1295
        %v4255 = vunpack.c.l.b16 %v1296
        %v4256 = vunpack.c.h.b16 %v1296
        %v4257 = vunpack.c.l.b16 %v1297
        %v4258 = vunpack.c.h.b16 %v1297
        %v4259 = vunpack.c.l.b16 %v1298
        %v4260 = vunpack.c.h.b16 %v1298
        %v4261 = vunpack.c.l.b16 %v1299
        %v4262 = vunpack.c.h.b16 %v1299
        %v4263 = vunpack.c.l.b16 %v1300
        %v4264 = vunpack.c.h.b16 %v1300
        %v4265 = vunpack.c.l.b16 %v1301
        %v4266 = vunpack.c.h.b16 %v1301
        %v4267 = vunpack.c.l.b16 %v1302
        %v4268 = vunpack.c.h.b16 %v1302
        %v4269 = vunpack.c.l.b16 %v1303
        %v4270 = vunpack.c.h.b16 %v1303
        %v4271 = vunpack.c.l.b16 %v1304
        %v4272 = vunpack.c.h.b16 %v1304
        %v4273 = vunpack.c.l.b16 %v1305
        %v4274 = vunpack.c.h.b16 %v1305
        %v4275 = vunpack.c.l.b16 %v1306
        %v4276 = vunpack.c.h.b16 %v1306
        %v4277 = vunpack.c.l.b16 %v1307
        %v4278 = vunpack.c.h.b16 %v1307
        %v4279 = vunpack.c.l.b16 %v1308
        %v4280 = vunpack.c.h.b16 %v1308
        %v4281 = vunpack.c.l.b16 %v1309
        %v4282 = vunpack.c.h.b16 %v1309
        %v4283 = vunpack.c.l.b16 %v1310
        %v4284 = vunpack.c.h.b16 %v1310
        %v4285 = vunpack.c.l.b16 %v1311
        %v4286 = vunpack.c.h.b16 %v1311
        %v4287 = vunpack.c.l.b16 %v1312
        %v4288 = vunpack.c.h.b16 %v1312
        %v4289 = vunpack.c.l.b16 %v1313
        %v4290 = vunpack.c.h.b16 %v1313
        %v4291 = vunpack.c.l.b16 %v1314
        %v4292 = vunpack.c.h.b16 %v1314
        %v4293 = vunpack.c.l.b16 %v1315
        %v4294 = vunpack.c.h.b16 %v1315
        %v4295 = vunpack.c.l.b16 %v1316
        %v4296 = vunpack.c.h.b16 %v1316
        %v4297 = vunpack.c.l.b16 %v1317
        %v4298 = vunpack.c.h.b16 %v1317
        %v4299 = vunpack.c.l.b16 %v1318
        %v4300 = vunpack.c.h.b16 %v1318
        %v4301 = vunpack.c.l.b16 %v1319
        %v4302 = vunpack.c.h.b16 %v1319
        %v4303 = vunpack.c.l.b16 %v1320
        %v4304 = vunpack.c.h.b16 %v1320
        %v4305 = vunpack.c.l.b16 %v1321
        %v4306 = vunpack.c.h.b16 %v1321
        %v4307 = vunpack.c.l.b16 %v1322
        %v4308 = vunpack.c.h.b16 %v1322
        %v4309 = vunpack.c.l.b16 %v1323
        %v4310 = vunpack.c.h.b16 %v1323
        %v4311 = vunpack.c.l.b16 %v1324
        %v4312 = vunpack.c.h.b16 %v1324
        %v4313 = vunpack.c.l.b16 %v1325
        %v4314 = vunpack.c.h.b16 %v1325
        %v4315 = vunpack.c.l.b16 %v1326
        %v4316 = vunpack.c.h.b16 %v1326
        %v4317 = vunpack.c.l.b16 %v1327
        %v4318 = vunpack.c.h.b16 %v1327
        %v4319 = vunpack.c.l.b16 %v1328
        %v4320 = vunpack.c.h.b16 %v1328
        %v4321 = vunpack.c.l.b16 %v1329
        %v4322 = vunpack.c.h.b16 %v1329
        %v4323 = vunpack.c.l.b16 %v1330
        %v4324 = vunpack.c.h.b16 %v1330
        %v4325 = vunpack.c.l.b16 %v1331
        %v4326 = vunpack.c.h.b16 %v1331
        %v4327 = vunpack.c.l.b16 %v1332
        %v4328 = vunpack.c.h.b16 %v1332
        %v4329 = vunpack.c.l.b16 %v1333
        %v4330 = vunpack.c.h.b16 %v1333
        %v4331 = vunpack.c.l.b16 %v1334
        %v4332 = vunpack.c.h.b16 %v1334
        %v4333 = vunpack.c.l.b16 %v1335
        %v4334 = vunpack.c.h.b16 %v1335
        %v4335 = vunpack.c.l.b16 %v1336
        %v4336 = vunpack.c.h.b16 %v1336
        %v4337 = vunpack.c.l.b16 %v1337
        %v4338 = vunpack.c.h.b16 %v1337
        %v4339 = vunpack.c.l.b16 %v1338
        %v4340 = vunpack.c.h.b16 %v1338
        %v4341 = vunpack.c.l.b16 %v1339
        %v4342 = vunpack.c.h.b16 %v1339
        %v4343 = vunpack.c.l.b16 %v1340
        %v4344 = vunpack.c.h.b16 %v1340
        %v4345 = vunpack.c.l.b16 %v1341
        %v4346 = vunpack.c.h.b16 %v1341
        %v4347 = vunpack.c.l.b16 %v1342
        %v4348 = vunpack.c.h.b16 %v1342
        %v4349 = vunpack.c.l.b16 %v1343
        %v4350 = vunpack.c.h.b16 %v1343
        %v4351 = vunpack.c.l.b16 %v1344
        %v4352 = vunpack.c.h.b16 %v1344
        %v4353 = vunpack.c.l.b16 %v1345
        %v4354 = vunpack.c.h.b16 %v1345
        %v4355 = vunpack.c.l.b16 %v1346
        %v4356 = vunpack.c.h.b16 %v1346
        %v4357 = vunpack.c.l.b16 %v1347
        %v4358 = vunpack.c.h.b16 %v1347
        %v4359 = vunpack.c.l.b16 %v1348
        %v4360 = vunpack.c.h.b16 %v1348
        %v4361 = vunpack.c.l.b16 %v1349
        %v4362 = vunpack.c.h.b16 %v1349
        %v4363 = vunpack.c.l.b16 %v1350
        %v4364 = vunpack.c.h.b16 %v1350
        %v4365 = vunpack.c.l.b16 %v1351
        %v4366 = vunpack.c.h.b16 %v1351
        %v4367 = vunpack.c.l.b16 %v1352
        %v4368 = vunpack.c.h.b16 %v1352
        %v4369 = vunpack.c.l.b16 %v1353
        %v4370 = vunpack.c.h.b16 %v1353
        %v4371 = vunpack.c.l.b16 %v1354
        %v4372 = vunpack.c.h.b16 %v1354
        %v4373 = vunpack.c.l.b16 %v1355
        %v4374 = vunpack.c.h.b16 %v1355
        %v4375 = vunpack.c.l.b16 %v1356
        %v4376 = vunpack.c.h.b16 %v1356
        %v4377 = vunpack.c.l.b16 %v1357
        %v4378 = vunpack.c.h.b16 %v1357
        %v4379 = vunpack.c.l.b16 %v1358
        %v4380 = vunpack.c.h.b16 %v1358
        %v4381 = vunpack.c.l.b16 %v1359
        %v4382 = vunpack.c.h.b16 %v1359
        %v4383 = vunpack.c.l.b16 %v1360
        %v4384 = vunpack.c.h.b16 %v1360
        %v4385 = vunpack.c.l.b16 %v1361
        %v4386 = vunpack.c.h.b16 %v1361
        %v4387 = vunpack.c.l.b16 %v1362
        %v4388 = vunpack.c.h.b16 %v1362
        %v4389 = vunpack.c.l.b16 %v1363
        %v4390 = vunpack.c.h.b16 %v1363
        %v4391 = vunpack.c.l.b16 %v1364
        %v4392 = vunpack.c.h.b16 %v1364
        %v4393 = vunpack.c.l.b16 %v1365
        %v4394 = vunpack.c.h.b16 %v1365
        %v4395 = vunpack.c.l.b16 %v1366
        %v4396 = vunpack.c.h.b16 %v1366
        %v4397 = vunpack.c.l.b16 %v1367
        %v4398 = vunpack.c.h.b16 %v1367
        %v4399 = vunpack.c.l.b16 %v1368
        %v4400 = vunpack.c.h.b16 %v1368
        %v4401 = vunpack.c.l.b16 %v1369
        %v4402 = vunpack.c.h.b16 %v1369
        %v4403 = vunpack.c.l.b16 %v1370
        %v4404 = vunpack.c.h.b16 %v1370
        %v4405 = vunpack.c.l.b16 %v1371
        %v4406 = vunpack.c.h.b16 %v1371
        %v4407 = vunpack.c.l.b16 %v1372
        %v4408 = vunpack.c.h.b16 %v1372
        %v4409 = vunpack.c.l.b16 %v1373
        %v4410 = vunpack.c.h.b16 %v1373
        %v4411 = vunpack.c.l.b16 %v1374
        %v4412 = vunpack.c.h.b16 %v1374
        %v4413 = vunpack.c.l.b16 %v1375
        %v4414 = vunpack.c.h.b16 %v1375
        %v4415 = vunpack.c.l.b16 %v1376
        %v4416 = vunpack.c.h.b16 %v1376
        %v4417 = vunpack.c.l.b16 %v1377
        %v4418 = vunpack.c.h.b16 %v1377
        %v4419 = vunpack.c.l.b16 %v1378
        %v4420 = vunpack.c.h.b16 %v1378
        %v4421 = vunpack.c.l.b16 %v1379
        %v4422 = vunpack.c.h.b16 %v1379
        %v4423 = vunpack.c.l.b16 %v1380
        %v4424 = vunpack.c.h.b16 %v1380
        %v4425 = vunpack.c.l.b16 %v1381
        %v4426 = vunpack.c.h.b16 %v1381
        %v4427 = vunpack.c.l.b16 %v1382
        %v4428 = vunpack.c.h.b16 %v1382
        %v4429 = vunpack.c.l.b16 %v1383
        %v4430 = vunpack.c.h.b16 %v1383
        %v4431 = vunpack.c.l.b16 %v1384
        %v4432 = vunpack.c.h.b16 %v1384
        %v4433 = vunpack.c.l.b16 %v1385
        %v4434 = vunpack.c.h.b16 %v1385
        %v4435 = vunpack.c.l.b16 %v1386
        %v4436 = vunpack.c.h.b16 %v1386
        %v4437 = vunpack.c.l.b16 %v1387
        %v4438 = vunpack.c.h.b16 %v1387
        %v4439 = vunpack.c.l.b16 %v1388
        %v4440 = vunpack.c.h.b16 %v1388
        %v4441 = vunpack.c.l.b16 %v1389
        %v4442 = vunpack.c.h.b16 %v1389
        %v4443 = vunpack.c.l.b16 %v1390
        %v4444 = vunpack.c.h.b16 %v1390
        %v4445 = vunpack.c.l.b16 %v1391
        %v4446 = vunpack.c.h.b16 %v1391
        %v4447 = vunpack.c.l.b16 %v1392
        %v4448 = vunpack.c.h.b16 %v1392
        %v4449 = vunpack.c.l.b16 %v1393
        %v4450 = vunpack.c.h.b16 %v1393
        %v4451 = vunpack.c.l.b16 %v1394
        %v4452 = vunpack.c.h.b16 %v1394
        %v4453 = vunpack.c.l.b16 %v1395
        %v4454 = vunpack.c.h.b16 %v1395
        %v4455 = vunpack.c.l.b16 %v1396
        %v4456 = vunpack.c.h.b16 %v1396
        %v4457 = vunpack.c.l.b16 %v1397
        %v4458 = vunpack.c.h.b16 %v1397
        %v4459 = vunpack.c.l.b16 %v1398
        %v4460 = vunpack.c.h.b16 %v1398
        %v4461 = vunpack.c.l.b16 %v1399
        %v4462 = vunpack.c.h.b16 %v1399
        %v4463 = vunpack.c.l.b16 %v1400
        %v4464 = vunpack.c.h.b16 %v1400
        %v4465 = vunpack.c.l.b16 %v1401
        %v4466 = vunpack.c.h.b16 %v1401
        %v4467 = vunpack.c.l.b16 %v1402
        %v4468 = vunpack.c.h.b16 %v1402
        %v4469 = vunpack.c.l.b16 %v1403
        %v4470 = vunpack.c.h.b16 %v1403
        %v4471 = vunpack.c.l.b16 %v1404
        %v4472 = vunpack.c.h.b16 %v1404
        %v4473 = vunpack.c.l.b16 %v1405
        %v4474 = vunpack.c.h.b16 %v1405
        %v4475 = vunpack.c.l.b16 %v1406
        %v4476 = vunpack.c.h.b16 %v1406
        %v4477 = vunpack.c.l.b16 %v1407
        %v4478 = vunpack.c.h.b16 %v1407
        %v4479 = vunpack.c.l.b16 %v1408
        %v4480 = vunpack.c.h.b16 %v1408
        %v4481 = vunpack.c.l.b16 %v1409
        %v4482 = vunpack.c.h.b16 %v1409
        %v4483 = vunpack.c.l.b16 %v1410
        %v4484 = vunpack.c.h.b16 %v1410
        %v4485 = vunpack.c.l.b16 %v1411
        %v4486 = vunpack.c.h.b16 %v1411
        %v4487 = vunpack.c.l.b16 %v1412
        %v4488 = vunpack.c.h.b16 %v1412
        %v4489 = vunpack.c.l.b16 %v1413
        %v4490 = vunpack.c.h.b16 %v1413
        %v4491 = vunpack.c.l.b16 %v1414
        %v4492 = vunpack.c.h.b16 %v1414
        %v4493 = vunpack.c.l.b16 %v1415
        %v4494 = vunpack.c.h.b16 %v1415
        %v4495 = vunpack.c.l.b16 %v1416
        %v4496 = vunpack.c.h.b16 %v1416
        %v4497 = vunpack.c.l.b16 %v1417
        %v4498 = vunpack.c.h.b16 %v1417
        %v4499 = vunpack.c.l.b16 %v1418
        %v4500 = vunpack.c.h.b16 %v1418
        %v4501 = vunpack.c.l.b16 %v1419
        %v4502 = vunpack.c.h.b16 %v1419
        %v4503 = vunpack.c.l.b16 %v1420
        %v4504 = vunpack.c.h.b16 %v1420
        %v4505 = vunpack.c.l.b16 %v1421
        %v4506 = vunpack.c.h.b16 %v1421
        %v4507 = vunpack.c.l.b16 %v1422
        %v4508 = vunpack.c.h.b16 %v1422
        %v4509 = vunpack.c.l.b16 %v1423
        %v4510 = vunpack.c.h.b16 %v1423
        %v4511 = vunpack.c.l.b16 %v1424
        %v4512 = vunpack.c.h.b16 %v1424
        %v4513 = vunpack.c.l.b16 %v1425
        %v4514 = vunpack.c.h.b16 %v1425
        %v4515 = vunpack.c.l.b16 %v1426
        %v4516 = vunpack.c.h.b16 %v1426
        %v4517 = vunpack.c.l.b16 %v1427
        %v4518 = vunpack.c.h.b16 %v1427
        %v4519 = vunpack.c.l.b16 %v1428
        %v4520 = vunpack.c.h.b16 %v1428
        %v4521 = vunpack.c.l.b16 %v1429
        %v4522 = vunpack.c.h.b16 %v1429
        %v4523 = vunpack.c.l.b16 %v1430
        %v4524 = vunpack.c.h.b16 %v1430
        %v4525 = vunpack.c.l.b16 %v1431
        %v4526 = vunpack.c.h.b16 %v1431
        %v4527 = vunpack.c.l.b16 %v1432
        %v4528 = vunpack.c.h.b16 %v1432
        %v4529 = vunpack.c.l.b16 %v1433
        %v4530 = vunpack.c.h.b16 %v1433
        %v4531 = vunpack.c.l.b16 %v1434
        %v4532 = vunpack.c.h.b16 %v1434
        %v4533 = vunpack.c.l.b16 %v1435
        %v4534 = vunpack.c.h.b16 %v1435
        %v4535 = vunpack.c.l.b16 %v1436
        %v4536 = vunpack.c.h.b16 %v1436
        %v4537 = vpack.c.b16 %v2505, %v2489
        %v4538 = vpack.c.b16 %v2506, %v2490
        %v4539 = vpack.c.b16 %v2507, %v2491
        %v4540 = vpack.c.b16 %v2508, %v2492
        %v4541 = vpack.c.b16 %v2509, %v2493
        %v4542 = vpack.c.b16 %v2510, %v2494
        %v4543 = vpack.c.b16 %v2511, %v2495
        %v4544 = vpack.c.b16 %v2512, %v2496
        %v4545 = vpack.c.b16 %v2513, %v2497
        %v4546 = vpack.c.b16 %v2514, %v2498
        %v4547 = vpack.c.b16 %v2515, %v2499
        %v4548 = vpack.c.b16 %v2516, %v2500
        %v4549 = vpack.c.b16 %v2517, %v2501
        %v4550 = vpack.c.b16 %v2518, %v2502
        %v4551 = vpack.c.b16 %v2519, %v2503
        %v4552 = vpack.c.b16 %v2520, %v2504
        %v4553 = vpack.c.b16 %v2537, %v2521
        %v4554 = vpack.c.b16 %v2538, %v2522
        %v4555 = vpack.c.b16 %v2539, %v2523
        %v4556 = vpack.c.b16 %v2540, %v2524
        %v4557 = vpack.c.b16 %v2541, %v2525
        %v4558 = vpack.c.b16 %v2542, %v2526
        %v4559 = vpack.c.b16 %v2543, %v2527
        %v4560 = vpack.c.b16 %v2544, %v2528
        %v4561 = vpack.c.b16 %v2545, %v2529
        %v4562 = vpack.c.b16 %v2546, %v2530
        %v4563 = vpack.c.b16 %v2547, %v2531
        %v4564 = vpack.c.b16 %v2548, %v2532
        %v4565 = vpack.c.b16 %v2549, %v2533
        %v4566 = vpack.c.b16 %v2550, %v2534
        %v4567 = vpack.c.b16 %v2551, %v2535
        %v4568 = vpack.c.b16 %v2552, %v2536
        %v4569 = vpack.c.b16 %v2569, %v2553
        %v4570 = vpack.c.b16 %v2570, %v2554
        %v4571 = vpack.c.b16 %v2571, %v2555
        %v4572 = vpack.c.b16 %v2572, %v2556
        %v4573 = vpack.c.b16 %v2573, %v2557
        %v4574 = vpack.c.b16 %v2574, %v2558
        %v4575 = vpack.c.b16 %v2575, %v2559
        %v4576 = vpack.c.b16 %v2576, %v2560
        %v4577 = vpack.c.b16 %v2577, %v2561
        %v4578 = vpack.c.b16 %v2578, %v2562
        %v4579 = vpack.c.b16 %v2579, %v2563
        %v4580 = vpack.c.b16 %v2580, %v2564
        %v4581 = vpack.c.b16 %v2581, %v2565
        %v4582 = vpack.c.b16 %v2582, %v2566
        %v4583 = vpack.c.b16 %v2583, %v2567
        %v4584 = vpack.c.b16 %v2584, %v2568
        %v4585 = vpack.c.b16 %v2601, %v2585
        %v4586 = vpack.c.b16 %v2602, %v2586
        %v4587 = vpack.c.b16 %v2603, %v2587
        %v4588 = vpack.c.b16 %v2604, %v2588
        %v4589 = vpack.c.b16 %v2605, %v2589
        %v4590 = vpack.c.b16 %v2606, %v2590
        %v4591 = vpack.c.b16 %v2607, %v2591
        %v4592 = vpack.c.b16 %v2608, %v2592
        %v4593 = vpack.c.b16 %v2609, %v2593
        %v4594 = vpack.c.b16 %v2610, %v2594
        %v4595 = vpack.c.b16 %v2611, %v2595
        %v4596 = vpack.c.b16 %v2612, %v2596
        %v4597 = vpack.c.b16 %v2613, %v2597
        %v4598 = vpack.c.b16 %v2614, %v2598
        %v4599 = vpack.c.b16 %v2615, %v2599
        %v4600 = vpack.c.b16 %v2616, %v2600
        %v4601 = vpack.c.b16 %v2633, %v2617
        %v4602 = vpack.c.b16 %v2634, %v2618
        %v4603 = vpack.c.b16 %v2635, %v2619
        %v4604 = vpack.c.b16 %v2636, %v2620
        %v4605 = vpack.c.b16 %v2637, %v2621
        %v4606 = vpack.c.b16 %v2638, %v2622
        %v4607 = vpack.c.b16 %v2639, %v2623
        %v4608 = vpack.c.b16 %v2640, %v2624
        %v4609 = vpack.c.b16 %v2641, %v2625
        %v4610 = vpack.c.b16 %v2642, %v2626
        %v4611 = vpack.c.b16 %v2643, %v2627
        %v4612 = vpack.c.b16 %v2644, %v2628
        %v4613 = vpack.c.b16 %v2645, %v2629
        %v4614 = vpack.c.b16 %v2646, %v2630
        %v4615 = vpack.c.b16 %v2647, %v2631
        %v4616 = vpack.c.b16 %v2648, %v2632
        %v4617 = vpack.c.b16 %v2665, %v2649
        %v4618 = vpack.c.b16 %v2666, %v2650
        %v4619 = vpack.c.b16 %v2667, %v2651
        %v4620 = vpack.c.b16 %v2668, %v2652
        %v4621 = vpack.c.b16 %v2669, %v2653
        %v4622 = vpack.c.b16 %v2670, %v2654
        %v4623 = vpack.c.b16 %v2671, %v2655
        %v4624 = vpack.c.b16 %v2672, %v2656
        %v4625 = vpack.c.b16 %v2673, %v2657
        %v4626 = vpack.c.b16 %v2674, %v2658
        %v4627 = vpack.c.b16 %v2675, %v2659
        %v4628 = vpack.c.b16 %v2676, %v2660
        %v4629 = vpack.c.b16 %v2677, %v2661
        %v4630 = vpack.c.b16 %v2678, %v2662
        %v4631 = vpack.c.b16 %v2679, %v2663
        %v4632 = vpack.c.b16 %v2680, %v2664
        %v4633 = vpack.c.b16 %v2697, %v2681
        %v4634 = vpack.c.b16 %v2698, %v2682
        %v4635 = vpack.c.b16 %v2699, %v2683
        %v4636 = vpack.c.b16 %v2700, %v2684
        %v4637 = vpack.c.b16 %v2701, %v2685
        %v4638 = vpack.c.b16 %v2702, %v2686
        %v4639 = vpack.c.b16 %v2703, %v2687
        %v4640 = vpack.c.b16 %v2704, %v2688
        %v4641 = vpack.c.b16 %v2705, %v2689
        %v4642 = vpack.c.b16 %v2706, %v2690
        %v4643 = vpack.c.b16 %v2707, %v2691
        %v4644 = vpack.c.b16 %v2708, %v2692
        %v4645 = vpack.c.b16 %v2709, %v2693
        %v4646 = vpack.c.b16 %v2710, %v2694
        %v4647 = vpack.c.b16 %v2711, %v2695
        %v4648 = vpack.c.b16 %v2712, %v2696
        %v4649 = vpack.c.b16 %v2729, %v2713
        %v4650 = vpack.c.b16 %v2730, %v2714
        %v4651 = vpack.c.b16 %v2731, %v2715
        %v4652 = vpack.c.b16 %v2732, %v2716
        %v4653 = vpack.c.b16 %v2733, %v2717
        %v4654 = vpack.c.b16 %v2734, %v2718
        %v4655 = vpack.c.b16 %v2735, %v2719
        %v4656 = vpack.c.b16 %v2736, %v2720
        %v4657 = vpack.c.b16 %v2737, %v2721
        %v4658 = vpack.c.b16 %v2738, %v2722
        %v4659 = vpack.c.b16 %v2739, %v2723
        %v4660 = vpack.c.b16 %v2740, %v2724
        %v4661 = vpack.c.b16 %v2741, %v2725
        %v4662 = vpack.c.b16 %v2742, %v2726
        %v4663 = vpack.c.b16 %v2743, %v2727
        %v4664 = vpack.c.b16 %v2744, %v2728
        %v4665 = vpack.c.b16 %v2761, %v2745
        %v4666 = vpack.c.b16 %v2762, %v2746
        %v4667 = vpack.c.b16 %v2763, %v2747
        %v4668 = vpack.c.b16 %v2764, %v2748
        %v4669 = vpack.c.b16 %v2765, %v2749
        %v4670 = vpack.c.b16 %v2766, %v2750
        %v4671 = vpack.c.b16 %v2767, %v2751
        %v4672 = vpack.c.b16 %v2768, %v2752
        %v4673 = vpack.c.b16 %v2769, %v2753
        %v4674 = vpack.c.b16 %v2770, %v2754
        %v4675 = vpack.c.b16 %v2771, %v2755
        %v4676 = vpack.c.b16 %v2772, %v2756
        %v4677 = vpack.c.b16 %v2773, %v2757
        %v4678 = vpack.c.b16 %v2774, %v2758
        %v4679 = vpack.c.b16 %v2775, %v2759
        %v4680 = vpack.c.b16 %v2776, %v2760
        %v4681 = vpack.c.b16 %v2793, %v2777
        %v4682 = vpack.c.b16 %v2794, %v2778
        %v4683 = vpack.c.b16 %v2795, %v2779
        %v4684 = vpack.c.b16 %v2796, %v2780
        %v4685 = vpack.c.b16 %v2797, %v2781
        %v4686 = vpack.c.b16 %v2798, %v2782
        %v4687 = vpack.c.b16 %v2799, %v2783
        %v4688 = vpack.c.b16 %v2800, %v2784
        %v4689 = vpack.c.b16 %v2801, %v2785
        %v4690 = vpack.c.b16 %v2802, %v2786
        %v4691 = vpack.c.b16 %v2803, %v2787
        %v4692 = vpack.c.b16 %v2804, %v2788
        %v4693 = vpack.c.b16 %v2805, %v2789
        %v4694 = vpack.c.b16 %v2806, %v2790
        %v4695 = vpack.c.b16 %v2807, %v2791
        %v4696 = vpack.c.b16 %v2808, %v2792
        %v4697 = vpack.c.b16 %v2825, %v2809
        %v4698 = vpack.c.b16 %v2826, %v2810
        %v4699 = vpack.c.b16 %v2827, %v2811
        %v4700 = vpack.c.b16 %v2828, %v2812
        %v4701 = vpack.c.b16 %v2829, %v2813
        %v4702 = vpack.c.b16 %v2830, %v2814
        %v4703 = vpack.c.b16 %v2831, %v2815
        %v4704 = vpack.c.b16 %v2832, %v2816
        %v4705 = vpack.c.b16 %v2833, %v2817
        %v4706 = vpack.c.b16 %v2834, %v2818
        %v4707 = vpack.c.b16 %v2835, %v2819
        %v4708 = vpack.c.b16 %v2836, %v2820
        %v4709 = vpack.c.b16 %v2837, %v2821
        %v4710 = vpack.c.b16 %v2838, %v2822
        %v4711 = vpack.c.b16 %v2839, %v2823
        %v4712 = vpack.c.b16 %v2840, %v2824
        %v4713 = vpack.c.b16 %v2857, %v2841
        %v4714 = vpack.c.b16 %v2858, %v2842
        %v4715 = vpack.c.b16 %v2859, %v2843
        %v4716 = vpack.c.b16 %v2860, %v2844
        %v4717 = vpack.c.b16 %v2861, %v2845
        %v4718 = vpack.c.b16 %v2862, %v2846
        %v4719 = vpack.c.b16 %v2863, %v2847
        %v4720 = vpack.c.b16 %v2864, %v2848
        %v4721 = vpack.c.b16 %v2865, %v2849
        %v4722 = vpack.c.b16 %v2866, %v2850
        %v4723 = vpack.c.b16 %v2867, %v2851
        %v4724 = vpack.c.b16 %v2868, %v2852
        %v4725 = vpack.c.b16 %v2869, %v2853
        %v4726 = vpack.c.b16 %v2870, %v2854
        %v4727 = vpack.c.b16 %v2871, %v2855
        %v4728 = vpack.c.b16 %v2872, %v2856
        %v4729 = vpack.c.b16 %v2889, %v2873
        %v4730 = vpack.c.b16 %v2890, %v2874
        %v4731 = vpack.c.b16 %v2891, %v2875
        %v4732 = vpack.c.b16 %v2892, %v2876
        %v4733 = vpack.c.b16 %v2893, %v2877
        %v4734 = vpack.c.b16 %v2894, %v2878
        %v4735 = vpack.c.b16 %v2895, %v2879
        %v4736 = vpack.c.b16 %v2896, %v2880
        %v4737 = vpack.c.b16 %v2897, %v2881
        %v4738 = vpack.c.b16 %v2898, %v2882
        %v4739 = vpack.c.b16 %v2899, %v2883
        %v4740 = vpack.c.b16 %v2900, %v2884
        %v4741 = vpack.c.b16 %v2901, %v2885
        %v4742 = vpack.c.b16 %v2902, %v2886
        %v4743 = vpack.c.b16 %v2903, %v2887
        %v4744 = vpack.c.b16 %v2904, %v2888
        %v4745 = vpack.c.b16 %v2921, %v2905
        %v4746 = vpack.c.b16 %v2922, %v2906
        %v4747 = vpack.c.b16 %v2923, %v2907
        %v4748 = vpack.c.b16 %v2924, %v2908
        %v4749 = vpack.c.b16 %v2925, %v2909
        %v4750 = vpack.c.b16 %v2926, %v2910
        %v4751 = vpack.c.b16 %v2927, %v2911
        %v4752 = vpack.c.b16 %v2928, %v2912
        %v4753 = vpack.c.b16 %v2929, %v2913
        %v4754 = vpack.c.b16 %v2930, %v2914
        %v4755 = vpack.c.b16 %v2931, %v2915
        %v4756 = vpack.c.b16 %v2932, %v2916
        %v4757 = vpack.c.b16 %v2933, %v2917
        %v4758 = vpack.c.b16 %v2934, %v2918
        %v4759 = vpack.c.b16 %v2935, %v2919
        %v4760 = vpack.c.b16 %v2936, %v2920
        %v4761 = vpack.c.b16 %v2953, %v2937
        %v4762 = vpack.c.b16 %v2954, %v2938
        %v4763 = vpack.c.b16 %v2955, %v2939
        %v4764 = vpack.c.b16 %v2956, %v2940
        %v4765 = vpack.c.b16 %v2957, %v2941
        %v4766 = vpack.c.b16 %v2958, %v2942
        %v4767 = vpack.c.b16 %v2959, %v2943
        %v4768 = vpack.c.b16 %v2960, %v2944
        %v4769 = vpack.c.b16 %v2961, %v2945
        %v4770 = vpack.c.b16 %v2962, %v2946
        %v4771 = vpack.c.b16 %v2963, %v2947
        %v4772 = vpack.c.b16 %v2964, %v2948
        %v4773 = vpack.c.b16 %v2965, %v2949
        %v4774 = vpack.c.b16 %v2966, %v2950
        %v4775 = vpack.c.b16 %v2967, %v2951
        %v4776 = vpack.c.b16 %v2968, %v2952
        %v4777 = vpack.c.b16 %v2985, %v2969
        %v4778 = vpack.c.b16 %v2986, %v2970
        %v4779 = vpack.c.b16 %v2987, %v2971
        %v4780 = vpack.c.b16 %v2988, %v2972
        %v4781 = vpack.c.b16 %v2989, %v2973
        %v4782 = vpack.c.b16 %v2990, %v2974
        %v4783 = vpack.c.b16 %v2991, %v2975
        %v4784 = vpack.c.b16 %v2992, %v2976
        %v4785 = vpack.c.b16 %v2993, %v2977
        %v4786 = vpack.c.b16 %v2994, %v2978
        %v4787 = vpack.c.b16 %v2995, %v2979
        %v4788 = vpack.c.b16 %v2996, %v2980
        %v4789 = vpack.c.b16 %v2997, %v2981
        %v4790 = vpack.c.b16 %v2998, %v2982
        %v4791 = vpack.c.b16 %v2999, %v2983
        %v4792 = vpack.c.b16 %v3000, %v2984
        %v4793 = vpack.c.b16 %v3017, %v3001
        %v4794 = vpack.c.b16 %v3018, %v3002
        %v4795 = vpack.c.b16 %v3019, %v3003
        %v4796 = vpack.c.b16 %v3020, %v3004
        %v4797 = vpack.c.b16 %v3021, %v3005
        %v4798 = vpack.c.b16 %v3022, %v3006
        %v4799 = vpack.c.b16 %v3023, %v3007
        %v4800 = vpack.c.b16 %v3024, %v3008
        %v4801 = vpack.c.b16 %v3025, %v3009
        %v4802 = vpack.c.b16 %v3026, %v3010
        %v4803 = vpack.c.b16 %v3027, %v3011
        %v4804 = vpack.c.b16 %v3028, %v3012
        %v4805 = vpack.c.b16 %v3029, %v3013
        %v4806 = vpack.c.b16 %v3030, %v3014
        %v4807 = vpack.c.b16 %v3031, %v3015
        %v4808 = vpack.c.b16 %v3032, %v3016
        %v4809 = vpack.c.b16 %v3049, %v3033
        %v4810 = vpack.c.b16 %v3050, %v3034
        %v4811 = vpack.c.b16 %v3051, %v3035
        %v4812 = vpack.c.b16 %v3052, %v3036
        %v4813 = vpack.c.b16 %v3053, %v3037
        %v4814 = vpack.c.b16 %v3054, %v3038
        %v4815 = vpack.c.b16 %v3055, %v3039
        %v4816 = vpack.c.b16 %v3056, %v3040
        %v4817 = vpack.c.b16 %v3057, %v3041
        %v4818 = vpack.c.b16 %v3058, %v3042
        %v4819 = vpack.c.b16 %v3059, %v3043
        %v4820 = vpack.c.b16 %v3060, %v3044
        %v4821 = vpack.c.b16 %v3061, %v3045
        %v4822 = vpack.c.b16 %v3062, %v3046
        %v4823 = vpack.c.b16 %v3063, %v3047
        %v4824 = vpack.c.b16 %v3064, %v3048
        %v4825 = vpack.c.b16 %v3081, %v3065
        %v4826 = vpack.c.b16 %v3082, %v3066
        %v4827 = vpack.c.b16 %v3083, %v3067
        %v4828 = vpack.c.b16 %v3084, %v3068
        %v4829 = vpack.c.b16 %v3085, %v3069
        %v4830 = vpack.c.b16 %v3086, %v3070
        %v4831 = vpack.c.b16 %v3087, %v3071
        %v4832 = vpack.c.b16 %v3088, %v3072
        %v4833 = vpack.c.b16 %v3089, %v3073
        %v4834 = vpack.c.b16 %v3090, %v3074
        %v4835 = vpack.c.b16 %v3091, %v3075
        %v4836 = vpack.c.b16 %v3092, %v3076
        %v4837 = vpack.c.b16 %v3093, %v3077
        %v4838 = vpack.c.b16 %v3094, %v3078
        %v4839 = vpack.c.b16 %v3095, %v3079
        %v4840 = vpack.c.b16 %v3096, %v3080
        %v4841 = vpack.c.b16 %v3113, %v3097
        %v4842 = vpack.c.b16 %v3114, %v3098
        %v4843 = vpack.c.b16 %v3115, %v3099
        %v4844 = vpack.c.b16 %v3116, %v3100
        %v4845 = vpack.c.b16 %v3117, %v3101
        %v4846 = vpack.c.b16 %v3118, %v3102
        %v4847 = vpack.c.b16 %v3119, %v3103
        %v4848 = vpack.c.b16 %v3120, %v3104
        %v4849 = vpack.c.b16 %v3121, %v3105
        %v4850 = vpack.c.b16 %v3122, %v3106
        %v4851 = vpack.c.b16 %v3123, %v3107
        %v4852 = vpack.c.b16 %v3124, %v3108
        %v4853 = vpack.c.b16 %v3125, %v3109
        %v4854 = vpack.c.b16 %v3126, %v3110
        %v4855 = vpack.c.b16 %v3127, %v3111
        %v4856 = vpack.c.b16 %v3128, %v3112
        %v4857 = vpack.c.b16 %v3145, %v3129
        %v4858 = vpack.c.b16 %v3146, %v3130
        %v4859 = vpack.c.b16 %v3147, %v3131
        %v4860 = vpack.c.b16 %v3148, %v3132
        %v4861 = vpack.c.b16 %v3149, %v3133
        %v4862 = vpack.c.b16 %v3150, %v3134
        %v4863 = vpack.c.b16 %v3151, %v3135
        %v4864 = vpack.c.b16 %v3152, %v3136
        %v4865 = vpack.c.b16 %v3153, %v3137
        %v4866 = vpack.c.b16 %v3154, %v3138
        %v4867 = vpack.c.b16 %v3155, %v3139
        %v4868 = vpack.c.b16 %v3156, %v3140
        %v4869 = vpack.c.b16 %v3157, %v3141
        %v4870 = vpack.c.b16 %v3158, %v3142
        %v4871 = vpack.c.b16 %v3159, %v3143
        %v4872 = vpack.c.b16 %v3160, %v3144
        %v4873 = vpack.c.b16 %v3177, %v3161
        %v4874 = vpack.c.b16 %v3178, %v3162
        %v4875 = vpack.c.b16 %v3179, %v3163
        %v4876 = vpack.c.b16 %v3180, %v3164
        %v4877 = vpack.c.b16 %v3181, %v3165
        %v4878 = vpack.c.b16 %v3182, %v3166
        %v4879 = vpack.c.b16 %v3183, %v3167
        %v4880 = vpack.c.b16 %v3184, %v3168
        %v4881 = vpack.c.b16 %v3185, %v3169
        %v4882 = vpack.c.b16 %v3186, %v3170
        %v4883 = vpack.c.b16 %v3187, %v3171
        %v4884 = vpack.c.b16 %v3188, %v3172
        %v4885 = vpack.c.b16 %v3189, %v3173
        %v4886 = vpack.c.b16 %v3190, %v3174
        %v4887 = vpack.c.b16 %v3191, %v3175
        %v4888 = vpack.c.b16 %v3192, %v3176
        %v4889 = vpack.c.b16 %v3209, %v3193
        %v4890 = vpack.c.b16 %v3210, %v3194
        %v4891 = vpack.c.b16 %v3211, %v3195
        %v4892 = vpack.c.b16 %v3212, %v3196
        %v4893 = vpack.c.b16 %v3213, %v3197
        %v4894 = vpack.c.b16 %v3214, %v3198
        %v4895 = vpack.c.b16 %v3215, %v3199
        %v4896 = vpack.c.b16 %v3216, %v3200
        %v4897 = vpack.c.b16 %v3217, %v3201
        %v4898 = vpack.c.b16 %v3218, %v3202
        %v4899 = vpack.c.b16 %v3219, %v3203
        %v4900 = vpack.c.b16 %v3220, %v3204
        %v4901 = vpack.c.b16 %v3221, %v3205
        %v4902 = vpack.c.b16 %v3222, %v3206
        %v4903 = vpack.c.b16 %v3223, %v3207
        %v4904 = vpack.c.b16 %v3224, %v3208
        %v4905 = vpack.c.b16 %v3241, %v3225
        %v4906 = vpack.c.b16 %v3242, %v3226
        %v4907 = vpack.c.b16 %v3243, %v3227
        %v4908 = vpack.c.b16 %v3244, %v3228
        %v4909 = vpack.c.b16 %v3245, %v3229
        %v4910 = vpack.c.b16 %v3246, %v3230
        %v4911 = vpack.c.b16 %v3247, %v3231
        %v4912 = vpack.c.b16 %v3248, %v3232
        %v4913 = vpack.c.b16 %v3249, %v3233
        %v4914 = vpack.c.b16 %v3250, %v3234
        %v4915 = vpack.c.b16 %v3251, %v3235
        %v4916 = vpack.c.b16 %v3252, %v3236
        %v4917 = vpack.c.b16 %v3253, %v3237
        %v4918 = vpack.c.b16 %v3254, %v3238
        %v4919 = vpack.c.b16 %v3255, %v3239
        %v4920 = vpack.c.b16 %v3256, %v3240
        %v4921 = vpack.c.b16 %v3273, %v3257
        %v4922 = vpack.c.b16 %v3274, %v3258
        %v4923 = vpack.c.b16 %v3275, %v3259
        %v4924 = vpack.c.b16 %v3276, %v3260
        %v4925 = vpack.c.b16 %v3277, %v3261
        %v4926 = vpack.c.b16 %v3278, %v3262
        %v4927 = vpack.c.b16 %v3279, %v3263
        %v4928 = vpack.c.b16 %v3280, %v3264
        %v4929 = vpack.c.b16 %v3281, %v3265
        %v4930 = vpack.c.b16 %v3282, %v3266
        %v4931 = vpack.c.b16 %v3283, %v3267
        %v4932 = vpack.c.b16 %v3284, %v3268
        %v4933 = vpack.c.b16 %v3285, %v3269
        %v4934 = vpack.c.b16 %v3286, %v3270
        %v4935 = vpack.c.b16 %v3287, %v3271
        %v4936 = vpack.c.b16 %v3288, %v3272
        %v4937 = vpack.c.b16 %v3305, %v3289
        %v4938 = vpack.c.b16 %v3306, %v3290
        %v4939 = vpack.c.b16 %v3307, %v3291
        %v4940 = vpack.c.b16 %v3308, %v3292
        %v4941 = vpack.c.b16 %v3309, %v3293
        %v4942 = vpack.c.b16 %v3310, %v3294
        %v4943 = vpack.c.b16 %v3311, %v3295
        %v4944 = vpack.c.b16 %v3312, %v3296
        %v4945 = vpack.c.b16 %v3313, %v3297
        %v4946 = vpack.c.b16 %v3314, %v3298
        %v4947 = vpack.c.b16 %v3315, %v3299
        %v4948 = vpack.c.b16 %v3316, %v3300
        %v4949 = vpack.c.b16 %v3317, %v3301
        %v4950 = vpack.c.b16 %v3318, %v3302
        %v4951 = vpack.c.b16 %v3319, %v3303
        %v4952 = vpack.c.b16 %v3320, %v3304
        %v4953 = vpack.c.b16 %v3337, %v3321
        %v4954 = vpack.c.b16 %v3338, %v3322
        %v4955 = vpack.c.b16 %v3339, %v3323
        %v4956 = vpack.c.b16 %v3340, %v3324
        %v4957 = vpack.c.b16 %v3341, %v3325
        %v4958 = vpack.c.b16 %v3342, %v3326
        %v4959 = vpack.c.b16 %v3343, %v3327
        %v4960 = vpack.c.b16 %v3344, %v3328
        %v4961 = vpack.c.b16 %v3345, %v3329
        %v4962 = vpack.c.b16 %v3346, %v3330
        %v4963 = vpack.c.b16 %v3347, %v3331
        %v4964 = vpack.c.b16 %v3348, %v3332
        %v4965 = vpack.c.b16 %v3349, %v3333
        %v4966 = vpack.c.b16 %v3350, %v3334
        %v4967 = vpack.c.b16 %v3351, %v3335
        %v4968 = vpack.c.b16 %v3352, %v3336
        %v4969 = vpack.c.b16 %v3369, %v3353
        %v4970 = vpack.c.b16 %v3370, %v3354
        %v4971 = vpack.c.b16 %v3371, %v3355
        %v4972 = vpack.c.b16 %v3372, %v3356
        %v4973 = vpack.c.b16 %v3373, %v3357
        %v4974 = vpack.c.b16 %v3374, %v3358
        %v4975 = vpack.c.b16 %v3375, %v3359
        %v4976 = vpack.c.b16 %v3376, %v3360
        %v4977 = vpack.c.b16 %v3377, %v3361
        %v4978 = vpack.c.b16 %v3378, %v3362
        %v4979 = vpack.c.b16 %v3379, %v3363
        %v4980 = vpack.c.b16 %v3380, %v3364
        %v4981 = vpack.c.b16 %v3381, %v3365
        %v4982 = vpack.c.b16 %v3382, %v3366
        %v4983 = vpack.c.b16 %v3383, %v3367
        %v4984 = vpack.c.b16 %v3384, %v3368
        %v4985 = vpack.c.b16 %v3401, %v3385
        %v4986 = vpack.c.b16 %v3402, %v3386
        %v4987 = vpack.c.b16 %v3403, %v3387
        %v4988 = vpack.c.b16 %v3404, %v3388
        %v4989 = vpack.c.b16 %v3405, %v3389
        %v4990 = vpack.c.b16 %v3406, %v3390
        %v4991 = vpack.c.b16 %v3407, %v3391
        %v4992 = vpack.c.b16 %v3408, %v3392
        %v4993 = vpack.c.b16 %v3409, %v3393
        %v4994 = vpack.c.b16 %v3410, %v3394
        %v4995 = vpack.c.b16 %v3411, %v3395
        %v4996 = vpack.c.b16 %v3412, %v3396
        %v4997 = vpack.c.b16 %v3413, %v3397
        %v4998 = vpack.c.b16 %v3414, %v3398
        %v4999 = vpack.c.b16 %v3415, %v3399
        %v5000 = vpack.c.b16 %v3416, %v3400
        %v5001 = vpack.c.b16 %v3433, %v3417
        %v5002 = vpack.c.b16 %v3434, %v3418
        %v5003 = vpack.c.b16 %v3435, %v3419
        %v5004 = vpack.c.b16 %v3436, %v3420
        %v5005 = vpack.c.b16 %v3437, %v3421
        %v5006 = vpack.c.b16 %v3438, %v3422
        %v5007 = vpack.c.b16 %v3439, %v3423
        %v5008 = vpack.c.b16 %v3440, %v3424
        %v5009 = vpack.c.b16 %v3441, %v3425
        %v5010 = vpack.c.b16 %v3442, %v3426
        %v5011 = vpack.c.b16 %v3443, %v3427
        %v5012 = vpack.c.b16 %v3444, %v3428
        %v5013 = vpack.c.b16 %v3445, %v3429
        %v5014 = vpack.c.b16 %v3446, %v3430
        %v5015 = vpack.c.b16 %v3447, %v3431
        %v5016 = vpack.c.b16 %v3448, %v3432
        %v5017 = vpack.c.b16 %v3465, %v3449
        %v5018 = vpack.c.b16 %v3466, %v3450
        %v5019 = vpack.c.b16 %v3467, %v3451
        %v5020 = vpack.c.b16 %v3468, %v3452
        %v5021 = vpack.c.b16 %v3469, %v3453
        %v5022 = vpack.c.b16 %v3470, %v3454
        %v5023 = vpack.c.b16 %v3471, %v3455
        %v5024 = vpack.c.b16 %v3472, %v3456
        %v5025 = vpack.c.b16 %v3473, %v3457
        %v5026 = vpack.c.b16 %v3474, %v3458
        %v5027 = vpack.c.b16 %v3475, %v3459
        %v5028 = vpack.c.b16 %v3476, %v3460
        %v5029 = vpack.c.b16 %v3477, %v3461
        %v5030 = vpack.c.b16 %v3478, %v3462
        %v5031 = vpack.c.b16 %v3479, %v3463
        %v5032 = vpack.c.b16 %v3480, %v3464
        %v5033 = vpack.c.b16 %v3497, %v3481
        %v5034 = vpack.c.b16 %v3498, %v3482
        %v5035 = vpack.c.b16 %v3499, %v3483
        %v5036 = vpack.c.b16 %v3500, %v3484
        %v5037 = vpack.c.b16 %v3501, %v3485
        %v5038 = vpack.c.b16 %v3502, %v3486
        %v5039 = vpack.c.b16 %v3503, %v3487
        %v5040 = vpack.c.b16 %v3504, %v3488
        %v5041 = vpack.c.b16 %v3505, %v3489
        %v5042 = vpack.c.b16 %v3506, %v3490
        %v5043 = vpack.c.b16 %v3507, %v3491
        %v5044 = vpack.c.b16 %v3508, %v3492
        %v5045 = vpack.c.b16 %v3509, %v3493
        %v5046 = vpack.c.b16 %v3510, %v3494
        %v5047 = vpack.c.b16 %v3511, %v3495
        %v5048 = vpack.c.b16 %v3512, %v3496
        %v5049 = vpack.c.b16 %v3529, %v3513
        %v5050 = vpack.c.b16 %v3530, %v3514
        %v5051 = vpack.c.b16 %v3531, %v3515
        %v5052 = vpack.c.b16 %v3532, %v3516
        %v5053 = vpack.c.b16 %v3533, %v3517
        %v5054 = vpack.c.b16 %v3534, %v3518
        %v5055 = vpack.c.b16 %v3535, %v3519
        %v5056 = vpack.c.b16 %v3536, %v3520
        %v5057 = vpack.c.b16 %v3537, %v3521
        %v5058 = vpack.c.b16 %v3538, %v3522
        %v5059 = vpack.c.b16 %v3539, %v3523
        %v5060 = vpack.c.b16 %v3540, %v3524
        %v5061 = vpack.c.b16 %v3541, %v3525
        %v5062 = vpack.c.b16 %v3542, %v3526
        %v5063 = vpack.c.b16 %v3543, %v3527
        %v5064 = vpack.c.b16 %v3544, %v3528
        %v5065 = vpack.c.b16 %v3561, %v3545
        %v5066 = vpack.c.b16 %v3562, %v3546
        %v5067 = vpack.c.b16 %v3563, %v3547
        %v5068 = vpack.c.b16 %v3564, %v3548
        %v5069 = vpack.c.b16 %v3565, %v3549
        %v5070 = vpack.c.b16 %v3566, %v3550
        %v5071 = vpack.c.b16 %v3567, %v3551
        %v5072 = vpack.c.b16 %v3568, %v3552
        %v5073 = vpack.c.b16 %v3569, %v3553
        %v5074 = vpack.c.b16 %v3570, %v3554
        %v5075 = vpack.c.b16 %v3571, %v3555
        %v5076 = vpack.c.b16 %v3572, %v3556
        %v5077 = vpack.c.b16 %v3573, %v3557
        %v5078 = vpack.c.b16 %v3574, %v3558
        %v5079 = vpack.c.b16 %v3575, %v3559
        %v5080 = vpack.c.b16 %v3576, %v3560
        %v5081 = vpack.c.b16 %v3593, %v3577
        %v5082 = vpack.c.b16 %v3594, %v3578
        %v5083 = vpack.c.b16 %v3595, %v3579
        %v5084 = vpack.c.b16 %v3596, %v3580
        %v5085 = vpack.c.b16 %v3597, %v3581
        %v5086 = vpack.c.b16 %v3598, %v3582
        %v5087 = vpack.c.b16 %v3599, %v3583
        %v5088 = vpack.c.b16 %v3600, %v3584
        %v5089 = vpack.c.b16 %v3601, %v3585
        %v5090 = vpack.c.b16 %v3602, %v3586
        %v5091 = vpack.c.b16 %v3603, %v3587
        %v5092 = vpack.c.b16 %v3604, %v3588
        %v5093 = vpack.c.b16 %v3605, %v3589
        %v5094 = vpack.c.b16 %v3606, %v3590
        %v5095 = vpack.c.b16 %v3607, %v3591
        %v5096 = vpack.c.b16 %v3608, %v3592
        %v5097 = vpack.c.b16 %v3625, %v3609
        %v5098 = vpack.c.b16 %v3626, %v3610
        %v5099 = vpack.c.b16 %v3627, %v3611
        %v5100 = vpack.c.b16 %v3628, %v3612
        %v5101 = vpack.c.b16 %v3629, %v3613
        %v5102 = vpack.c.b16 %v3630, %v3614
        %v5103 = vpack.c.b16 %v3631, %v3615
        %v5104 = vpack.c.b16 %v3632, %v3616
        %v5105 = vpack.c.b16 %v3633, %v3617
        %v5106 = vpack.c.b16 %v3634, %v3618
        %v5107 = vpack.c.b16 %v3635, %v3619
        %v5108 = vpack.c.b16 %v3636, %v3620
        %v5109 = vpack.c.b16 %v3637, %v3621
        %v5110 = vpack.c.b16 %v3638, %v3622
        %v5111 = vpack.c.b16 %v3639, %v3623
        %v5112 = vpack.c.b16 %v3640, %v3624
        %v5113 = vpack.c.b16 %v3657, %v3641
        %v5114 = vpack.c.b16 %v3658, %v3642
        %v5115 = vpack.c.b16 %v3659, %v3643
        %v5116 = vpack.c.b16 %v3660, %v3644
        %v5117 = vpack.c.b16 %v3661, %v3645
        %v5118 = vpack.c.b16 %v3662, %v3646
        %v5119 = vpack.c.b16 %v3663, %v3647
        %v5120 = vpack.c.b16 %v3664, %v3648
        %v5121 = vpack.c.b16 %v3665, %v3649
        %v5122 = vpack.c.b16 %v3666, %v3650
        %v5123 = vpack.c.b16 %v3667, %v3651
        %v5124 = vpack.c.b16 %v3668, %v3652
        %v5125 = vpack.c.b16 %v3669, %v3653
        %v5126 = vpack.c.b16 %v3670, %v3654
        %v5127 = vpack.c.b16 %v3671, %v3655
        %v5128 = vpack.c.b16 %v3672, %v3656
        %v5129 = vpack.c.b16 %v3689, %v3673
        %v5130 = vpack.c.b16 %v3690, %v3674
        %v5131 = vpack.c.b16 %v3691, %v3675
        %v5132 = vpack.c.b16 %v3692, %v3676
        %v5133 = vpack.c.b16 %v3693, %v3677
        %v5134 = vpack.c.b16 %v3694, %v3678
        %v5135 = vpack.c.b16 %v3695, %v3679
        %v5136 = vpack.c.b16 %v3696, %v3680
        %v5137 = vpack.c.b16 %v3697, %v3681
        %v5138 = vpack.c.b16 %v3698, %v3682
        %v5139 = vpack.c.b16 %v3699, %v3683
        %v5140 = vpack.c.b16 %v3700, %v3684
        %v5141 = vpack.c.b16 %v3701, %v3685
        %v5142 = vpack.c.b16 %v3702, %v3686
        %v5143 = vpack.c.b16 %v3703, %v3687
        %v5144 = vpack.c.b16 %v3704, %v3688
        %v5145 = vpack.c.b16 %v3721, %v3705
        %v5146 = vpack.c.b16 %v3722, %v3706
        %v5147 = vpack.c.b16 %v3723, %v3707
        %v5148 = vpack.c.b16 %v3724, %v3708
        %v5149 = vpack.c.b16 %v3725, %v3709
        %v5150 = vpack.c.b16 %v3726, %v3710
        %v5151 = vpack.c.b16 %v3727, %v3711
        %v5152 = vpack.c.b16 %v3728, %v3712
        %v5153 = vpack.c.b16 %v3729, %v3713
        %v5154 = vpack.c.b16 %v3730, %v3714
        %v5155 = vpack.c.b16 %v3731, %v3715
        %v5156 = vpack.c.b16 %v3732, %v3716
        %v5157 = vpack.c.b16 %v3733, %v3717
        %v5158 = vpack.c.b16 %v3734, %v3718
        %v5159 = vpack.c.b16 %v3735, %v3719
        %v5160 = vpack.c.b16 %v3736, %v3720
        %v5161 = vpack.c.b16 %v3753, %v3737
        %v5162 = vpack.c.b16 %v3754, %v3738
        %v5163 = vpack.c.b16 %v3755, %v3739
        %v5164 = vpack.c.b16 %v3756, %v3740
        %v5165 = vpack.c.b16 %v3757, %v3741
        %v5166 = vpack.c.b16 %v3758, %v3742
        %v5167 = vpack.c.b16 %v3759, %v3743
        %v5168 = vpack.c.b16 %v3760, %v3744
        %v5169 = vpack.c.b16 %v3761, %v3745
        %v5170 = vpack.c.b16 %v3762, %v3746
        %v5171 = vpack.c.b16 %v3763, %v3747
        %v5172 = vpack.c.b16 %v3764, %v3748
        %v5173 = vpack.c.b16 %v3765, %v3749
        %v5174 = vpack.c.b16 %v3766, %v3750
        %v5175 = vpack.c.b16 %v3767, %v3751
        %v5176 = vpack.c.b16 %v3768, %v3752
        %v5177 = vpack.c.b16 %v3785, %v3769
        %v5178 = vpack.c.b16 %v3786, %v3770
        %v5179 = vpack.c.b16 %v3787, %v3771
        %v5180 = vpack.c.b16 %v3788, %v3772
        %v5181 = vpack.c.b16 %v3789, %v3773
        %v5182 = vpack.c.b16 %v3790, %v3774
        %v5183 = vpack.c.b16 %v3791, %v3775
        %v5184 = vpack.c.b16 %v3792, %v3776
        %v5185 = vpack.c.b16 %v3793, %v3777
        %v5186 = vpack.c.b16 %v3794, %v3778
        %v5187 = vpack.c.b16 %v3795, %v3779
        %v5188 = vpack.c.b16 %v3796, %v3780
        %v5189 = vpack.c.b16 %v3797, %v3781
        %v5190 = vpack.c.b16 %v3798, %v3782
        %v5191 = vpack.c.b16 %v3799, %v3783
        %v5192 = vpack.c.b16 %v3800, %v3784
        %v5193 = vpack.c.b16 %v3817, %v3801
        %v5194 = vpack.c.b16 %v3818, %v3802
        %v5195 = vpack.c.b16 %v3819, %v3803
        %v5196 = vpack.c.b16 %v3820, %v3804
        %v5197 = vpack.c.b16 %v3821, %v3805
        %v5198 = vpack.c.b16 %v3822, %v3806
        %v5199 = vpack.c.b16 %v3823, %v3807
        %v5200 = vpack.c.b16 %v3824, %v3808
        %v5201 = vpack.c.b16 %v3825, %v3809
        %v5202 = vpack.c.b16 %v3826, %v3810
        %v5203 = vpack.c.b16 %v3827, %v3811
        %v5204 = vpack.c.b16 %v3828, %v3812
        %v5205 = vpack.c.b16 %v3829, %v3813
        %v5206 = vpack.c.b16 %v3830, %v3814
        %v5207 = vpack.c.b16 %v3831, %v3815
        %v5208 = vpack.c.b16 %v3832, %v3816
        %v5209 = vpack.c.b16 %v3849, %v3833
        %v5210 = vpack.c.b16 %v3850, %v3834
        %v5211 = vpack.c.b16 %v3851, %v3835
        %v5212 = vpack.c.b16 %v3852, %v3836
        %v5213 = vpack.c.b16 %v3853, %v3837
        %v5214 = vpack.c.b16 %v3854, %v3838
        %v5215 = vpack.c.b16 %v3855, %v3839
        %v5216 = vpack.c.b16 %v3856, %v3840
        %v5217 = vpack.c.b16 %v3857, %v3841
        %v5218 = vpack.c.b16 %v3858, %v3842
        %v5219 = vpack.c.b16 %v3859, %v3843
        %v5220 = vpack.c.b16 %v3860, %v3844
        %v5221 = vpack.c.b16 %v3861, %v3845
        %v5222 = vpack.c.b16 %v3862, %v3846
        %v5223 = vpack.c.b16 %v3863, %v3847
        %v5224 = vpack.c.b16 %v3864, %v3848
        %v5225 = vpack.c.b16 %v3881, %v3865
        %v5226 = vpack.c.b16 %v3882, %v3866
        %v5227 = vpack.c.b16 %v3883, %v3867
        %v5228 = vpack.c.b16 %v3884, %v3868
        %v5229 = vpack.c.b16 %v3885, %v3869
        %v5230 = vpack.c.b16 %v3886, %v3870
        %v5231 = vpack.c.b16 %v3887, %v3871
        %v5232 = vpack.c.b16 %v3888, %v3872
        %v5233 = vpack.c.b16 %v3889, %v3873
        %v5234 = vpack.c.b16 %v3890, %v3874
        %v5235 = vpack.c.b16 %v3891, %v3875
        %v5236 = vpack.c.b16 %v3892, %v3876
        %v5237 = vpack.c.b16 %v3893, %v3877
        %v5238 = vpack.c.b16 %v3894, %v3878
        %v5239 = vpack.c.b16 %v3895, %v3879
        %v5240 = vpack.c.b16 %v3896, %v3880
        %v5241 = vpack.c.b16 %v3913, %v3897
        %v5242 = vpack.c.b16 %v3914, %v3898
        %v5243 = vpack.c.b16 %v3915, %v3899
        %v5244 = vpack.c.b16 %v3916, %v3900
        %v5245 = vpack.c.b16 %v3917, %v3901
        %v5246 = vpack.c.b16 %v3918, %v3902
        %v5247 = vpack.c.b16 %v3919, %v3903
        %v5248 = vpack.c.b16 %v3920, %v3904
        %v5249 = vpack.c.b16 %v3921, %v3905
        %v5250 = vpack.c.b16 %v3922, %v3906
        %v5251 = vpack.c.b16 %v3923, %v3907
        %v5252 = vpack.c.b16 %v3924, %v3908
        %v5253 = vpack.c.b16 %v3925, %v3909
        %v5254 = vpack.c.b16 %v3926, %v3910
        %v5255 = vpack.c.b16 %v3927, %v3911
        %v5256 = vpack.c.b16 %v3928, %v3912
        %v5257 = vpack.c.b16 %v3945, %v3929
        %v5258 = vpack.c.b16 %v3946, %v3930
        %v5259 = vpack.c.b16 %v3947, %v3931
        %v5260 = vpack.c.b16 %v3948, %v3932
        %v5261 = vpack.c.b16 %v3949, %v3933
        %v5262 = vpack.c.b16 %v3950, %v3934
        %v5263 = vpack.c.b16 %v3951, %v3935
        %v5264 = vpack.c.b16 %v3952, %v3936
        %v5265 = vpack.c.b16 %v3953, %v3937
        %v5266 = vpack.c.b16 %v3954, %v3938
        %v5267 = vpack.c.b16 %v3955, %v3939
        %v5268 = vpack.c.b16 %v3956, %v3940
        %v5269 = vpack.c.b16 %v3957, %v3941
        %v5270 = vpack.c.b16 %v3958, %v3942
        %v5271 = vpack.c.b16 %v3959, %v3943
        %v5272 = vpack.c.b16 %v3960, %v3944
        %v5273 = vpack.c.b16 %v3977, %v3961
        %v5274 = vpack.c.b16 %v3978, %v3962
        %v5275 = vpack.c.b16 %v3979, %v3963
        %v5276 = vpack.c.b16 %v3980, %v3964
        %v5277 = vpack.c.b16 %v3981, %v3965
        %v5278 = vpack.c.b16 %v3982, %v3966
        %v5279 = vpack.c.b16 %v3983, %v3967
        %v5280 = vpack.c.b16 %v3984, %v3968
        %v5281 = vpack.c.b16 %v3985, %v3969
        %v5282 = vpack.c.b16 %v3986, %v3970
        %v5283 = vpack.c.b16 %v3987, %v3971
        %v5284 = vpack.c.b16 %v3988, %v3972
        %v5285 = vpack.c.b16 %v3989, %v3973
        %v5286 = vpack.c.b16 %v3990, %v3974
        %v5287 = vpack.c.b16 %v3991, %v3975
        %v5288 = vpack.c.b16 %v3992, %v3976
        %v5289 = vpack.c.b16 %v4009, %v3993
        %v5290 = vpack.c.b16 %v4010, %v3994
        %v5291 = vpack.c.b16 %v4011, %v3995
        %v5292 = vpack.c.b16 %v4012, %v3996
        %v5293 = vpack.c.b16 %v4013, %v3997
        %v5294 = vpack.c.b16 %v4014, %v3998
        %v5295 = vpack.c.b16 %v4015, %v3999
        %v5296 = vpack.c.b16 %v4016, %v4000
        %v5297 = vpack.c.b16 %v4017, %v4001
        %v5298 = vpack.c.b16 %v4018, %v4002
        %v5299 = vpack.c.b16 %v4019, %v4003
        %v5300 = vpack.c.b16 %v4020, %v4004
        %v5301 = vpack.c.b16 %v4021, %v4005
        %v5302 = vpack.c.b16 %v4022, %v4006
        %v5303 = vpack.c.b16 %v4023, %v4007
        %v5304 = vpack.c.b16 %v4024, %v4008
        %v5305 = vpack.c.b16 %v4041, %v4025
        %v5306 = vpack.c.b16 %v4042, %v4026
        %v5307 = vpack.c.b16 %v4043, %v4027
        %v5308 = vpack.c.b16 %v4044, %v4028
        %v5309 = vpack.c.b16 %v4045, %v4029
        %v5310 = vpack.c.b16 %v4046, %v4030
        %v5311 = vpack.c.b16 %v4047, %v4031
        %v5312 = vpack.c.b16 %v4048, %v4032
        %v5313 = vpack.c.b16 %v4049, %v4033
        %v5314 = vpack.c.b16 %v4050, %v4034
        %v5315 = vpack.c.b16 %v4051, %v4035
        %v5316 = vpack.c.b16 %v4052, %v4036
        %v5317 = vpack.c.b16 %v4053, %v4037
        %v5318 = vpack.c.b16 %v4054, %v4038
        %v5319 = vpack.c.b16 %v4055, %v4039
        %v5320 = vpack.c.b16 %v4056, %v4040
        %v5321 = vpack.c.b16 %v4073, %v4057
        %v5322 = vpack.c.b16 %v4074, %v4058
        %v5323 = vpack.c.b16 %v4075, %v4059
        %v5324 = vpack.c.b16 %v4076, %v4060
        %v5325 = vpack.c.b16 %v4077, %v4061
        %v5326 = vpack.c.b16 %v4078, %v4062
        %v5327 = vpack.c.b16 %v4079, %v4063
        %v5328 = vpack.c.b16 %v4080, %v4064
        %v5329 = vpack.c.b16 %v4081, %v4065
        %v5330 = vpack.c.b16 %v4082, %v4066
        %v5331 = vpack.c.b16 %v4083, %v4067
        %v5332 = vpack.c.b16 %v4084, %v4068
        %v5333 = vpack.c.b16 %v4085, %v4069
        %v5334 = vpack.c.b16 %v4086, %v4070
        %v5335 = vpack.c.b16 %v4087, %v4071
        %v5336 = vpack.c.b16 %v4088, %v4072
        %v5337 = vpack.c.b16 %v4105, %v4089
        %v5338 = vpack.c.b16 %v4106, %v4090
        %v5339 = vpack.c.b16 %v4107, %v4091
        %v5340 = vpack.c.b16 %v4108, %v4092
        %v5341 = vpack.c.b16 %v4109, %v4093
        %v5342 = vpack.c.b16 %v4110, %v4094
        %v5343 = vpack.c.b16 %v4111, %v4095
        %v5344 = vpack.c.b16 %v4112, %v4096
        %v5345 = vpack.c.b16 %v4113, %v4097
        %v5346 = vpack.c.b16 %v4114, %v4098
        %v5347 = vpack.c.b16 %v4115, %v4099
        %v5348 = vpack.c.b16 %v4116, %v4100
        %v5349 = vpack.c.b16 %v4117, %v4101
        %v5350 = vpack.c.b16 %v4118, %v4102
        %v5351 = vpack.c.b16 %v4119, %v4103
        %v5352 = vpack.c.b16 %v4120, %v4104
        %v5353 = vpack.c.b16 %v4137, %v4121
        %v5354 = vpack.c.b16 %v4138, %v4122
        %v5355 = vpack.c.b16 %v4139, %v4123
        %v5356 = vpack.c.b16 %v4140, %v4124
        %v5357 = vpack.c.b16 %v4141, %v4125
        %v5358 = vpack.c.b16 %v4142, %v4126
        %v5359 = vpack.c.b16 %v4143, %v4127
        %v5360 = vpack.c.b16 %v4144, %v4128
        %v5361 = vpack.c.b16 %v4145, %v4129
        %v5362 = vpack.c.b16 %v4146, %v4130
        %v5363 = vpack.c.b16 %v4147, %v4131
        %v5364 = vpack.c.b16 %v4148, %v4132
        %v5365 = vpack.c.b16 %v4149, %v4133
        %v5366 = vpack.c.b16 %v4150, %v4134
        %v5367 = vpack.c.b16 %v4151, %v4135
        %v5368 = vpack.c.b16 %v4152, %v4136
        %v5369 = vpack.c.b16 %v4169, %v4153
        %v5370 = vpack.c.b16 %v4170, %v4154
        %v5371 = vpack.c.b16 %v4171, %v4155
        %v5372 = vpack.c.b16 %v4172, %v4156
        %v5373 = vpack.c.b16 %v4173, %v4157
        %v5374 = vpack.c.b16 %v4174, %v4158
        %v5375 = vpack.c.b16 %v4175, %v4159
        %v5376 = vpack.c.b16 %v4176, %v4160
        %v5377 = vpack.c.b16 %v4177, %v4161
        %v5378 = vpack.c.b16 %v4178, %v4162
        %v5379 = vpack.c.b16 %v4179, %v4163
        %v5380 = vpack.c.b16 %v4180, %v4164
        %v5381 = vpack.c.b16 %v4181, %v4165
        %v5382 = vpack.c.b16 %v4182, %v4166
        %v5383 = vpack.c.b16 %v4183, %v4167
        %v5384 = vpack.c.b16 %v4184, %v4168
        %v5385 = vpack.c.b16 %v4201, %v4185
        %v5386 = vpack.c.b16 %v4202, %v4186
        %v5387 = vpack.c.b16 %v4203, %v4187
        %v5388 = vpack.c.b16 %v4204, %v4188
        %v5389 = vpack.c.b16 %v4205, %v4189
        %v5390 = vpack.c.b16 %v4206, %v4190
        %v5391 = vpack.c.b16 %v4207, %v4191
        %v5392 = vpack.c.b16 %v4208, %v4192
        %v5393 = vpack.c.b16 %v4209, %v4193
        %v5394 = vpack.c.b16 %v4210, %v4194
        %v5395 = vpack.c.b16 %v4211, %v4195
        %v5396 = vpack.c.b16 %v4212, %v4196
        %v5397 = vpack.c.b16 %v4213, %v4197
        %v5398 = vpack.c.b16 %v4214, %v4198
        %v5399 = vpack.c.b16 %v4215, %v4199
        %v5400 = vpack.c.b16 %v4216, %v4200
        %v5401 = vpack.c.b16 %v4233, %v4217
        %v5402 = vpack.c.b16 %v4234, %v4218
        %v5403 = vpack.c.b16 %v4235, %v4219
        %v5404 = vpack.c.b16 %v4236, %v4220
        %v5405 = vpack.c.b16 %v4237, %v4221
        %v5406 = vpack.c.b16 %v4238, %v4222
        %v5407 = vpack.c.b16 %v4239, %v4223
        %v5408 = vpack.c.b16 %v4240, %v4224
        %v5409 = vpack.c.b16 %v4241, %v4225
        %v5410 = vpack.c.b16 %v4242, %v4226
        %v5411 = vpack.c.b16 %v4243, %v4227
        %v5412 = vpack.c.b16 %v4244, %v4228
        %v5413 = vpack.c.b16 %v4245, %v4229
        %v5414 = vpack.c.b16 %v4246, %v4230
        %v5415 = vpack.c.b16 %v4247, %v4231
        %v5416 = vpack.c.b16 %v4248, %v4232
        %v5417 = vpack.c.b16 %v4265, %v4249
        %v5418 = vpack.c.b16 %v4266, %v4250
        %v5419 = vpack.c.b16 %v4267, %v4251
        %v5420 = vpack.c.b16 %v4268, %v4252
        %v5421 = vpack.c.b16 %v4269, %v4253
        %v5422 = vpack.c.b16 %v4270, %v4254
        %v5423 = vpack.c.b16 %v4271, %v4255
        %v5424 = vpack.c.b16 %v4272, %v4256
        %v5425 = vpack.c.b16 %v4273, %v4257
        %v5426 = vpack.c.b16 %v4274, %v4258
        %v5427 = vpack.c.b16 %v4275, %v4259
        %v5428 = vpack.c.b16 %v4276, %v4260
        %v5429 = vpack.c.b16 %v4277, %v4261
        %v5430 = vpack.c.b16 %v4278, %v4262
        %v5431 = vpack.c.b16 %v4279, %v4263
        %v5432 = vpack.c.b16 %v4280, %v4264
        %v5433 = vpack.c.b16 %v4297, %v4281
        %v5434 = vpack.c.b16 %v4298, %v4282
        %v5435 = vpack.c.b16 %v4299, %v4283
        %v5436 = vpack.c.b16 %v4300, %v4284
        %v5437 = vpack.c.b16 %v4301, %v4285
        %v5438 = vpack.c.b16 %v4302, %v4286
        %v5439 = vpack.c.b16 %v4303, %v4287
        %v5440 = vpack.c.b16 %v4304, %v4288
        %v5441 = vpack.c.b16 %v4305, %v4289
        %v5442 = vpack.c.b16 %v4306, %v4290
        %v5443 = vpack.c.b16 %v4307, %v4291
        %v5444 = vpack.c.b16 %v4308, %v4292
        %v5445 = vpack.c.b16 %v4309, %v4293
        %v5446 = vpack.c.b16 %v4310, %v4294
        %v5447 = vpack.c.b16 %v4311, %v4295
        %v5448 = vpack.c.b16 %v4312, %v4296
        %v5449 = vpack.c.b16 %v4329, %v4313
        %v5450 = vpack.c.b16 %v4330, %v4314
        %v5451 = vpack.c.b16 %v4331, %v4315
        %v5452 = vpack.c.b16 %v4332, %v4316
        %v5453 = vpack.c.b16 %v4333, %v4317
        %v5454 = vpack.c.b16 %v4334, %v4318
        %v5455 = vpack.c.b16 %v4335, %v4319
        %v5456 = vpack.c.b16 %v4336, %v4320
        %v5457 = vpack.c.b16 %v4337, %v4321
        %v5458 = vpack.c.b16 %v4338, %v4322
        %v5459 = vpack.c.b16 %v4339, %v4323
        %v5460 = vpack.c.b16 %v4340, %v4324
        %v5461 = vpack.c.b16 %v4341, %v4325
        %v5462 = vpack.c.b16 %v4342, %v4326
        %v5463 = vpack.c.b16 %v4343, %v4327
        %v5464 = vpack.c.b16 %v4344, %v4328
        %v5465 = vpack.c.b16 %v4361, %v4345
        %v5466 = vpack.c.b16 %v4362, %v4346
        %v5467 = vpack.c.b16 %v4363, %v4347
        %v5468 = vpack.c.b16 %v4364, %v4348
        %v5469 = vpack.c.b16 %v4365, %v4349
        %v5470 = vpack.c.b16 %v4366, %v4350
        %v5471 = vpack.c.b16 %v4367, %v4351
        %v5472 = vpack.c.b16 %v4368, %v4352
        %v5473 = vpack.c.b16 %v4369, %v4353
        %v5474 = vpack.c.b16 %v4370, %v4354
        %v5475 = vpack.c.b16 %v4371, %v4355
        %v5476 = vpack.c.b16 %v4372, %v4356
        %v5477 = vpack.c.b16 %v4373, %v4357
        %v5478 = vpack.c.b16 %v4374, %v4358
        %v5479 = vpack.c.b16 %v4375, %v4359
        %v5480 = vpack.c.b16 %v4376, %v4360
        %v5481 = vpack.c.b16 %v4393, %v4377
        %v5482 = vpack.c.b16 %v4394, %v4378
        %v5483 = vpack.c.b16 %v4395, %v4379
        %v5484 = vpack.c.b16 %v4396, %v4380
        %v5485 = vpack.c.b16 %v4397, %v4381
        %v5486 = vpack.c.b16 %v4398, %v4382
        %v5487 = vpack.c.b16 %v4399, %v4383
        %v5488 = vpack.c.b16 %v4400, %v4384
        %v5489 = vpack.c.b16 %v4401, %v4385
        %v5490 = vpack.c.b16 %v4402, %v4386
        %v5491 = vpack.c.b16 %v4403, %v4387
        %v5492 = vpack.c.b16 %v4404, %v4388
        %v5493 = vpack.c.b16 %v4405, %v4389
        %v5494 = vpack.c.b16 %v4406, %v4390
        %v5495 = vpack.c.b16 %v4407, %v4391
        %v5496 = vpack.c.b16 %v4408, %v4392
        %v5497 = vpack.c.b16 %v4425, %v4409
        %v5498 = vpack.c.b16 %v4426, %v4410
        %v5499 = vpack.c.b16 %v4427, %v4411
        %v5500 = vpack.c.b16 %v4428, %v4412
        %v5501 = vpack.c.b16 %v4429, %v4413
        %v5502 = vpack.c.b16 %v4430, %v4414
        %v5503 = vpack.c.b16 %v4431, %v4415
        %v5504 = vpack.c.b16 %v4432, %v4416
        %v5505 = vpack.c.b16 %v4433, %v4417
        %v5506 = vpack.c.b16 %v4434, %v4418
        %v5507 = vpack.c.b16 %v4435, %v4419
        %v5508 = vpack.c.b16 %v4436, %v4420
        %v5509 = vpack.c.b16 %v4437, %v4421
        %v5510 = vpack.c.b16 %v4438, %v4422
        %v5511 = vpack.c.b16 %v4439, %v4423
        %v5512 = vpack.c.b16 %v4440, %v4424
        %v5513 = vpack.c.b16 %v4457, %v4441
        %v5514 = vpack.c.b16 %v4458, %v4442
        %v5515 = vpack.c.b16 %v4459, %v4443
        %v5516 = vpack.c.b16 %v4460, %v4444
        %v5517 = vpack.c.b16 %v4461, %v4445
        %v5518 = vpack.c.b16 %v4462, %v4446
        %v5519 = vpack.c.b16 %v4463, %v4447
        %v5520 = vpack.c.b16 %v4464, %v4448
        %v5521 = vpack.c.b16 %v4465, %v4449
        %v5522 = vpack.c.b16 %v4466, %v4450
        %v5523 = vpack.c.b16 %v4467, %v4451
        %v5524 = vpack.c.b16 %v4468, %v4452
        %v5525 = vpack.c.b16 %v4469, %v4453
        %v5526 = vpack.c.b16 %v4470, %v4454
        %v5527 = vpack.c.b16 %v4471, %v4455
        %v5528 = vpack.c.b16 %v4472, %v4456
        %v5529 = vpack.c.b16 %v4489, %v4473
        %v5530 = vpack.c.b16 %v4490, %v4474
        %v5531 = vpack.c.b16 %v4491, %v4475
        %v5532 = vpack.c.b16 %v4492, %v4476
        %v5533 = vpack.c.b16 %v4493, %v4477
        %v5534 = vpack.c.b16 %v4494, %v4478
        %v5535 = vpack.c.b16 %v4495, %v4479
        %v5536 = vpack.c.b16 %v4496, %v4480
        %v5537 = vpack.c.b16 %v4497, %v4481
        %v5538 = vpack.c.b16 %v4498, %v4482
        %v5539 = vpack.c.b16 %v4499, %v4483
        %v5540 = vpack.c.b16 %v4500, %v4484
        %v5541 = vpack.c.b16 %v4501, %v4485
        %v5542 = vpack.c.b16 %v4502, %v4486
        %v5543 = vpack.c.b16 %v4503, %v4487
        %v5544 = vpack.c.b16 %v4504, %v4488
        %v5545 = vpack.c.b16 %v4521, %v4505
        %v5546 = vpack.c.b16 %v4522, %v4506
        %v5547 = vpack.c.b16 %v4523, %v4507
        %v5548 = vpack.c.b16 %v4524, %v4508
        %v5549 = vpack.c.b16 %v4525, %v4509
        %v5550 = vpack.c.b16 %v4526, %v4510
        %v5551 = vpack.c.b16 %v4527, %v4511
        %v5552 = vpack.c.b16 %v4528, %v4512
        %v5553 = vpack.c.b16 %v4529, %v4513
        %v5554 = vpack.c.b16 %v4530, %v4514
        %v5555 = vpack.c.b16 %v4531, %v4515
        %v5556 = vpack.c.b16 %v4532, %v4516
        %v5557 = vpack.c.b16 %v4533, %v4517
        %v5558 = vpack.c.b16 %v4534, %v4518
        %v5559 = vpack.c.b16 %v4535, %v4519
        %v5560 = vpack.c.b16 %v4536, %v4520
        %6585 = vmatprep.subr.bf16.mxu0 %v4538
        %6586 = vmatpush1.bf16.msra.mxu0 %v4537
        %6587 = vmatprep.subr.bf16.mxu0 %v4554
        %6588 = vmatpush1.bf16.msra.mxu0 %v4553
        %6589 = vmatprep.subr.bf16.mxu0 %v4570
        %6590 = vmatpush1.bf16.msra.mxu0 %v4569
        %6591 = vmatprep.subr.bf16.mxu0 %v4586
        %6592 = vmatpush1.bf16.msra.mxu0 %v4585
        %6593 = vmatprep.subr.bf16.mxu0 %v4602
        %6594 = vmatpush1.bf16.msra.mxu0 %v4601
        %6595 = vmatprep.subr.bf16.mxu0 %v4618
        %6596 = vmatpush1.bf16.msra.mxu0 %v4617
        %6597 = vmatprep.subr.bf16.mxu0 %v4634
        %6598 = vmatpush1.bf16.msra.mxu0 %v4633
        %6599 = vmatprep.subr.bf16.mxu0 %v4650
        %6600 = vmatpush1.bf16.msra.mxu0 %v4649
        %6601 = vmatprep.subr.bf16.mxu0 %v4666
        %6602 = vmatpush1.bf16.msra.mxu0 %v4665
        %6603 = vmatprep.subr.bf16.mxu0 %v4682
        %6604 = vmatpush1.bf16.msra.mxu0 %v4681
        %6605 = vmatprep.subr.bf16.mxu0 %v4698
        %6606 = vmatpush1.bf16.msra.mxu0 %v4697
        %6607 = vmatprep.subr.bf16.mxu0 %v4714
        %6608 = vmatpush1.bf16.msra.mxu0 %v4713
        %6609 = vmatprep.subr.bf16.mxu0 %v4730
        %6610 = vmatpush1.bf16.msra.mxu0 %v4729
        %6611 = vmatprep.subr.bf16.mxu0 %v4746
        %6612 = vmatpush1.bf16.msra.mxu0 %v4745
        %6613 = vmatprep.subr.bf16.mxu0 %v4762
        %6614 = vmatpush1.bf16.msra.mxu0 %v4761
        %6615 = vmatprep.subr.bf16.mxu0 %v4778
        %6616 = vmatpush1.bf16.msra.mxu0 %v4777
        %6617 = vmatprep.mubr.bf16.mxu0 %v1450
        %6618 = vmatmul.mubr.bf16.gmra.mrb[0].mxu0 %v1449
        %v6619 = vpop.f32.mrb[0].mxu0
        %v6620 = vadd.f32 0.0, %v6619
        %v6621 = vpop.f32.mrb[0].mxu0
        %v6622 = vadd.f32 0.0, %v6621
        %v6623 = vpop.f32.mrb[0].mxu0
        %v6624 = vpop.f32.mrb[0].mxu0
        %6625 = vdwg.mxu0
        %6626 = vmatprep.subr.bf16.mxu0 %v4794
        %6627 = vmatpush1.bf16.msra.mxu0 %v4793
        %6628 = vmatprep.subr.bf16.mxu0 %v4810
        %6629 = vmatpush1.bf16.msra.mxu0 %v4809
        %6630 = vmatprep.subr.bf16.mxu0 %v4826
        %6631 = vmatpush1.bf16.msra.mxu0 %v4825
        %6632 = vmatprep.subr.bf16.mxu0 %v4842
        %6633 = vmatpush1.bf16.msra.mxu0 %v4841
        %6634 = vmatprep.subr.bf16.mxu0 %v4858
        %6635 = vmatpush1.bf16.msra.mxu0 %v4857
        %6636 = vmatprep.subr.bf16.mxu0 %v4874
        %6637 = vmatpush1.bf16.msra.mxu0 %v4873
        %6638 = vmatprep.subr.bf16.mxu0 %v4890
        %6639 = vmatpush1.bf16.msra.mxu0 %v4889
        %6640 = vmatprep.subr.bf16.mxu0 %v4906
        %6641 = vmatpush1.bf16.msra.mxu0 %v4905
        %6642 = vmatprep.subr.bf16.mxu0 %v4922
        %6643 = vmatpush1.bf16.msra.mxu0 %v4921
        %6644 = vmatprep.subr.bf16.mxu0 %v4938
        %6645 = vmatpush1.bf16.msra.mxu0 %v4937
        %6646 = vmatprep.subr.bf16.mxu0 %v4954
        %6647 = vmatpush1.bf16.msra.mxu0 %v4953
        %6648 = vmatprep.subr.bf16.mxu0 %v4970
        %6649 = vmatpush1.bf16.msra.mxu0 %v4969
        %6650 = vmatprep.subr.bf16.mxu0 %v4986
        %6651 = vmatpush1.bf16.msra.mxu0 %v4985
        %6652 = vmatprep.subr.bf16.mxu0 %v5002
        %6653 = vmatpush1.bf16.msra.mxu0 %v5001
        %6654 = vmatprep.subr.bf16.mxu0 %v5018
        %6655 = vmatpush1.bf16.msra.mxu0 %v5017
        %6656 = vmatprep.subr.bf16.mxu0 %v5034
        %6657 = vmatpush1.bf16.msra.mxu0 %v5033
        %6658 = vmatprep.mubr.bf16.mxu0 %v1452
        %6659 = vmatmul.mubr.bf16.gmra.mrb[0].mxu0 %v1451
        %v6660 = vpop.f32.mrb[0].mxu0
        %v6661 = vadd.f32 %v6620, %v6660
        %v6662 = vpop.f32.mrb[0].mxu0
        %v6663 = vadd.f32 %v6622, %v6662
        %v6664 = vpop.f32.mrb[0].mxu0
        %v6665 = vpop.f32.mrb[0].mxu0
        %6666 = vdwg.mxu0
        %6667 = vmatprep.subr.bf16.mxu0 %v5050
        %6668 = vmatpush1.bf16.msra.mxu0 %v5049
        %6669 = vmatprep.subr.bf16.mxu0 %v5066
        %6670 = vmatpush1.bf16.msra.mxu0 %v5065
        %6671 = vmatprep.subr.bf16.mxu0 %v5082
        %6672 = vmatpush1.bf16.msra.mxu0 %v5081
        %6673 = vmatprep.subr.bf16.mxu0 %v5098
        %6674 = vmatpush1.bf16.msra.mxu0 %v5097
        %6675 = vmatprep.subr.bf16.mxu0 %v5114
        %6676 = vmatpush1.bf16.msra.mxu0 %v5113
        %6677 = vmatprep.subr.bf16.mxu0 %v5130
        %6678 = vmatpush1.bf16.msra.mxu0 %v5129
        %6679 = vmatprep.subr.bf16.mxu0 %v5146
        %6680 = vmatpush1.bf16.msra.mxu0 %v5145
        %6681 = vmatprep.subr.bf16.mxu0 %v5162
        %6682 = vmatpush1.bf16.msra.mxu0 %v5161
        %6683 = vmatprep.subr.bf16.mxu0 %v5178
        %6684 = vmatpush1.bf16.msra.mxu0 %v5177
        %6685 = vmatprep.subr.bf16.mxu0 %v5194
        %6686 = vmatpush1.bf16.msra.mxu0 %v5193
        %6687 = vmatprep.subr.bf16.mxu0 %v5210
        %6688 = vmatpush1.bf16.msra.mxu0 %v5209
        %6689 = vmatprep.subr.bf16.mxu0 %v5226
        %6690 = vmatpush1.bf16.msra.mxu0 %v5225
        %6691 = vmatprep.subr.bf16.mxu0 %v5242
        %6692 = vmatpush1.bf16.msra.mxu0 %v5241
        %6693 = vmatprep.subr.bf16.mxu0 %v5258
        %6694 = vmatpush1.bf16.msra.mxu0 %v5257
        %6695 = vmatprep.subr.bf16.mxu0 %v5274
        %6696 = vmatpush1.bf16.msra.mxu0 %v5273
        %6697 = vmatprep.subr.bf16.mxu0 %v5290
        %6698 = vmatpush1.bf16.msra.mxu0 %v5289
        %6699 = vmatprep.mubr.bf16.mxu0 %v1454
        %6700 = vmatmul.mubr.bf16.gmra.mrb[0].mxu0 %v1453
        %v6701 = vpop.f32.mrb[0].mxu0
        %v6702 = vadd.f32 %v6661, %v6701
        %v6703 = vpop.f32.mrb[0].mxu0
        %v6704 = vadd.f32 %v6663, %v6703
        %v6705 = vpop.f32.mrb[0].mxu0
        %v6706 = vpop.f32.mrb[0].mxu0
        %6707 = vdwg.mxu0
        %6708 = vmatprep.subr.bf16.mxu0 %v5306
        %6709 = vmatpush1.bf16.msra.mxu0 %v5305
        %6710 = vmatprep.subr.bf16.mxu0 %v5322
        %6711 = vmatpush1.bf16.msra.mxu0 %v5321
        %6712 = vmatprep.subr.bf16.mxu0 %v5338
        %6713 = vmatpush1.bf16.msra.mxu0 %v5337
        %6714 = vmatprep.subr.bf16.mxu0 %v5354
        %6715 = vmatpush1.bf16.msra.mxu0 %v5353
        %6716 = vmatprep.subr.bf16.mxu0 %v5370
        %6717 = vmatpush1.bf16.msra.mxu0 %v5369
        %6718 = vmatprep.subr.bf16.mxu0 %v5386
        %6719 = vmatpush1.bf16.msra.mxu0 %v5385
        %6720 = vmatprep.subr.bf16.mxu0 %v5402
        %6721 = vmatpush1.bf16.msra.mxu0 %v5401
        %6722 = vmatprep.subr.bf16.mxu0 %v5418
        %6723 = vmatpush1.bf16.msra.mxu0 %v5417
        %6724 = vmatprep.subr.bf16.mxu0 %v5434
        %6725 = vmatpush1.bf16.msra.mxu0 %v5433
        %6726 = vmatprep.subr.bf16.mxu0 %v5450
        %6727 = vmatpush1.bf16.msra.mxu0 %v5449
        %6728 = vmatprep.subr.bf16.mxu0 %v5466
        %6729 = vmatpush1.bf16.msra.mxu0 %v5465
        %6730 = vmatprep.subr.bf16.mxu0 %v5482
        %6731 = vmatpush1.bf16.msra.mxu0 %v5481
        %6732 = vmatprep.subr.bf16.mxu0 %v5498
        %6733 = vmatpush1.bf16.msra.mxu0 %v5497
        %6734 = vmatprep.subr.bf16.mxu0 %v5514
        %6735 = vmatpush1.bf16.msra.mxu0 %v5513
        %6736 = vmatprep.subr.bf16.mxu0 %v5530
        %6737 = vmatpush1.bf16.msra.mxu0 %v5529
        %6738 = vmatprep.subr.bf16.mxu0 %v5546
        %6739 = vmatpush1.bf16.msra.mxu0 %v5545
        %6740 = vmatprep.mubr.bf16.mxu0 %v1456
        %6741 = vmatmul.mubr.bf16.gmra.mrb[0].mxu0 %v1455
        %v6742 = vpop.f32.mrb[0].mxu0
        %v6743 = vadd.f32 %v6702, %v6742
        %v6744 = vpop.f32.mrb[0].mxu0
        %v6745 = vadd.f32 %v6704, %v6744
        %v6746 = vpop.f32.mrb[0].mxu0
        %v6747 = vpop.f32.mrb[0].mxu0
        %6748 = vdwg.mxu0
        %6749 = vmatprep.subr.bf16.mxu0 %v4540
        %6750 = vmatpush1.bf16.msra.mxu0 %v4539
        %6751 = vmatprep.subr.bf16.mxu0 %v4556
        %6752 = vmatpush1.bf16.msra.mxu0 %v4555
        %6753 = vmatprep.subr.bf16.mxu0 %v4572
        %6754 = vmatpush1.bf16.msra.mxu0 %v4571
        %6755 = vmatprep.subr.bf16.mxu0 %v4588
        %6756 = vmatpush1.bf16.msra.mxu0 %v4587
        %6757 = vmatprep.subr.bf16.mxu0 %v4604
        %6758 = vmatpush1.bf16.msra.mxu0 %v4603
        %6759 = vmatprep.subr.bf16.mxu0 %v4620
        %6760 = vmatpush1.bf16.msra.mxu0 %v4619
        %6761 = vmatprep.subr.bf16.mxu0 %v4636
        %6762 = vmatpush1.bf16.msra.mxu0 %v4635
        %6763 = vmatprep.subr.bf16.mxu0 %v4652
        %6764 = vmatpush1.bf16.msra.mxu0 %v4651
        %6765 = vmatprep.subr.bf16.mxu0 %v4668
        %6766 = vmatpush1.bf16.msra.mxu0 %v4667
        %6767 = vmatprep.subr.bf16.mxu0 %v4684
        %6768 = vmatpush1.bf16.msra.mxu0 %v4683
        %6769 = vmatprep.subr.bf16.mxu0 %v4700
        %6770 = vmatpush1.bf16.msra.mxu0 %v4699
        %6771 = vmatprep.subr.bf16.mxu0 %v4716
        %6772 = vmatpush1.bf16.msra.mxu0 %v4715
        %6773 = vmatprep.subr.bf16.mxu0 %v4732
        %6774 = vmatpush1.bf16.msra.mxu0 %v4731
        %6775 = vmatprep.subr.bf16.mxu0 %v4748
        %6776 = vmatpush1.bf16.msra.mxu0 %v4747
        %6777 = vmatprep.subr.bf16.mxu0 %v4764
        %6778 = vmatpush1.bf16.msra.mxu0 %v4763
        %6779 = vmatprep.subr.bf16.mxu0 %v4780
        %6780 = vmatpush1.bf16.msra.mxu0 %v4779
        %6781 = vmatprep.mubr.bf16.mxu0 %v1450
        %6782 = vmatmul.mubr.bf16.gmra.mrb[0].mxu0 %v1449
        %v6783 = vpop.f32.mrb[0].mxu0
        %v6784 = vadd.f32 0.0, %v6783
        %v6785 = vpop.f32.mrb[0].mxu0
        %v6786 = vadd.f32 0.0, %v6785
        %v6787 = vpop.f32.mrb[0].mxu0
        %v6788 = vpop.f32.mrb[0].mxu0
        %6789 = vdwg.mxu0
        %6790 = vmatprep.subr.bf16.mxu0 %v4796
        %6791 = vmatpush1.bf16.msra.mxu0 %v4795
        %6792 = vmatprep.subr.bf16.mxu0 %v4812
        %6793 = vmatpush1.bf16.msra.mxu0 %v4811
        %6794 = vmatprep.subr.bf16.mxu0 %v4828
        %6795 = vmatpush1.bf16.msra.mxu0 %v4827
        %6796 = vmatprep.subr.bf16.mxu0 %v4844
        %6797 = vmatpush1.bf16.msra.mxu0 %v4843
        %6798 = vmatprep.subr.bf16.mxu0 %v4860
        %6799 = vmatpush1.bf16.msra.mxu0 %v4859
        %6800 = vmatprep.subr.bf16.mxu0 %v4876
        %6801 = vmatpush1.bf16.msra.mxu0 %v4875
        %6802 = vmatprep.subr.bf16.mxu0 %v4892
        %6803 = vmatpush1.bf16.msra.mxu0 %v4891
        %6804 = vmatprep.subr.bf16.mxu0 %v4908
        %6805 = vmatpush1.bf16.msra.mxu0 %v4907
        %6806 = vmatprep.subr.bf16.mxu0 %v4924
        %6807 = vmatpush1.bf16.msra.mxu0 %v4923
        %6808 = vmatprep.subr.bf16.mxu0 %v4940
        %6809 = vmatpush1.bf16.msra.mxu0 %v4939
        %6810 = vmatprep.subr.bf16.mxu0 %v4956
        %6811 = vmatpush1.bf16.msra.mxu0 %v4955
        %6812 = vmatprep.subr.bf16.mxu0 %v4972
        %6813 = vmatpush1.bf16.msra.mxu0 %v4971
        %6814 = vmatprep.subr.bf16.mxu0 %v4988
        %6815 = vmatpush1.bf16.msra.mxu0 %v4987
        %6816 = vmatprep.subr.bf16.mxu0 %v5004
        %6817 = vmatpush1.bf16.msra.mxu0 %v5003
        %6818 = vmatprep.subr.bf16.mxu0 %v5020
        %6819 = vmatpush1.bf16.msra.mxu0 %v5019
        %6820 = vmatprep.subr.bf16.mxu0 %v5036
        %6821 = vmatpush1.bf16.msra.mxu0 %v5035
        %6822 = vmatprep.mubr.bf16.mxu0 %v1452
        %6823 = vmatmul.mubr.bf16.gmra.mrb[0].mxu0 %v1451
        %v6824 = vpop.f32.mrb[0].mxu0
        %v6825 = vadd.f32 %v6784, %v6824
        %v6826 = vpop.f32.mrb[0].mxu0
        %v6827 = vadd.f32 %v6786, %v6826
        %v6828 = vpop.f32.mrb[0].mxu0
        %v6829 = vpop.f32.mrb[0].mxu0
        %6830 = vdwg.mxu0
        %6831 = vmatprep.subr.bf16.mxu0 %v5052
        %6832 = vmatpush1.bf16.msra.mxu0 %v5051
        %6833 = vmatprep.subr.bf16.mxu0 %v5068
        %6834 = vmatpush1.bf16.msra.mxu0 %v5067
        %6835 = vmatprep.subr.bf16.mxu0 %v5084
        %6836 = vmatpush1.bf16.msra.mxu0 %v5083
        %6837 = vmatprep.subr.bf16.mxu0 %v5100
        %6838 = vmatpush1.bf16.msra.mxu0 %v5099
        %6839 = vmatprep.subr.bf16.mxu0 %v5116
        %6840 = vmatpush1.bf16.msra.mxu0 %v5115
        %6841 = vmatprep.subr.bf16.mxu0 %v5132
        %6842 = vmatpush1.bf16.msra.mxu0 %v5131
        %6843 = vmatprep.subr.bf16.mxu0 %v5148
        %6844 = vmatpush1.bf16.msra.mxu0 %v5147
        %6845 = vmatprep.subr.bf16.mxu0 %v5164
        %6846 = vmatpush1.bf16.msra.mxu0 %v5163
        %6847 = vmatprep.subr.bf16.mxu0 %v5180
        %6848 = vmatpush1.bf16.msra.mxu0 %v5179
        %6849 = vmatprep.subr.bf16.mxu0 %v5196
        %6850 = vmatpush1.bf16.msra.mxu0 %v5195
        %6851 = vmatprep.subr.bf16.mxu0 %v5212
        %6852 = vmatpush1.bf16.msra.mxu0 %v5211
        %6853 = vmatprep.subr.bf16.mxu0 %v5228
        %6854 = vmatpush1.bf16.msra.mxu0 %v5227
        %6855 = vmatprep.subr.bf16.mxu0 %v5244
        %6856 = vmatpush1.bf16.msra.mxu0 %v5243
        %6857 = vmatprep.subr.bf16.mxu0 %v5260
        %6858 = vmatpush1.bf16.msra.mxu0 %v5259
        %6859 = vmatprep.subr.bf16.mxu0 %v5276
        %6860 = vmatpush1.bf16.msra.mxu0 %v5275
        %6861 = vmatprep.subr.bf16.mxu0 %v5292
        %6862 = vmatpush1.bf16.msra.mxu0 %v5291
        %6863 = vmatprep.mubr.bf16.mxu0 %v1454
        %6864 = vmatmul.mubr.bf16.gmra.mrb[0].mxu0 %v1453
        %v6865 = vpop.f32.mrb[0].mxu0
        %v6866 = vadd.f32 %v6825, %v6865
        %v6867 = vpop.f32.mrb[0].mxu0
        %v6868 = vadd.f32 %v6827, %v6867
        %v6869 = vpop.f32.mrb[0].mxu0
        %v6870 = vpop.f32.mrb[0].mxu0
        %6871 = vdwg.mxu0
        %6872 = vmatprep.subr.bf16.mxu0 %v5308
        %6873 = vmatpush1.bf16.msra.mxu0 %v5307
        %6874 = vmatprep.subr.bf16.mxu0 %v5324
        %6875 = vmatpush1.bf16.msra.mxu0 %v5323
        %6876 = vmatprep.subr.bf16.mxu0 %v5340
        %6877 = vmatpush1.bf16.msra.mxu0 %v5339
        %6878 = vmatprep.subr.bf16.mxu0 %v5356
        %6879 = vmatpush1.bf16.msra.mxu0 %v5355
        %6880 = vmatprep.subr.bf16.mxu0 %v5372
        %6881 = vmatpush1.bf16.msra.mxu0 %v5371
        %6882 = vmatprep.subr.bf16.mxu0 %v5388
        %6883 = vmatpush1.bf16.msra.mxu0 %v5387
        %6884 = vmatprep.subr.bf16.mxu0 %v5404
        %6885 = vmatpush1.bf16.msra.mxu0 %v5403
        %6886 = vmatprep.subr.bf16.mxu0 %v5420
        %6887 = vmatpush1.bf16.msra.mxu0 %v5419
        %6888 = vmatprep.subr.bf16.mxu0 %v5436
        %6889 = vmatpush1.bf16.msra.mxu0 %v5435
        %6890 = vmatprep.subr.bf16.mxu0 %v5452
        %6891 = vmatpush1.bf16.msra.mxu0 %v5451
        %6892 = vmatprep.subr.bf16.mxu0 %v5468
        %6893 = vmatpush1.bf16.msra.mxu0 %v5467
        %6894 = vmatprep.subr.bf16.mxu0 %v5484
        %6895 = vmatpush1.bf16.msra.mxu0 %v5483
        %6896 = vmatprep.subr.bf16.mxu0 %v5500
        %6897 = vmatpush1.bf16.msra.mxu0 %v5499
        %6898 = vmatprep.subr.bf16.mxu0 %v5516
        %6899 = vmatpush1.bf16.msra.mxu0 %v5515
        %6900 = vmatprep.subr.bf16.mxu0 %v5532
        %6901 = vmatpush1.bf16.msra.mxu0 %v5531
        %6902 = vmatprep.subr.bf16.mxu0 %v5548
        %6903 = vmatpush1.bf16.msra.mxu0 %v5547
        %6904 = vmatprep.mubr.bf16.mxu0 %v1456
        %6905 = vmatmul.mubr.bf16.gmra.mrb[0].mxu0 %v1455
        %v6906 = vpop.f32.mrb[0].mxu0
        %v6907 = vadd.f32 %v6866, %v6906
        %v6908 = vpop.f32.mrb[0].mxu0
        %v6909 = vadd.f32 %v6868, %v6908
        %v6910 = vpop.f32.mrb[0].mxu0
        %v6911 = vpop.f32.mrb[0].mxu0
        %6912 = vdwg.mxu0
        %6913 = vmatprep.subr.bf16.mxu0 %v4542
        %6914 = vmatpush1.bf16.msra.mxu0 %v4541
        %6915 = vmatprep.subr.bf16.mxu0 %v4558
        %6916 = vmatpush1.bf16.msra.mxu0 %v4557
        %6917 = vmatprep.subr.bf16.mxu0 %v4574
        %6918 = vmatpush1.bf16.msra.mxu0 %v4573
        %6919 = vmatprep.subr.bf16.mxu0 %v4590
        %6920 = vmatpush1.bf16.msra.mxu0 %v4589
        %6921 = vmatprep.subr.bf16.mxu0 %v4606
        %6922 = vmatpush1.bf16.msra.mxu0 %v4605
        %6923 = vmatprep.subr.bf16.mxu0 %v4622
        %6924 = vmatpush1.bf16.msra.mxu0 %v4621
        %6925 = vmatprep.subr.bf16.mxu0 %v4638
        %6926 = vmatpush1.bf16.msra.mxu0 %v4637
        %6927 = vmatprep.subr.bf16.mxu0 %v4654
        %6928 = vmatpush1.bf16.msra.mxu0 %v4653
        %6929 = vmatprep.subr.bf16.mxu0 %v4670
        %6930 = vmatpush1.bf16.msra.mxu0 %v4669
        %6931 = vmatprep.subr.bf16.mxu0 %v4686
        %6932 = vmatpush1.bf16.msra.mxu0 %v4685
        %6933 = vmatprep.subr.bf16.mxu0 %v4702
        %6934 = vmatpush1.bf16.msra.mxu0 %v4701
        %6935 = vmatprep.subr.bf16.mxu0 %v4718
        %6936 = vmatpush1.bf16.msra.mxu0 %v4717
        %6937 = vmatprep.subr.bf16.mxu0 %v4734
        %6938 = vmatpush1.bf16.msra.mxu0 %v4733
        %6939 = vmatprep.subr.bf16.mxu0 %v4750
        %6940 = vmatpush1.bf16.msra.mxu0 %v4749
        %6941 = vmatprep.subr.bf16.mxu0 %v4766
        %6942 = vmatpush1.bf16.msra.mxu0 %v4765
        %6943 = vmatprep.subr.bf16.mxu0 %v4782
        %6944 = vmatpush1.bf16.msra.mxu0 %v4781
        %6945 = vmatprep.mubr.bf16.mxu0 %v1450
        %6946 = vmatmul.mubr.bf16.gmra.mrb[0].mxu0 %v1449
        %v6947 = vpop.f32.mrb[0].mxu0
        %v6948 = vadd.f32 0.0, %v6947
        %v6949 = vpop.f32.mrb[0].mxu0
        %v6950 = vadd.f32 0.0, %v6949
        %v6951 = vpop.f32.mrb[0].mxu0
        %v6952 = vpop.f32.mrb[0].mxu0
        %6953 = vdwg.mxu0
        %6954 = vmatprep.subr.bf16.mxu0 %v4798
        %6955 = vmatpush1.bf16.msra.mxu0 %v4797
        %6956 = vmatprep.subr.bf16.mxu0 %v4814
        %6957 = vmatpush1.bf16.msra.mxu0 %v4813
        %6958 = vmatprep.subr.bf16.mxu0 %v4830
        %6959 = vmatpush1.bf16.msra.mxu0 %v4829
        %6960 = vmatprep.subr.bf16.mxu0 %v4846
        %6961 = vmatpush1.bf16.msra.mxu0 %v4845
        %6962 = vmatprep.subr.bf16.mxu0 %v4862
        %6963 = vmatpush1.bf16.msra.mxu0 %v4861
        %6964 = vmatprep.subr.bf16.mxu0 %v4878
        %6965 = vmatpush1.bf16.msra.mxu0 %v4877
        %6966 = vmatprep.subr.bf16.mxu0 %v4894
        %6967 = vmatpush1.bf16.msra.mxu0 %v4893
        %6968 = vmatprep.subr.bf16.mxu0 %v4910
        %6969 = vmatpush1.bf16.msra.mxu0 %v4909
        %6970 = vmatprep.subr.bf16.mxu0 %v4926
        %6971 = vmatpush1.bf16.msra.mxu0 %v4925
        %6972 = vmatprep.subr.bf16.mxu0 %v4942
        %6973 = vmatpush1.bf16.msra.mxu0 %v4941
        %6974 = vmatprep.subr.bf16.mxu0 %v4958
        %6975 = vmatpush1.bf16.msra.mxu0 %v4957
        %6976 = vmatprep.subr.bf16.mxu0 %v4974
        %6977 = vmatpush1.bf16.msra.mxu0 %v4973
        %6978 = vmatprep.subr.bf16.mxu0 %v4990
        %6979 = vmatpush1.bf16.msra.mxu0 %v4989
        %6980 = vmatprep.subr.bf16.mxu0 %v5006
        %6981 = vmatpush1.bf16.msra.mxu0 %v5005
        %6982 = vmatprep.subr.bf16.mxu0 %v5022
        %6983 = vmatpush1.bf16.msra.mxu0 %v5021
        %6984 = vmatprep.subr.bf16.mxu0 %v5038
        %6985 = vmatpush1.bf16.msra.mxu0 %v5037
        %6986 = vmatprep.mubr.bf16.mxu0 %v1452
        %6987 = vmatmul.mubr.bf16.gmra.mrb[0].mxu0 %v1451
        %v6988 = vpop.f32.mrb[0].mxu0
        %v6989 = vadd.f32 %v6948, %v6988
        %v6990 = vpop.f32.mrb[0].mxu0
        %v6991 = vadd.f32 %v6950, %v6990
        %v6992 = vpop.f32.mrb[0].mxu0
        %v6993 = vpop.f32.mrb[0].mxu0
        %6994 = vdwg.mxu0
        %6995 = vmatprep.subr.bf16.mxu0 %v5054
        %6996 = vmatpush1.bf16.msra.mxu0 %v5053
        %6997 = vmatprep.subr.bf16.mxu0 %v5070
        %6998 = vmatpush1.bf16.msra.mxu0 %v5069
        %6999 = vmatprep.subr.bf16.mxu0 %v5086
        %7000 = vmatpush1.bf16.msra.mxu0 %v5085
        %7001 = vmatprep.subr.bf16.mxu0 %v5102
        %7002 = vmatpush1.bf16.msra.mxu0 %v5101
        %7003 = vmatprep.subr.bf16.mxu0 %v5118
        %7004 = vmatpush1.bf16.msra.mxu0 %v5117
        %7005 = vmatprep.subr.bf16.mxu0 %v5134
        %7006 = vmatpush1.bf16.msra.mxu0 %v5133
        %7007 = vmatprep.subr.bf16.mxu0 %v5150
        %7008 = vmatpush1.bf16.msra.mxu0 %v5149
        %7009 = vmatprep.subr.bf16.mxu0 %v5166
        %7010 = vmatpush1.bf16.msra.mxu0 %v5165
        %7011 = vmatprep.subr.bf16.mxu0 %v5182
        %7012 = vmatpush1.bf16.msra.mxu0 %v5181
        %7013 = vmatprep.subr.bf16.mxu0 %v5198
        %7014 = vmatpush1.bf16.msra.mxu0 %v5197
        %7015 = vmatprep.subr.bf16.mxu0 %v5214
        %7016 = vmatpush1.bf16.msra.mxu0 %v5213
        %7017 = vmatprep.subr.bf16.mxu0 %v5230
        %7018 = vmatpush1.bf16.msra.mxu0 %v5229
        %7019 = vmatprep.subr.bf16.mxu0 %v5246
        %7020 = vmatpush1.bf16.msra.mxu0 %v5245
        %7021 = vmatprep.subr.bf16.mxu0 %v5262
        %7022 = vmatpush1.bf16.msra.mxu0 %v5261
        %7023 = vmatprep.subr.bf16.mxu0 %v5278
        %7024 = vmatpush1.bf16.msra.mxu0 %v5277
        %7025 = vmatprep.subr.bf16.mxu0 %v5294
        %7026 = vmatpush1.bf16.msra.mxu0 %v5293
        %7027 = vmatprep.mubr.bf16.mxu0 %v1454
        %7028 = vmatmul.mubr.bf16.gmra.mrb[0].mxu0 %v1453
        %v7029 = vpop.f32.mrb[0].mxu0
        %v7030 = vadd.f32 %v6989, %v7029
        %v7031 = vpop.f32.mrb[0].mxu0
        %v7032 = vadd.f32 %v6991, %v7031
        %v7033 = vpop.f32.mrb[0].mxu0
        %v7034 = vpop.f32.mrb[0].mxu0
        %7035 = vdwg.mxu0
        %7036 = vmatprep.subr.bf16.mxu0 %v5310
        %7037 = vmatpush1.bf16.msra.mxu0 %v5309
        %7038 = vmatprep.subr.bf16.mxu0 %v5326
        %7039 = vmatpush1.bf16.msra.mxu0 %v5325
        %7040 = vmatprep.subr.bf16.mxu0 %v5342
        %7041 = vmatpush1.bf16.msra.mxu0 %v5341
        %7042 = vmatprep.subr.bf16.mxu0 %v5358
        %7043 = vmatpush1.bf16.msra.mxu0 %v5357
        %7044 = vmatprep.subr.bf16.mxu0 %v5374
        %7045 = vmatpush1.bf16.msra.mxu0 %v5373
        %7046 = vmatprep.subr.bf16.mxu0 %v5390
        %7047 = vmatpush1.bf16.msra.mxu0 %v5389
        %7048 = vmatprep.subr.bf16.mxu0 %v5406
        %7049 = vmatpush1.bf16.msra.mxu0 %v5405
        %7050 = vmatprep.subr.bf16.mxu0 %v5422
        %7051 = vmatpush1.bf16.msra.mxu0 %v5421
        %7052 = vmatprep.subr.bf16.mxu0 %v5438
        %7053 = vmatpush1.bf16.msra.mxu0 %v5437
        %7054 = vmatprep.subr.bf16.mxu0 %v5454
        %7055 = vmatpush1.bf16.msra.mxu0 %v5453
        %7056 = vmatprep.subr.bf16.mxu0 %v5470
        %7057 = vmatpush1.bf16.msra.mxu0 %v5469
        %7058 = vmatprep.subr.bf16.mxu0 %v5486
        %7059 = vmatpush1.bf16.msra.mxu0 %v5485
        %7060 = vmatprep.subr.bf16.mxu0 %v5502
        %7061 = vmatpush1.bf16.msra.mxu0 %v5501
        %7062 = vmatprep.subr.bf16.mxu0 %v5518
        %7063 = vmatpush1.bf16.msra.mxu0 %v5517
        %7064 = vmatprep.subr.bf16.mxu0 %v5534
        %7065 = vmatpush1.bf16.msra.mxu0 %v5533
        %7066 = vmatprep.subr.bf16.mxu0 %v5550
        %7067 = vmatpush1.bf16.msra.mxu0 %v5549
        %7068 = vmatprep.mubr.bf16.mxu0 %v1456
        %7069 = vmatmul.mubr.bf16.gmra.mrb[0].mxu0 %v1455
        %v7070 = vpop.f32.mrb[0].mxu0
        %v7071 = vadd.f32 %v7030, %v7070
        %v7072 = vpop.f32.mrb[0].mxu0
        %v7073 = vadd.f32 %v7032, %v7072
        %v7074 = vpop.f32.mrb[0].mxu0
        %v7075 = vpop.f32.mrb[0].mxu0
        %7076 = vdwg.mxu0
        %7077 = vmatprep.subr.bf16.mxu0 %v4544
        %7078 = vmatpush1.bf16.msra.mxu0 %v4543
        %7079 = vmatprep.subr.bf16.mxu0 %v4560
        %7080 = vmatpush1.bf16.msra.mxu0 %v4559
        %7081 = vmatprep.subr.bf16.mxu0 %v4576
        %7082 = vmatpush1.bf16.msra.mxu0 %v4575
        %7083 = vmatprep.subr.bf16.mxu0 %v4592
        %7084 = vmatpush1.bf16.msra.mxu0 %v4591
        %7085 = vmatprep.subr.bf16.mxu0 %v4608
        %7086 = vmatpush1.bf16.msra.mxu0 %v4607
        %7087 = vmatprep.subr.bf16.mxu0 %v4624
        %7088 = vmatpush1.bf16.msra.mxu0 %v4623
        %7089 = vmatprep.subr.bf16.mxu0 %v4640
        %7090 = vmatpush1.bf16.msra.mxu0 %v4639
        %7091 = vmatprep.subr.bf16.mxu0 %v4656
        %7092 = vmatpush1.bf16.msra.mxu0 %v4655
        %7093 = vmatprep.subr.bf16.mxu0 %v4672
        %7094 = vmatpush1.bf16.msra.mxu0 %v4671
        %7095 = vmatprep.subr.bf16.mxu0 %v4688
        %7096 = vmatpush1.bf16.msra.mxu0 %v4687
        %7097 = vmatprep.subr.bf16.mxu0 %v4704
        %7098 = vmatpush1.bf16.msra.mxu0 %v4703
        %7099 = vmatprep.subr.bf16.mxu0 %v4720
        %7100 = vmatpush1.bf16.msra.mxu0 %v4719
        %7101 = vmatprep.subr.bf16.mxu0 %v4736
        %7102 = vmatpush1.bf16.msra.mxu0 %v4735
        %7103 = vmatprep.subr.bf16.mxu0 %v4752
        %7104 = vmatpush1.bf16.msra.mxu0 %v4751
        %7105 = vmatprep.subr.bf16.mxu0 %v4768
        %7106 = vmatpush1.bf16.msra.mxu0 %v4767
        %7107 = vmatprep.subr.bf16.mxu0 %v4784
        %7108 = vmatpush1.bf16.msra.mxu0 %v4783
        %7109 = vmatprep.mubr.bf16.mxu0 %v1450
        %7110 = vmatmul.mubr.bf16.gmra.mrb[0].mxu0 %v1449
        %v7111 = vpop.f32.mrb[0].mxu0
        %v7112 = vadd.f32 0.0, %v7111
        %v7113 = vpop.f32.mrb[0].mxu0
        %v7114 = vadd.f32 0.0, %v7113
        %v7115 = vpop.f32.mrb[0].mxu0
        %v7116 = vpop.f32.mrb[0].mxu0
        %7117 = vdwg.mxu0
        %7118 = vmatprep.subr.bf16.mxu0 %v4800
        %7119 = vmatpush1.bf16.msra.mxu0 %v4799
        %7120 = vmatprep.subr.bf16.mxu0 %v4816
        %7121 = vmatpush1.bf16.msra.mxu0 %v4815
        %7122 = vmatprep.subr.bf16.mxu0 %v4832
        %7123 = vmatpush1.bf16.msra.mxu0 %v4831
        %7124 = vmatprep.subr.bf16.mxu0 %v4848
        %7125 = vmatpush1.bf16.msra.mxu0 %v4847
        %7126 = vmatprep.subr.bf16.mxu0 %v4864
        %7127 = vmatpush1.bf16.msra.mxu0 %v4863
        %7128 = vmatprep.subr.bf16.mxu0 %v4880
        %7129 = vmatpush1.bf16.msra.mxu0 %v4879
        %7130 = vmatprep.subr.bf16.mxu0 %v4896
        %7131 = vmatpush1.bf16.msra.mxu0 %v4895
        %7132 = vmatprep.subr.bf16.mxu0 %v4912
        %7133 = vmatpush1.bf16.msra.mxu0 %v4911
        %7134 = vmatprep.subr.bf16.mxu0 %v4928
        %7135 = vmatpush1.bf16.msra.mxu0 %v4927
        %7136 = vmatprep.subr.bf16.mxu0 %v4944
        %7137 = vmatpush1.bf16.msra.mxu0 %v4943
        %7138 = vmatprep.subr.bf16.mxu0 %v4960
        %7139 = vmatpush1.bf16.msra.mxu0 %v4959
        %7140 = vmatprep.subr.bf16.mxu0 %v4976
        %7141 = vmatpush1.bf16.msra.mxu0 %v4975
        %7142 = vmatprep.subr.bf16.mxu0 %v4992
        %7143 = vmatpush1.bf16.msra.mxu0 %v4991
        %7144 = vmatprep.subr.bf16.mxu0 %v5008
        %7145 = vmatpush1.bf16.msra.mxu0 %v5007
        %7146 = vmatprep.subr.bf16.mxu0 %v5024
        %7147 = vmatpush1.bf16.msra.mxu0 %v5023
        %7148 = vmatprep.subr.bf16.mxu0 %v5040
        %7149 = vmatpush1.bf16.msra.mxu0 %v5039
        %7150 = vmatprep.mubr.bf16.mxu0 %v1452
        %7151 = vmatmul.mubr.bf16.gmra.mrb[0].mxu0 %v1451
        %v7152 = vpop.f32.mrb[0].mxu0
        %v7153 = vadd.f32 %v7112, %v7152
        %v7154 = vpop.f32.mrb[0].mxu0
        %v7155 = vadd.f32 %v7114, %v7154
        %v7156 = vpop.f32.mrb[0].mxu0
        %v7157 = vpop.f32.mrb[0].mxu0
        %7158 = vdwg.mxu0
        %7159 = vmatprep.subr.bf16.mxu0 %v5056
        %7160 = vmatpush1.bf16.msra.mxu0 %v5055
        %7161 = vmatprep.subr.bf16.mxu0 %v5072
        %7162 = vmatpush1.bf16.msra.mxu0 %v5071
        %7163 = vmatprep.subr.bf16.mxu0 %v5088
        %7164 = vmatpush1.bf16.msra.mxu0 %v5087
        %7165 = vmatprep.subr.bf16.mxu0 %v5104
        %7166 = vmatpush1.bf16.msra.mxu0 %v5103
        %7167 = vmatprep.subr.bf16.mxu0 %v5120
        %7168 = vmatpush1.bf16.msra.mxu0 %v5119
        %7169 = vmatprep.subr.bf16.mxu0 %v5136
        %7170 = vmatpush1.bf16.msra.mxu0 %v5135
        %7171 = vmatprep.subr.bf16.mxu0 %v5152
        %7172 = vmatpush1.bf16.msra.mxu0 %v5151
        %7173 = vmatprep.subr.bf16.mxu0 %v5168
        %7174 = vmatpush1.bf16.msra.mxu0 %v5167
        %7175 = vmatprep.subr.bf16.mxu0 %v5184
        %7176 = vmatpush1.bf16.msra.mxu0 %v5183
        %7177 = vmatprep.subr.bf16.mxu0 %v5200
        %7178 = vmatpush1.bf16.msra.mxu0 %v5199
        %7179 = vmatprep.subr.bf16.mxu0 %v5216
        %7180 = vmatpush1.bf16.msra.mxu0 %v5215
        %7181 = vmatprep.subr.bf16.mxu0 %v5232
        %7182 = vmatpush1.bf16.msra.mxu0 %v5231
        %7183 = vmatprep.subr.bf16.mxu0 %v5248
        %7184 = vmatpush1.bf16.msra.mxu0 %v5247
        %7185 = vmatprep.subr.bf16.mxu0 %v5264
        %7186 = vmatpush1.bf16.msra.mxu0 %v5263
        %7187 = vmatprep.subr.bf16.mxu0 %v5280
        %7188 = vmatpush1.bf16.msra.mxu0 %v5279
        %7189 = vmatprep.subr.bf16.mxu0 %v5296
        %7190 = vmatpush1.bf16.msra.mxu0 %v5295
        %7191 = vmatprep.mubr.bf16.mxu0 %v1454
        %7192 = vmatmul.mubr.bf16.gmra.mrb[0].mxu0 %v1453
        %v7193 = vpop.f32.mrb[0].mxu0
        %v7194 = vadd.f32 %v7153, %v7193
        %v7195 = vpop.f32.mrb[0].mxu0
        %v7196 = vadd.f32 %v7155, %v7195
        %v7197 = vpop.f32.mrb[0].mxu0
        %v7198 = vpop.f32.mrb[0].mxu0
        %7199 = vdwg.mxu0
        %7200 = vmatprep.subr.bf16.mxu0 %v5312
        %7201 = vmatpush1.bf16.msra.mxu0 %v5311
        %7202 = vmatprep.subr.bf16.mxu0 %v5328
        %7203 = vmatpush1.bf16.msra.mxu0 %v5327
        %7204 = vmatprep.subr.bf16.mxu0 %v5344
        %7205 = vmatpush1.bf16.msra.mxu0 %v5343
        %7206 = vmatprep.subr.bf16.mxu0 %v5360
        %7207 = vmatpush1.bf16.msra.mxu0 %v5359
        %7208 = vmatprep.subr.bf16.mxu0 %v5376
        %7209 = vmatpush1.bf16.msra.mxu0 %v5375
        %7210 = vmatprep.subr.bf16.mxu0 %v5392
        %7211 = vmatpush1.bf16.msra.mxu0 %v5391
        %7212 = vmatprep.subr.bf16.mxu0 %v5408
        %7213 = vmatpush1.bf16.msra.mxu0 %v5407
        %7214 = vmatprep.subr.bf16.mxu0 %v5424
        %7215 = vmatpush1.bf16.msra.mxu0 %v5423
        %7216 = vmatprep.subr.bf16.mxu0 %v5440
        %7217 = vmatpush1.bf16.msra.mxu0 %v5439
        %7218 = vmatprep.subr.bf16.mxu0 %v5456
        %7219 = vmatpush1.bf16.msra.mxu0 %v5455
        %7220 = vmatprep.subr.bf16.mxu0 %v5472
        %7221 = vmatpush1.bf16.msra.mxu0 %v5471
        %7222 = vmatprep.subr.bf16.mxu0 %v5488
        %7223 = vmatpush1.bf16.msra.mxu0 %v5487
        %7224 = vmatprep.subr.bf16.mxu0 %v5504
        %7225 = vmatpush1.bf16.msra.mxu0 %v5503
        %7226 = vmatprep.subr.bf16.mxu0 %v5520
        %7227 = vmatpush1.bf16.msra.mxu0 %v5519
        %7228 = vmatprep.subr.bf16.mxu0 %v5536
        %7229 = vmatpush1.bf16.msra.mxu0 %v5535
        %7230 = vmatprep.subr.bf16.mxu0 %v5552
        %7231 = vmatpush1.bf16.msra.mxu0 %v5551
        %7232 = vmatprep.mubr.bf16.mxu0 %v1456
        %7233 = vmatmul.mubr.bf16.gmra.mrb[0].mxu0 %v1455
        %v7234 = vpop.f32.mrb[0].mxu0
        %v7235 = vadd.f32 %v7194, %v7234
        %v7236 = vpop.f32.mrb[0].mxu0
        %v7237 = vadd.f32 %v7196, %v7236
        %v7238 = vpop.f32.mrb[0].mxu0
        %v7239 = vpop.f32.mrb[0].mxu0
        %7240 = vdwg.mxu0
        %7241 = vmatprep.subr.bf16.mxu0 %v4546
        %7242 = vmatpush1.bf16.msra.mxu0 %v4545
        %7243 = vmatprep.subr.bf16.mxu0 %v4562
        %7244 = vmatpush1.bf16.msra.mxu0 %v4561
        %7245 = vmatprep.subr.bf16.mxu0 %v4578
        %7246 = vmatpush1.bf16.msra.mxu0 %v4577
        %7247 = vmatprep.subr.bf16.mxu0 %v4594
        %7248 = vmatpush1.bf16.msra.mxu0 %v4593
        %7249 = vmatprep.subr.bf16.mxu0 %v4610
        %7250 = vmatpush1.bf16.msra.mxu0 %v4609
        %7251 = vmatprep.subr.bf16.mxu0 %v4626
        %7252 = vmatpush1.bf16.msra.mxu0 %v4625
        %7253 = vmatprep.subr.bf16.mxu0 %v4642
        %7254 = vmatpush1.bf16.msra.mxu0 %v4641
        %7255 = vmatprep.subr.bf16.mxu0 %v4658
        %7256 = vmatpush1.bf16.msra.mxu0 %v4657
        %7257 = vmatprep.subr.bf16.mxu0 %v4674
        %7258 = vmatpush1.bf16.msra.mxu0 %v4673
        %7259 = vmatprep.subr.bf16.mxu0 %v4690
        %7260 = vmatpush1.bf16.msra.mxu0 %v4689
        %7261 = vmatprep.subr.bf16.mxu0 %v4706
        %7262 = vmatpush1.bf16.msra.mxu0 %v4705
        %7263 = vmatprep.subr.bf16.mxu0 %v4722
        %7264 = vmatpush1.bf16.msra.mxu0 %v4721
        %7265 = vmatprep.subr.bf16.mxu0 %v4738
        %7266 = vmatpush1.bf16.msra.mxu0 %v4737
        %7267 = vmatprep.subr.bf16.mxu0 %v4754
        %7268 = vmatpush1.bf16.msra.mxu0 %v4753
        %7269 = vmatprep.subr.bf16.mxu0 %v4770
        %7270 = vmatpush1.bf16.msra.mxu0 %v4769
        %7271 = vmatprep.subr.bf16.mxu0 %v4786
        %7272 = vmatpush1.bf16.msra.mxu0 %v4785
        %7273 = vmatprep.mubr.bf16.mxu0 %v1450
        %7274 = vmatmul.mubr.bf16.gmra.mrb[0].mxu0 %v1449
        %v7275 = vpop.f32.mrb[0].mxu0
        %v7276 = vadd.f32 0.0, %v7275
        %v7277 = vpop.f32.mrb[0].mxu0
        %v7278 = vadd.f32 0.0, %v7277
        %v7279 = vpop.f32.mrb[0].mxu0
        %v7280 = vpop.f32.mrb[0].mxu0
        %7281 = vdwg.mxu0
        %7282 = vmatprep.subr.bf16.mxu0 %v4802
        %7283 = vmatpush1.bf16.msra.mxu0 %v4801
        %7284 = vmatprep.subr.bf16.mxu0 %v4818
        %7285 = vmatpush1.bf16.msra.mxu0 %v4817
        %7286 = vmatprep.subr.bf16.mxu0 %v4834
        %7287 = vmatpush1.bf16.msra.mxu0 %v4833
        %7288 = vmatprep.subr.bf16.mxu0 %v4850
        %7289 = vmatpush1.bf16.msra.mxu0 %v4849
        %7290 = vmatprep.subr.bf16.mxu0 %v4866
        %7291 = vmatpush1.bf16.msra.mxu0 %v4865
        %7292 = vmatprep.subr.bf16.mxu0 %v4882
        %7293 = vmatpush1.bf16.msra.mxu0 %v4881
        %7294 = vmatprep.subr.bf16.mxu0 %v4898
        %7295 = vmatpush1.bf16.msra.mxu0 %v4897
        %7296 = vmatprep.subr.bf16.mxu0 %v4914
        %7297 = vmatpush1.bf16.msra.mxu0 %v4913
        %7298 = vmatprep.subr.bf16.mxu0 %v4930
        %7299 = vmatpush1.bf16.msra.mxu0 %v4929
        %7300 = vmatprep.subr.bf16.mxu0 %v4946
        %7301 = vmatpush1.bf16.msra.mxu0 %v4945
        %7302 = vmatprep.subr.bf16.mxu0 %v4962
        %7303 = vmatpush1.bf16.msra.mxu0 %v4961
        %7304 = vmatprep.subr.bf16.mxu0 %v4978
        %7305 = vmatpush1.bf16.msra.mxu0 %v4977
        %7306 = vmatprep.subr.bf16.mxu0 %v4994
        %7307 = vmatpush1.bf16.msra.mxu0 %v4993
        %7308 = vmatprep.subr.bf16.mxu0 %v5010
        %7309 = vmatpush1.bf16.msra.mxu0 %v5009
        %7310 = vmatprep.subr.bf16.mxu0 %v5026
        %7311 = vmatpush1.bf16.msra.mxu0 %v5025
        %7312 = vmatprep.subr.bf16.mxu0 %v5042
        %7313 = vmatpush1.bf16.msra.mxu0 %v5041
        %7314 = vmatprep.mubr.bf16.mxu0 %v1452
        %7315 = vmatmul.mubr.bf16.gmra.mrb[0].mxu0 %v1451
        %v7316 = vpop.f32.mrb[0].mxu0
        %v7317 = vadd.f32 %v7276, %v7316
        %v7318 = vpop.f32.mrb[0].mxu0
        %v7319 = vadd.f32 %v7278, %v7318
        %v7320 = vpop.f32.mrb[0].mxu0
        %v7321 = vpop.f32.mrb[0].mxu0
        %7322 = vdwg.mxu0
        %7323 = vmatprep.subr.bf16.mxu0 %v5058
        %7324 = vmatpush1.bf16.msra.mxu0 %v5057
        %7325 = vmatprep.subr.bf16.mxu0 %v5074
        %7326 = vmatpush1.bf16.msra.mxu0 %v5073
        %7327 = vmatprep.subr.bf16.mxu0 %v5090
        %7328 = vmatpush1.bf16.msra.mxu0 %v5089
        %7329 = vmatprep.subr.bf16.mxu0 %v5106
        %7330 = vmatpush1.bf16.msra.mxu0 %v5105
        %7331 = vmatprep.subr.bf16.mxu0 %v5122
        %7332 = vmatpush1.bf16.msra.mxu0 %v5121
        %7333 = vmatprep.subr.bf16.mxu0 %v5138
        %7334 = vmatpush1.bf16.msra.mxu0 %v5137
        %7335 = vmatprep.subr.bf16.mxu0 %v5154
        %7336 = vmatpush1.bf16.msra.mxu0 %v5153
        %7337 = vmatprep.subr.bf16.mxu0 %v5170
        %7338 = vmatpush1.bf16.msra.mxu0 %v5169
        %7339 = vmatprep.subr.bf16.mxu0 %v5186
        %7340 = vmatpush1.bf16.msra.mxu0 %v5185
        %7341 = vmatprep.subr.bf16.mxu0 %v5202
        %7342 = vmatpush1.bf16.msra.mxu0 %v5201
        %7343 = vmatprep.subr.bf16.mxu0 %v5218
        %7344 = vmatpush1.bf16.msra.mxu0 %v5217
        %7345 = vmatprep.subr.bf16.mxu0 %v5234
        %7346 = vmatpush1.bf16.msra.mxu0 %v5233
        %7347 = vmatprep.subr.bf16.mxu0 %v5250
        %7348 = vmatpush1.bf16.msra.mxu0 %v5249
        %7349 = vmatprep.subr.bf16.mxu0 %v5266
        %7350 = vmatpush1.bf16.msra.mxu0 %v5265
        %7351 = vmatprep.subr.bf16.mxu0 %v5282
        %7352 = vmatpush1.bf16.msra.mxu0 %v5281
        %7353 = vmatprep.subr.bf16.mxu0 %v5298
        %7354 = vmatpush1.bf16.msra.mxu0 %v5297
        %7355 = vmatprep.mubr.bf16.mxu0 %v1454
        %7356 = vmatmul.mubr.bf16.gmra.mrb[0].mxu0 %v1453
        %v7357 = vpop.f32.mrb[0].mxu0
        %v7358 = vadd.f32 %v7317, %v7357
        %v7359 = vpop.f32.mrb[0].mxu0
        %v7360 = vadd.f32 %v7319, %v7359
        %v7361 = vpop.f32.mrb[0].mxu0
        %v7362 = vpop.f32.mrb[0].mxu0
        %7363 = vdwg.mxu0
        %7364 = vmatprep.subr.bf16.mxu0 %v5314
        %7365 = vmatpush1.bf16.msra.mxu0 %v5313
        %7366 = vmatprep.subr.bf16.mxu0 %v5330
        %7367 = vmatpush1.bf16.msra.mxu0 %v5329
        %7368 = vmatprep.subr.bf16.mxu0 %v5346
        %7369 = vmatpush1.bf16.msra.mxu0 %v5345
        %7370 = vmatprep.subr.bf16.mxu0 %v5362
        %7371 = vmatpush1.bf16.msra.mxu0 %v5361
        %7372 = vmatprep.subr.bf16.mxu0 %v5378
        %7373 = vmatpush1.bf16.msra.mxu0 %v5377
        %7374 = vmatprep.subr.bf16.mxu0 %v5394
        %7375 = vmatpush1.bf16.msra.mxu0 %v5393
        %7376 = vmatprep.subr.bf16.mxu0 %v5410
        %7377 = vmatpush1.bf16.msra.mxu0 %v5409
        %7378 = vmatprep.subr.bf16.mxu0 %v5426
        %7379 = vmatpush1.bf16.msra.mxu0 %v5425
        %7380 = vmatprep.subr.bf16.mxu0 %v5442
        %7381 = vmatpush1.bf16.msra.mxu0 %v5441
        %7382 = vmatprep.subr.bf16.mxu0 %v5458
        %7383 = vmatpush1.bf16.msra.mxu0 %v5457
        %7384 = vmatprep.subr.bf16.mxu0 %v5474
        %7385 = vmatpush1.bf16.msra.mxu0 %v5473
        %7386 = vmatprep.subr.bf16.mxu0 %v5490
        %7387 = vmatpush1.bf16.msra.mxu0 %v5489
        %7388 = vmatprep.subr.bf16.mxu0 %v5506
        %7389 = vmatpush1.bf16.msra.mxu0 %v5505
        %7390 = vmatprep.subr.bf16.mxu0 %v5522
        %7391 = vmatpush1.bf16.msra.mxu0 %v5521
        %7392 = vmatprep.subr.bf16.mxu0 %v5538
        %7393 = vmatpush1.bf16.msra.mxu0 %v5537
        %7394 = vmatprep.subr.bf16.mxu0 %v5554
        %7395 = vmatpush1.bf16.msra.mxu0 %v5553
        %7396 = vmatprep.mubr.bf16.mxu0 %v1456
        %7397 = vmatmul.mubr.bf16.gmra.mrb[0].mxu0 %v1455
        %v7398 = vpop.f32.mrb[0].mxu0
        %v7399 = vadd.f32 %v7358, %v7398
        %v7400 = vpop.f32.mrb[0].mxu0
        %v7401 = vadd.f32 %v7360, %v7400
        %v7402 = vpop.f32.mrb[0].mxu0
        %v7403 = vpop.f32.mrb[0].mxu0
        %7404 = vdwg.mxu0
        %7405 = vmatprep.subr.bf16.mxu0 %v4548
        %7406 = vmatpush1.bf16.msra.mxu0 %v4547
        %7407 = vmatprep.subr.bf16.mxu0 %v4564
        %7408 = vmatpush1.bf16.msra.mxu0 %v4563
        %7409 = vmatprep.subr.bf16.mxu0 %v4580
        %7410 = vmatpush1.bf16.msra.mxu0 %v4579
        %7411 = vmatprep.subr.bf16.mxu0 %v4596
        %7412 = vmatpush1.bf16.msra.mxu0 %v4595
        %7413 = vmatprep.subr.bf16.mxu0 %v4612
        %7414 = vmatpush1.bf16.msra.mxu0 %v4611
        %7415 = vmatprep.subr.bf16.mxu0 %v4628
        %7416 = vmatpush1.bf16.msra.mxu0 %v4627
        %7417 = vmatprep.subr.bf16.mxu0 %v4644
        %7418 = vmatpush1.bf16.msra.mxu0 %v4643
        %7419 = vmatprep.subr.bf16.mxu0 %v4660
        %7420 = vmatpush1.bf16.msra.mxu0 %v4659
        %7421 = vmatprep.subr.bf16.mxu0 %v4676
        %7422 = vmatpush1.bf16.msra.mxu0 %v4675
        %7423 = vmatprep.subr.bf16.mxu0 %v4692
        %7424 = vmatpush1.bf16.msra.mxu0 %v4691
        %7425 = vmatprep.subr.bf16.mxu0 %v4708
        %7426 = vmatpush1.bf16.msra.mxu0 %v4707
        %7427 = vmatprep.subr.bf16.mxu0 %v4724
        %7428 = vmatpush1.bf16.msra.mxu0 %v4723
        %7429 = vmatprep.subr.bf16.mxu0 %v4740
        %7430 = vmatpush1.bf16.msra.mxu0 %v4739
        %7431 = vmatprep.subr.bf16.mxu0 %v4756
        %7432 = vmatpush1.bf16.msra.mxu0 %v4755
        %7433 = vmatprep.subr.bf16.mxu0 %v4772
        %7434 = vmatpush1.bf16.msra.mxu0 %v4771
        %7435 = vmatprep.subr.bf16.mxu0 %v4788
        %7436 = vmatpush1.bf16.msra.mxu0 %v4787
        %7437 = vmatprep.mubr.bf16.mxu0 %v1450
        %7438 = vmatmul.mubr.bf16.gmra.mrb[0].mxu0 %v1449
        %v7439 = vpop.f32.mrb[0].mxu0
        %v7440 = vadd.f32 0.0, %v7439
        %v7441 = vpop.f32.mrb[0].mxu0
        %v7442 = vadd.f32 0.0, %v7441
        %v7443 = vpop.f32.mrb[0].mxu0
        %v7444 = vpop.f32.mrb[0].mxu0
        %7445 = vdwg.mxu0
        %7446 = vmatprep.subr.bf16.mxu0 %v4804
        %7447 = vmatpush1.bf16.msra.mxu0 %v4803
        %7448 = vmatprep.subr.bf16.mxu0 %v4820
        %7449 = vmatpush1.bf16.msra.mxu0 %v4819
        %7450 = vmatprep.subr.bf16.mxu0 %v4836
        %7451 = vmatpush1.bf16.msra.mxu0 %v4835
        %7452 = vmatprep.subr.bf16.mxu0 %v4852
        %7453 = vmatpush1.bf16.msra.mxu0 %v4851
        %7454 = vmatprep.subr.bf16.mxu0 %v4868
        %7455 = vmatpush1.bf16.msra.mxu0 %v4867
        %7456 = vmatprep.subr.bf16.mxu0 %v4884
        %7457 = vmatpush1.bf16.msra.mxu0 %v4883
        %7458 = vmatprep.subr.bf16.mxu0 %v4900
        %7459 = vmatpush1.bf16.msra.mxu0 %v4899
        %7460 = vmatprep.subr.bf16.mxu0 %v4916
        %7461 = vmatpush1.bf16.msra.mxu0 %v4915
        %7462 = vmatprep.subr.bf16.mxu0 %v4932
        %7463 = vmatpush1.bf16.msra.mxu0 %v4931
        %7464 = vmatprep.subr.bf16.mxu0 %v4948
        %7465 = vmatpush1.bf16.msra.mxu0 %v4947
        %7466 = vmatprep.subr.bf16.mxu0 %v4964
        %7467 = vmatpush1.bf16.msra.mxu0 %v4963
        %7468 = vmatprep.subr.bf16.mxu0 %v4980
        %7469 = vmatpush1.bf16.msra.mxu0 %v4979
        %7470 = vmatprep.subr.bf16.mxu0 %v4996
        %7471 = vmatpush1.bf16.msra.mxu0 %v4995
        %7472 = vmatprep.subr.bf16.mxu0 %v5012
        %7473 = vmatpush1.bf16.msra.mxu0 %v5011
        %7474 = vmatprep.subr.bf16.mxu0 %v5028
        %7475 = vmatpush1.bf16.msra.mxu0 %v5027
        %7476 = vmatprep.subr.bf16.mxu0 %v5044
        %7477 = vmatpush1.bf16.msra.mxu0 %v5043
        %7478 = vmatprep.mubr.bf16.mxu0 %v1452
        %7479 = vmatmul.mubr.bf16.gmra.mrb[0].mxu0 %v1451
        %v7480 = vpop.f32.mrb[0].mxu0
        %v7481 = vadd.f32 %v7440, %v7480
        %v7482 = vpop.f32.mrb[0].mxu0
        %v7483 = vadd.f32 %v7442, %v7482
        %v7484 = vpop.f32.mrb[0].mxu0
        %v7485 = vpop.f32.mrb[0].mxu0
        %7486 = vdwg.mxu0
        %7487 = vmatprep.subr.bf16.mxu0 %v5060
        %7488 = vmatpush1.bf16.msra.mxu0 %v5059
        %7489 = vmatprep.subr.bf16.mxu0 %v5076
        %7490 = vmatpush1.bf16.msra.mxu0 %v5075
        %7491 = vmatprep.subr.bf16.mxu0 %v5092
        %7492 = vmatpush1.bf16.msra.mxu0 %v5091
        %7493 = vmatprep.subr.bf16.mxu0 %v5108
        %7494 = vmatpush1.bf16.msra.mxu0 %v5107
        %7495 = vmatprep.subr.bf16.mxu0 %v5124
        %7496 = vmatpush1.bf16.msra.mxu0 %v5123
        %7497 = vmatprep.subr.bf16.mxu0 %v5140
        %7498 = vmatpush1.bf16.msra.mxu0 %v5139
        %7499 = vmatprep.subr.bf16.mxu0 %v5156
        %7500 = vmatpush1.bf16.msra.mxu0 %v5155
        %7501 = vmatprep.subr.bf16.mxu0 %v5172
        %7502 = vmatpush1.bf16.msra.mxu0 %v5171
        %7503 = vmatprep.subr.bf16.mxu0 %v5188
        %7504 = vmatpush1.bf16.msra.mxu0 %v5187
        %7505 = vmatprep.subr.bf16.mxu0 %v5204
        %7506 = vmatpush1.bf16.msra.mxu0 %v5203
        %7507 = vmatprep.subr.bf16.mxu0 %v5220
        %7508 = vmatpush1.bf16.msra.mxu0 %v5219
        %7509 = vmatprep.subr.bf16.mxu0 %v5236
        %7510 = vmatpush1.bf16.msra.mxu0 %v5235
        %7511 = vmatprep.subr.bf16.mxu0 %v5252
        %7512 = vmatpush1.bf16.msra.mxu0 %v5251
        %7513 = vmatprep.subr.bf16.mxu0 %v5268
        %7514 = vmatpush1.bf16.msra.mxu0 %v5267
        %7515 = vmatprep.subr.bf16.mxu0 %v5284
        %7516 = vmatpush1.bf16.msra.mxu0 %v5283
        %7517 = vmatprep.subr.bf16.mxu0 %v5300
        %7518 = vmatpush1.bf16.msra.mxu0 %v5299
        %7519 = vmatprep.mubr.bf16.mxu0 %v1454
        %7520 = vmatmul.mubr.bf16.gmra.mrb[0].mxu0 %v1453
        %v7521 = vpop.f32.mrb[0].mxu0
        %v7522 = vadd.f32 %v7481, %v7521
        %v7523 = vpop.f32.mrb[0].mxu0
        %v7524 = vadd.f32 %v7483, %v7523
        %v7525 = vpop.f32.mrb[0].mxu0
        %v7526 = vpop.f32.mrb[0].mxu0
        %7527 = vdwg.mxu0
        %7528 = vmatprep.subr.bf16.mxu0 %v5316
        %7529 = vmatpush1.bf16.msra.mxu0 %v5315
        %7530 = vmatprep.subr.bf16.mxu0 %v5332
        %7531 = vmatpush1.bf16.msra.mxu0 %v5331
        %7532 = vmatprep.subr.bf16.mxu0 %v5348
        %7533 = vmatpush1.bf16.msra.mxu0 %v5347
        %7534 = vmatprep.subr.bf16.mxu0 %v5364
        %7535 = vmatpush1.bf16.msra.mxu0 %v5363
        %7536 = vmatprep.subr.bf16.mxu0 %v5380
        %7537 = vmatpush1.bf16.msra.mxu0 %v5379
        %7538 = vmatprep.subr.bf16.mxu0 %v5396
        %7539 = vmatpush1.bf16.msra.mxu0 %v5395
        %7540 = vmatprep.subr.bf16.mxu0 %v5412
        %7541 = vmatpush1.bf16.msra.mxu0 %v5411
        %7542 = vmatprep.subr.bf16.mxu0 %v5428
        %7543 = vmatpush1.bf16.msra.mxu0 %v5427
        %7544 = vmatprep.subr.bf16.mxu0 %v5444
        %7545 = vmatpush1.bf16.msra.mxu0 %v5443
        %7546 = vmatprep.subr.bf16.mxu0 %v5460
        %7547 = vmatpush1.bf16.msra.mxu0 %v5459
        %7548 = vmatprep.subr.bf16.mxu0 %v5476
        %7549 = vmatpush1.bf16.msra.mxu0 %v5475
        %7550 = vmatprep.subr.bf16.mxu0 %v5492
        %7551 = vmatpush1.bf16.msra.mxu0 %v5491
        %7552 = vmatprep.subr.bf16.mxu0 %v5508
        %7553 = vmatpush1.bf16.msra.mxu0 %v5507
        %7554 = vmatprep.subr.bf16.mxu0 %v5524
        %7555 = vmatpush1.bf16.msra.mxu0 %v5523
        %7556 = vmatprep.subr.bf16.mxu0 %v5540
        %7557 = vmatpush1.bf16.msra.mxu0 %v5539
        %7558 = vmatprep.subr.bf16.mxu0 %v5556
        %7559 = vmatpush1.bf16.msra.mxu0 %v5555
        %7560 = vmatprep.mubr.bf16.mxu0 %v1456
        %7561 = vmatmul.mubr.bf16.gmra.mrb[0].mxu0 %v1455
        %v7562 = vpop.f32.mrb[0].mxu0
        %v7563 = vadd.f32 %v7522, %v7562
        %v7564 = vpop.f32.mrb[0].mxu0
        %v7565 = vadd.f32 %v7524, %v7564
        %v7566 = vpop.f32.mrb[0].mxu0
        %v7567 = vpop.f32.mrb[0].mxu0
        %7568 = vdwg.mxu0
        %7569 = vmatprep.subr.bf16.mxu0 %v4550
        %7570 = vmatpush1.bf16.msra.mxu0 %v4549
        %7571 = vmatprep.subr.bf16.mxu0 %v4566
        %7572 = vmatpush1.bf16.msra.mxu0 %v4565
        %7573 = vmatprep.subr.bf16.mxu0 %v4582
        %7574 = vmatpush1.bf16.msra.mxu0 %v4581
        %7575 = vmatprep.subr.bf16.mxu0 %v4598
        %7576 = vmatpush1.bf16.msra.mxu0 %v4597
        %7577 = vmatprep.subr.bf16.mxu0 %v4614
        %7578 = vmatpush1.bf16.msra.mxu0 %v4613
        %7579 = vmatprep.subr.bf16.mxu0 %v4630
        %7580 = vmatpush1.bf16.msra.mxu0 %v4629
        %7581 = vmatprep.subr.bf16.mxu0 %v4646
        %7582 = vmatpush1.bf16.msra.mxu0 %v4645
        %7583 = vmatprep.subr.bf16.mxu0 %v4662
        %7584 = vmatpush1.bf16.msra.mxu0 %v4661
        %7585 = vmatprep.subr.bf16.mxu0 %v4678
        %7586 = vmatpush1.bf16.msra.mxu0 %v4677
        %7587 = vmatprep.subr.bf16.mxu0 %v4694
        %7588 = vmatpush1.bf16.msra.mxu0 %v4693
        %7589 = vmatprep.subr.bf16.mxu0 %v4710
        %7590 = vmatpush1.bf16.msra.mxu0 %v4709
        %7591 = vmatprep.subr.bf16.mxu0 %v4726
        %7592 = vmatpush1.bf16.msra.mxu0 %v4725
        %7593 = vmatprep.subr.bf16.mxu0 %v4742
        %7594 = vmatpush1.bf16.msra.mxu0 %v4741
        %7595 = vmatprep.subr.bf16.mxu0 %v4758
        %7596 = vmatpush1.bf16.msra.mxu0 %v4757
        %7597 = vmatprep.subr.bf16.mxu0 %v4774
        %7598 = vmatpush1.bf16.msra.mxu0 %v4773
        %7599 = vmatprep.subr.bf16.mxu0 %v4790
        %7600 = vmatpush1.bf16.msra.mxu0 %v4789
        %7601 = vmatprep.mubr.bf16.mxu0 %v1450
        %7602 = vmatmul.mubr.bf16.gmra.mrb[0].mxu0 %v1449
        %v7603 = vpop.f32.mrb[0].mxu0
        %v7604 = vadd.f32 0.0, %v7603
        %v7605 = vpop.f32.mrb[0].mxu0
        %v7606 = vadd.f32 0.0, %v7605
        %v7607 = vpop.f32.mrb[0].mxu0
        %v7608 = vpop.f32.mrb[0].mxu0
        %7609 = vdwg.mxu0
        %7610 = vmatprep.subr.bf16.mxu0 %v4806
        %7611 = vmatpush1.bf16.msra.mxu0 %v4805
        %7612 = vmatprep.subr.bf16.mxu0 %v4822
        %7613 = vmatpush1.bf16.msra.mxu0 %v4821
        %7614 = vmatprep.subr.bf16.mxu0 %v4838
        %7615 = vmatpush1.bf16.msra.mxu0 %v4837
        %7616 = vmatprep.subr.bf16.mxu0 %v4854
        %7617 = vmatpush1.bf16.msra.mxu0 %v4853
        %7618 = vmatprep.subr.bf16.mxu0 %v4870
        %7619 = vmatpush1.bf16.msra.mxu0 %v4869
        %7620 = vmatprep.subr.bf16.mxu0 %v4886
        %7621 = vmatpush1.bf16.msra.mxu0 %v4885
        %7622 = vmatprep.subr.bf16.mxu0 %v4902
        %7623 = vmatpush1.bf16.msra.mxu0 %v4901
        %7624 = vmatprep.subr.bf16.mxu0 %v4918
        %7625 = vmatpush1.bf16.msra.mxu0 %v4917
        %7626 = vmatprep.subr.bf16.mxu0 %v4934
        %7627 = vmatpush1.bf16.msra.mxu0 %v4933
        %7628 = vmatprep.subr.bf16.mxu0 %v4950
        %7629 = vmatpush1.bf16.msra.mxu0 %v4949
        %7630 = vmatprep.subr.bf16.mxu0 %v4966
        %7631 = vmatpush1.bf16.msra.mxu0 %v4965
        %7632 = vmatprep.subr.bf16.mxu0 %v4982
        %7633 = vmatpush1.bf16.msra.mxu0 %v4981
        %7634 = vmatprep.subr.bf16.mxu0 %v4998
        %7635 = vmatpush1.bf16.msra.mxu0 %v4997
        %7636 = vmatprep.subr.bf16.mxu0 %v5014
        %7637 = vmatpush1.bf16.msra.mxu0 %v5013
        %7638 = vmatprep.subr.bf16.mxu0 %v5030
        %7639 = vmatpush1.bf16.msra.mxu0 %v5029
        %7640 = vmatprep.subr.bf16.mxu0 %v5046
        %7641 = vmatpush1.bf16.msra.mxu0 %v5045
        %7642 = vmatprep.mubr.bf16.mxu0 %v1452
        %7643 = vmatmul.mubr.bf16.gmra.mrb[0].mxu0 %v1451
        %v7644 = vpop.f32.mrb[0].mxu0
        %v7645 = vadd.f32 %v7604, %v7644
        %v7646 = vpop.f32.mrb[0].mxu0
        %v7647 = vadd.f32 %v7606, %v7646
        %v7648 = vpop.f32.mrb[0].mxu0
        %v7649 = vpop.f32.mrb[0].mxu0
        %7650 = vdwg.mxu0
        %7651 = vmatprep.subr.bf16.mxu0 %v5062
        %7652 = vmatpush1.bf16.msra.mxu0 %v5061
        %7653 = vmatprep.subr.bf16.mxu0 %v5078
        %7654 = vmatpush1.bf16.msra.mxu0 %v5077
        %7655 = vmatprep.subr.bf16.mxu0 %v5094
        %7656 = vmatpush1.bf16.msra.mxu0 %v5093
        %7657 = vmatprep.subr.bf16.mxu0 %v5110
        %7658 = vmatpush1.bf16.msra.mxu0 %v5109
        %7659 = vmatprep.subr.bf16.mxu0 %v5126
        %7660 = vmatpush1.bf16.msra.mxu0 %v5125
        %7661 = vmatprep.subr.bf16.mxu0 %v5142
        %7662 = vmatpush1.bf16.msra.mxu0 %v5141
        %7663 = vmatprep.subr.bf16.mxu0 %v5158
        %7664 = vmatpush1.bf16.msra.mxu0 %v5157
        %7665 = vmatprep.subr.bf16.mxu0 %v5174
        %7666 = vmatpush1.bf16.msra.mxu0 %v5173
        %7667 = vmatprep.subr.bf16.mxu0 %v5190
        %7668 = vmatpush1.bf16.msra.mxu0 %v5189
        %7669 = vmatprep.subr.bf16.mxu0 %v5206
        %7670 = vmatpush1.bf16.msra.mxu0 %v5205
        %7671 = vmatprep.subr.bf16.mxu0 %v5222
        %7672 = vmatpush1.bf16.msra.mxu0 %v5221
        %7673 = vmatprep.subr.bf16.mxu0 %v5238
        %7674 = vmatpush1.bf16.msra.mxu0 %v5237
        %7675 = vmatprep.subr.bf16.mxu0 %v5254
        %7676 = vmatpush1.bf16.msra.mxu0 %v5253
        %7677 = vmatprep.subr.bf16.mxu0 %v5270
        %7678 = vmatpush1.bf16.msra.mxu0 %v5269
        %7679 = vmatprep.subr.bf16.mxu0 %v5286
        %7680 = vmatpush1.bf16.msra.mxu0 %v5285
        %7681 = vmatprep.subr.bf16.mxu0 %v5302
        %7682 = vmatpush1.bf16.msra.mxu0 %v5301
        %7683 = vmatprep.mubr.bf16.mxu0 %v1454
        %7684 = vmatmul.mubr.bf16.gmra.mrb[0].mxu0 %v1453
        %v7685 = vpop.f32.mrb[0].mxu0
        %v7686 = vadd.f32 %v7645, %v7685
        %v7687 = vpop.f32.mrb[0].mxu0
        %v7688 = vadd.f32 %v7647, %v7687
        %v7689 = vpop.f32.mrb[0].mxu0
        %v7690 = vpop.f32.mrb[0].mxu0
        %7691 = vdwg.mxu0
        %7692 = vmatprep.subr.bf16.mxu0 %v5318
        %7693 = vmatpush1.bf16.msra.mxu0 %v5317
        %7694 = vmatprep.subr.bf16.mxu0 %v5334
        %7695 = vmatpush1.bf16.msra.mxu0 %v5333
        %7696 = vmatprep.subr.bf16.mxu0 %v5350
        %7697 = vmatpush1.bf16.msra.mxu0 %v5349
        %7698 = vmatprep.subr.bf16.mxu0 %v5366
        %7699 = vmatpush1.bf16.msra.mxu0 %v5365
        %7700 = vmatprep.subr.bf16.mxu0 %v5382
        %7701 = vmatpush1.bf16.msra.mxu0 %v5381
        %7702 = vmatprep.subr.bf16.mxu0 %v5398
        %7703 = vmatpush1.bf16.msra.mxu0 %v5397
        %7704 = vmatprep.subr.bf16.mxu0 %v5414
        %7705 = vmatpush1.bf16.msra.mxu0 %v5413
        %7706 = vmatprep.subr.bf16.mxu0 %v5430
        %7707 = vmatpush1.bf16.msra.mxu0 %v5429
        %7708 = vmatprep.subr.bf16.mxu0 %v5446
        %7709 = vmatpush1.bf16.msra.mxu0 %v5445
        %7710 = vmatprep.subr.bf16.mxu0 %v5462
        %7711 = vmatpush1.bf16.msra.mxu0 %v5461
        %7712 = vmatprep.subr.bf16.mxu0 %v5478
        %7713 = vmatpush1.bf16.msra.mxu0 %v5477
        %7714 = vmatprep.subr.bf16.mxu0 %v5494
        %7715 = vmatpush1.bf16.msra.mxu0 %v5493
        %7716 = vmatprep.subr.bf16.mxu0 %v5510
        %7717 = vmatpush1.bf16.msra.mxu0 %v5509
        %7718 = vmatprep.subr.bf16.mxu0 %v5526
        %7719 = vmatpush1.bf16.msra.mxu0 %v5525
        %7720 = vmatprep.subr.bf16.mxu0 %v5542
        %7721 = vmatpush1.bf16.msra.mxu0 %v5541
        %7722 = vmatprep.subr.bf16.mxu0 %v5558
        %7723 = vmatpush1.bf16.msra.mxu0 %v5557
        %7724 = vmatprep.mubr.bf16.mxu0 %v1456
        %7725 = vmatmul.mubr.bf16.gmra.mrb[0].mxu0 %v1455
        %v7726 = vpop.f32.mrb[0].mxu0
        %v7727 = vadd.f32 %v7686, %v7726
        %v7728 = vpop.f32.mrb[0].mxu0
        %v7729 = vadd.f32 %v7688, %v7728
        %v7730 = vpop.f32.mrb[0].mxu0
        %v7731 = vpop.f32.mrb[0].mxu0
        %7732 = vdwg.mxu0
        %7733 = vmatprep.subr.bf16.mxu0 %v4552
        %7734 = vmatpush1.bf16.msra.mxu0 %v4551
        %7735 = vmatprep.subr.bf16.mxu0 %v4568
        %7736 = vmatpush1.bf16.msra.mxu0 %v4567
        %7737 = vmatprep.subr.bf16.mxu0 %v4584
        %7738 = vmatpush1.bf16.msra.mxu0 %v4583
        %7739 = vmatprep.subr.bf16.mxu0 %v4600
        %7740 = vmatpush1.bf16.msra.mxu0 %v4599
        %7741 = vmatprep.subr.bf16.mxu0 %v4616
        %7742 = vmatpush1.bf16.msra.mxu0 %v4615
        %7743 = vmatprep.subr.bf16.mxu0 %v4632
        %7744 = vmatpush1.bf16.msra.mxu0 %v4631
        %7745 = vmatprep.subr.bf16.mxu0 %v4648
        %7746 = vmatpush1.bf16.msra.mxu0 %v4647
        %7747 = vmatprep.subr.bf16.mxu0 %v4664
        %7748 = vmatpush1.bf16.msra.mxu0 %v4663
        %7749 = vmatprep.subr.bf16.mxu0 %v4680
        %7750 = vmatpush1.bf16.msra.mxu0 %v4679
        %7751 = vmatprep.subr.bf16.mxu0 %v4696
        %7752 = vmatpush1.bf16.msra.mxu0 %v4695
        %7753 = vmatprep.subr.bf16.mxu0 %v4712
        %7754 = vmatpush1.bf16.msra.mxu0 %v4711
        %7755 = vmatprep.subr.bf16.mxu0 %v4728
        %7756 = vmatpush1.bf16.msra.mxu0 %v4727
        %7757 = vmatprep.subr.bf16.mxu0 %v4744
        %7758 = vmatpush1.bf16.msra.mxu0 %v4743
        %7759 = vmatprep.subr.bf16.mxu0 %v4760
        %7760 = vmatpush1.bf16.msra.mxu0 %v4759
        %7761 = vmatprep.subr.bf16.mxu0 %v4776
        %7762 = vmatpush1.bf16.msra.mxu0 %v4775
        %7763 = vmatprep.subr.bf16.mxu0 %v4792
        %7764 = vmatpush1.bf16.msra.mxu0 %v4791
        %7765 = vmatprep.mubr.bf16.mxu0 %v1450
        %7766 = vmatmul.mubr.bf16.gmra.mrb[0].mxu0 %v1449
        %v7767 = vpop.f32.mrb[0].mxu0
        %v7768 = vadd.f32 0.0, %v7767
        %v7769 = vpop.f32.mrb[0].mxu0
        %v7770 = vadd.f32 0.0, %v7769
        %v7771 = vpop.f32.mrb[0].mxu0
        %v7772 = vpop.f32.mrb[0].mxu0
        %7773 = vdwg.mxu0
        %7774 = vmatprep.subr.bf16.mxu0 %v4808
        %7775 = vmatpush1.bf16.msra.mxu0 %v4807
        %7776 = vmatprep.subr.bf16.mxu0 %v4824
        %7777 = vmatpush1.bf16.msra.mxu0 %v4823
        %7778 = vmatprep.subr.bf16.mxu0 %v4840
        %7779 = vmatpush1.bf16.msra.mxu0 %v4839
        %7780 = vmatprep.subr.bf16.mxu0 %v4856
        %7781 = vmatpush1.bf16.msra.mxu0 %v4855
        %7782 = vmatprep.subr.bf16.mxu0 %v4872
        %7783 = vmatpush1.bf16.msra.mxu0 %v4871
        %7784 = vmatprep.subr.bf16.mxu0 %v4888
        %7785 = vmatpush1.bf16.msra.mxu0 %v4887
        %7786 = vmatprep.subr.bf16.mxu0 %v4904
        %7787 = vmatpush1.bf16.msra.mxu0 %v4903
        %7788 = vmatprep.subr.bf16.mxu0 %v4920
        %7789 = vmatpush1.bf16.msra.mxu0 %v4919
        %7790 = vmatprep.subr.bf16.mxu0 %v4936
        %7791 = vmatpush1.bf16.msra.mxu0 %v4935
        %7792 = vmatprep.subr.bf16.mxu0 %v4952
        %7793 = vmatpush1.bf16.msra.mxu0 %v4951
        %7794 = vmatprep.subr.bf16.mxu0 %v4968
        %7795 = vmatpush1.bf16.msra.mxu0 %v4967
        %7796 = vmatprep.subr.bf16.mxu0 %v4984
        %7797 = vmatpush1.bf16.msra.mxu0 %v4983
        %7798 = vmatprep.subr.bf16.mxu0 %v5000
        %7799 = vmatpush1.bf16.msra.mxu0 %v4999
        %7800 = vmatprep.subr.bf16.mxu0 %v5016
        %7801 = vmatpush1.bf16.msra.mxu0 %v5015
        %7802 = vmatprep.subr.bf16.mxu0 %v5032
        %7803 = vmatpush1.bf16.msra.mxu0 %v5031
        %7804 = vmatprep.subr.bf16.mxu0 %v5048
        %7805 = vmatpush1.bf16.msra.mxu0 %v5047
        %7806 = vmatprep.mubr.bf16.mxu0 %v1452
        %7807 = vmatmul.mubr.bf16.gmra.mrb[0].mxu0 %v1451
        %v7808 = vpop.f32.mrb[0].mxu0
        %v7809 = vadd.f32 %v7768, %v7808
        %v7810 = vpop.f32.mrb[0].mxu0
        %v7811 = vadd.f32 %v7770, %v7810
        %v7812 = vpop.f32.mrb[0].mxu0
        %v7813 = vpop.f32.mrb[0].mxu0
        %7814 = vdwg.mxu0
        %7815 = vmatprep.subr.bf16.mxu0 %v5064
        %7816 = vmatpush1.bf16.msra.mxu0 %v5063
        %7817 = vmatprep.subr.bf16.mxu0 %v5080
        %7818 = vmatpush1.bf16.msra.mxu0 %v5079
        %7819 = vmatprep.subr.bf16.mxu0 %v5096
        %7820 = vmatpush1.bf16.msra.mxu0 %v5095
        %7821 = vmatprep.subr.bf16.mxu0 %v5112
        %7822 = vmatpush1.bf16.msra.mxu0 %v5111
        %7823 = vmatprep.subr.bf16.mxu0 %v5128
        %7824 = vmatpush1.bf16.msra.mxu0 %v5127
        %7825 = vmatprep.subr.bf16.mxu0 %v5144
        %7826 = vmatpush1.bf16.msra.mxu0 %v5143
        %7827 = vmatprep.subr.bf16.mxu0 %v5160
        %7828 = vmatpush1.bf16.msra.mxu0 %v5159
        %7829 = vmatprep.subr.bf16.mxu0 %v5176
        %7830 = vmatpush1.bf16.msra.mxu0 %v5175
        %7831 = vmatprep.subr.bf16.mxu0 %v5192
        %7832 = vmatpush1.bf16.msra.mxu0 %v5191
        %7833 = vmatprep.subr.bf16.mxu0 %v5208
        %7834 = vmatpush1.bf16.msra.mxu0 %v5207
        %7835 = vmatprep.subr.bf16.mxu0 %v5224
        %7836 = vmatpush1.bf16.msra.mxu0 %v5223
        %7837 = vmatprep.subr.bf16.mxu0 %v5240
        %7838 = vmatpush1.bf16.msra.mxu0 %v5239
        %7839 = vmatprep.subr.bf16.mxu0 %v5256
        %7840 = vmatpush1.bf16.msra.mxu0 %v5255
        %7841 = vmatprep.subr.bf16.mxu0 %v5272
        %7842 = vmatpush1.bf16.msra.mxu0 %v5271
        %7843 = vmatprep.subr.bf16.mxu0 %v5288
        %7844 = vmatpush1.bf16.msra.mxu0 %v5287
        %7845 = vmatprep.subr.bf16.mxu0 %v5304
        %7846 = vmatpush1.bf16.msra.mxu0 %v5303
        %7847 = vmatprep.mubr.bf16.mxu0 %v1454
        %7848 = vmatmul.mubr.bf16.gmra.mrb[0].mxu0 %v1453
        %v7849 = vpop.f32.mrb[0].mxu0
        %v7850 = vadd.f32 %v7809, %v7849
        %v7851 = vpop.f32.mrb[0].mxu0
        %v7852 = vadd.f32 %v7811, %v7851
        %v7853 = vpop.f32.mrb[0].mxu0
        %v7854 = vpop.f32.mrb[0].mxu0
        %7855 = vdwg.mxu0
        %7856 = vmatprep.subr.bf16.mxu0 %v5320
        %7857 = vmatpush1.bf16.msra.mxu0 %v5319
        %7858 = vmatprep.subr.bf16.mxu0 %v5336
        %7859 = vmatpush1.bf16.msra.mxu0 %v5335
        %7860 = vmatprep.subr.bf16.mxu0 %v5352
        %7861 = vmatpush1.bf16.msra.mxu0 %v5351
        %7862 = vmatprep.subr.bf16.mxu0 %v5368
        %7863 = vmatpush1.bf16.msra.mxu0 %v5367
        %7864 = vmatprep.subr.bf16.mxu0 %v5384
        %7865 = vmatpush1.bf16.msra.mxu0 %v5383
        %7866 = vmatprep.subr.bf16.mxu0 %v5400
        %7867 = vmatpush1.bf16.msra.mxu0 %v5399
        %7868 = vmatprep.subr.bf16.mxu0 %v5416
        %7869 = vmatpush1.bf16.msra.mxu0 %v5415
        %7870 = vmatprep.subr.bf16.mxu0 %v5432
        %7871 = vmatpush1.bf16.msra.mxu0 %v5431
        %7872 = vmatprep.subr.bf16.mxu0 %v5448
        %7873 = vmatpush1.bf16.msra.mxu0 %v5447
        %7874 = vmatprep.subr.bf16.mxu0 %v5464
        %7875 = vmatpush1.bf16.msra.mxu0 %v5463
        %7876 = vmatprep.subr.bf16.mxu0 %v5480
        %7877 = vmatpush1.bf16.msra.mxu0 %v5479
        %7878 = vmatprep.subr.bf16.mxu0 %v5496
        %7879 = vmatpush1.bf16.msra.mxu0 %v5495
        %7880 = vmatprep.subr.bf16.mxu0 %v5512
        %7881 = vmatpush1.bf16.msra.mxu0 %v5511
        %7882 = vmatprep.subr.bf16.mxu0 %v5528
        %7883 = vmatpush1.bf16.msra.mxu0 %v5527
        %7884 = vmatprep.subr.bf16.mxu0 %v5544
        %7885 = vmatpush1.bf16.msra.mxu0 %v5543
        %7886 = vmatprep.subr.bf16.mxu0 %v5560
        %7887 = vmatpush1.bf16.msra.mxu0 %v5559
        %7888 = vmatprep.mubr.bf16.mxu0 %v1456
        %7889 = vmatmul.mubr.bf16.gmra.mrb[0].mxu0 %v1455
        %v7890 = vpop.f32.mrb[0].mxu0
        %v7891 = vadd.f32 %v7850, %v7890
        %v7892 = vpop.f32.mrb[0].mxu0
        %v7893 = vadd.f32 %v7852, %v7892
        %v7894 = vpop.f32.mrb[0].mxu0
        %v7895 = vpop.f32.mrb[0].mxu0
        %7896 = vdwg.mxu0
        %v7897 = vadd.f32 %v393, %v6743
        %v7898 = vadd.f32 %v394, %v6745
        %v7899 = vadd.f32 %v395, %v6907
        %v7900 = vadd.f32 %v396, %v6909
        %v7901 = vadd.f32 %v397, %v7071
        %v7902 = vadd.f32 %v398, %v7073
        %v7903 = vadd.f32 %v399, %v7235
        %v7904 = vadd.f32 %v400, %v7237
        %v7905 = vadd.f32 %v401, %v7399
        %v7906 = vadd.f32 %v402, %v7401
        %v7907 = vadd.f32 %v403, %v7563
        %v7908 = vadd.f32 %v404, %v7565
        %v7909 = vadd.f32 %v405, %v7727
        %v7910 = vadd.f32 %v406, %v7729
        %v7911 = vadd.f32 %v407, %v7891
        %v7912 = vadd.f32 %v408, %v7893
        %7913 = vst [vmem:[#allocation2] sm:$0xff] %v7897
        %7914 = vst [vmem:[#allocation2 + $0x8] sm:$0xff] %v7898
        %7915 = vst [vmem:[#allocation2 + $0x10] sm:$0xff] %v7899
        %7916 = vst [vmem:[#allocation2 + $0x18] sm:$0xff] %v7900
        %7917 = vst [vmem:[#allocation2 + $0x20] sm:$0xff] %v7901
        %7918 = vst [vmem:[#allocation2 + $0x28] sm:$0xff] %v7902
        %7919 = vst [vmem:[#allocation2 + $0x30] sm:$0xff] %v7903
        %7920 = vst [vmem:[#allocation2 + $0x38] sm:$0xff] %v7904
        %7921 = vst [vmem:[#allocation2 + $0x40] sm:$0xff] %v7905
        %7922 = vst [vmem:[#allocation2 + $0x48] sm:$0xff] %v7906
        %7923 = vst [vmem:[#allocation2 + $0x50] sm:$0xff] %v7907
        %7924 = vst [vmem:[#allocation2 + $0x58] sm:$0xff] %v7908
        %7925 = vst [vmem:[#allocation2 + $0x60] sm:$0xff] %v7909
        %7926 = vst [vmem:[#allocation2 + $0x68] sm:$0xff] %v7910
        %7927 = vst [vmem:[#allocation2 + $0x70] sm:$0xff] %v7911
        %7928 = vst [vmem:[#allocation2 + $0x78] sm:$0xff] %v7912
        %p7929 = scmp.eq.s32.totalorder %s31, 3
        // Predicated region
        $region73: #{tpu_custom_call.1} parent=43 // pred_check
          %p7930 = pneg %p7929
        $region74: #{tpu_custom_call.1} parent=43 // pred_check_branch
          %7932 = sbr.rel (%p7930) target = $region76
        $region75: #{tpu_custom_call.1} parent=43 // pred_region
          %v7933 = vld [vmem:[#allocation2] sm:$0xff]
          %v7934 = vld [vmem:[#allocation2 + $0x8] sm:$0xff]
          %v7935 = vld [vmem:[#allocation2 + $0x10] sm:$0xff]
          %v7936 = vld [vmem:[#allocation2 + $0x18] sm:$0xff]
          %v7937 = vld [vmem:[#allocation2 + $0x20] sm:$0xff]
          %v7938 = vld [vmem:[#allocation2 + $0x28] sm:$0xff]
          %v7939 = vld [vmem:[#allocation2 + $0x30] sm:$0xff]
          %v7940 = vld [vmem:[#allocation2 + $0x38] sm:$0xff]
          %v7941 = vld [vmem:[#allocation2 + $0x40] sm:$0xff]
          %v7942 = vld [vmem:[#allocation2 + $0x48] sm:$0xff]
          %v7943 = vld [vmem:[#allocation2 + $0x50] sm:$0xff]
          %v7944 = vld [vmem:[#allocation2 + $0x58] sm:$0xff]
          %v7945 = vld [vmem:[#allocation2 + $0x60] sm:$0xff]
          %v7946 = vld [vmem:[#allocation2 + $0x68] sm:$0xff]
          %v7947 = vld [vmem:[#allocation2 + $0x70] sm:$0xff]
          %v7948 = vld [vmem:[#allocation2 + $0x78] sm:$0xff]
          %v7949 = vld [vmem:[#allocation8] sm:$0xff]
          %v7950 = vld [vmem:[#allocation8 + $0x8] sm:$0xff]
          %v7953 = vlaneseq
          %v7954 = vshrl.u32 %v7953, 7
          %v7955 = vsub.s32 0, %v7954
          %v7956 = vrot.slane %v7949, %v7955
          %v7957 = vlaneseq
          %v7958 = vshrl.u32 %v7957, 7
          %v7959 = vsub.s32 1, %v7958
          %v7960 = vrot.slane %v7949, %v7959
          %v7961 = vlaneseq
          %v7962 = vshrl.u32 %v7961, 7
          %v7963 = vsub.s32 2, %v7962
          %v7964 = vrot.slane %v7949, %v7963
          %v7965 = vlaneseq
          %v7966 = vshrl.u32 %v7965, 7
          %v7967 = vsub.s32 3, %v7966
          %v7968 = vrot.slane %v7949, %v7967
          %v7969 = vlaneseq
          %v7970 = vshrl.u32 %v7969, 7
          %v7971 = vsub.s32 4, %v7970
          %v7972 = vrot.slane %v7949, %v7971
          %v7973 = vlaneseq
          %v7974 = vshrl.u32 %v7973, 7
          %v7975 = vsub.s32 5, %v7974
          %v7976 = vrot.slane %v7949, %v7975
          %v7977 = vlaneseq
          %v7978 = vshrl.u32 %v7977, 7
          %v7979 = vsub.s32 6, %v7978
          %v7980 = vrot.slane %v7949, %v7979
          %v7981 = vlaneseq
          %v7982 = vshrl.u32 %v7981, 7
          %v7983 = vsub.s32 7, %v7982
          %v7984 = vrot.slane %v7949, %v7983
          %v7985 = vlaneseq
          %v7986 = vshrl.u32 %v7985, 7
          %v7987 = vsub.s32 0, %v7986
          %v7988 = vrot.slane %v7950, %v7987
          %v7989 = vlaneseq
          %v7990 = vshrl.u32 %v7989, 7
          %v7991 = vsub.s32 1, %v7990
          %v7992 = vrot.slane %v7950, %v7991
          %v7993 = vlaneseq
          %v7994 = vshrl.u32 %v7993, 7
          %v7995 = vsub.s32 2, %v7994
          %v7996 = vrot.slane %v7950, %v7995
          %v7997 = vlaneseq
          %v7998 = vshrl.u32 %v7997, 7
          %v7999 = vsub.s32 3, %v7998
          %v8000 = vrot.slane %v7950, %v7999
          %v8001 = vlaneseq
          %v8002 = vshrl.u32 %v8001, 7
          %v8003 = vsub.s32 4, %v8002
          %v8004 = vrot.slane %v7950, %v8003
          %v8005 = vlaneseq
          %v8006 = vshrl.u32 %v8005, 7
          %v8007 = vsub.s32 5, %v8006
          %v8008 = vrot.slane %v7950, %v8007
          %v8009 = vlaneseq
          %v8010 = vshrl.u32 %v8009, 7
          %v8011 = vsub.s32 6, %v8010
          %v8012 = vrot.slane %v7950, %v8011
          %v8013 = vlaneseq
          %v8014 = vshrl.u32 %v8013, 7
          %v8015 = vsub.s32 7, %v8014
          %v8016 = vrot.slane %v7950, %v8015
          %v8033 = vadd.f32 %v7933, %v7956
          %v8034 = vadd.f32 %v7934, %v7960
          %v8035 = vadd.f32 %v7935, %v7964
          %v8036 = vadd.f32 %v7936, %v7968
          %v8037 = vadd.f32 %v7937, %v7972
          %v8038 = vadd.f32 %v7938, %v7976
          %v8039 = vadd.f32 %v7939, %v7980
          %v8040 = vadd.f32 %v7940, %v7984
          %v8041 = vadd.f32 %v7941, %v7988
          %v8042 = vadd.f32 %v7942, %v7992
          %v8043 = vadd.f32 %v7943, %v7996
          %v8044 = vadd.f32 %v7944, %v8000
          %v8045 = vadd.f32 %v7945, %v8004
          %v8046 = vadd.f32 %v7946, %v8008
          %v8047 = vadd.f32 %v7947, %v8012
          %v8048 = vadd.f32 %v7948, %v8016
          %v8049 = vmax.f32 %v8033, 0.0
          %v8050 = vmax.f32 %v8034, 0.0
          %v8051 = vmax.f32 %v8035, 0.0
          %v8052 = vmax.f32 %v8036, 0.0
          %v8053 = vmax.f32 %v8037, 0.0
          %v8054 = vmax.f32 %v8038, 0.0
          %v8055 = vmax.f32 %v8039, 0.0
          %v8056 = vmax.f32 %v8040, 0.0
          %v8057 = vmax.f32 %v8041, 0.0
          %v8058 = vmax.f32 %v8042, 0.0
          %v8059 = vmax.f32 %v8043, 0.0
          %v8060 = vmax.f32 %v8044, 0.0
          %v8061 = vmax.f32 %v8045, 0.0
          %v8062 = vmax.f32 %v8046, 0.0
          %v8063 = vmax.f32 %v8047, 0.0
          %v8064 = vmax.f32 %v8048, 0.0
          %v8065 = vpack.c.bf16 %v8049, %v8049
          %v8066 = vpack.c.bf16 %v8050, %v8050
          %v8067 = vpack.c.bf16 %v8051, %v8051
          %v8068 = vpack.c.bf16 %v8052, %v8052
          %v8069 = vpack.c.bf16 %v8053, %v8053
          %v8070 = vpack.c.bf16 %v8054, %v8054
          %v8071 = vpack.c.bf16 %v8055, %v8055
          %v8072 = vpack.c.bf16 %v8056, %v8056
          %v8073 = vpack.c.bf16 %v8057, %v8057
          %v8074 = vpack.c.bf16 %v8058, %v8058
          %v8075 = vpack.c.bf16 %v8059, %v8059
          %v8076 = vpack.c.bf16 %v8060, %v8060
          %v8077 = vpack.c.bf16 %v8061, %v8061
          %v8078 = vpack.c.bf16 %v8062, %v8062
          %v8079 = vpack.c.bf16 %v8063, %v8063
          %v8080 = vpack.c.bf16 %v8064, %v8064
          %v8081 = vld [vmem:[#allocation9] sm:$0xf]
          %v8082 = vld [vmem:[#allocation9 + $0x4] sm:$0xf]
          %v8083 = vld [vmem:[#allocation9 + $0x8] sm:$0xf]
          %v8084 = vld [vmem:[#allocation9 + $0xc] sm:$0xf]
          %v8085 = vld [vmem:[#allocation9 + $0x10] sm:$0xf]
          %v8086 = vld [vmem:[#allocation9 + $0x14] sm:$0xf]
          %v8087 = vld [vmem:[#allocation9 + $0x18] sm:$0xf]
          %v8088 = vld [vmem:[#allocation9 + $0x1c] sm:$0xf]
          %v8089 = vld [vmem:[#allocation9 + $0x20] sm:$0xf]
          %v8090 = vld [vmem:[#allocation9 + $0x24] sm:$0xf]
          %v8091 = vld [vmem:[#allocation9 + $0x28] sm:$0xf]
          %v8092 = vld [vmem:[#allocation9 + $0x2c] sm:$0xf]
          %v8093 = vld [vmem:[#allocation9 + $0x30] sm:$0xf]
          %v8094 = vld [vmem:[#allocation9 + $0x34] sm:$0xf]
          %v8095 = vld [vmem:[#allocation9 + $0x38] sm:$0xf]
          %v8096 = vld [vmem:[#allocation9 + $0x3c] sm:$0xf]
          %v8097 = vld [vmem:[#allocation9 + $0x40] sm:$0xf]
          %v8098 = vld [vmem:[#allocation9 + $0x44] sm:$0xf]
          %v8099 = vld [vmem:[#allocation9 + $0x48] sm:$0xf]
          %v8100 = vld [vmem:[#allocation9 + $0x4c] sm:$0xf]
          %v8101 = vld [vmem:[#allocation9 + $0x50] sm:$0xf]
          %v8102 = vld [vmem:[#allocation9 + $0x54] sm:$0xf]
          %v8103 = vld [vmem:[#allocation9 + $0x58] sm:$0xf]
          %v8104 = vld [vmem:[#allocation9 + $0x5c] sm:$0xf]
          %v8105 = vld [vmem:[#allocation9 + $0x60] sm:$0xf]
          %v8106 = vld [vmem:[#allocation9 + $0x64] sm:$0xf]
          %v8107 = vld [vmem:[#allocation9 + $0x68] sm:$0xf]
          %v8108 = vld [vmem:[#allocation9 + $0x6c] sm:$0xf]
          %v8109 = vld [vmem:[#allocation9 + $0x70] sm:$0xf]
          %v8110 = vld [vmem:[#allocation9 + $0x74] sm:$0xf]
          %v8111 = vld [vmem:[#allocation9 + $0x78] sm:$0xf]
          %v8112 = vld [vmem:[#allocation9 + $0x7c] sm:$0xf]
          %v8113 = vld [vmem:[#allocation9 + $0x80] sm:$0xf]
          %v8114 = vld [vmem:[#allocation9 + $0x84] sm:$0xf]
          %v8115 = vld [vmem:[#allocation9 + $0x88] sm:$0xf]
          %v8116 = vld [vmem:[#allocation9 + $0x8c] sm:$0xf]
          %v8117 = vld [vmem:[#allocation9 + $0x90] sm:$0xf]
          %v8118 = vld [vmem:[#allocation9 + $0x94] sm:$0xf]
          %v8119 = vld [vmem:[#allocation9 + $0x98] sm:$0xf]
          %v8120 = vld [vmem:[#allocation9 + $0x9c] sm:$0xf]
          %v8121 = vld [vmem:[#allocation9 + $0xa0] sm:$0xf]
          %v8122 = vld [vmem:[#allocation9 + $0xa4] sm:$0xf]
          %v8123 = vld [vmem:[#allocation9 + $0xa8] sm:$0xf]
          %v8124 = vld [vmem:[#allocation9 + $0xac] sm:$0xf]
          %v8125 = vld [vmem:[#allocation9 + $0xb0] sm:$0xf]
          %v8126 = vld [vmem:[#allocation9 + $0xb4] sm:$0xf]
          %v8127 = vld [vmem:[#allocation9 + $0xb8] sm:$0xf]
          %v8128 = vld [vmem:[#allocation9 + $0xbc] sm:$0xf]
          %v8129 = vld [vmem:[#allocation9 + $0xc0] sm:$0xf]
          %v8130 = vld [vmem:[#allocation9 + $0xc4] sm:$0xf]
          %v8131 = vld [vmem:[#allocation9 + $0xc8] sm:$0xf]
          %v8132 = vld [vmem:[#allocation9 + $0xcc] sm:$0xf]
          %v8133 = vld [vmem:[#allocation9 + $0xd0] sm:$0xf]
          %v8134 = vld [vmem:[#allocation9 + $0xd4] sm:$0xf]
          %v8135 = vld [vmem:[#allocation9 + $0xd8] sm:$0xf]
          %v8136 = vld [vmem:[#allocation9 + $0xdc] sm:$0xf]
          %v8137 = vld [vmem:[#allocation9 + $0xe0] sm:$0xf]
          %v8138 = vld [vmem:[#allocation9 + $0xe4] sm:$0xf]
          %v8139 = vld [vmem:[#allocation9 + $0xe8] sm:$0xf]
          %v8140 = vld [vmem:[#allocation9 + $0xec] sm:$0xf]
          %v8141 = vld [vmem:[#allocation9 + $0xf0] sm:$0xf]
          %v8142 = vld [vmem:[#allocation9 + $0xf4] sm:$0xf]
          %v8143 = vld [vmem:[#allocation9 + $0xf8] sm:$0xf]
          %v8144 = vld [vmem:[#allocation9 + $0xfc] sm:$0xf]
          %v8145 = vld [vmem:[#allocation9 + $0x100] sm:$0xf]
          %v8146 = vld [vmem:[#allocation9 + $0x104] sm:$0xf]
          %v8147 = vld [vmem:[#allocation9 + $0x108] sm:$0xf]
          %v8148 = vld [vmem:[#allocation9 + $0x10c] sm:$0xf]
          %v8149 = vld [vmem:[#allocation9 + $0x110] sm:$0xf]
          %v8150 = vld [vmem:[#allocation9 + $0x114] sm:$0xf]
          %v8151 = vld [vmem:[#allocation9 + $0x118] sm:$0xf]
          %v8152 = vld [vmem:[#allocation9 + $0x11c] sm:$0xf]
          %v8153 = vld [vmem:[#allocation9 + $0x120] sm:$0xf]
          %v8154 = vld [vmem:[#allocation9 + $0x124] sm:$0xf]
          %v8155 = vld [vmem:[#allocation9 + $0x128] sm:$0xf]
          %v8156 = vld [vmem:[#allocation9 + $0x12c] sm:$0xf]
          %v8157 = vld [vmem:[#allocation9 + $0x130] sm:$0xf]
          %v8158 = vld [vmem:[#allocation9 + $0x134] sm:$0xf]
          %v8159 = vld [vmem:[#allocation9 + $0x138] sm:$0xf]
          %v8160 = vld [vmem:[#allocation9 + $0x13c] sm:$0xf]
          %v8161 = vld [vmem:[#allocation9 + $0x140] sm:$0xf]
          %v8162 = vld [vmem:[#allocation9 + $0x144] sm:$0xf]
          %v8163 = vld [vmem:[#allocation9 + $0x148] sm:$0xf]
          %v8164 = vld [vmem:[#allocation9 + $0x14c] sm:$0xf]
          %v8165 = vld [vmem:[#allocation9 + $0x150] sm:$0xf]
          %v8166 = vld [vmem:[#allocation9 + $0x154] sm:$0xf]
          %v8167 = vld [vmem:[#allocation9 + $0x158] sm:$0xf]
          %v8168 = vld [vmem:[#allocation9 + $0x15c] sm:$0xf]
          %v8169 = vld [vmem:[#allocation9 + $0x160] sm:$0xf]
          %v8170 = vld [vmem:[#allocation9 + $0x164] sm:$0xf]
          %v8171 = vld [vmem:[#allocation9 + $0x168] sm:$0xf]
          %v8172 = vld [vmem:[#allocation9 + $0x16c] sm:$0xf]
          %v8173 = vld [vmem:[#allocation9 + $0x170] sm:$0xf]
          %v8174 = vld [vmem:[#allocation9 + $0x174] sm:$0xf]
          %v8175 = vld [vmem:[#allocation9 + $0x178] sm:$0xf]
          %v8176 = vld [vmem:[#allocation9 + $0x17c] sm:$0xf]
          %v8177 = vld [vmem:[#allocation9 + $0x180] sm:$0xf]
          %v8178 = vld [vmem:[#allocation9 + $0x184] sm:$0xf]
          %v8179 = vld [vmem:[#allocation9 + $0x188] sm:$0xf]
          %v8180 = vld [vmem:[#allocation9 + $0x18c] sm:$0xf]
          %v8181 = vld [vmem:[#allocation9 + $0x190] sm:$0xf]
          %v8182 = vld [vmem:[#allocation9 + $0x194] sm:$0xf]
          %v8183 = vld [vmem:[#allocation9 + $0x198] sm:$0xf]
          %v8184 = vld [vmem:[#allocation9 + $0x19c] sm:$0xf]
          %v8185 = vld [vmem:[#allocation9 + $0x1a0] sm:$0xf]
          %v8186 = vld [vmem:[#allocation9 + $0x1a4] sm:$0xf]
          %v8187 = vld [vmem:[#allocation9 + $0x1a8] sm:$0xf]
          %v8188 = vld [vmem:[#allocation9 + $0x1ac] sm:$0xf]
          %v8189 = vld [vmem:[#allocation9 + $0x1b0] sm:$0xf]
          %v8190 = vld [vmem:[#allocation9 + $0x1b4] sm:$0xf]
          %v8191 = vld [vmem:[#allocation9 + $0x1b8] sm:$0xf]
          %v8192 = vld [vmem:[#allocation9 + $0x1bc] sm:$0xf]
          %v8193 = vld [vmem:[#allocation9 + $0x1c0] sm:$0xf]
          %v8194 = vld [vmem:[#allocation9 + $0x1c4] sm:$0xf]
          %v8195 = vld [vmem:[#allocation9 + $0x1c8] sm:$0xf]
          %v8196 = vld [vmem:[#allocation9 + $0x1cc] sm:$0xf]
          %v8197 = vld [vmem:[#allocation9 + $0x1d0] sm:$0xf]
          %v8198 = vld [vmem:[#allocation9 + $0x1d4] sm:$0xf]
          %v8199 = vld [vmem:[#allocation9 + $0x1d8] sm:$0xf]
          %v8200 = vld [vmem:[#allocation9 + $0x1dc] sm:$0xf]
          %v8201 = vld [vmem:[#allocation9 + $0x1e0] sm:$0xf]
          %v8202 = vld [vmem:[#allocation9 + $0x1e4] sm:$0xf]
          %v8203 = vld [vmem:[#allocation9 + $0x1e8] sm:$0xf]
          %v8204 = vld [vmem:[#allocation9 + $0x1ec] sm:$0xf]
          %v8205 = vld [vmem:[#allocation9 + $0x1f0] sm:$0xf]
          %v8206 = vld [vmem:[#allocation9 + $0x1f4] sm:$0xf]
          %v8207 = vld [vmem:[#allocation9 + $0x1f8] sm:$0xf]
          %v8208 = vld [vmem:[#allocation9 + $0x1fc] sm:$0xf]
          %v8209 = vld [vmem:[#allocation9 + $0x200] sm:$0xf]
          %v8210 = vld [vmem:[#allocation9 + $0x204] sm:$0xf]
          %v8211 = vld [vmem:[#allocation9 + $0x208] sm:$0xf]
          %v8212 = vld [vmem:[#allocation9 + $0x20c] sm:$0xf]
          %v8213 = vld [vmem:[#allocation9 + $0x210] sm:$0xf]
          %v8214 = vld [vmem:[#allocation9 + $0x214] sm:$0xf]
          %v8215 = vld [vmem:[#allocation9 + $0x218] sm:$0xf]
          %v8216 = vld [vmem:[#allocation9 + $0x21c] sm:$0xf]
          %v8217 = vld [vmem:[#allocation9 + $0x220] sm:$0xf]
          %v8218 = vld [vmem:[#allocation9 + $0x224] sm:$0xf]
          %v8219 = vld [vmem:[#allocation9 + $0x228] sm:$0xf]
          %v8220 = vld [vmem:[#allocation9 + $0x22c] sm:$0xf]
          %v8221 = vld [vmem:[#allocation9 + $0x230] sm:$0xf]
          %v8222 = vld [vmem:[#allocation9 + $0x234] sm:$0xf]
          %v8223 = vld [vmem:[#allocation9 + $0x238] sm:$0xf]
          %v8224 = vld [vmem:[#allocation9 + $0x23c] sm:$0xf]
          %v8225 = vld [vmem:[#allocation9 + $0x240] sm:$0xf]
          %v8226 = vld [vmem:[#allocation9 + $0x244] sm:$0xf]
          %v8227 = vld [vmem:[#allocation9 + $0x248] sm:$0xf]
          %v8228 = vld [vmem:[#allocation9 + $0x24c] sm:$0xf]
          %v8229 = vld [vmem:[#allocation9 + $0x250] sm:$0xf]
          %v8230 = vld [vmem:[#allocation9 + $0x254] sm:$0xf]
          %v8231 = vld [vmem:[#allocation9 + $0x258] sm:$0xf]
          %v8232 = vld [vmem:[#allocation9 + $0x25c] sm:$0xf]
          %v8233 = vld [vmem:[#allocation9 + $0x260] sm:$0xf]
          %v8234 = vld [vmem:[#allocation9 + $0x264] sm:$0xf]
          %v8235 = vld [vmem:[#allocation9 + $0x268] sm:$0xf]
          %v8236 = vld [vmem:[#allocation9 + $0x26c] sm:$0xf]
          %v8237 = vld [vmem:[#allocation9 + $0x270] sm:$0xf]
          %v8238 = vld [vmem:[#allocation9 + $0x274] sm:$0xf]
          %v8239 = vld [vmem:[#allocation9 + $0x278] sm:$0xf]
          %v8240 = vld [vmem:[#allocation9 + $0x27c] sm:$0xf]
          %v8241 = vld [vmem:[#allocation9 + $0x280] sm:$0xf]
          %v8242 = vld [vmem:[#allocation9 + $0x284] sm:$0xf]
          %v8243 = vld [vmem:[#allocation9 + $0x288] sm:$0xf]
          %v8244 = vld [vmem:[#allocation9 + $0x28c] sm:$0xf]
          %v8245 = vld [vmem:[#allocation9 + $0x290] sm:$0xf]
          %v8246 = vld [vmem:[#allocation9 + $0x294] sm:$0xf]
          %v8247 = vld [vmem:[#allocation9 + $0x298] sm:$0xf]
          %v8248 = vld [vmem:[#allocation9 + $0x29c] sm:$0xf]
          %v8249 = vld [vmem:[#allocation9 + $0x2a0] sm:$0xf]
          %v8250 = vld [vmem:[#allocation9 + $0x2a4] sm:$0xf]
          %v8251 = vld [vmem:[#allocation9 + $0x2a8] sm:$0xf]
          %v8252 = vld [vmem:[#allocation9 + $0x2ac] sm:$0xf]
          %v8253 = vld [vmem:[#allocation9 + $0x2b0] sm:$0xf]
          %v8254 = vld [vmem:[#allocation9 + $0x2b4] sm:$0xf]
          %v8255 = vld [vmem:[#allocation9 + $0x2b8] sm:$0xf]
          %v8256 = vld [vmem:[#allocation9 + $0x2bc] sm:$0xf]
          %v8257 = vld [vmem:[#allocation9 + $0x2c0] sm:$0xf]
          %v8258 = vld [vmem:[#allocation9 + $0x2c4] sm:$0xf]
          %v8259 = vld [vmem:[#allocation9 + $0x2c8] sm:$0xf]
          %v8260 = vld [vmem:[#allocation9 + $0x2cc] sm:$0xf]
          %v8261 = vld [vmem:[#allocation9 + $0x2d0] sm:$0xf]
          %v8262 = vld [vmem:[#allocation9 + $0x2d4] sm:$0xf]
          %v8263 = vld [vmem:[#allocation9 + $0x2d8] sm:$0xf]
          %v8264 = vld [vmem:[#allocation9 + $0x2dc] sm:$0xf]
          %v8265 = vld [vmem:[#allocation9 + $0x2e0] sm:$0xf]
          %v8266 = vld [vmem:[#allocation9 + $0x2e4] sm:$0xf]
          %v8267 = vld [vmem:[#allocation9 + $0x2e8] sm:$0xf]
          %v8268 = vld [vmem:[#allocation9 + $0x2ec] sm:$0xf]
          %v8269 = vld [vmem:[#allocation9 + $0x2f0] sm:$0xf]
          %v8270 = vld [vmem:[#allocation9 + $0x2f4] sm:$0xf]
          %v8271 = vld [vmem:[#allocation9 + $0x2f8] sm:$0xf]
          %v8272 = vld [vmem:[#allocation9 + $0x2fc] sm:$0xf]
          %v8273 = vld [vmem:[#allocation9 + $0x300] sm:$0xf]
          %v8274 = vld [vmem:[#allocation9 + $0x304] sm:$0xf]
          %v8275 = vld [vmem:[#allocation9 + $0x308] sm:$0xf]
          %v8276 = vld [vmem:[#allocation9 + $0x30c] sm:$0xf]
          %v8277 = vld [vmem:[#allocation9 + $0x310] sm:$0xf]
          %v8278 = vld [vmem:[#allocation9 + $0x314] sm:$0xf]
          %v8279 = vld [vmem:[#allocation9 + $0x318] sm:$0xf]
          %v8280 = vld [vmem:[#allocation9 + $0x31c] sm:$0xf]
          %v8281 = vld [vmem:[#allocation9 + $0x320] sm:$0xf]
          %v8282 = vld [vmem:[#allocation9 + $0x324] sm:$0xf]
          %v8283 = vld [vmem:[#allocation9 + $0x328] sm:$0xf]
          %v8284 = vld [vmem:[#allocation9 + $0x32c] sm:$0xf]
          %v8285 = vld [vmem:[#allocation9 + $0x330] sm:$0xf]
          %v8286 = vld [vmem:[#allocation9 + $0x334] sm:$0xf]
          %v8287 = vld [vmem:[#allocation9 + $0x338] sm:$0xf]
          %v8288 = vld [vmem:[#allocation9 + $0x33c] sm:$0xf]
          %v8289 = vld [vmem:[#allocation9 + $0x340] sm:$0xf]
          %v8290 = vld [vmem:[#allocation9 + $0x344] sm:$0xf]
          %v8291 = vld [vmem:[#allocation9 + $0x348] sm:$0xf]
          %v8292 = vld [vmem:[#allocation9 + $0x34c] sm:$0xf]
          %v8293 = vld [vmem:[#allocation9 + $0x350] sm:$0xf]
          %v8294 = vld [vmem:[#allocation9 + $0x354] sm:$0xf]
          %v8295 = vld [vmem:[#allocation9 + $0x358] sm:$0xf]
          %v8296 = vld [vmem:[#allocation9 + $0x35c] sm:$0xf]
          %v8297 = vld [vmem:[#allocation9 + $0x360] sm:$0xf]
          %v8298 = vld [vmem:[#allocation9 + $0x364] sm:$0xf]
          %v8299 = vld [vmem:[#allocation9 + $0x368] sm:$0xf]
          %v8300 = vld [vmem:[#allocation9 + $0x36c] sm:$0xf]
          %v8301 = vld [vmem:[#allocation9 + $0x370] sm:$0xf]
          %v8302 = vld [vmem:[#allocation9 + $0x374] sm:$0xf]
          %v8303 = vld [vmem:[#allocation9 + $0x378] sm:$0xf]
          %v8304 = vld [vmem:[#allocation9 + $0x37c] sm:$0xf]
          %v8305 = vld [vmem:[#allocation9 + $0x380] sm:$0xf]
          %v8306 = vld [vmem:[#allocation9 + $0x384] sm:$0xf]
          %v8307 = vld [vmem:[#allocation9 + $0x388] sm:$0xf]
          %v8308 = vld [vmem:[#allocation9 + $0x38c] sm:$0xf]
          %v8309 = vld [vmem:[#allocation9 + $0x390] sm:$0xf]
          %v8310 = vld [vmem:[#allocation9 + $0x394] sm:$0xf]
          %v8311 = vld [vmem:[#allocation9 + $0x398] sm:$0xf]
          %v8312 = vld [vmem:[#allocation9 + $0x39c] sm:$0xf]
          %v8313 = vld [vmem:[#allocation9 + $0x3a0] sm:$0xf]
          %v8314 = vld [vmem:[#allocation9 + $0x3a4] sm:$0xf]
          %v8315 = vld [vmem:[#allocation9 + $0x3a8] sm:$0xf]
          %v8316 = vld [vmem:[#allocation9 + $0x3ac] sm:$0xf]
          %v8317 = vld [vmem:[#allocation9 + $0x3b0] sm:$0xf]
          %v8318 = vld [vmem:[#allocation9 + $0x3b4] sm:$0xf]
          %v8319 = vld [vmem:[#allocation9 + $0x3b8] sm:$0xf]
          %v8320 = vld [vmem:[#allocation9 + $0x3bc] sm:$0xf]
          %v8321 = vld [vmem:[#allocation9 + $0x3c0] sm:$0xf]
          %v8322 = vld [vmem:[#allocation9 + $0x3c4] sm:$0xf]
          %v8323 = vld [vmem:[#allocation9 + $0x3c8] sm:$0xf]
          %v8324 = vld [vmem:[#allocation9 + $0x3cc] sm:$0xf]
          %v8325 = vld [vmem:[#allocation9 + $0x3d0] sm:$0xf]
          %v8326 = vld [vmem:[#allocation9 + $0x3d4] sm:$0xf]
          %v8327 = vld [vmem:[#allocation9 + $0x3d8] sm:$0xf]
          %v8328 = vld [vmem:[#allocation9 + $0x3dc] sm:$0xf]
          %v8329 = vld [vmem:[#allocation9 + $0x3e0] sm:$0xf]
          %v8330 = vld [vmem:[#allocation9 + $0x3e4] sm:$0xf]
          %v8331 = vld [vmem:[#allocation9 + $0x3e8] sm:$0xf]
          %v8332 = vld [vmem:[#allocation9 + $0x3ec] sm:$0xf]
          %v8333 = vld [vmem:[#allocation9 + $0x3f0] sm:$0xf]
          %v8334 = vld [vmem:[#allocation9 + $0x3f4] sm:$0xf]
          %v8335 = vld [vmem:[#allocation9 + $0x3f8] sm:$0xf]
          %v8336 = vld [vmem:[#allocation9 + $0x3fc] sm:$0xf]
          %v8593 = vunpack.c.l.b16 %v8081
          %v8594 = vunpack.c.l.b16 %v8082
          %v8595 = vunpack.c.l.b16 %v8083
          %v8596 = vunpack.c.l.b16 %v8084
          %v8597 = vunpack.c.l.b16 %v8085
          %v8598 = vunpack.c.l.b16 %v8086
          %v8599 = vunpack.c.l.b16 %v8087
          %v8600 = vunpack.c.l.b16 %v8088
          %v8601 = vunpack.c.l.b16 %v8089
          %v8602 = vunpack.c.l.b16 %v8090
          %v8603 = vunpack.c.l.b16 %v8091
          %v8604 = vunpack.c.l.b16 %v8092
          %v8605 = vunpack.c.l.b16 %v8093
          %v8606 = vunpack.c.l.b16 %v8094
          %v8607 = vunpack.c.l.b16 %v8095
          %v8608 = vunpack.c.l.b16 %v8096
          %v8609 = vunpack.c.l.b16 %v8097
          %v8610 = vunpack.c.l.b16 %v8098
          %v8611 = vunpack.c.l.b16 %v8099
          %v8612 = vunpack.c.l.b16 %v8100
          %v8613 = vunpack.c.l.b16 %v8101
          %v8614 = vunpack.c.l.b16 %v8102
          %v8615 = vunpack.c.l.b16 %v8103
          %v8616 = vunpack.c.l.b16 %v8104
          %v8617 = vunpack.c.l.b16 %v8105
          %v8618 = vunpack.c.l.b16 %v8106
          %v8619 = vunpack.c.l.b16 %v8107
          %v8620 = vunpack.c.l.b16 %v8108
          %v8621 = vunpack.c.l.b16 %v8109
          %v8622 = vunpack.c.l.b16 %v8110
          %v8623 = vunpack.c.l.b16 %v8111
          %v8624 = vunpack.c.l.b16 %v8112
          %v8625 = vunpack.c.l.b16 %v8113
          %v8626 = vunpack.c.l.b16 %v8114
          %v8627 = vunpack.c.l.b16 %v8115
          %v8628 = vunpack.c.l.b16 %v8116
          %v8629 = vunpack.c.l.b16 %v8117
          %v8630 = vunpack.c.l.b16 %v8118
          %v8631 = vunpack.c.l.b16 %v8119
          %v8632 = vunpack.c.l.b16 %v8120
          %v8633 = vunpack.c.l.b16 %v8121
          %v8634 = vunpack.c.l.b16 %v8122
          %v8635 = vunpack.c.l.b16 %v8123
          %v8636 = vunpack.c.l.b16 %v8124
          %v8637 = vunpack.c.l.b16 %v8125
          %v8638 = vunpack.c.l.b16 %v8126
          %v8639 = vunpack.c.l.b16 %v8127
          %v8640 = vunpack.c.l.b16 %v8128
          %v8641 = vunpack.c.l.b16 %v8129
          %v8642 = vunpack.c.l.b16 %v8130
          %v8643 = vunpack.c.l.b16 %v8131
          %v8644 = vunpack.c.l.b16 %v8132
          %v8645 = vunpack.c.l.b16 %v8133
          %v8646 = vunpack.c.l.b16 %v8134
          %v8647 = vunpack.c.l.b16 %v8135
          %v8648 = vunpack.c.l.b16 %v8136
          %v8649 = vunpack.c.l.b16 %v8137
          %v8650 = vunpack.c.l.b16 %v8138
          %v8651 = vunpack.c.l.b16 %v8139
          %v8652 = vunpack.c.l.b16 %v8140
          %v8653 = vunpack.c.l.b16 %v8141
          %v8654 = vunpack.c.l.b16 %v8142
          %v8655 = vunpack.c.l.b16 %v8143
          %v8656 = vunpack.c.l.b16 %v8144
          %v8657 = vunpack.c.l.b16 %v8145
          %v8658 = vunpack.c.l.b16 %v8146
          %v8659 = vunpack.c.l.b16 %v8147
          %v8660 = vunpack.c.l.b16 %v8148
          %v8661 = vunpack.c.l.b16 %v8149
          %v8662 = vunpack.c.l.b16 %v8150
          %v8663 = vunpack.c.l.b16 %v8151
          %v8664 = vunpack.c.l.b16 %v8152
          %v8665 = vunpack.c.l.b16 %v8153
          %v8666 = vunpack.c.l.b16 %v8154
          %v8667 = vunpack.c.l.b16 %v8155
          %v8668 = vunpack.c.l.b16 %v8156
          %v8669 = vunpack.c.l.b16 %v8157
          %v8670 = vunpack.c.l.b16 %v8158
          %v8671 = vunpack.c.l.b16 %v8159
          %v8672 = vunpack.c.l.b16 %v8160
          %v8673 = vunpack.c.l.b16 %v8161
          %v8674 = vunpack.c.l.b16 %v8162
          %v8675 = vunpack.c.l.b16 %v8163
          %v8676 = vunpack.c.l.b16 %v8164
          %v8677 = vunpack.c.l.b16 %v8165
          %v8678 = vunpack.c.l.b16 %v8166
          %v8679 = vunpack.c.l.b16 %v8167
          %v8680 = vunpack.c.l.b16 %v8168
          %v8681 = vunpack.c.l.b16 %v8169
          %v8682 = vunpack.c.l.b16 %v8170
          %v8683 = vunpack.c.l.b16 %v8171
          %v8684 = vunpack.c.l.b16 %v8172
          %v8685 = vunpack.c.l.b16 %v8173
          %v8686 = vunpack.c.l.b16 %v8174
          %v8687 = vunpack.c.l.b16 %v8175
          %v8688 = vunpack.c.l.b16 %v8176
          %v8689 = vunpack.c.l.b16 %v8177
          %v8690 = vunpack.c.l.b16 %v8178
          %v8691 = vunpack.c.l.b16 %v8179
          %v8692 = vunpack.c.l.b16 %v8180
          %v8693 = vunpack.c.l.b16 %v8181
          %v8694 = vunpack.c.l.b16 %v8182
          %v8695 = vunpack.c.l.b16 %v8183
          %v8696 = vunpack.c.l.b16 %v8184
          %v8697 = vunpack.c.l.b16 %v8185
          %v8698 = vunpack.c.l.b16 %v8186
          %v8699 = vunpack.c.l.b16 %v8187
          %v8700 = vunpack.c.l.b16 %v8188
          %v8701 = vunpack.c.l.b16 %v8189
          %v8702 = vunpack.c.l.b16 %v8190
          %v8703 = vunpack.c.l.b16 %v8191
          %v8704 = vunpack.c.l.b16 %v8192
          %v8705 = vunpack.c.l.b16 %v8193
          %v8706 = vunpack.c.l.b16 %v8194
          %v8707 = vunpack.c.l.b16 %v8195
          %v8708 = vunpack.c.l.b16 %v8196
          %v8709 = vunpack.c.l.b16 %v8197
          %v8710 = vunpack.c.l.b16 %v8198
          %v8711 = vunpack.c.l.b16 %v8199
          %v8712 = vunpack.c.l.b16 %v8200
          %v8713 = vunpack.c.l.b16 %v8201
          %v8714 = vunpack.c.l.b16 %v8202
          %v8715 = vunpack.c.l.b16 %v8203
          %v8716 = vunpack.c.l.b16 %v8204
          %v8717 = vunpack.c.l.b16 %v8205
          %v8718 = vunpack.c.l.b16 %v8206
          %v8719 = vunpack.c.l.b16 %v8207
          %v8720 = vunpack.c.l.b16 %v8208
          %v8721 = vunpack.c.l.b16 %v8209
          %v8722 = vunpack.c.l.b16 %v8210
          %v8723 = vunpack.c.l.b16 %v8211
          %v8724 = vunpack.c.l.b16 %v8212
          %v8725 = vunpack.c.l.b16 %v8213
          %v8726 = vunpack.c.l.b16 %v8214
          %v8727 = vunpack.c.l.b16 %v8215
          %v8728 = vunpack.c.l.b16 %v8216
          %v8729 = vunpack.c.l.b16 %v8217
          %v8730 = vunpack.c.l.b16 %v8218
          %v8731 = vunpack.c.l.b16 %v8219
          %v8732 = vunpack.c.l.b16 %v8220
          %v8733 = vunpack.c.l.b16 %v8221
          %v8734 = vunpack.c.l.b16 %v8222
          %v8735 = vunpack.c.l.b16 %v8223
          %v8736 = vunpack.c.l.b16 %v8224
          %v8737 = vunpack.c.l.b16 %v8225
          %v8738 = vunpack.c.l.b16 %v8226
          %v8739 = vunpack.c.l.b16 %v8227
          %v8740 = vunpack.c.l.b16 %v8228
          %v8741 = vunpack.c.l.b16 %v8229
          %v8742 = vunpack.c.l.b16 %v8230
          %v8743 = vunpack.c.l.b16 %v8231
          %v8744 = vunpack.c.l.b16 %v8232
          %v8745 = vunpack.c.l.b16 %v8233
          %v8746 = vunpack.c.l.b16 %v8234
          %v8747 = vunpack.c.l.b16 %v8235
          %v8748 = vunpack.c.l.b16 %v8236
          %v8749 = vunpack.c.l.b16 %v8237
          %v8750 = vunpack.c.l.b16 %v8238
          %v8751 = vunpack.c.l.b16 %v8239
          %v8752 = vunpack.c.l.b16 %v8240
          %v8753 = vunpack.c.l.b16 %v8241
          %v8754 = vunpack.c.l.b16 %v8242
          %v8755 = vunpack.c.l.b16 %v8243
          %v8756 = vunpack.c.l.b16 %v8244
          %v8757 = vunpack.c.l.b16 %v8245
          %v8758 = vunpack.c.l.b16 %v8246
          %v8759 = vunpack.c.l.b16 %v8247
          %v8760 = vunpack.c.l.b16 %v8248
          %v8761 = vunpack.c.l.b16 %v8249
          %v8762 = vunpack.c.l.b16 %v8250
          %v8763 = vunpack.c.l.b16 %v8251
          %v8764 = vunpack.c.l.b16 %v8252
          %v8765 = vunpack.c.l.b16 %v8253
          %v8766 = vunpack.c.l.b16 %v8254
          %v8767 = vunpack.c.l.b16 %v8255
          %v8768 = vunpack.c.l.b16 %v8256
          %v8769 = vunpack.c.l.b16 %v8257
          %v8770 = vunpack.c.l.b16 %v8258
          %v8771 = vunpack.c.l.b16 %v8259
          %v8772 = vunpack.c.l.b16 %v8260
          %v8773 = vunpack.c.l.b16 %v8261
          %v8774 = vunpack.c.l.b16 %v8262
          %v8775 = vunpack.c.l.b16 %v8263
          %v8776 = vunpack.c.l.b16 %v8264
          %v8777 = vunpack.c.l.b16 %v8265
          %v8778 = vunpack.c.l.b16 %v8266
          %v8779 = vunpack.c.l.b16 %v8267
          %v8780 = vunpack.c.l.b16 %v8268
          %v8781 = vunpack.c.l.b16 %v8269
          %v8782 = vunpack.c.l.b16 %v8270
          %v8783 = vunpack.c.l.b16 %v8271
          %v8784 = vunpack.c.l.b16 %v8272
          %v8785 = vunpack.c.l.b16 %v8273
          %v8786 = vunpack.c.l.b16 %v8274
          %v8787 = vunpack.c.l.b16 %v8275
          %v8788 = vunpack.c.l.b16 %v8276
          %v8789 = vunpack.c.l.b16 %v8277
          %v8790 = vunpack.c.l.b16 %v8278
          %v8791 = vunpack.c.l.b16 %v8279
          %v8792 = vunpack.c.l.b16 %v8280
          %v8793 = vunpack.c.l.b16 %v8281
          %v8794 = vunpack.c.l.b16 %v8282
          %v8795 = vunpack.c.l.b16 %v8283
          %v8796 = vunpack.c.l.b16 %v8284
          %v8797 = vunpack.c.l.b16 %v8285
          %v8798 = vunpack.c.l.b16 %v8286
          %v8799 = vunpack.c.l.b16 %v8287
          %v8800 = vunpack.c.l.b16 %v8288
          %v8801 = vunpack.c.l.b16 %v8289
          %v8802 = vunpack.c.l.b16 %v8290
          %v8803 = vunpack.c.l.b16 %v8291
          %v8804 = vunpack.c.l.b16 %v8292
          %v8805 = vunpack.c.l.b16 %v8293
          %v8806 = vunpack.c.l.b16 %v8294
          %v8807 = vunpack.c.l.b16 %v8295
          %v8808 = vunpack.c.l.b16 %v8296
          %v8809 = vunpack.c.l.b16 %v8297
          %v8810 = vunpack.c.l.b16 %v8298
          %v8811 = vunpack.c.l.b16 %v8299
          %v8812 = vunpack.c.l.b16 %v8300
          %v8813 = vunpack.c.l.b16 %v8301
          %v8814 = vunpack.c.l.b16 %v8302
          %v8815 = vunpack.c.l.b16 %v8303
          %v8816 = vunpack.c.l.b16 %v8304
          %v8817 = vunpack.c.l.b16 %v8305
          %v8818 = vunpack.c.l.b16 %v8306
          %v8819 = vunpack.c.l.b16 %v8307
          %v8820 = vunpack.c.l.b16 %v8308
          %v8821 = vunpack.c.l.b16 %v8309
          %v8822 = vunpack.c.l.b16 %v8310
          %v8823 = vunpack.c.l.b16 %v8311
          %v8824 = vunpack.c.l.b16 %v8312
          %v8825 = vunpack.c.l.b16 %v8313
          %v8826 = vunpack.c.l.b16 %v8314
          %v8827 = vunpack.c.l.b16 %v8315
          %v8828 = vunpack.c.l.b16 %v8316
          %v8829 = vunpack.c.l.b16 %v8317
          %v8830 = vunpack.c.l.b16 %v8318
          %v8831 = vunpack.c.l.b16 %v8319
          %v8832 = vunpack.c.l.b16 %v8320
          %v8833 = vunpack.c.l.b16 %v8321
          %v8834 = vunpack.c.l.b16 %v8322
          %v8835 = vunpack.c.l.b16 %v8323
          %v8836 = vunpack.c.l.b16 %v8324
          %v8837 = vunpack.c.l.b16 %v8325
          %v8838 = vunpack.c.l.b16 %v8326
          %v8839 = vunpack.c.l.b16 %v8327
          %v8840 = vunpack.c.l.b16 %v8328
          %v8841 = vunpack.c.l.b16 %v8329
          %v8842 = vunpack.c.l.b16 %v8330
          %v8843 = vunpack.c.l.b16 %v8331
          %v8844 = vunpack.c.l.b16 %v8332
          %v8845 = vunpack.c.l.b16 %v8333
          %v8846 = vunpack.c.l.b16 %v8334
          %v8847 = vunpack.c.l.b16 %v8335
          %v8848 = vunpack.c.l.b16 %v8336
          %v8849 = vpack.c.b16 %v8594, %v8593
          %v8850 = vpack.c.b16 %v8596, %v8595
          %v8851 = vpack.c.b16 %v8598, %v8597
          %v8852 = vpack.c.b16 %v8600, %v8599
          %v8853 = vpack.c.b16 %v8602, %v8601
          %v8854 = vpack.c.b16 %v8604, %v8603
          %v8855 = vpack.c.b16 %v8606, %v8605
          %v8856 = vpack.c.b16 %v8608, %v8607
          %v8857 = vpack.c.b16 %v8610, %v8609
          %v8858 = vpack.c.b16 %v8612, %v8611
          %v8859 = vpack.c.b16 %v8614, %v8613
          %v8860 = vpack.c.b16 %v8616, %v8615
          %v8861 = vpack.c.b16 %v8618, %v8617
          %v8862 = vpack.c.b16 %v8620, %v8619
          %v8863 = vpack.c.b16 %v8622, %v8621
          %v8864 = vpack.c.b16 %v8624, %v8623
          %v8865 = vpack.c.b16 %v8626, %v8625
          %v8866 = vpack.c.b16 %v8628, %v8627
          %v8867 = vpack.c.b16 %v8630, %v8629
          %v8868 = vpack.c.b16 %v8632, %v8631
          %v8869 = vpack.c.b16 %v8634, %v8633
          %v8870 = vpack.c.b16 %v8636, %v8635
          %v8871 = vpack.c.b16 %v8638, %v8637
          %v8872 = vpack.c.b16 %v8640, %v8639
          %v8873 = vpack.c.b16 %v8642, %v8641
          %v8874 = vpack.c.b16 %v8644, %v8643
          %v8875 = vpack.c.b16 %v8646, %v8645
          %v8876 = vpack.c.b16 %v8648, %v8647
          %v8877 = vpack.c.b16 %v8650, %v8649
          %v8878 = vpack.c.b16 %v8652, %v8651
          %v8879 = vpack.c.b16 %v8654, %v8653
          %v8880 = vpack.c.b16 %v8656, %v8655
          %v8881 = vpack.c.b16 %v8658, %v8657
          %v8882 = vpack.c.b16 %v8660, %v8659
          %v8883 = vpack.c.b16 %v8662, %v8661
          %v8884 = vpack.c.b16 %v8664, %v8663
          %v8885 = vpack.c.b16 %v8666, %v8665
          %v8886 = vpack.c.b16 %v8668, %v8667
          %v8887 = vpack.c.b16 %v8670, %v8669
          %v8888 = vpack.c.b16 %v8672, %v8671
          %v8889 = vpack.c.b16 %v8674, %v8673
          %v8890 = vpack.c.b16 %v8676, %v8675
          %v8891 = vpack.c.b16 %v8678, %v8677
          %v8892 = vpack.c.b16 %v8680, %v8679
          %v8893 = vpack.c.b16 %v8682, %v8681
          %v8894 = vpack.c.b16 %v8684, %v8683
          %v8895 = vpack.c.b16 %v8686, %v8685
          %v8896 = vpack.c.b16 %v8688, %v8687
          %v8897 = vpack.c.b16 %v8690, %v8689
          %v8898 = vpack.c.b16 %v8692, %v8691
          %v8899 = vpack.c.b16 %v8694, %v8693
          %v8900 = vpack.c.b16 %v8696, %v8695
          %v8901 = vpack.c.b16 %v8698, %v8697
          %v8902 = vpack.c.b16 %v8700, %v8699
          %v8903 = vpack.c.b16 %v8702, %v8701
          %v8904 = vpack.c.b16 %v8704, %v8703
          %v8905 = vpack.c.b16 %v8706, %v8705
          %v8906 = vpack.c.b16 %v8708, %v8707
          %v8907 = vpack.c.b16 %v8710, %v8709
          %v8908 = vpack.c.b16 %v8712, %v8711
          %v8909 = vpack.c.b16 %v8714, %v8713
          %v8910 = vpack.c.b16 %v8716, %v8715
          %v8911 = vpack.c.b16 %v8718, %v8717
          %v8912 = vpack.c.b16 %v8720, %v8719
          %v8913 = vpack.c.b16 %v8722, %v8721
          %v8914 = vpack.c.b16 %v8724, %v8723
          %v8915 = vpack.c.b16 %v8726, %v8725
          %v8916 = vpack.c.b16 %v8728, %v8727
          %v8917 = vpack.c.b16 %v8730, %v8729
          %v8918 = vpack.c.b16 %v8732, %v8731
          %v8919 = vpack.c.b16 %v8734, %v8733
          %v8920 = vpack.c.b16 %v8736, %v8735
          %v8921 = vpack.c.b16 %v8738, %v8737
          %v8922 = vpack.c.b16 %v8740, %v8739
          %v8923 = vpack.c.b16 %v8742, %v8741
          %v8924 = vpack.c.b16 %v8744, %v8743
          %v8925 = vpack.c.b16 %v8746, %v8745
          %v8926 = vpack.c.b16 %v8748, %v8747
          %v8927 = vpack.c.b16 %v8750, %v8749
          %v8928 = vpack.c.b16 %v8752, %v8751
          %v8929 = vpack.c.b16 %v8754, %v8753
          %v8930 = vpack.c.b16 %v8756, %v8755
          %v8931 = vpack.c.b16 %v8758, %v8757
          %v8932 = vpack.c.b16 %v8760, %v8759
          %v8933 = vpack.c.b16 %v8762, %v8761
          %v8934 = vpack.c.b16 %v8764, %v8763
          %v8935 = vpack.c.b16 %v8766, %v8765
          %v8936 = vpack.c.b16 %v8768, %v8767
          %v8937 = vpack.c.b16 %v8770, %v8769
          %v8938 = vpack.c.b16 %v8772, %v8771
          %v8939 = vpack.c.b16 %v8774, %v8773
          %v8940 = vpack.c.b16 %v8776, %v8775
          %v8941 = vpack.c.b16 %v8778, %v8777
          %v8942 = vpack.c.b16 %v8780, %v8779
          %v8943 = vpack.c.b16 %v8782, %v8781
          %v8944 = vpack.c.b16 %v8784, %v8783
          %v8945 = vpack.c.b16 %v8786, %v8785
          %v8946 = vpack.c.b16 %v8788, %v8787
          %v8947 = vpack.c.b16 %v8790, %v8789
          %v8948 = vpack.c.b16 %v8792, %v8791
          %v8949 = vpack.c.b16 %v8794, %v8793
          %v8950 = vpack.c.b16 %v8796, %v8795
          %v8951 = vpack.c.b16 %v8798, %v8797
          %v8952 = vpack.c.b16 %v8800, %v8799
          %v8953 = vpack.c.b16 %v8802, %v8801
          %v8954 = vpack.c.b16 %v8804, %v8803
          %v8955 = vpack.c.b16 %v8806, %v8805
          %v8956 = vpack.c.b16 %v8808, %v8807
          %v8957 = vpack.c.b16 %v8810, %v8809
          %v8958 = vpack.c.b16 %v8812, %v8811
          %v8959 = vpack.c.b16 %v8814, %v8813
          %v8960 = vpack.c.b16 %v8816, %v8815
          %v8961 = vpack.c.b16 %v8818, %v8817
          %v8962 = vpack.c.b16 %v8820, %v8819
          %v8963 = vpack.c.b16 %v8822, %v8821
          %v8964 = vpack.c.b16 %v8824, %v8823
          %v8965 = vpack.c.b16 %v8826, %v8825
          %v8966 = vpack.c.b16 %v8828, %v8827
          %v8967 = vpack.c.b16 %v8830, %v8829
          %v8968 = vpack.c.b16 %v8832, %v8831
          %v8969 = vpack.c.b16 %v8834, %v8833
          %v8970 = vpack.c.b16 %v8836, %v8835
          %v8971 = vpack.c.b16 %v8838, %v8837
          %v8972 = vpack.c.b16 %v8840, %v8839
          %v8973 = vpack.c.b16 %v8842, %v8841
          %v8974 = vpack.c.b16 %v8844, %v8843
          %v8975 = vpack.c.b16 %v8846, %v8845
          %v8976 = vpack.c.b16 %v8848, %v8847
          %9105 = vmatprep.subr.bf16.mxu0 0
          %9106 = vmatpush1.bf16.msra.mxu0 %v8849
          %9107 = vmatprep.subr.bf16.mxu0 0
          %9108 = vmatpush1.bf16.msra.mxu0 %v8850
          %9109 = vmatprep.subr.bf16.mxu0 0
          %9110 = vmatpush1.bf16.msra.mxu0 %v8851
          %9111 = vmatprep.subr.bf16.mxu0 0
          %9112 = vmatpush1.bf16.msra.mxu0 %v8852
          %9113 = vmatprep.subr.bf16.mxu0 0
          %9114 = vmatpush1.bf16.msra.mxu0 %v8853
          %9115 = vmatprep.subr.bf16.mxu0 0
          %9116 = vmatpush1.bf16.msra.mxu0 %v8854
          %9117 = vmatprep.subr.bf16.mxu0 0
          %9118 = vmatpush1.bf16.msra.mxu0 %v8855
          %9119 = vmatprep.subr.bf16.mxu0 0
          %9120 = vmatpush1.bf16.msra.mxu0 %v8856
          %9121 = vmatprep.subr.bf16.mxu0 0
          %9122 = vmatpush1.bf16.msra.mxu0 %v8857
          %9123 = vmatprep.subr.bf16.mxu0 0
          %9124 = vmatpush1.bf16.msra.mxu0 %v8858
          %9125 = vmatprep.subr.bf16.mxu0 0
          %9126 = vmatpush1.bf16.msra.mxu0 %v8859
          %9127 = vmatprep.subr.bf16.mxu0 0
          %9128 = vmatpush1.bf16.msra.mxu0 %v8860
          %9129 = vmatprep.subr.bf16.mxu0 0
          %9130 = vmatpush1.bf16.msra.mxu0 %v8861
          %9131 = vmatprep.subr.bf16.mxu0 0
          %9132 = vmatpush1.bf16.msra.mxu0 %v8862
          %9133 = vmatprep.subr.bf16.mxu0 0
          %9134 = vmatpush1.bf16.msra.mxu0 %v8863
          %9135 = vmatprep.subr.bf16.mxu0 0
          %9136 = vmatpush1.bf16.msra.mxu0 %v8864
          %9137 = vmatprep.mubr.bf16.mxu0 %v8066
          %9138 = vmatmul.mubr.bf16.gmra.mrb[0].mxu0 %v8065
          %v9139 = vpop.f32.mrb[0].mxu0
          %v9140 = vadd.f32 0.0, %v9139
          %v9141 = vpop.f32.mrb[0].mxu0
          %v9142 = vpop.f32.mrb[0].mxu0
          %v9143 = vpop.f32.mrb[0].mxu0
          %9144 = vdwg.mxu0
          %9145 = vmatprep.subr.bf16.mxu0 0
          %9146 = vmatpush1.bf16.msra.mxu0 %v8865
          %9147 = vmatprep.subr.bf16.mxu0 0
          %9148 = vmatpush1.bf16.msra.mxu0 %v8866
          %9149 = vmatprep.subr.bf16.mxu0 0
          %9150 = vmatpush1.bf16.msra.mxu0 %v8867
          %9151 = vmatprep.subr.bf16.mxu0 0
          %9152 = vmatpush1.bf16.msra.mxu0 %v8868
          %9153 = vmatprep.subr.bf16.mxu0 0
          %9154 = vmatpush1.bf16.msra.mxu0 %v8869
          %9155 = vmatprep.subr.bf16.mxu0 0
          %9156 = vmatpush1.bf16.msra.mxu0 %v8870
          %9157 = vmatprep.subr.bf16.mxu0 0
          %9158 = vmatpush1.bf16.msra.mxu0 %v8871
          %9159 = vmatprep.subr.bf16.mxu0 0
          %9160 = vmatpush1.bf16.msra.mxu0 %v8872
          %9161 = vmatprep.subr.bf16.mxu0 0
          %9162 = vmatpush1.bf16.msra.mxu0 %v8873
          %9163 = vmatprep.subr.bf16.mxu0 0
          %9164 = vmatpush1.bf16.msra.mxu0 %v8874
          %9165 = vmatprep.subr.bf16.mxu0 0
          %9166 = vmatpush1.bf16.msra.mxu0 %v8875
          %9167 = vmatprep.subr.bf16.mxu0 0
          %9168 = vmatpush1.bf16.msra.mxu0 %v8876
          %9169 = vmatprep.subr.bf16.mxu0 0
          %9170 = vmatpush1.bf16.msra.mxu0 %v8877
          %9171 = vmatprep.subr.bf16.mxu0 0
          %9172 = vmatpush1.bf16.msra.mxu0 %v8878
          %9173 = vmatprep.subr.bf16.mxu0 0
          %9174 = vmatpush1.bf16.msra.mxu0 %v8879
          %9175 = vmatprep.subr.bf16.mxu0 0
          %9176 = vmatpush1.bf16.msra.mxu0 %v8880
          %9177 = vmatprep.mubr.bf16.mxu0 %v8068
          %9178 = vmatmul.mubr.bf16.gmra.mrb[0].mxu0 %v8067
          %v9179 = vpop.f32.mrb[0].mxu0
          %v9180 = vadd.f32 %v9140, %v9179
          %v9181 = vpop.f32.mrb[0].mxu0
          %v9182 = vpop.f32.mrb[0].mxu0
          %v9183 = vpop.f32.mrb[0].mxu0
          %9184 = vdwg.mxu0
          %9185 = vmatprep.subr.bf16.mxu0 0
          %9186 = vmatpush1.bf16.msra.mxu0 %v8881
          %9187 = vmatprep.subr.bf16.mxu0 0
          %9188 = vmatpush1.bf16.msra.mxu0 %v8882
          %9189 = vmatprep.subr.bf16.mxu0 0
          %9190 = vmatpush1.bf16.msra.mxu0 %v8883
          %9191 = vmatprep.subr.bf16.mxu0 0
          %9192 = vmatpush1.bf16.msra.mxu0 %v8884
          %9193 = vmatprep.subr.bf16.mxu0 0
          %9194 = vmatpush1.bf16.msra.mxu0 %v8885
          %9195 = vmatprep.subr.bf16.mxu0 0
          %9196 = vmatpush1.bf16.msra.mxu0 %v8886
          %9197 = vmatprep.subr.bf16.mxu0 0
          %9198 = vmatpush1.bf16.msra.mxu0 %v8887
          %9199 = vmatprep.subr.bf16.mxu0 0
          %9200 = vmatpush1.bf16.msra.mxu0 %v8888
          %9201 = vmatprep.subr.bf16.mxu0 0
          %9202 = vmatpush1.bf16.msra.mxu0 %v8889
          %9203 = vmatprep.subr.bf16.mxu0 0
          %9204 = vmatpush1.bf16.msra.mxu0 %v8890
          %9205 = vmatprep.subr.bf16.mxu0 0
          %9206 = vmatpush1.bf16.msra.mxu0 %v8891
          %9207 = vmatprep.subr.bf16.mxu0 0
          %9208 = vmatpush1.bf16.msra.mxu0 %v8892
          %9209 = vmatprep.subr.bf16.mxu0 0
          %9210 = vmatpush1.bf16.msra.mxu0 %v8893
          %9211 = vmatprep.subr.bf16.mxu0 0
          %9212 = vmatpush1.bf16.msra.mxu0 %v8894
          %9213 = vmatprep.subr.bf16.mxu0 0
          %9214 = vmatpush1.bf16.msra.mxu0 %v8895
          %9215 = vmatprep.subr.bf16.mxu0 0
          %9216 = vmatpush1.bf16.msra.mxu0 %v8896
          %9217 = vmatprep.mubr.bf16.mxu0 %v8070
          %9218 = vmatmul.mubr.bf16.gmra.mrb[0].mxu0 %v8069
          %v9219 = vpop.f32.mrb[0].mxu0
          %v9220 = vadd.f32 %v9180, %v9219
          %v9221 = vpop.f32.mrb[0].mxu0
          %v9222 = vpop.f32.mrb[0].mxu0
          %v9223 = vpop.f32.mrb[0].mxu0
          %9224 = vdwg.mxu0
          %9225 = vmatprep.subr.bf16.mxu0 0
          %9226 = vmatpush1.bf16.msra.mxu0 %v8897
          %9227 = vmatprep.subr.bf16.mxu0 0
          %9228 = vmatpush1.bf16.msra.mxu0 %v8898
          %9229 = vmatprep.subr.bf16.mxu0 0
          %9230 = vmatpush1.bf16.msra.mxu0 %v8899
          %9231 = vmatprep.subr.bf16.mxu0 0
          %9232 = vmatpush1.bf16.msra.mxu0 %v8900
          %9233 = vmatprep.subr.bf16.mxu0 0
          %9234 = vmatpush1.bf16.msra.mxu0 %v8901
          %9235 = vmatprep.subr.bf16.mxu0 0
          %9236 = vmatpush1.bf16.msra.mxu0 %v8902
          %9237 = vmatprep.subr.bf16.mxu0 0
          %9238 = vmatpush1.bf16.msra.mxu0 %v8903
          %9239 = vmatprep.subr.bf16.mxu0 0
          %9240 = vmatpush1.bf16.msra.mxu0 %v8904
          %9241 = vmatprep.subr.bf16.mxu0 0
          %9242 = vmatpush1.bf16.msra.mxu0 %v8905
          %9243 = vmatprep.subr.bf16.mxu0 0
          %9244 = vmatpush1.bf16.msra.mxu0 %v8906
          %9245 = vmatprep.subr.bf16.mxu0 0
          %9246 = vmatpush1.bf16.msra.mxu0 %v8907
          %9247 = vmatprep.subr.bf16.mxu0 0
          %9248 = vmatpush1.bf16.msra.mxu0 %v8908
          %9249 = vmatprep.subr.bf16.mxu0 0
          %9250 = vmatpush1.bf16.msra.mxu0 %v8909
          %9251 = vmatprep.subr.bf16.mxu0 0
          %9252 = vmatpush1.bf16.msra.mxu0 %v8910
          %9253 = vmatprep.subr.bf16.mxu0 0
          %9254 = vmatpush1.bf16.msra.mxu0 %v8911
          %9255 = vmatprep.subr.bf16.mxu0 0
          %9256 = vmatpush1.bf16.msra.mxu0 %v8912
          %9257 = vmatprep.mubr.bf16.mxu0 %v8072
          %9258 = vmatmul.mubr.bf16.gmra.mrb[0].mxu0 %v8071
          %v9259 = vpop.f32.mrb[0].mxu0
          %v9260 = vadd.f32 %v9220, %v9259
          %v9261 = vpop.f32.mrb[0].mxu0
          %v9262 = vpop.f32.mrb[0].mxu0
          %v9263 = vpop.f32.mrb[0].mxu0
          %9264 = vdwg.mxu0
          %9265 = vmatprep.subr.bf16.mxu0 0
          %9266 = vmatpush1.bf16.msra.mxu0 %v8913
          %9267 = vmatprep.subr.bf16.mxu0 0
          %9268 = vmatpush1.bf16.msra.mxu0 %v8914
          %9269 = vmatprep.subr.bf16.mxu0 0
          %9270 = vmatpush1.bf16.msra.mxu0 %v8915
          %9271 = vmatprep.subr.bf16.mxu0 0
          %9272 = vmatpush1.bf16.msra.mxu0 %v8916
          %9273 = vmatprep.subr.bf16.mxu0 0
          %9274 = vmatpush1.bf16.msra.mxu0 %v8917
          %9275 = vmatprep.subr.bf16.mxu0 0
          %9276 = vmatpush1.bf16.msra.mxu0 %v8918
          %9277 = vmatprep.subr.bf16.mxu0 0
          %9278 = vmatpush1.bf16.msra.mxu0 %v8919
          %9279 = vmatprep.subr.bf16.mxu0 0
          %9280 = vmatpush1.bf16.msra.mxu0 %v8920
          %9281 = vmatprep.subr.bf16.mxu0 0
          %9282 = vmatpush1.bf16.msra.mxu0 %v8921
          %9283 = vmatprep.subr.bf16.mxu0 0
          %9284 = vmatpush1.bf16.msra.mxu0 %v8922
          %9285 = vmatprep.subr.bf16.mxu0 0
          %9286 = vmatpush1.bf16.msra.mxu0 %v8923
          %9287 = vmatprep.subr.bf16.mxu0 0
          %9288 = vmatpush1.bf16.msra.mxu0 %v8924
          %9289 = vmatprep.subr.bf16.mxu0 0
          %9290 = vmatpush1.bf16.msra.mxu0 %v8925
          %9291 = vmatprep.subr.bf16.mxu0 0
          %9292 = vmatpush1.bf16.msra.mxu0 %v8926
          %9293 = vmatprep.subr.bf16.mxu0 0
          %9294 = vmatpush1.bf16.msra.mxu0 %v8927
          %9295 = vmatprep.subr.bf16.mxu0 0
          %9296 = vmatpush1.bf16.msra.mxu0 %v8928
          %9297 = vmatprep.mubr.bf16.mxu0 %v8074
          %9298 = vmatmul.mubr.bf16.gmra.mrb[0].mxu0 %v8073
          %v9299 = vpop.f32.mrb[0].mxu0
          %v9300 = vadd.f32 %v9260, %v9299
          %v9301 = vpop.f32.mrb[0].mxu0
          %v9302 = vpop.f32.mrb[0].mxu0
          %v9303 = vpop.f32.mrb[0].mxu0
          %9304 = vdwg.mxu0
          %9305 = vmatprep.subr.bf16.mxu0 0
          %9306 = vmatpush1.bf16.msra.mxu0 %v8929
          %9307 = vmatprep.subr.bf16.mxu0 0
          %9308 = vmatpush1.bf16.msra.mxu0 %v8930
          %9309 = vmatprep.subr.bf16.mxu0 0
          %9310 = vmatpush1.bf16.msra.mxu0 %v8931
          %9311 = vmatprep.subr.bf16.mxu0 0
          %9312 = vmatpush1.bf16.msra.mxu0 %v8932
          %9313 = vmatprep.subr.bf16.mxu0 0
          %9314 = vmatpush1.bf16.msra.mxu0 %v8933
          %9315 = vmatprep.subr.bf16.mxu0 0
          %9316 = vmatpush1.bf16.msra.mxu0 %v8934
          %9317 = vmatprep.subr.bf16.mxu0 0
          %9318 = vmatpush1.bf16.msra.mxu0 %v8935
          %9319 = vmatprep.subr.bf16.mxu0 0
          %9320 = vmatpush1.bf16.msra.mxu0 %v8936
          %9321 = vmatprep.subr.bf16.mxu0 0
          %9322 = vmatpush1.bf16.msra.mxu0 %v8937
          %9323 = vmatprep.subr.bf16.mxu0 0
          %9324 = vmatpush1.bf16.msra.mxu0 %v8938
          %9325 = vmatprep.subr.bf16.mxu0 0
          %9326 = vmatpush1.bf16.msra.mxu0 %v8939
          %9327 = vmatprep.subr.bf16.mxu0 0
          %9328 = vmatpush1.bf16.msra.mxu0 %v8940
          %9329 = vmatprep.subr.bf16.mxu0 0
          %9330 = vmatpush1.bf16.msra.mxu0 %v8941
          %9331 = vmatprep.subr.bf16.mxu0 0
          %9332 = vmatpush1.bf16.msra.mxu0 %v8942
          %9333 = vmatprep.subr.bf16.mxu0 0
          %9334 = vmatpush1.bf16.msra.mxu0 %v8943
          %9335 = vmatprep.subr.bf16.mxu0 0
          %9336 = vmatpush1.bf16.msra.mxu0 %v8944
          %9337 = vmatprep.mubr.bf16.mxu0 %v8076
          %9338 = vmatmul.mubr.bf16.gmra.mrb[0].mxu0 %v8075
          %v9339 = vpop.f32.mrb[0].mxu0
          %v9340 = vadd.f32 %v9300, %v9339
          %v9341 = vpop.f32.mrb[0].mxu0
          %v9342 = vpop.f32.mrb[0].mxu0
          %v9343 = vpop.f32.mrb[0].mxu0
          %9344 = vdwg.mxu0
          %9345 = vmatprep.subr.bf16.mxu0 0
          %9346 = vmatpush1.bf16.msra.mxu0 %v8945
          %9347 = vmatprep.subr.bf16.mxu0 0
          %9348 = vmatpush1.bf16.msra.mxu0 %v8946
          %9349 = vmatprep.subr.bf16.mxu0 0
          %9350 = vmatpush1.bf16.msra.mxu0 %v8947
          %9351 = vmatprep.subr.bf16.mxu0 0
          %9352 = vmatpush1.bf16.msra.mxu0 %v8948
          %9353 = vmatprep.subr.bf16.mxu0 0
          %9354 = vmatpush1.bf16.msra.mxu0 %v8949
          %9355 = vmatprep.subr.bf16.mxu0 0
          %9356 = vmatpush1.bf16.msra.mxu0 %v8950
          %9357 = vmatprep.subr.bf16.mxu0 0
          %9358 = vmatpush1.bf16.msra.mxu0 %v8951
          %9359 = vmatprep.subr.bf16.mxu0 0
          %9360 = vmatpush1.bf16.msra.mxu0 %v8952
          %9361 = vmatprep.subr.bf16.mxu0 0
          %9362 = vmatpush1.bf16.msra.mxu0 %v8953
          %9363 = vmatprep.subr.bf16.mxu0 0
          %9364 = vmatpush1.bf16.msra.mxu0 %v8954
          %9365 = vmatprep.subr.bf16.mxu0 0
          %9366 = vmatpush1.bf16.msra.mxu0 %v8955
          %9367 = vmatprep.subr.bf16.mxu0 0
          %9368 = vmatpush1.bf16.msra.mxu0 %v8956
          %9369 = vmatprep.subr.bf16.mxu0 0
          %9370 = vmatpush1.bf16.msra.mxu0 %v8957
          %9371 = vmatprep.subr.bf16.mxu0 0
          %9372 = vmatpush1.bf16.msra.mxu0 %v8958
          %9373 = vmatprep.subr.bf16.mxu0 0
          %9374 = vmatpush1.bf16.msra.mxu0 %v8959
          %9375 = vmatprep.subr.bf16.mxu0 0
          %9376 = vmatpush1.bf16.msra.mxu0 %v8960
          %9377 = vmatprep.mubr.bf16.mxu0 %v8078
          %9378 = vmatmul.mubr.bf16.gmra.mrb[0].mxu0 %v8077
          %v9379 = vpop.f32.mrb[0].mxu0
          %v9380 = vadd.f32 %v9340, %v9379
          %v9381 = vpop.f32.mrb[0].mxu0
          %v9382 = vpop.f32.mrb[0].mxu0
          %v9383 = vpop.f32.mrb[0].mxu0
          %9384 = vdwg.mxu0
          %9385 = vmatprep.subr.bf16.mxu0 0
          %9386 = vmatpush1.bf16.msra.mxu0 %v8961
          %9387 = vmatprep.subr.bf16.mxu0 0
          %9388 = vmatpush1.bf16.msra.mxu0 %v8962
          %9389 = vmatprep.subr.bf16.mxu0 0
          %9390 = vmatpush1.bf16.msra.mxu0 %v8963
          %9391 = vmatprep.subr.bf16.mxu0 0
          %9392 = vmatpush1.bf16.msra.mxu0 %v8964
          %9393 = vmatprep.subr.bf16.mxu0 0
          %9394 = vmatpush1.bf16.msra.mxu0 %v8965
          %9395 = vmatprep.subr.bf16.mxu0 0
          %9396 = vmatpush1.bf16.msra.mxu0 %v8966
          %9397 = vmatprep.subr.bf16.mxu0 0
          %9398 = vmatpush1.bf16.msra.mxu0 %v8967
          %9399 = vmatprep.subr.bf16.mxu0 0
          %9400 = vmatpush1.bf16.msra.mxu0 %v8968
          %9401 = vmatprep.subr.bf16.mxu0 0
          %9402 = vmatpush1.bf16.msra.mxu0 %v8969
          %9403 = vmatprep.subr.bf16.mxu0 0
          %9404 = vmatpush1.bf16.msra.mxu0 %v8970
          %9405 = vmatprep.subr.bf16.mxu0 0
          %9406 = vmatpush1.bf16.msra.mxu0 %v8971
          %9407 = vmatprep.subr.bf16.mxu0 0
          %9408 = vmatpush1.bf16.msra.mxu0 %v8972
          %9409 = vmatprep.subr.bf16.mxu0 0
          %9410 = vmatpush1.bf16.msra.mxu0 %v8973
          %9411 = vmatprep.subr.bf16.mxu0 0
          %9412 = vmatpush1.bf16.msra.mxu0 %v8974
          %9413 = vmatprep.subr.bf16.mxu0 0
          %9414 = vmatpush1.bf16.msra.mxu0 %v8975
          %9415 = vmatprep.subr.bf16.mxu0 0
          %9416 = vmatpush1.bf16.msra.mxu0 %v8976
          %9417 = vmatprep.mubr.bf16.mxu0 %v8080
          %9418 = vmatmul.mubr.bf16.gmra.mrb[0].mxu0 %v8079
          %v9419 = vpop.f32.mrb[0].mxu0
          %v9420 = vadd.f32 %v9380, %v9419
          %v9421 = vpop.f32.mrb[0].mxu0
          %v9422 = vpop.f32.mrb[0].mxu0
          %v9423 = vpop.f32.mrb[0].mxu0
          %9424 = vdwg.mxu0
          %v9425 = vld [vmem:[#allocation11] sm:$0x1]
          %v9427 = vlaneseq
          %v9428 = vshrl.u32 %v9427, 7
          %v9429 = vsub.s32 0, %v9428
          %v9430 = vrot.slane %v9425, %v9429
          %v9432 = vmul.f32 %v9420, %v9430
          %v9433 = vld [vmem:[#allocation12] sm:$0x1]
          %v9435 = vlaneseq
          %v9436 = vshrl.u32 %v9435, 7
          %v9437 = vsub.s32 0, %v9436
          %v9438 = vrot.slane %v9433, %v9437
          %v9440 = vadd.f32 %v9432, %v9438
          %9441 = vst [vmem:[#allocation14] sm:$0xff] %v9440
        $region76: #{tpu_custom_call.1} parent=43 // pred_fallthru
          _
        // Predicated region
        $region77: #{tpu_custom_call.1} parent=43 // pred_check
          %p9442 = pneg %p194
        $region78: #{tpu_custom_call.1} parent=43 // pred_check_branch
          %9444 = sbr.rel (%p9442) target = $region80
        $region79: #{tpu_custom_call.1} parent=43 // pred_region
          %s9446 = ssub.s32 128, 128
          %9447 = vsyncadd [#allocation5], %s9446
          %s9448 = smul.addr %s30, 128
          %s9449 = scalar_lea.hbm %s6, %s9448
          %s9451 = sshll.u32 [#allocation14], 4
          %s9452 = int_to_ptr.vmem [resolvable:$true] %s9451
          %9454 = dma.vmem_to_hbm [thread:$0]  %s9452, 128, %s9449, [#allocation5]
        $region80: #{tpu_custom_call.1} parent=43 // pred_fallthru
          _
        // Predicated region
        $region81: #{tpu_custom_call.1} parent=43 // pred_check
          %p9455 = pneg %p194
        $region82: #{tpu_custom_call.1} parent=43 // pred_check_branch
          %9457 = sbr.rel (%p9455) target = $region84
        $region83: #{tpu_custom_call.1} parent=43 // pred_region
          %9458 = dma.done [#allocation5], 128
        $region84: #{tpu_custom_call.1} parent=43 // pred_fallthru
          _
      $region44: #{tpu_custom_call.1} parent=5 // pred_fallthru
        _
      %p9459 = scmp.le.s32.totalorder 2, %s21
      // Predicated region
      $region85: #{tpu_custom_call.1} parent=5 // pred_check
        %p9460 = pneg %p9459
      $region86: #{tpu_custom_call.1} parent=5 // pred_check_branch
        %9462 = sbr.rel (%p9460) target = $region88
      $region87: #{tpu_custom_call.1} parent=5 // pred_region
        %s9463 = ssub.s32 %s21, 2
      $region88: #{tpu_custom_call.1} parent=5 // pred_fallthru
        _
    $region6: #{tpu_custom_call.1} parent=1 // loop_footer
      %s25 = sadd.s32 1, %s21
    $region7: #{tpu_custom_call.1} parent=1 // loop_footer_branch
      %20 = sbr.rel target = $region3
    $region8: #{tpu_custom_call.1} parent=1 // loop_exit
      _
    %9464 = vsyncpa [#allocation4], 1
    %s9465 = scalar_lea.sflag [#allocation4], 1
    %9466 = vsyncpa %s9465, 1
    %9467 = vsyncpa [#allocation7], 1
    %s9468 = scalar_lea.sflag [#allocation7], 1
    %9469 = vsyncpa %s9468, 1
    %9470 = vsyncpa [#allocation10], 1
    %9471 = vsyncpa [#allocation13], 1
    %9472 = vsyncpa [#allocation5], 1
    %s9473 = scalar_lea.sflag [#allocation5], 1
    %9474 = vsyncpa %s9473, 1

</llo_original>
